<compile_context>
chip_gen: v7x
topology: tpu7x:2x2x1
jax: 0.10.0
libtpu: 0.0.40
codegen_flags: <defaults>
</compile_context>

<pallas_src>
import functools

import jax
import jax.numpy as jnp
from jax import lax
from jax.experimental import pallas as pl
from jax.experimental.pallas import tpu as pltpu


def _encoder_layer_kernel(x_ref, w1_ref, w2_ref, o_ref, attn_ref, *, kernel_size):
    bt, L, D = x_ref.shape
    k = kernel_size
    p = (k - 1) // 2              # ramp pad size, matches moving_avg
    pf = float(p)

    x = x_ref[...].astype(jnp.float32)       # (bt, L, D)
    w1 = w1_ref[...].astype(jnp.float32)     # (D, d_ff)   == conv1.weight.T
    w2 = w2_ref[...].astype(jnp.float32)     # (d_ff, D)   == conv2.weight.T

    # ---- moving-average machinery shared by decomp1 / decomp2 ----
    ti = lax.broadcasted_iota(jnp.int32, (L, L), 0)
    tj = lax.broadcasted_iota(jnp.int32, (L, L), 1)
    band = jnp.where((tj >= ti - p) & (tj <= ti + p), 1.0, 0.0).astype(jnp.float32)
    band_b = jnp.broadcast_to(band[None], (bt, L, L))

    t = lax.broadcasted_iota(jnp.int32, (L, D), 0).astype(jnp.float32)
    tc = jnp.minimum(t, pf)
    a_f = pf - tc                                     # # front-pad rows in window
    b_f = 0.5 * (pf * (pf + 1.0) - tc * (tc + 1.0))   # sum of their ramp multipliers
    n_e = jnp.maximum(t + pf - float(L) + 1.0, 0.0)   # # end-pad rows in window
    c_e = 0.5 * n_e * (n_e - 1.0)                     # sum of their ramp multipliers
    inv_k = 1.0 / float(k)

    def moving_avg(v):                                # v: (bt, L, D) f32
        start = v[:, 0:1, :]
        end = v[:, L - 1:L, :]
        start_diff = (v[:, 1:2, :] - start) * (1.0 / (pf + 1.0))
        end_diff = (end - v[:, L - 2:L - 1, :]) * (1.0 / (pf + 1.0))
        front = a_f * start + b_f * start_diff        # (bt, L, D)
        tail = n_e * end - c_e * end_diff
        mid = jnp.einsum('btm,bmd->btd', band_b, v,
                         preferred_element_type=jnp.float32)
        return (front + mid + tail) * inv_k

    # ---- attention ----
    # TODO(synk): `self.attention` is a constructor-injected module
    # (AutoCorrelation in Autoformer); a plain softmax(Q K^T / sqrt(D)) V with
    # Q = K = V = x stands in here. attn_mask is None / unused.
    scores = jnp.einsum('bqd,bkd->bqk', x, x,
                        preferred_element_type=jnp.float32) * (1.0 / (D ** 0.5))
    m = jnp.max(scores, axis=-1, keepdims=True)
    e = jnp.exp(scores - m)
    attn = e / jnp.sum(e, axis=-1, keepdims=True)
    new_x = jnp.einsum('bqk,bkd->bqd', attn, x,
                       preferred_element_type=jnp.float32)

    # residual + decomp1   (dropout == identity in eval mode)
    x1 = x + new_x
    s1 = x1 - moving_avg(x1)

    # pointwise feed-forward (Conv1d kernel_size=1, bias=False) + decomp2
    s1_2d = s1.reshape(bt * L, D)
    h = jnp.maximum(jnp.dot(s1_2d, w1, preferred_element_type=jnp.float32), 0.0)
    y = jnp.dot(h, w2, preferred_element_type=jnp.float32).reshape(bt, L, D)

    z = s1 + y
    res = z - moving_avg(z)

    o_ref[...] = res.astype(o_ref.dtype)
    attn_ref[...] = attn.astype(attn_ref.dtype)


def encoder_layer_forward(x, conv1_w_t, conv2_w_t, *, kernel_size=25, block_b=None):
    """Autoformer EncoderLayer forward.

    x: (B, L, d_model); conv1_w_t: (d_model, d_ff); conv2_w_t: (d_ff, d_model)
    (transposed Conv1d weights).  Returns (res, attn): (B, L, d_model), (B, L, L).
    """
    B, L, D = x.shape
    d_ff = conv1_w_t.shape[1]

    if block_b is None:
        # Batch several sequences per grid step so activation tiles are ~2 MiB:
        # amortizes per-step overhead, stays inside default scoped VMEM on
        # v5e (16 MiB) / v6e (32 MiB) / v7x (32 of 64 MiB).
        bytes_per_seq = L * max(D, d_ff) * 4
        block_b = max(1, min(B, (2 * 1024 * 1024) // max(1, bytes_per_seq)))
        while B % block_b:
            block_b -= 1
    grid = (B // block_b,)

    kernel = functools.partial(_encoder_layer_kernel, kernel_size=kernel_size)

    return pl.pallas_call(
        kernel,
        out_shape=(
            jax.ShapeDtypeStruct((B, L, D), x.dtype),
            jax.ShapeDtypeStruct((B, L, L), jnp.float32),
        ),
        grid_spec=pltpu.PrefetchScalarGridSpec(
            num_scalar_prefetch=0,
            grid=grid,
            in_specs=[
                pl.BlockSpec((block_b, L, D), lambda b: (b, 0, 0)),
                pl.BlockSpec((D, d_ff), lambda b: (0, 0)),   # weights fetched once
                pl.BlockSpec((d_ff, D), lambda b: (0, 0)),
            ],
            out_specs=[
                pl.BlockSpec((block_b, L, D), lambda b: (b, 0, 0)),
                pl.BlockSpec((block_b, L, L), lambda b: (b, 0, 0)),
            ],
        ),
        compiler_params=pltpu.CompilerParams(
            dimension_semantics=("parallel",),
        ),
    )(x, conv1_w_t, conv2_w_t)


# ----------------------- pure-JAX reference (literal) -----------------------
def _moving_avg_ref(x, kernel_size):
    p = (kernel_size - 1) // 2
    start = x[:, :1, :]
    end = x[:, -1:, :]
    if p > 0:
        start_diff = (x[:, 1:2, :] - start) / (p + 1)
        end_diff = (end - x[:, -2:-1, :]) / (p + 1)
        front = jnp.concatenate([start + start_diff * (i + 1) for i in range(p)], axis=1)
        tail = jnp.concatenate([end - end_diff * (p - i) for i in range(p, 0, -1)], axis=1)
        xp = jnp.concatenate([front, x, tail], axis=1)
    else:
        xp = x
    L = x.shape[1]
    return jnp.stack(
        [jnp.mean(xp[:, t:t + kernel_size, :], axis=1) for t in range(L)], axis=1)


def _encoder_layer_ref(x, w1t, w2t, kernel_size):
    D = x.shape[-1]
    scores = jnp.einsum('bqd,bkd->bqk', x, x) / jnp.sqrt(jnp.float32(D))
    attn = jax.nn.softmax(scores, axis=-1)
    new_x = jnp.einsum('bqk,bkd->bqd', attn, x)
    x1 = x + new_x
    s1 = x1 - _moving_avg_ref(x1, kernel_size)
    h = jnp.maximum(jnp.einsum('bld,df->blf', s1, w1t), 0.0)
    y = jnp.einsum('blf,fd->bld', h, w2t)
    z = s1 + y
    return z - _moving_avg_ref(z, kernel_size), attn


if __name__ == "__main__":
    # Full-f32 matmuls everywhere so the Pallas kernel and the XLA reference agree.
    jax.config.update("jax_default_matmul_precision", "highest")

    B, L, D, D_FF, K = 2, 32, 128, 512, 25   # lane-dense d_model / d_ff, default moving_avg=25
    key = jax.random.PRNGKey(0)
    kx, k1, k2 = jax.random.split(key, 3)
    x = jax.random.normal(kx, (B, L, D), dtype=jnp.float32)
    conv1_w_t = jax.random.normal(k1, (D, D_FF), dtype=jnp.float32) / jnp.sqrt(jnp.float32(D))
    conv2_w_t = jax.random.normal(k2, (D_FF, D), dtype=jnp.float32) / jnp.sqrt(jnp.float32(D_FF))

    res, attn = encoder_layer_forward(x, conv1_w_t, conv2_w_t, kernel_size=K)
    res, attn = jax.block_until_ready((res, attn))

    ref_res, ref_attn = _encoder_layer_ref(x, conv1_w_t, conv2_w_t, K)
    assert res.shape == (B, L, D) and attn.shape == (B, L, L)
    assert jnp.allclose(attn, ref_attn, atol=5e-5, rtol=5e-5), \
        float(jnp.max(jnp.abs(attn - ref_attn)))
    assert jnp.allclose(res, ref_res, atol=5e-4, rtol=5e-4), \
        float(jnp.max(jnp.abs(res - ref_res)))

    print("KERNEL_OK")
</pallas_src>

<mosaic_0001>
module attributes {stable_mosaic.version = 11 : i64} {
  func.func @_encoder_layer_kernel(%arg0: i32, %arg1: memref<2x32x128xf32, #tpu.memory_space<vmem>>, %arg2: memref<128x512xf32, #tpu.memory_space<vmem>>, %arg3: memref<512x128xf32, #tpu.memory_space<vmem>>, %arg4: memref<2x32x128xf32, #tpu.memory_space<vmem>>, %arg5: memref<2x32x32xf32, #tpu.memory_space<vmem>>) attributes {dimension_semantics = [#tpu.dimension_semantics<parallel>], iteration_bounds = array<i64: 1>, scalar_prefetch = 0 : i64, scratch_operands = 0 : i64, tpu.core_type = #tpu.core_type<tc>, window_params = [{transform_indices = @transform_0, window_bounds = array<i64: 2, 32, 128>}, {pipeline_mode = #tpu.pipeline_mode<synchronous>, transform_indices = @transform_1, window_bounds = array<i64: 128, 512>}, {pipeline_mode = #tpu.pipeline_mode<synchronous>, transform_indices = @transform_2, window_bounds = array<i64: 512, 128>}, {transform_indices = @transform_3, window_bounds = array<i64: 2, 32, 128>}, {transform_indices = @transform_4, window_bounds = array<i64: 2, 32, 32>}]} {
    %c0 = arith.constant 0 : index
    %c0_0 = arith.constant 0 : index
    %c0_1 = arith.constant 0 : index
    %0 = vector.load %arg1[%c0, %c0_0, %c0_1] : memref<2x32x128xf32, #tpu.memory_space<vmem>>, vector<2x32x128xf32>
    %c0_2 = arith.constant 0 : index
    %c0_3 = arith.constant 0 : index
    %1 = vector.load %arg2[%c0_2, %c0_3] : memref<128x512xf32, #tpu.memory_space<vmem>>, vector<128x512xf32>
    %c0_4 = arith.constant 0 : index
    %c0_5 = arith.constant 0 : index
    %2 = vector.load %arg3[%c0_4, %c0_5] : memref<512x128xf32, #tpu.memory_space<vmem>>, vector<512x128xf32>
    %3 = tpu.iota {dimensions = array<i32: 0>} : vector<32x32xi32>
    %4 = tpu.iota {dimensions = array<i32: 1>} : vector<32x32xi32>
    %c12_i32 = arith.constant 12 : i32
    %5 = vector.broadcast %c12_i32 : i32 to vector<32x32xi32>
    %6 = arith.subi %3, %5 : vector<32x32xi32>
    %7 = arith.cmpi sge, %4, %6 : vector<32x32xi32>
    %c12_i32_6 = arith.constant 12 : i32
    %8 = vector.broadcast %c12_i32_6 : i32 to vector<32x32xi32>
    %9 = arith.addi %3, %8 : vector<32x32xi32>
    %10 = arith.cmpi sle, %4, %9 : vector<32x32xi32>
    %11 = arith.andi %7, %10 : vector<32x32xi1>
    %cst = arith.constant 1.000000e+00 : f32
    %cst_7 = arith.constant 0.000000e+00 : f32
    %12 = vector.broadcast %cst : f32 to vector<32x32xf32>
    %13 = vector.broadcast %cst_7 : f32 to vector<32x32xf32>
    %14 = arith.select %11, %12, %13 : vector<32x32xi1>, vector<32x32xf32>
    %15 = vector.shape_cast %14 : vector<32x32xf32> to vector<1x32x32xf32>
    %16 = vector.shape_cast %15 : vector<1x32x32xf32> to vector<1x32x32xf32>
    %17 = vector.broadcast %16 : vector<1x32x32xf32> to vector<2x32x32xf32>
    %18 = tpu.iota {dimensions = array<i32: 0>} : vector<32x128xi32>
    %19 = arith.sitofp %18 : vector<32x128xi32> to vector<32x128xf32>
    %cst_8 = arith.constant 1.200000e+01 : f32
    %20 = vector.broadcast %cst_8 : f32 to vector<32x128xf32>
    %21 = arith.minimumf %19, %20 : vector<32x128xf32>
    %cst_9 = arith.constant 1.200000e+01 : f32
    %22 = vector.broadcast %cst_9 : f32 to vector<32x128xf32>
    %23 = arith.subf %22, %21 : vector<32x128xf32>
    %cst_10 = arith.constant 1.000000e+00 : f32
    %24 = vector.broadcast %cst_10 : f32 to vector<32x128xf32>
    %25 = arith.addf %21, %24 : vector<32x128xf32>
    %26 = arith.mulf %21, %25 : vector<32x128xf32>
    %cst_11 = arith.constant 1.560000e+02 : f32
    %27 = vector.broadcast %cst_11 : f32 to vector<32x128xf32>
    %28 = arith.subf %27, %26 : vector<32x128xf32>
    %cst_12 = arith.constant 5.000000e-01 : f32
    %29 = vector.broadcast %cst_12 : f32 to vector<32x128xf32>
    %30 = arith.mulf %29, %28 : vector<32x128xf32>
    %cst_13 = arith.constant 1.200000e+01 : f32
    %31 = vector.broadcast %cst_13 : f32 to vector<32x128xf32>
    %32 = arith.addf %19, %31 : vector<32x128xf32>
    %cst_14 = arith.constant 3.200000e+01 : f32
    %33 = vector.broadcast %cst_14 : f32 to vector<32x128xf32>
    %34 = arith.subf %32, %33 : vector<32x128xf32>
    %cst_15 = arith.constant 1.000000e+00 : f32
    %35 = vector.broadcast %cst_15 : f32 to vector<32x128xf32>
    %36 = arith.addf %34, %35 : vector<32x128xf32>
    %cst_16 = arith.constant 0.000000e+00 : f32
    %37 = vector.broadcast %cst_16 : f32 to vector<32x128xf32>
    %38 = arith.maximumf %36, %37 : vector<32x128xf32>
    %cst_17 = arith.constant 5.000000e-01 : f32
    %39 = vector.broadcast %cst_17 : f32 to vector<32x128xf32>
    %40 = arith.mulf %39, %38 : vector<32x128xf32>
    %cst_18 = arith.constant 1.000000e+00 : f32
    %41 = vector.broadcast %cst_18 : f32 to vector<32x128xf32>
    %42 = arith.subf %38, %41 : vector<32x128xf32>
    %43 = arith.mulf %40, %42 : vector<32x128xf32>
    "tpu.trace_start"() <{level = 10 : i32, message = "bqd,bkd->bqk"}> : () -> ()
    %cst_19 = arith.constant dense<0.000000e+00> : vector<2x32x32xf32>
    %44 = tpu.matmul %0, %0, %cst_19 {dimension_numbers = #tpu.dot_dimension_numbers<[2], [2], [1], [1], [0, 0, 0, 1, 1, 1], [0], [0]>, precision = #tpu.contract_precision<fp32>} : vector<2x32x128xf32>, vector<2x32x128xf32>, vector<2x32x32xf32> -> vector<2x32x32xf32>
    "tpu.trace_stop"() : () -> ()
    %cst_20 = arith.constant 0.0883883461 : f32
    %45 = vector.broadcast %cst_20 : f32 to vector<2x32x32xf32>
    %46 = arith.mulf %44, %45 : vector<2x32x32xf32>
    %cst_21 = arith.constant dense<0xFF800000> : vector<2x32xf32>
    %47 = vector.multi_reduction <maximumf>, %46, %cst_21 [2] : vector<2x32x32xf32> to vector<2x32xf32>
    %48 = vector.shape_cast %47 : vector<2x32xf32> to vector<2x32x1xf32>
    %49 = vector.broadcast %48 : vector<2x32x1xf32> to vector<2x32x32xf32>
    %50 = arith.subf %46, %49 : vector<2x32x32xf32>
    %51 = math.exp %50 : vector<2x32x32xf32>
    %cst_22 = arith.constant dense<0.000000e+00> : vector<2x32xf32>
    %52 = vector.multi_reduction <add>, %51, %cst_22 [2] : vector<2x32x32xf32> to vector<2x32xf32>
    %53 = vector.shape_cast %52 : vector<2x32xf32> to vector<2x32x1xf32>
    %54 = vector.broadcast %53 : vector<2x32x1xf32> to vector<2x32x32xf32>
    %55 = arith.divf %51, %54 : vector<2x32x32xf32>
    "tpu.trace_start"() <{level = 10 : i32, message = "bqk,bkd->bqd"}> : () -> ()
    %cst_23 = arith.constant dense<0.000000e+00> : vector<2x32x128xf32>
    %56 = tpu.matmul %55, %0, %cst_23 {dimension_numbers = #tpu.dot_dimension_numbers<[2], [1], [1], [2], [0, 0, 0, 1, 1, 2], [0], [0]>, precision = #tpu.contract_precision<fp32>} : vector<2x32x32xf32>, vector<2x32x128xf32>, vector<2x32x128xf32> -> vector<2x32x128xf32>
    "tpu.trace_stop"() : () -> ()
    %57 = arith.addf %0, %56 : vector<2x32x128xf32>
    %58 = vector.extract_strided_slice %57 {offsets = [0, 0, 0], sizes = [2, 1, 128], strides = [1, 1, 1]} : vector<2x32x128xf32> to vector<2x1x128xf32>
    %59 = vector.extract_strided_slice %57 {offsets = [0, 31, 0], sizes = [2, 1, 128], strides = [1, 1, 1]} : vector<2x32x128xf32> to vector<2x1x128xf32>
    %60 = vector.extract_strided_slice %57 {offsets = [0, 1, 0], sizes = [2, 1, 128], strides = [1, 1, 1]} : vector<2x32x128xf32> to vector<2x1x128xf32>
    %61 = arith.subf %60, %58 : vector<2x1x128xf32>
    %cst_24 = arith.constant 0.0769230798 : f32
    %62 = vector.broadcast %cst_24 : f32 to vector<2x1x128xf32>
    %63 = arith.mulf %61, %62 : vector<2x1x128xf32>
    %64 = vector.extract_strided_slice %57 {offsets = [0, 30, 0], sizes = [2, 1, 128], strides = [1, 1, 1]} : vector<2x32x128xf32> to vector<2x1x128xf32>
    %65 = arith.subf %59, %64 : vector<2x1x128xf32>
    %cst_25 = arith.constant 0.0769230798 : f32
    %66 = vector.broadcast %cst_25 : f32 to vector<2x1x128xf32>
    %67 = arith.mulf %65, %66 : vector<2x1x128xf32>
    %68 = vector.shape_cast %23 : vector<32x128xf32> to vector<1x32x128xf32>
    %69 = vector.broadcast %68 : vector<1x32x128xf32> to vector<2x32x128xf32>
    %70 = vector.broadcast %58 : vector<2x1x128xf32> to vector<2x32x128xf32>
    %71 = arith.mulf %69, %70 : vector<2x32x128xf32>
    %72 = vector.shape_cast %30 : vector<32x128xf32> to vector<1x32x128xf32>
    %73 = vector.broadcast %72 : vector<1x32x128xf32> to vector<2x32x128xf32>
    %74 = vector.broadcast %63 : vector<2x1x128xf32> to vector<2x32x128xf32>
    %75 = arith.mulf %73, %74 : vector<2x32x128xf32>
    %76 = arith.addf %71, %75 : vector<2x32x128xf32>
    %77 = vector.shape_cast %38 : vector<32x128xf32> to vector<1x32x128xf32>
    %78 = vector.broadcast %77 : vector<1x32x128xf32> to vector<2x32x128xf32>
    %79 = vector.broadcast %59 : vector<2x1x128xf32> to vector<2x32x128xf32>
    %80 = arith.mulf %78, %79 : vector<2x32x128xf32>
    %81 = vector.shape_cast %43 : vector<32x128xf32> to vector<1x32x128xf32>
    %82 = vector.broadcast %81 : vector<1x32x128xf32> to vector<2x32x128xf32>
    %83 = vector.broadcast %67 : vector<2x1x128xf32> to vector<2x32x128xf32>
    %84 = arith.mulf %82, %83 : vector<2x32x128xf32>
    %85 = arith.subf %80, %84 : vector<2x32x128xf32>
    "tpu.trace_start"() <{level = 10 : i32, message = "btm,bmd->btd"}> : () -> ()
    %cst_26 = arith.constant dense<0.000000e+00> : vector<2x32x128xf32>
    %86 = tpu.matmul %17, %57, %cst_26 {dimension_numbers = #tpu.dot_dimension_numbers<[2], [1], [1], [2], [0, 0, 0, 1, 1, 2], [0], [0]>, precision = #tpu.contract_precision<fp32>} : vector<2x32x32xf32>, vector<2x32x128xf32>, vector<2x32x128xf32> -> vector<2x32x128xf32>
    "tpu.trace_stop"() : () -> ()
    %87 = arith.addf %76, %86 : vector<2x32x128xf32>
    %88 = arith.addf %87, %85 : vector<2x32x128xf32>
    %cst_27 = arith.constant 4.000000e-02 : f32
    %89 = vector.broadcast %cst_27 : f32 to vector<2x32x128xf32>
    %90 = arith.mulf %88, %89 : vector<2x32x128xf32>
    %91 = arith.subf %57, %90 : vector<2x32x128xf32>
    %92 = vector.shape_cast %91 : vector<2x32x128xf32> to vector<64x128xf32>
    %cst_28 = arith.constant dense<0.000000e+00> : vector<64x512xf32>
    %93 = tpu.matmul %92, %1, %cst_28 {dimension_numbers = #tpu.dot_dimension_numbers<[1], [0], [0], [1], [0, 0, 1, 1], [], []>, precision = #tpu.contract_precision<fp32>} : vector<64x128xf32>, vector<128x512xf32>, vector<64x512xf32> -> vector<64x512xf32>
    %cst_29 = arith.constant 0.000000e+00 : f32
    %94 = vector.broadcast %cst_29 : f32 to vector<64x512xf32>
    %95 = arith.maximumf %93, %94 : vector<64x512xf32>
    %cst_30 = arith.constant dense<0.000000e+00> : vector<64x128xf32>
    %96 = tpu.matmul %95, %2, %cst_30 {dimension_numbers = #tpu.dot_dimension_numbers<[1], [0], [0], [1], [0, 0, 1, 1], [], []>, precision = #tpu.contract_precision<fp32>} : vector<64x512xf32>, vector<512x128xf32>, vector<64x128xf32> -> vector<64x128xf32>
    %97 = vector.shape_cast %96 : vector<64x128xf32> to vector<2x32x128xf32>
    %98 = arith.addf %91, %97 : vector<2x32x128xf32>
    %99 = vector.extract_strided_slice %98 {offsets = [0, 0, 0], sizes = [2, 1, 128], strides = [1, 1, 1]} : vector<2x32x128xf32> to vector<2x1x128xf32>
    %100 = vector.extract_strided_slice %98 {offsets = [0, 31, 0], sizes = [2, 1, 128], strides = [1, 1, 1]} : vector<2x32x128xf32> to vector<2x1x128xf32>
    %101 = vector.extract_strided_slice %98 {offsets = [0, 1, 0], sizes = [2, 1, 128], strides = [1, 1, 1]} : vector<2x32x128xf32> to vector<2x1x128xf32>
    %102 = arith.subf %101, %99 : vector<2x1x128xf32>
    %cst_31 = arith.constant 0.0769230798 : f32
    %103 = vector.broadcast %cst_31 : f32 to vector<2x1x128xf32>
    %104 = arith.mulf %102, %103 : vector<2x1x128xf32>
    %105 = vector.extract_strided_slice %98 {offsets = [0, 30, 0], sizes = [2, 1, 128], strides = [1, 1, 1]} : vector<2x32x128xf32> to vector<2x1x128xf32>
    %106 = arith.subf %100, %105 : vector<2x1x128xf32>
    %cst_32 = arith.constant 0.0769230798 : f32
    %107 = vector.broadcast %cst_32 : f32 to vector<2x1x128xf32>
    %108 = arith.mulf %106, %107 : vector<2x1x128xf32>
    %109 = vector.shape_cast %23 : vector<32x128xf32> to vector<1x32x128xf32>
    %110 = vector.broadcast %109 : vector<1x32x128xf32> to vector<2x32x128xf32>
    %111 = vector.broadcast %99 : vector<2x1x128xf32> to vector<2x32x128xf32>
    %112 = arith.mulf %110, %111 : vector<2x32x128xf32>
    %113 = vector.shape_cast %30 : vector<32x128xf32> to vector<1x32x128xf32>
    %114 = vector.broadcast %113 : vector<1x32x128xf32> to vector<2x32x128xf32>
    %115 = vector.broadcast %104 : vector<2x1x128xf32> to vector<2x32x128xf32>
    %116 = arith.mulf %114, %115 : vector<2x32x128xf32>
    %117 = arith.addf %112, %116 : vector<2x32x128xf32>
    %118 = vector.shape_cast %38 : vector<32x128xf32> to vector<1x32x128xf32>
    %119 = vector.broadcast %118 : vector<1x32x128xf32> to vector<2x32x128xf32>
    %120 = vector.broadcast %100 : vector<2x1x128xf32> to vector<2x32x128xf32>
    %121 = arith.mulf %119, %120 : vector<2x32x128xf32>
    %122 = vector.shape_cast %43 : vector<32x128xf32> to vector<1x32x128xf32>
    %123 = vector.broadcast %122 : vector<1x32x128xf32> to vector<2x32x128xf32>
    %124 = vector.broadcast %108 : vector<2x1x128xf32> to vector<2x32x128xf32>
    %125 = arith.mulf %123, %124 : vector<2x32x128xf32>
    %126 = arith.subf %121, %125 : vector<2x32x128xf32>
    "tpu.trace_start"() <{level = 10 : i32, message = "btm,bmd->btd"}> : () -> ()
    %cst_33 = arith.constant dense<0.000000e+00> : vector<2x32x128xf32>
    %127 = tpu.matmul %17, %98, %cst_33 {dimension_numbers = #tpu.dot_dimension_numbers<[2], [1], [1], [2], [0, 0, 0, 1, 1, 2], [0], [0]>, precision = #tpu.contract_precision<fp32>} : vector<2x32x32xf32>, vector<2x32x128xf32>, vector<2x32x128xf32> -> vector<2x32x128xf32>
    "tpu.trace_stop"() : () -> ()
    %128 = arith.addf %117, %127 : vector<2x32x128xf32>
    %129 = arith.addf %128, %126 : vector<2x32x128xf32>
    %cst_34 = arith.constant 4.000000e-02 : f32
    %130 = vector.broadcast %cst_34 : f32 to vector<2x32x128xf32>
    %131 = arith.mulf %129, %130 : vector<2x32x128xf32>
    %132 = arith.subf %98, %131 : vector<2x32x128xf32>
    %c0_35 = arith.constant 0 : index
    %c0_36 = arith.constant 0 : index
    %c0_37 = arith.constant 0 : index
    %133 = vector.load %arg4[%c0_35, %c0_36, %c0_37] : memref<2x32x128xf32, #tpu.memory_space<vmem>>, vector<2x32x128xf32>
    tpu.vector_store %arg4[%c0_35, %c0_36, %c0_37], %132 {strides = array<i32>} : memref<2x32x128xf32, #tpu.memory_space<vmem>>, vector<2x32x128xf32>,
    %c0_38 = arith.constant 0 : index
    %c0_39 = arith.constant 0 : index
    %c0_40 = arith.constant 0 : index
    %134 = vector.load %arg5[%c0_38, %c0_39, %c0_40] : memref<2x32x32xf32, #tpu.memory_space<vmem>>, vector<2x32x32xf32>
    tpu.vector_store %arg5[%c0_38, %c0_39, %c0_40], %55 {strides = array<i32>} : memref<2x32x32xf32, #tpu.memory_space<vmem>>, vector<2x32x32xf32>,
    return
  }
  func.func @transform_0(%arg0: i32) -> (i32, i32, i32) {
    %c0_i32 = arith.constant 0 : i32
    %c0_i32_0 = arith.constant 0 : i32
    %c0_i32_1 = arith.constant 0 : i32
    return %arg0, %c0_i32, %c0_i32_0 : i32, i32, i32
  }
  func.func @transform_1(%arg0: i32) -> (i32, i32) {
    %c0_i32 = arith.constant 0 : i32
    %c0_i32_0 = arith.constant 0 : i32
    %c0_i32_1 = arith.constant 0 : i32
    return %c0_i32, %c0_i32_0 : i32, i32
  }
  func.func @transform_2(%arg0: i32) -> (i32, i32) {
    %c0_i32 = arith.constant 0 : i32
    %c0_i32_0 = arith.constant 0 : i32
    %c0_i32_1 = arith.constant 0 : i32
    return %c0_i32, %c0_i32_0 : i32, i32
  }
  func.func @transform_3(%arg0: i32) -> (i32, i32, i32) {
    %c0_i32 = arith.constant 0 : i32
    %c0_i32_0 = arith.constant 0 : i32
    %c0_i32_1 = arith.constant 0 : i32
    return %arg0, %c0_i32, %c0_i32_0 : i32, i32, i32
  }
  func.func @transform_4(%arg0: i32) -> (i32, i32, i32) {
    %c0_i32 = arith.constant 0 : i32
    %c0_i32_0 = arith.constant 0 : i32
    %c0_i32_1 = arith.constant 0 : i32
    return %arg0, %c0_i32, %c0_i32_0 : i32, i32, i32
  }
}

</mosaic_0001>

<llo_original>
// kernel: tpu_custom_call.1
$region0: #{tpu_custom_call.1}
  #allocation0 [shape = 'u32[]', space=smem, size = 0x4, offset = 0x4, fixed_abs, tag = 'smem constant byte address 0x4 - core index']
  #allocation1 [shape = 'u32[144,128]{1,0:T(1,128)}', space=vmem, size = 0x12000, scoped, tag = 'internal scratch']
  %s0 = inlined_call_operand.hbm [shape: f32[2,32,128], index: 0, kind: input, shape index: {}]
  %s1 = inlined_call_operand.hbm [shape: f32[128,512], index: 1, kind: input, shape index: {}]
  %s2 = inlined_call_operand.hbm [shape: f32[512,128], index: 2, kind: input, shape index: {}]
  %s3 = inlined_call_operand.hbm [shape: f32[2,32,128], index: 3, kind: output, shape index: {0}]
  %s4 = inlined_call_operand.hbm [shape: f32[2,32,32], index: 4, kind: output, shape index: {1}]
  %5 = xla_tuple %s3, %s4
  %s6 = sld [smem:[#allocation0]]
  $region42: #{tpu_custom_call.1} parent=0
    _
  %s8 = ssub.s32 1, %s6
  %s9 = scalar_select 0, %s8, %s6
  $region1: #{tpu_custom_call.1} parent=0
    #allocation2 [shape = 'u8[32768]{0}', space=vmem, size = 0x8000, scoped, tag = 'input window, operand 0, single buffered']
    #allocation3 [shape = 's32[1]{0}', space=sflag, size = 0x4, scoped, tag = 'scoped memory for tpu_custom_call.1']
    #allocation4 [shape = 's32[1]{0}', space=sflag, size = 0x4, scoped, tag = 'scoped memory for tpu_custom_call.1']
    #allocation5 [shape = 'u8[262144]{0}', space=vmem, size = 0x40000, scoped, tag = 'input window, operand 1, single buffered']
    #allocation6 [shape = 's32[1]{0}', space=sflag, size = 0x4, scoped, tag = 'scoped memory for tpu_custom_call.1']
    #allocation7 [shape = 'u8[262144]{0}', space=vmem, size = 0x40000, scoped, tag = 'input window, operand 2, single buffered']
    #allocation8 [shape = 'u8[32768]{0}', space=vmem, size = 0x8000, scoped, tag = 'output window, operand 0, single buffered']
    #allocation9 [shape = 'u8[32768]{0}', space=vmem, size = 0x8000, scoped, tag = 'output window, operand 1, single buffered']
    #allocation10 [shape = 's32[1]{0}', space=sflag, size = 0x4, scoped, tag = 'scoped memory for tpu_custom_call.1']
    %10 = vsyncpa [#allocation3], 0
    %11 = vsyncpa [#allocation6], 0
    %12 = vsyncpa [#allocation4], 0
    %13 = vsyncpa [#allocation10], 0
    // Predicated region
    $region2: #{tpu_custom_call.1} parent=1 // pred_check
      _
    $region3: #{tpu_custom_call.1} parent=1 // pred_check_branch
      %15 = sbr.rel (0) target = $region5
    $region4: #{tpu_custom_call.1} parent=1 // pred_region
      %s17 = ssub.s32 1024, 1024
      %18 = vsyncadd [#allocation3], %s17
      %s19 = sshll.u32 [#allocation2], 4
      %s20 = int_to_ptr.vmem [resolvable:$true] %s19
      %25 = dma.hbm_to_vmem [thread:$0]  %s0, 1024, %s20, [#allocation3], 128, 128, 8
    $region5: #{tpu_custom_call.1} parent=1 // pred_fallthru
      _
    // Predicated region
    $region6: #{tpu_custom_call.1} parent=1 // pred_check
      _
    $region7: #{tpu_custom_call.1} parent=1 // pred_check_branch
      %27 = sbr.rel (0) target = $region9
    $region8: #{tpu_custom_call.1} parent=1 // pred_region
      %s29 = ssub.s32 8192, 8192
      %30 = vsyncadd [#allocation6], %s29
      %s31 = sshll.u32 [#allocation5], 4
      %s32 = int_to_ptr.vmem [resolvable:$true] %s31
      %37 = dma.hbm_to_vmem [thread:$0]  %s1, 8192, %s32, [#allocation6], 512, 512, 32
    $region9: #{tpu_custom_call.1} parent=1 // pred_fallthru
      _
    // Predicated region
    $region10: #{tpu_custom_call.1} parent=1 // pred_check
      _
    $region11: #{tpu_custom_call.1} parent=1 // pred_check_branch
      %39 = sbr.rel (0) target = $region13
    $region12: #{tpu_custom_call.1} parent=1 // pred_region
      %s41 = ssub.s32 8192, 8192
      %42 = vsyncadd [#allocation6], %s41
      %s43 = sshll.u32 [#allocation7], 4
      %s44 = int_to_ptr.vmem [resolvable:$true] %s43
      %49 = dma.hbm_to_vmem [thread:$0]  %s2, 8192, %s44, [#allocation6], 128, 128, 8
    $region13: #{tpu_custom_call.1} parent=1 // pred_fallthru
      _
    // Predicated region
    $region14: #{tpu_custom_call.1} parent=1 // pred_check
      _
    $region15: #{tpu_custom_call.1} parent=1 // pred_check_branch
      %51 = sbr.rel (0) target = $region17
    $region16: #{tpu_custom_call.1} parent=1 // pred_region
      %52 = dma.done [#allocation3], 1024
    $region17: #{tpu_custom_call.1} parent=1 // pred_fallthru
      _
    // Predicated region
    $region18: #{tpu_custom_call.1} parent=1 // pred_check
      _
    $region19: #{tpu_custom_call.1} parent=1 // pred_check_branch
      %54 = sbr.rel (0) target = $region21
    $region20: #{tpu_custom_call.1} parent=1 // pred_region
      %55 = dma.done [#allocation6], 8192
    $region21: #{tpu_custom_call.1} parent=1 // pred_fallthru
      _
    // Predicated region
    $region22: #{tpu_custom_call.1} parent=1 // pred_check
      _
    $region23: #{tpu_custom_call.1} parent=1 // pred_check_branch
      %57 = sbr.rel (0) target = $region25
    $region24: #{tpu_custom_call.1} parent=1 // pred_region
      %58 = dma.done [#allocation6], 8192
    $region25: #{tpu_custom_call.1} parent=1 // pred_fallthru
      _
    %v59 = vld [vmem:[#allocation2] sm:$0xff]
    %v60 = vld [vmem:[#allocation2 + $0x8] sm:$0xff]
    %v61 = vld [vmem:[#allocation2 + $0x10] sm:$0xff]
    %v62 = vld [vmem:[#allocation2 + $0x18] sm:$0xff]
    %v63 = vld [vmem:[#allocation2 + $0x20] sm:$0xff]
    %v64 = vld [vmem:[#allocation2 + $0x28] sm:$0xff]
    %v65 = vld [vmem:[#allocation2 + $0x30] sm:$0xff]
    %v66 = vld [vmem:[#allocation2 + $0x38] sm:$0xff]
    %v67 = vld [vmem:[#allocation5] sm:$0xff]
    %v68 = vld [vmem:[#allocation5 + $0x8] sm:$0xff]
    %v69 = vld [vmem:[#allocation5 + $0x10] sm:$0xff]
    %v70 = vld [vmem:[#allocation5 + $0x18] sm:$0xff]
    %v71 = vld [vmem:[#allocation5 + $0x20] sm:$0xff]
    %v72 = vld [vmem:[#allocation5 + $0x28] sm:$0xff]
    %v73 = vld [vmem:[#allocation5 + $0x30] sm:$0xff]
    %v74 = vld [vmem:[#allocation5 + $0x38] sm:$0xff]
    %v75 = vld [vmem:[#allocation5 + $0x40] sm:$0xff]
    %v76 = vld [vmem:[#allocation5 + $0x48] sm:$0xff]
    %v77 = vld [vmem:[#allocation5 + $0x50] sm:$0xff]
    %v78 = vld [vmem:[#allocation5 + $0x58] sm:$0xff]
    %v79 = vld [vmem:[#allocation5 + $0x60] sm:$0xff]
    %v80 = vld [vmem:[#allocation5 + $0x68] sm:$0xff]
    %v81 = vld [vmem:[#allocation5 + $0x70] sm:$0xff]
    %v82 = vld [vmem:[#allocation5 + $0x78] sm:$0xff]
    %v83 = vld [vmem:[#allocation5 + $0x80] sm:$0xff]
    %v84 = vld [vmem:[#allocation5 + $0x88] sm:$0xff]
    %v85 = vld [vmem:[#allocation5 + $0x90] sm:$0xff]
    %v86 = vld [vmem:[#allocation5 + $0x98] sm:$0xff]
    %v87 = vld [vmem:[#allocation5 + $0xa0] sm:$0xff]
    %v88 = vld [vmem:[#allocation5 + $0xa8] sm:$0xff]
    %v89 = vld [vmem:[#allocation5 + $0xb0] sm:$0xff]
    %v90 = vld [vmem:[#allocation5 + $0xb8] sm:$0xff]
    %v91 = vld [vmem:[#allocation5 + $0xc0] sm:$0xff]
    %v92 = vld [vmem:[#allocation5 + $0xc8] sm:$0xff]
    %v93 = vld [vmem:[#allocation5 + $0xd0] sm:$0xff]
    %v94 = vld [vmem:[#allocation5 + $0xd8] sm:$0xff]
    %v95 = vld [vmem:[#allocation5 + $0xe0] sm:$0xff]
    %v96 = vld [vmem:[#allocation5 + $0xe8] sm:$0xff]
    %v97 = vld [vmem:[#allocation5 + $0xf0] sm:$0xff]
    %v98 = vld [vmem:[#allocation5 + $0xf8] sm:$0xff]
    %v99 = vld [vmem:[#allocation5 + $0x100] sm:$0xff]
    %v100 = vld [vmem:[#allocation5 + $0x108] sm:$0xff]
    %v101 = vld [vmem:[#allocation5 + $0x110] sm:$0xff]
    %v102 = vld [vmem:[#allocation5 + $0x118] sm:$0xff]
    %v103 = vld [vmem:[#allocation5 + $0x120] sm:$0xff]
    %v104 = vld [vmem:[#allocation5 + $0x128] sm:$0xff]
    %v105 = vld [vmem:[#allocation5 + $0x130] sm:$0xff]
    %v106 = vld [vmem:[#allocation5 + $0x138] sm:$0xff]
    %v107 = vld [vmem:[#allocation5 + $0x140] sm:$0xff]
    %v108 = vld [vmem:[#allocation5 + $0x148] sm:$0xff]
    %v109 = vld [vmem:[#allocation5 + $0x150] sm:$0xff]
    %v110 = vld [vmem:[#allocation5 + $0x158] sm:$0xff]
    %v111 = vld [vmem:[#allocation5 + $0x160] sm:$0xff]
    %v112 = vld [vmem:[#allocation5 + $0x168] sm:$0xff]
    %v113 = vld [vmem:[#allocation5 + $0x170] sm:$0xff]
    %v114 = vld [vmem:[#allocation5 + $0x178] sm:$0xff]
    %v115 = vld [vmem:[#allocation5 + $0x180] sm:$0xff]
    %v116 = vld [vmem:[#allocation5 + $0x188] sm:$0xff]
    %v117 = vld [vmem:[#allocation5 + $0x190] sm:$0xff]
    %v118 = vld [vmem:[#allocation5 + $0x198] sm:$0xff]
    %v119 = vld [vmem:[#allocation5 + $0x1a0] sm:$0xff]
    %v120 = vld [vmem:[#allocation5 + $0x1a8] sm:$0xff]
    %v121 = vld [vmem:[#allocation5 + $0x1b0] sm:$0xff]
    %v122 = vld [vmem:[#allocation5 + $0x1b8] sm:$0xff]
    %v123 = vld [vmem:[#allocation5 + $0x1c0] sm:$0xff]
    %v124 = vld [vmem:[#allocation5 + $0x1c8] sm:$0xff]
    %v125 = vld [vmem:[#allocation5 + $0x1d0] sm:$0xff]
    %v126 = vld [vmem:[#allocation5 + $0x1d8] sm:$0xff]
    %v127 = vld [vmem:[#allocation5 + $0x1e0] sm:$0xff]
    %v128 = vld [vmem:[#allocation5 + $0x1e8] sm:$0xff]
    %v129 = vld [vmem:[#allocation5 + $0x1f0] sm:$0xff]
    %v130 = vld [vmem:[#allocation5 + $0x1f8] sm:$0xff]
    %v131 = vld [vmem:[#allocation7] sm:$0xff]
    %v132 = vld [vmem:[#allocation7 + $0x8] sm:$0xff]
    %v133 = vld [vmem:[#allocation7 + $0x10] sm:$0xff]
    %v134 = vld [vmem:[#allocation7 + $0x18] sm:$0xff]
    %v135 = vld [vmem:[#allocation7 + $0x20] sm:$0xff]
    %v136 = vld [vmem:[#allocation7 + $0x28] sm:$0xff]
    %v137 = vld [vmem:[#allocation7 + $0x30] sm:$0xff]
    %v138 = vld [vmem:[#allocation7 + $0x38] sm:$0xff]
    %v139 = vld [vmem:[#allocation7 + $0x40] sm:$0xff]
    %v140 = vld [vmem:[#allocation7 + $0x48] sm:$0xff]
    %v141 = vld [vmem:[#allocation7 + $0x50] sm:$0xff]
    %v142 = vld [vmem:[#allocation7 + $0x58] sm:$0xff]
    %v143 = vld [vmem:[#allocation7 + $0x60] sm:$0xff]
    %v144 = vld [vmem:[#allocation7 + $0x68] sm:$0xff]
    %v145 = vld [vmem:[#allocation7 + $0x70] sm:$0xff]
    %v146 = vld [vmem:[#allocation7 + $0x78] sm:$0xff]
    %v147 = vld [vmem:[#allocation7 + $0x80] sm:$0xff]
    %v148 = vld [vmem:[#allocation7 + $0x88] sm:$0xff]
    %v149 = vld [vmem:[#allocation7 + $0x90] sm:$0xff]
    %v150 = vld [vmem:[#allocation7 + $0x98] sm:$0xff]
    %v151 = vld [vmem:[#allocation7 + $0xa0] sm:$0xff]
    %v152 = vld [vmem:[#allocation7 + $0xa8] sm:$0xff]
    %v153 = vld [vmem:[#allocation7 + $0xb0] sm:$0xff]
    %v154 = vld [vmem:[#allocation7 + $0xb8] sm:$0xff]
    %v155 = vld [vmem:[#allocation7 + $0xc0] sm:$0xff]
    %v156 = vld [vmem:[#allocation7 + $0xc8] sm:$0xff]
    %v157 = vld [vmem:[#allocation7 + $0xd0] sm:$0xff]
    %v158 = vld [vmem:[#allocation7 + $0xd8] sm:$0xff]
    %v159 = vld [vmem:[#allocation7 + $0xe0] sm:$0xff]
    %v160 = vld [vmem:[#allocation7 + $0xe8] sm:$0xff]
    %v161 = vld [vmem:[#allocation7 + $0xf0] sm:$0xff]
    %v162 = vld [vmem:[#allocation7 + $0xf8] sm:$0xff]
    %v163 = vld [vmem:[#allocation7 + $0x100] sm:$0xff]
    %v164 = vld [vmem:[#allocation7 + $0x108] sm:$0xff]
    %v165 = vld [vmem:[#allocation7 + $0x110] sm:$0xff]
    %v166 = vld [vmem:[#allocation7 + $0x118] sm:$0xff]
    %v167 = vld [vmem:[#allocation7 + $0x120] sm:$0xff]
    %v168 = vld [vmem:[#allocation7 + $0x128] sm:$0xff]
    %v169 = vld [vmem:[#allocation7 + $0x130] sm:$0xff]
    %v170 = vld [vmem:[#allocation7 + $0x138] sm:$0xff]
    %v171 = vld [vmem:[#allocation7 + $0x140] sm:$0xff]
    %v172 = vld [vmem:[#allocation7 + $0x148] sm:$0xff]
    %v173 = vld [vmem:[#allocation7 + $0x150] sm:$0xff]
    %v174 = vld [vmem:[#allocation7 + $0x158] sm:$0xff]
    %v175 = vld [vmem:[#allocation7 + $0x160] sm:$0xff]
    %v176 = vld [vmem:[#allocation7 + $0x168] sm:$0xff]
    %v177 = vld [vmem:[#allocation7 + $0x170] sm:$0xff]
    %v178 = vld [vmem:[#allocation7 + $0x178] sm:$0xff]
    %v179 = vld [vmem:[#allocation7 + $0x180] sm:$0xff]
    %v180 = vld [vmem:[#allocation7 + $0x188] sm:$0xff]
    %v181 = vld [vmem:[#allocation7 + $0x190] sm:$0xff]
    %v182 = vld [vmem:[#allocation7 + $0x198] sm:$0xff]
    %v183 = vld [vmem:[#allocation7 + $0x1a0] sm:$0xff]
    %v184 = vld [vmem:[#allocation7 + $0x1a8] sm:$0xff]
    %v185 = vld [vmem:[#allocation7 + $0x1b0] sm:$0xff]
    %v186 = vld [vmem:[#allocation7 + $0x1b8] sm:$0xff]
    %v187 = vld [vmem:[#allocation7 + $0x1c0] sm:$0xff]
    %v188 = vld [vmem:[#allocation7 + $0x1c8] sm:$0xff]
    %v189 = vld [vmem:[#allocation7 + $0x1d0] sm:$0xff]
    %v190 = vld [vmem:[#allocation7 + $0x1d8] sm:$0xff]
    %v191 = vld [vmem:[#allocation7 + $0x1e0] sm:$0xff]
    %v192 = vld [vmem:[#allocation7 + $0x1e8] sm:$0xff]
    %v193 = vld [vmem:[#allocation7 + $0x1f0] sm:$0xff]
    %v194 = vld [vmem:[#allocation7 + $0x1f8] sm:$0xff]
    %v195 = vlaneseq
    %v196 = vshrl.u32 %v195, 7
    %v197 = vadd.s32 %v196, 8
    %v198 = vadd.s32 %v196, 16
    %v199 = vadd.s32 %v196, 24
    %v200 = vlaneseq
    %v201 = vand.u32 %v200, 127
    %v202 = vsub.s32 %v196, 12
    %v203 = vsub.s32 %v197, 12
    %v204 = vsub.s32 %v198, 12
    %v205 = vsub.s32 %v199, 12
    %vm206 = vcmp.ge.s32.totalorder %v201, %v202
    %vm207 = vcmp.ge.s32.totalorder %v201, %v203
    %vm208 = vcmp.ge.s32.totalorder %v201, %v204
    %vm209 = vcmp.ge.s32.totalorder %v201, %v205
    %v210 = vadd.s32 %v196, 12
    %v211 = vadd.s32 %v197, 12
    %v212 = vadd.s32 %v198, 12
    %v213 = vadd.s32 %v199, 12
    %vm214 = vcmp.le.s32.totalorder %v201, %v210
    %vm215 = vcmp.le.s32.totalorder %v201, %v211
    %vm216 = vcmp.le.s32.totalorder %v201, %v212
    %vm217 = vcmp.le.s32.totalorder %v201, %v213
    %vm218 = vmand %vm206, %vm214
    %vm219 = vmand %vm207, %vm215
    %vm220 = vmand %vm208, %vm216
    %vm221 = vmand %vm209, %vm217
    %v222 = vsel %vm218, 1.0, 0.0
    %v223 = vsel %vm219, 1.0, 0.0
    %v224 = vsel %vm220, 1.0, 0.0
    %v225 = vsel %vm221, 1.0, 0.0
    %v226 = vcvt.s32.f32 %v196
    %v227 = vcvt.s32.f32 %v197
    %v228 = vcvt.s32.f32 %v198
    %v229 = vcvt.s32.f32 %v199
    %v230 = vmin.f32 %v226, 12.0
    %v231 = vmin.f32 %v227, 12.0
    %v232 = vmin.f32 %v228, 12.0
    %v233 = vmin.f32 %v229, 12.0
    %v234 = vsub.f32 12.0, %v230
    %v235 = vsub.f32 12.0, %v231
    %v236 = vsub.f32 12.0, %v232
    %v237 = vsub.f32 12.0, %v233
    %v238 = vadd.f32 %v230, 1.0
    %v239 = vadd.f32 %v231, 1.0
    %v240 = vadd.f32 %v232, 1.0
    %v241 = vadd.f32 %v233, 1.0
    %v242 = vmul.f32 %v230, %v238
    %v243 = vmul.f32 %v231, %v239
    %v244 = vmul.f32 %v232, %v240
    %v245 = vmul.f32 %v233, %v241
    %v246 = vsub.f32 156.0, %v242
    %v247 = vsub.f32 156.0, %v243
    %v248 = vsub.f32 156.0, %v244
    %v249 = vsub.f32 156.0, %v245
    %v250 = vmul.f32 %v246, 0.5
    %v251 = vmul.f32 %v247, 0.5
    %v252 = vmul.f32 %v248, 0.5
    %v253 = vmul.f32 %v249, 0.5
    %v254 = vadd.f32 %v226, 12.0
    %v255 = vadd.f32 %v227, 12.0
    %v256 = vadd.f32 %v228, 12.0
    %v257 = vadd.f32 %v229, 12.0
    %v258 = vsub.f32 %v254, 32.0
    %v259 = vsub.f32 %v255, 32.0
    %v260 = vsub.f32 %v256, 32.0
    %v261 = vsub.f32 %v257, 32.0
    %v262 = vadd.f32 %v258, 1.0
    %v263 = vadd.f32 %v259, 1.0
    %v264 = vadd.f32 %v260, 1.0
    %v265 = vadd.f32 %v261, 1.0
    %v266 = vmax.f32 %v262, 0.0
    %v267 = vmax.f32 %v263, 0.0
    %v268 = vmax.f32 %v264, 0.0
    %v269 = vmax.f32 %v265, 0.0
    %v270 = vmul.f32 %v266, 0.5
    %v271 = vmul.f32 %v267, 0.5
    %v272 = vmul.f32 %v268, 0.5
    %v273 = vmul.f32 %v269, 0.5
    %v274 = vsub.f32 %v266, 1.0
    %v275 = vsub.f32 %v267, 1.0
    %v276 = vsub.f32 %v268, 1.0
    %v277 = vsub.f32 %v269, 1.0
    %v278 = vmul.f32 %v270, %v274
    %v279 = vmul.f32 %v271, %v275
    %v280 = vmul.f32 %v272, %v276
    %v281 = vmul.f32 %v273, %v277
    %282 = vmatprep.subr.mxu0 0.0
    %v283 = vand.u32 %v59, 4294901760
    %284 = vmatpush1.xpose.msra.mxu0 %v283
    %285 = vmatprep.subr.mxu0 0.0
    %v286 = vand.u32 %v60, 4294901760
    %287 = vmatpush1.xpose.msra.mxu0 %v286
    %288 = vmatprep.subr.mxu0 0.0
    %v289 = vand.u32 %v61, 4294901760
    %290 = vmatpush1.xpose.msra.mxu0 %v289
    %291 = vmatprep.subr.mxu0 0.0
    %v292 = vand.u32 %v62, 4294901760
    %293 = vmatpush1.xpose.msra.mxu0 %v292
    %294 = vmatprep.subr.mxu0 0.0
    %295 = vmatpush1.xpose.msra.mxu0 0.0
    %296 = vmatprep.subr.mxu0 0.0
    %297 = vmatpush1.xpose.msra.mxu0 0.0
    %298 = vmatprep.subr.mxu0 0.0
    %299 = vmatpush1.xpose.msra.mxu0 0.0
    %300 = vmatprep.subr.mxu0 0.0
    %301 = vmatpush1.xpose.msra.mxu0 0.0
    %302 = vmatprep.subr.mxu0 0.0
    %303 = vmatpush1.xpose.msra.mxu0 0.0
    %304 = vmatprep.subr.mxu0 0.0
    %305 = vmatpush1.xpose.msra.mxu0 0.0
    %306 = vmatprep.subr.mxu0 0.0
    %307 = vmatpush1.xpose.msra.mxu0 0.0
    %308 = vmatprep.subr.mxu0 0.0
    %309 = vmatpush1.xpose.msra.mxu0 0.0
    %310 = vmatprep.subr.mxu0 0.0
    %311 = vmatpush1.xpose.msra.mxu0 0.0
    %312 = vmatprep.subr.mxu0 0.0
    %313 = vmatpush1.xpose.msra.mxu0 0.0
    %314 = vmatprep.subr.mxu0 0.0
    %315 = vmatpush1.xpose.msra.mxu0 0.0
    %316 = vmatprep.subr.mxu0 0.0
    %317 = vmatpush1.xpose.msra.mxu0 0.0
    %318 = vmatprep.subr.mxu0 0.0
    %319 = vmatpush1.xpose.msra.mxu0 0.0
    %320 = vmatprep.subr.mxu0 0.0
    %321 = vmatpush1.xpose.msra.mxu0 0.0
    %322 = vmatprep.subr.mxu0 0.0
    %323 = vmatpush1.xpose.msra.mxu0 0.0
    %324 = vmatprep.subr.mxu0 0.0
    %325 = vmatpush1.xpose.msra.mxu0 0.0
    %326 = vmatprep.subr.mxu0 0.0
    %327 = vmatpush1.xpose.msra.mxu0 0.0
    %328 = vmatprep.subr.mxu0 0.0
    %329 = vmatpush1.xpose.msra.mxu0 0.0
    %330 = vmatprep.subr.mxu0 0.0
    %331 = vmatpush1.xpose.msra.mxu0 0.0
    %332 = vmatprep.subr.mxu0 0.0
    %333 = vmatpush1.xpose.msra.mxu0 0.0
    %334 = vmatprep.subr.mxu0 0.0
    %335 = vmatpush1.xpose.msra.mxu0 0.0
    %336 = vmatprep.subr.mxu0 0.0
    %337 = vmatpush1.xpose.msra.mxu0 0.0
    %338 = vmatprep.subr.mxu0 0.0
    %339 = vmatpush1.xpose.msra.mxu0 0.0
    %340 = vmatprep.subr.mxu0 0.0
    %341 = vmatpush1.xpose.msra.mxu0 0.0
    %342 = vmatprep.subr.mxu0 0.0
    %343 = vmatpush1.xpose.msra.mxu0 0.0
    %344 = vmatprep.subr.mxu0 0.0
    %345 = vmatpush1.xpose.msra.mxu0 0.0
    %346 = vmatprep.subr.mxu0 0.0
    %347 = vmatpush1.xpose.msra.mxu0 0.0
    %348 = vmatprep.subr.mxu0 0.0
    %349 = vmatpush1.xpose.msra.mxu0 0.0
    %350 = vmatprep.mubr.f32.mxu0 0.0
    %v351 = vand.u32 %v59, 4294901760
    %v352 = vsub.f32 %v59, %v351
    %v353 = vand.u32 %v352, 4294901760
    %v354 = vsub.f32 %v352, %v353
    %v355 = vand.u32 %v354, 4294901760
    %356 = vmatmul.mubr.f32.gmra.mrb[0].mxu0 %v355
    %v357 = vpop.f32.mrb[0].mxu0
    %v358 = vadd.f32 0.0, %v357
    %v359 = vpop.f32.mrb[0].mxu0
    %360 = vmatprep.mubr.f32.mxu0 0.0
    %v361 = vand.u32 %v60, 4294901760
    %v362 = vsub.f32 %v60, %v361
    %v363 = vand.u32 %v362, 4294901760
    %v364 = vsub.f32 %v362, %v363
    %v365 = vand.u32 %v364, 4294901760
    %366 = vmatmul.mubr.f32.gmra.mrb[0].mxu0 %v365
    %v367 = vpop.f32.mrb[0].mxu0
    %v368 = vadd.f32 0.0, %v367
    %v369 = vpop.f32.mrb[0].mxu0
    %370 = vmatprep.mubr.f32.mxu0 0.0
    %v371 = vand.u32 %v61, 4294901760
    %v372 = vsub.f32 %v61, %v371
    %v373 = vand.u32 %v372, 4294901760
    %v374 = vsub.f32 %v372, %v373
    %v375 = vand.u32 %v374, 4294901760
    %376 = vmatmul.mubr.f32.gmra.mrb[0].mxu0 %v375
    %v377 = vpop.f32.mrb[0].mxu0
    %v378 = vadd.f32 0.0, %v377
    %v379 = vpop.f32.mrb[0].mxu0
    %380 = vmatprep.mubr.f32.mxu0 0.0
    %v381 = vand.u32 %v62, 4294901760
    %v382 = vsub.f32 %v62, %v381
    %v383 = vand.u32 %v382, 4294901760
    %v384 = vsub.f32 %v382, %v383
    %v385 = vand.u32 %v384, 4294901760
    %386 = vmatmul.mubr.f32.gmra.mrb[0].mxu0 %v385
    %v387 = vpop.f32.mrb[0].mxu0
    %v388 = vadd.f32 0.0, %v387
    %v389 = vpop.f32.mrb[0].mxu0
    %390 = vdwg.mxu0
    %391 = vmatprep.subr.mxu0 0.0
    %v392 = vand.u32 %v59, 4294901760
    %v393 = vsub.f32 %v59, %v392
    %v394 = vand.u32 %v393, 4294901760
    %v395 = vsub.f32 %v393, %v394
    %v396 = vand.u32 %v395, 4294901760
    %397 = vmatpush1.xpose.msra.mxu0 %v396
    %398 = vmatprep.subr.mxu0 0.0
    %v399 = vand.u32 %v60, 4294901760
    %v400 = vsub.f32 %v60, %v399
    %v401 = vand.u32 %v400, 4294901760
    %v402 = vsub.f32 %v400, %v401
    %v403 = vand.u32 %v402, 4294901760
    %404 = vmatpush1.xpose.msra.mxu0 %v403
    %405 = vmatprep.subr.mxu0 0.0
    %v406 = vand.u32 %v61, 4294901760
    %v407 = vsub.f32 %v61, %v406
    %v408 = vand.u32 %v407, 4294901760
    %v409 = vsub.f32 %v407, %v408
    %v410 = vand.u32 %v409, 4294901760
    %411 = vmatpush1.xpose.msra.mxu0 %v410
    %412 = vmatprep.subr.mxu0 0.0
    %v413 = vand.u32 %v62, 4294901760
    %v414 = vsub.f32 %v62, %v413
    %v415 = vand.u32 %v414, 4294901760
    %v416 = vsub.f32 %v414, %v415
    %v417 = vand.u32 %v416, 4294901760
    %418 = vmatpush1.xpose.msra.mxu0 %v417
    %419 = vmatprep.subr.mxu0 0.0
    %420 = vmatpush1.xpose.msra.mxu0 0.0
    %421 = vmatprep.subr.mxu0 0.0
    %422 = vmatpush1.xpose.msra.mxu0 0.0
    %423 = vmatprep.subr.mxu0 0.0
    %424 = vmatpush1.xpose.msra.mxu0 0.0
    %425 = vmatprep.subr.mxu0 0.0
    %426 = vmatpush1.xpose.msra.mxu0 0.0
    %427 = vmatprep.subr.mxu0 0.0
    %428 = vmatpush1.xpose.msra.mxu0 0.0
    %429 = vmatprep.subr.mxu0 0.0
    %430 = vmatpush1.xpose.msra.mxu0 0.0
    %431 = vmatprep.subr.mxu0 0.0
    %432 = vmatpush1.xpose.msra.mxu0 0.0
    %433 = vmatprep.subr.mxu0 0.0
    %434 = vmatpush1.xpose.msra.mxu0 0.0
    %435 = vmatprep.subr.mxu0 0.0
    %436 = vmatpush1.xpose.msra.mxu0 0.0
    %437 = vmatprep.subr.mxu0 0.0
    %438 = vmatpush1.xpose.msra.mxu0 0.0
    %439 = vmatprep.subr.mxu0 0.0
    %440 = vmatpush1.xpose.msra.mxu0 0.0
    %441 = vmatprep.subr.mxu0 0.0
    %442 = vmatpush1.xpose.msra.mxu0 0.0
    %443 = vmatprep.subr.mxu0 0.0
    %444 = vmatpush1.xpose.msra.mxu0 0.0
    %445 = vmatprep.subr.mxu0 0.0
    %446 = vmatpush1.xpose.msra.mxu0 0.0
    %447 = vmatprep.subr.mxu0 0.0
    %448 = vmatpush1.xpose.msra.mxu0 0.0
    %449 = vmatprep.subr.mxu0 0.0
    %450 = vmatpush1.xpose.msra.mxu0 0.0
    %451 = vmatprep.subr.mxu0 0.0
    %452 = vmatpush1.xpose.msra.mxu0 0.0
    %453 = vmatprep.subr.mxu0 0.0
    %454 = vmatpush1.xpose.msra.mxu0 0.0
    %455 = vmatprep.subr.mxu0 0.0
    %456 = vmatpush1.xpose.msra.mxu0 0.0
    %457 = vmatprep.subr.mxu0 0.0
    %458 = vmatpush1.xpose.msra.mxu0 0.0
    %459 = vmatprep.subr.mxu0 0.0
    %460 = vmatpush1.xpose.msra.mxu0 0.0
    %461 = vmatprep.subr.mxu0 0.0
    %462 = vmatpush1.xpose.msra.mxu0 0.0
    %463 = vmatprep.subr.mxu0 0.0
    %464 = vmatpush1.xpose.msra.mxu0 0.0
    %465 = vmatprep.subr.mxu0 0.0
    %466 = vmatpush1.xpose.msra.mxu0 0.0
    %467 = vmatprep.subr.mxu0 0.0
    %468 = vmatpush1.xpose.msra.mxu0 0.0
    %469 = vmatprep.subr.mxu0 0.0
    %470 = vmatpush1.xpose.msra.mxu0 0.0
    %471 = vmatprep.subr.mxu0 0.0
    %472 = vmatpush1.xpose.msra.mxu0 0.0
    %473 = vmatprep.subr.mxu0 0.0
    %474 = vmatpush1.xpose.msra.mxu0 0.0
    %475 = vmatprep.mubr.f32.mxu0 0.0
    %v476 = vand.u32 %v59, 4294901760
    %477 = vmatmul.mubr.f32.gmra.mrb[0].mxu0 %v476
    %v478 = vpop.f32.mrb[0].mxu0
    %v479 = vadd.f32 %v358, %v478
    %v480 = vpop.f32.mrb[0].mxu0
    %481 = vmatprep.mubr.f32.mxu0 0.0
    %v482 = vand.u32 %v60, 4294901760
    %483 = vmatmul.mubr.f32.gmra.mrb[0].mxu0 %v482
    %v484 = vpop.f32.mrb[0].mxu0
    %v485 = vadd.f32 %v368, %v484
    %v486 = vpop.f32.mrb[0].mxu0
    %487 = vmatprep.mubr.f32.mxu0 0.0
    %v488 = vand.u32 %v61, 4294901760
    %489 = vmatmul.mubr.f32.gmra.mrb[0].mxu0 %v488
    %v490 = vpop.f32.mrb[0].mxu0
    %v491 = vadd.f32 %v378, %v490
    %v492 = vpop.f32.mrb[0].mxu0
    %493 = vmatprep.mubr.f32.mxu0 0.0
    %v494 = vand.u32 %v62, 4294901760
    %495 = vmatmul.mubr.f32.gmra.mrb[0].mxu0 %v494
    %v496 = vpop.f32.mrb[0].mxu0
    %v497 = vadd.f32 %v388, %v496
    %v498 = vpop.f32.mrb[0].mxu0
    %499 = vdwg.mxu0
    %500 = vmatprep.subr.mxu0 0.0
    %v501 = vand.u32 %v59, 4294901760
    %v502 = vsub.f32 %v59, %v501
    %503 = vmatpush1.xpose.msra.mxu0 %v502
    %504 = vmatprep.subr.mxu0 0.0
    %v505 = vand.u32 %v60, 4294901760
    %v506 = vsub.f32 %v60, %v505
    %507 = vmatpush1.xpose.msra.mxu0 %v506
    %508 = vmatprep.subr.mxu0 0.0
    %v509 = vand.u32 %v61, 4294901760
    %v510 = vsub.f32 %v61, %v509
    %511 = vmatpush1.xpose.msra.mxu0 %v510
    %512 = vmatprep.subr.mxu0 0.0
    %v513 = vand.u32 %v62, 4294901760
    %v514 = vsub.f32 %v62, %v513
    %515 = vmatpush1.xpose.msra.mxu0 %v514
    %516 = vmatprep.subr.mxu0 0.0
    %517 = vmatpush1.xpose.msra.mxu0 0.0
    %518 = vmatprep.subr.mxu0 0.0
    %519 = vmatpush1.xpose.msra.mxu0 0.0
    %520 = vmatprep.subr.mxu0 0.0
    %521 = vmatpush1.xpose.msra.mxu0 0.0
    %522 = vmatprep.subr.mxu0 0.0
    %523 = vmatpush1.xpose.msra.mxu0 0.0
    %524 = vmatprep.subr.mxu0 0.0
    %525 = vmatpush1.xpose.msra.mxu0 0.0
    %526 = vmatprep.subr.mxu0 0.0
    %527 = vmatpush1.xpose.msra.mxu0 0.0
    %528 = vmatprep.subr.mxu0 0.0
    %529 = vmatpush1.xpose.msra.mxu0 0.0
    %530 = vmatprep.subr.mxu0 0.0
    %531 = vmatpush1.xpose.msra.mxu0 0.0
    %532 = vmatprep.subr.mxu0 0.0
    %533 = vmatpush1.xpose.msra.mxu0 0.0
    %534 = vmatprep.subr.mxu0 0.0
    %535 = vmatpush1.xpose.msra.mxu0 0.0
    %536 = vmatprep.subr.mxu0 0.0
    %537 = vmatpush1.xpose.msra.mxu0 0.0
    %538 = vmatprep.subr.mxu0 0.0
    %539 = vmatpush1.xpose.msra.mxu0 0.0
    %540 = vmatprep.subr.mxu0 0.0
    %541 = vmatpush1.xpose.msra.mxu0 0.0
    %542 = vmatprep.subr.mxu0 0.0
    %543 = vmatpush1.xpose.msra.mxu0 0.0
    %544 = vmatprep.subr.mxu0 0.0
    %545 = vmatpush1.xpose.msra.mxu0 0.0
    %546 = vmatprep.subr.mxu0 0.0
    %547 = vmatpush1.xpose.msra.mxu0 0.0
    %548 = vmatprep.subr.mxu0 0.0
    %549 = vmatpush1.xpose.msra.mxu0 0.0
    %550 = vmatprep.subr.mxu0 0.0
    %551 = vmatpush1.xpose.msra.mxu0 0.0
    %552 = vmatprep.subr.mxu0 0.0
    %553 = vmatpush1.xpose.msra.mxu0 0.0
    %554 = vmatprep.subr.mxu0 0.0
    %555 = vmatpush1.xpose.msra.mxu0 0.0
    %556 = vmatprep.subr.mxu0 0.0
    %557 = vmatpush1.xpose.msra.mxu0 0.0
    %558 = vmatprep.subr.mxu0 0.0
    %559 = vmatpush1.xpose.msra.mxu0 0.0
    %560 = vmatprep.subr.mxu0 0.0
    %561 = vmatpush1.xpose.msra.mxu0 0.0
    %562 = vmatprep.subr.mxu0 0.0
    %563 = vmatpush1.xpose.msra.mxu0 0.0
    %564 = vmatprep.subr.mxu0 0.0
    %565 = vmatpush1.xpose.msra.mxu0 0.0
    %566 = vmatprep.subr.mxu0 0.0
    %567 = vmatpush1.xpose.msra.mxu0 0.0
    %568 = vmatprep.subr.mxu0 0.0
    %569 = vmatpush1.xpose.msra.mxu0 0.0
    %570 = vmatprep.subr.mxu0 0.0
    %571 = vmatpush1.xpose.msra.mxu0 0.0
    %572 = vmatprep.mubr.f32.mxu0 0.0
    %v573 = vand.u32 %v59, 4294901760
    %v574 = vsub.f32 %v59, %v573
    %575 = vmatmul.mubr.f32.gmra.mrb[0].mxu0 %v574
    %v576 = vpop.f32.mrb[0].mxu0
    %v577 = vadd.f32 %v479, %v576
    %v578 = vpop.f32.mrb[0].mxu0
    %579 = vmatprep.mubr.f32.mxu0 0.0
    %v580 = vand.u32 %v60, 4294901760
    %v581 = vsub.f32 %v60, %v580
    %582 = vmatmul.mubr.f32.gmra.mrb[0].mxu0 %v581
    %v583 = vpop.f32.mrb[0].mxu0
    %v584 = vadd.f32 %v485, %v583
    %v585 = vpop.f32.mrb[0].mxu0
    %586 = vmatprep.mubr.f32.mxu0 0.0
    %v587 = vand.u32 %v61, 4294901760
    %v588 = vsub.f32 %v61, %v587
    %589 = vmatmul.mubr.f32.gmra.mrb[0].mxu0 %v588
    %v590 = vpop.f32.mrb[0].mxu0
    %v591 = vadd.f32 %v491, %v590
    %v592 = vpop.f32.mrb[0].mxu0
    %593 = vmatprep.mubr.f32.mxu0 0.0
    %v594 = vand.u32 %v62, 4294901760
    %v595 = vsub.f32 %v62, %v594
    %596 = vmatmul.mubr.f32.gmra.mrb[0].mxu0 %v595
    %v597 = vpop.f32.mrb[0].mxu0
    %v598 = vadd.f32 %v497, %v597
    %v599 = vpop.f32.mrb[0].mxu0
    %600 = vdwg.mxu0
    %601 = vmatprep.subr.mxu0 0.0
    %v602 = vand.u32 %v59, 4294901760
    %603 = vmatpush1.xpose.msra.mxu0 %v602
    %604 = vmatprep.subr.mxu0 0.0
    %v605 = vand.u32 %v60, 4294901760
    %606 = vmatpush1.xpose.msra.mxu0 %v605
    %607 = vmatprep.subr.mxu0 0.0
    %v608 = vand.u32 %v61, 4294901760
    %609 = vmatpush1.xpose.msra.mxu0 %v608
    %610 = vmatprep.subr.mxu0 0.0
    %v611 = vand.u32 %v62, 4294901760
    %612 = vmatpush1.xpose.msra.mxu0 %v611
    %613 = vmatprep.subr.mxu0 0.0
    %614 = vmatpush1.xpose.msra.mxu0 0.0
    %615 = vmatprep.subr.mxu0 0.0
    %616 = vmatpush1.xpose.msra.mxu0 0.0
    %617 = vmatprep.subr.mxu0 0.0
    %618 = vmatpush1.xpose.msra.mxu0 0.0
    %619 = vmatprep.subr.mxu0 0.0
    %620 = vmatpush1.xpose.msra.mxu0 0.0
    %621 = vmatprep.subr.mxu0 0.0
    %622 = vmatpush1.xpose.msra.mxu0 0.0
    %623 = vmatprep.subr.mxu0 0.0
    %624 = vmatpush1.xpose.msra.mxu0 0.0
    %625 = vmatprep.subr.mxu0 0.0
    %626 = vmatpush1.xpose.msra.mxu0 0.0
    %627 = vmatprep.subr.mxu0 0.0
    %628 = vmatpush1.xpose.msra.mxu0 0.0
    %629 = vmatprep.subr.mxu0 0.0
    %630 = vmatpush1.xpose.msra.mxu0 0.0
    %631 = vmatprep.subr.mxu0 0.0
    %632 = vmatpush1.xpose.msra.mxu0 0.0
    %633 = vmatprep.subr.mxu0 0.0
    %634 = vmatpush1.xpose.msra.mxu0 0.0
    %635 = vmatprep.subr.mxu0 0.0
    %636 = vmatpush1.xpose.msra.mxu0 0.0
    %637 = vmatprep.subr.mxu0 0.0
    %638 = vmatpush1.xpose.msra.mxu0 0.0
    %639 = vmatprep.subr.mxu0 0.0
    %640 = vmatpush1.xpose.msra.mxu0 0.0
    %641 = vmatprep.subr.mxu0 0.0
    %642 = vmatpush1.xpose.msra.mxu0 0.0
    %643 = vmatprep.subr.mxu0 0.0
    %644 = vmatpush1.xpose.msra.mxu0 0.0
    %645 = vmatprep.subr.mxu0 0.0
    %646 = vmatpush1.xpose.msra.mxu0 0.0
    %647 = vmatprep.subr.mxu0 0.0
    %648 = vmatpush1.xpose.msra.mxu0 0.0
    %649 = vmatprep.subr.mxu0 0.0
    %650 = vmatpush1.xpose.msra.mxu0 0.0
    %651 = vmatprep.subr.mxu0 0.0
    %652 = vmatpush1.xpose.msra.mxu0 0.0
    %653 = vmatprep.subr.mxu0 0.0
    %654 = vmatpush1.xpose.msra.mxu0 0.0
    %655 = vmatprep.subr.mxu0 0.0
    %656 = vmatpush1.xpose.msra.mxu0 0.0
    %657 = vmatprep.subr.mxu0 0.0
    %658 = vmatpush1.xpose.msra.mxu0 0.0
    %659 = vmatprep.subr.mxu0 0.0
    %660 = vmatpush1.xpose.msra.mxu0 0.0
    %661 = vmatprep.subr.mxu0 0.0
    %662 = vmatpush1.xpose.msra.mxu0 0.0
    %663 = vmatprep.subr.mxu0 0.0
    %664 = vmatpush1.xpose.msra.mxu0 0.0
    %665 = vmatprep.subr.mxu0 0.0
    %666 = vmatpush1.xpose.msra.mxu0 0.0
    %667 = vmatprep.subr.mxu0 0.0
    %668 = vmatpush1.xpose.msra.mxu0 0.0
    %669 = vmatprep.mubr.f32.mxu0 0.0
    %v670 = vand.u32 %v59, 4294901760
    %v671 = vsub.f32 %v59, %v670
    %v672 = vand.u32 %v671, 4294901760
    %673 = vmatmul.mubr.f32.gmra.mrb[0].mxu0 %v672
    %v674 = vpop.f32.mrb[0].mxu0
    %v675 = vadd.f32 %v577, %v674
    %v676 = vpop.f32.mrb[0].mxu0
    %677 = vmatprep.mubr.f32.mxu0 0.0
    %v678 = vand.u32 %v60, 4294901760
    %v679 = vsub.f32 %v60, %v678
    %v680 = vand.u32 %v679, 4294901760
    %681 = vmatmul.mubr.f32.gmra.mrb[0].mxu0 %v680
    %v682 = vpop.f32.mrb[0].mxu0
    %v683 = vadd.f32 %v584, %v682
    %v684 = vpop.f32.mrb[0].mxu0
    %685 = vmatprep.mubr.f32.mxu0 0.0
    %v686 = vand.u32 %v61, 4294901760
    %v687 = vsub.f32 %v61, %v686
    %v688 = vand.u32 %v687, 4294901760
    %689 = vmatmul.mubr.f32.gmra.mrb[0].mxu0 %v688
    %v690 = vpop.f32.mrb[0].mxu0
    %v691 = vadd.f32 %v591, %v690
    %v692 = vpop.f32.mrb[0].mxu0
    %693 = vmatprep.mubr.f32.mxu0 0.0
    %v694 = vand.u32 %v62, 4294901760
    %v695 = vsub.f32 %v62, %v694
    %v696 = vand.u32 %v695, 4294901760
    %697 = vmatmul.mubr.f32.gmra.mrb[0].mxu0 %v696
    %v698 = vpop.f32.mrb[0].mxu0
    %v699 = vadd.f32 %v598, %v698
    %v700 = vpop.f32.mrb[0].mxu0
    %701 = vdwg.mxu0
    %702 = vmatprep.subr.mxu0 0.0
    %v703 = vand.u32 %v59, 4294901760
    %v704 = vsub.f32 %v59, %v703
    %v705 = vand.u32 %v704, 4294901760
    %706 = vmatpush1.xpose.msra.mxu0 %v705
    %707 = vmatprep.subr.mxu0 0.0
    %v708 = vand.u32 %v60, 4294901760
    %v709 = vsub.f32 %v60, %v708
    %v710 = vand.u32 %v709, 4294901760
    %711 = vmatpush1.xpose.msra.mxu0 %v710
    %712 = vmatprep.subr.mxu0 0.0
    %v713 = vand.u32 %v61, 4294901760
    %v714 = vsub.f32 %v61, %v713
    %v715 = vand.u32 %v714, 4294901760
    %716 = vmatpush1.xpose.msra.mxu0 %v715
    %717 = vmatprep.subr.mxu0 0.0
    %v718 = vand.u32 %v62, 4294901760
    %v719 = vsub.f32 %v62, %v718
    %v720 = vand.u32 %v719, 4294901760
    %721 = vmatpush1.xpose.msra.mxu0 %v720
    %722 = vmatprep.subr.mxu0 0.0
    %723 = vmatpush1.xpose.msra.mxu0 0.0
    %724 = vmatprep.subr.mxu0 0.0
    %725 = vmatpush1.xpose.msra.mxu0 0.0
    %726 = vmatprep.subr.mxu0 0.0
    %727 = vmatpush1.xpose.msra.mxu0 0.0
    %728 = vmatprep.subr.mxu0 0.0
    %729 = vmatpush1.xpose.msra.mxu0 0.0
    %730 = vmatprep.subr.mxu0 0.0
    %731 = vmatpush1.xpose.msra.mxu0 0.0
    %732 = vmatprep.subr.mxu0 0.0
    %733 = vmatpush1.xpose.msra.mxu0 0.0
    %734 = vmatprep.subr.mxu0 0.0
    %735 = vmatpush1.xpose.msra.mxu0 0.0
    %736 = vmatprep.subr.mxu0 0.0
    %737 = vmatpush1.xpose.msra.mxu0 0.0
    %738 = vmatprep.subr.mxu0 0.0
    %739 = vmatpush1.xpose.msra.mxu0 0.0
    %740 = vmatprep.subr.mxu0 0.0
    %741 = vmatpush1.xpose.msra.mxu0 0.0
    %742 = vmatprep.subr.mxu0 0.0
    %743 = vmatpush1.xpose.msra.mxu0 0.0
    %744 = vmatprep.subr.mxu0 0.0
    %745 = vmatpush1.xpose.msra.mxu0 0.0
    %746 = vmatprep.subr.mxu0 0.0
    %747 = vmatpush1.xpose.msra.mxu0 0.0
    %748 = vmatprep.subr.mxu0 0.0
    %749 = vmatpush1.xpose.msra.mxu0 0.0
    %750 = vmatprep.subr.mxu0 0.0
    %751 = vmatpush1.xpose.msra.mxu0 0.0
    %752 = vmatprep.subr.mxu0 0.0
    %753 = vmatpush1.xpose.msra.mxu0 0.0
    %754 = vmatprep.subr.mxu0 0.0
    %755 = vmatpush1.xpose.msra.mxu0 0.0
    %756 = vmatprep.subr.mxu0 0.0
    %757 = vmatpush1.xpose.msra.mxu0 0.0
    %758 = vmatprep.subr.mxu0 0.0
    %759 = vmatpush1.xpose.msra.mxu0 0.0
    %760 = vmatprep.subr.mxu0 0.0
    %761 = vmatpush1.xpose.msra.mxu0 0.0
    %762 = vmatprep.subr.mxu0 0.0
    %763 = vmatpush1.xpose.msra.mxu0 0.0
    %764 = vmatprep.subr.mxu0 0.0
    %765 = vmatpush1.xpose.msra.mxu0 0.0
    %766 = vmatprep.subr.mxu0 0.0
    %767 = vmatpush1.xpose.msra.mxu0 0.0
    %768 = vmatprep.subr.mxu0 0.0
    %769 = vmatpush1.xpose.msra.mxu0 0.0
    %770 = vmatprep.subr.mxu0 0.0
    %771 = vmatpush1.xpose.msra.mxu0 0.0
    %772 = vmatprep.subr.mxu0 0.0
    %773 = vmatpush1.xpose.msra.mxu0 0.0
    %774 = vmatprep.subr.mxu0 0.0
    %775 = vmatpush1.xpose.msra.mxu0 0.0
    %776 = vmatprep.subr.mxu0 0.0
    %777 = vmatpush1.xpose.msra.mxu0 0.0
    %778 = vmatprep.mubr.f32.mxu0 0.0
    %v779 = vand.u32 %v59, 4294901760
    %780 = vmatmul.mubr.f32.gmra.mrb[0].mxu0 %v779
    %v781 = vpop.f32.mrb[0].mxu0
    %v782 = vadd.f32 %v675, %v781
    %v783 = vpop.f32.mrb[0].mxu0
    %784 = vmatprep.mubr.f32.mxu0 0.0
    %v785 = vand.u32 %v60, 4294901760
    %786 = vmatmul.mubr.f32.gmra.mrb[0].mxu0 %v785
    %v787 = vpop.f32.mrb[0].mxu0
    %v788 = vadd.f32 %v683, %v787
    %v789 = vpop.f32.mrb[0].mxu0
    %790 = vmatprep.mubr.f32.mxu0 0.0
    %v791 = vand.u32 %v61, 4294901760
    %792 = vmatmul.mubr.f32.gmra.mrb[0].mxu0 %v791
    %v793 = vpop.f32.mrb[0].mxu0
    %v794 = vadd.f32 %v691, %v793
    %v795 = vpop.f32.mrb[0].mxu0
    %796 = vmatprep.mubr.f32.mxu0 0.0
    %v797 = vand.u32 %v62, 4294901760
    %798 = vmatmul.mubr.f32.gmra.mrb[0].mxu0 %v797
    %v799 = vpop.f32.mrb[0].mxu0
    %v800 = vadd.f32 %v699, %v799
    %v801 = vpop.f32.mrb[0].mxu0
    %802 = vdwg.mxu0
    %803 = vmatprep.subr.mxu0 0.0
    %v804 = vand.u32 %v59, 4294901760
    %805 = vmatpush1.xpose.msra.mxu0 %v804
    %806 = vmatprep.subr.mxu0 0.0
    %v807 = vand.u32 %v60, 4294901760
    %808 = vmatpush1.xpose.msra.mxu0 %v807
    %809 = vmatprep.subr.mxu0 0.0
    %v810 = vand.u32 %v61, 4294901760
    %811 = vmatpush1.xpose.msra.mxu0 %v810
    %812 = vmatprep.subr.mxu0 0.0
    %v813 = vand.u32 %v62, 4294901760
    %814 = vmatpush1.xpose.msra.mxu0 %v813
    %815 = vmatprep.subr.mxu0 0.0
    %816 = vmatpush1.xpose.msra.mxu0 0.0
    %817 = vmatprep.subr.mxu0 0.0
    %818 = vmatpush1.xpose.msra.mxu0 0.0
    %819 = vmatprep.subr.mxu0 0.0
    %820 = vmatpush1.xpose.msra.mxu0 0.0
    %821 = vmatprep.subr.mxu0 0.0
    %822 = vmatpush1.xpose.msra.mxu0 0.0
    %823 = vmatprep.subr.mxu0 0.0
    %824 = vmatpush1.xpose.msra.mxu0 0.0
    %825 = vmatprep.subr.mxu0 0.0
    %826 = vmatpush1.xpose.msra.mxu0 0.0
    %827 = vmatprep.subr.mxu0 0.0
    %828 = vmatpush1.xpose.msra.mxu0 0.0
    %829 = vmatprep.subr.mxu0 0.0
    %830 = vmatpush1.xpose.msra.mxu0 0.0
    %831 = vmatprep.subr.mxu0 0.0
    %832 = vmatpush1.xpose.msra.mxu0 0.0
    %833 = vmatprep.subr.mxu0 0.0
    %834 = vmatpush1.xpose.msra.mxu0 0.0
    %835 = vmatprep.subr.mxu0 0.0
    %836 = vmatpush1.xpose.msra.mxu0 0.0
    %837 = vmatprep.subr.mxu0 0.0
    %838 = vmatpush1.xpose.msra.mxu0 0.0
    %839 = vmatprep.subr.mxu0 0.0
    %840 = vmatpush1.xpose.msra.mxu0 0.0
    %841 = vmatprep.subr.mxu0 0.0
    %842 = vmatpush1.xpose.msra.mxu0 0.0
    %843 = vmatprep.subr.mxu0 0.0
    %844 = vmatpush1.xpose.msra.mxu0 0.0
    %845 = vmatprep.subr.mxu0 0.0
    %846 = vmatpush1.xpose.msra.mxu0 0.0
    %847 = vmatprep.subr.mxu0 0.0
    %848 = vmatpush1.xpose.msra.mxu0 0.0
    %849 = vmatprep.subr.mxu0 0.0
    %850 = vmatpush1.xpose.msra.mxu0 0.0
    %851 = vmatprep.subr.mxu0 0.0
    %852 = vmatpush1.xpose.msra.mxu0 0.0
    %853 = vmatprep.subr.mxu0 0.0
    %854 = vmatpush1.xpose.msra.mxu0 0.0
    %855 = vmatprep.subr.mxu0 0.0
    %856 = vmatpush1.xpose.msra.mxu0 0.0
    %857 = vmatprep.subr.mxu0 0.0
    %858 = vmatpush1.xpose.msra.mxu0 0.0
    %859 = vmatprep.subr.mxu0 0.0
    %860 = vmatpush1.xpose.msra.mxu0 0.0
    %861 = vmatprep.subr.mxu0 0.0
    %862 = vmatpush1.xpose.msra.mxu0 0.0
    %863 = vmatprep.subr.mxu0 0.0
    %864 = vmatpush1.xpose.msra.mxu0 0.0
    %865 = vmatprep.subr.mxu0 0.0
    %866 = vmatpush1.xpose.msra.mxu0 0.0
    %867 = vmatprep.subr.mxu0 0.0
    %868 = vmatpush1.xpose.msra.mxu0 0.0
    %869 = vmatprep.subr.mxu0 0.0
    %870 = vmatpush1.xpose.msra.mxu0 0.0
    %871 = vmatprep.mubr.f32.mxu0 0.0
    %v872 = vand.u32 %v59, 4294901760
    %873 = vmatmul.mubr.f32.gmra.mrb[0].mxu0 %v872
    %v874 = vpop.f32.mrb[0].mxu0
    %v875 = vadd.f32 %v782, %v874
    %v876 = vpop.f32.mrb[0].mxu0
    %877 = vmatprep.mubr.f32.mxu0 0.0
    %v878 = vand.u32 %v60, 4294901760
    %879 = vmatmul.mubr.f32.gmra.mrb[0].mxu0 %v878
    %v880 = vpop.f32.mrb[0].mxu0
    %v881 = vadd.f32 %v788, %v880
    %v882 = vpop.f32.mrb[0].mxu0
    %883 = vmatprep.mubr.f32.mxu0 0.0
    %v884 = vand.u32 %v61, 4294901760
    %885 = vmatmul.mubr.f32.gmra.mrb[0].mxu0 %v884
    %v886 = vpop.f32.mrb[0].mxu0
    %v887 = vadd.f32 %v794, %v886
    %v888 = vpop.f32.mrb[0].mxu0
    %889 = vmatprep.mubr.f32.mxu0 0.0
    %v890 = vand.u32 %v62, 4294901760
    %891 = vmatmul.mubr.f32.gmra.mrb[0].mxu0 %v890
    %v892 = vpop.f32.mrb[0].mxu0
    %v893 = vadd.f32 %v800, %v892
    %v894 = vpop.f32.mrb[0].mxu0
    %895 = vdwg.mxu0
    %896 = vmatprep.subr.mxu0 0.0
    %v897 = vand.u32 %v63, 4294901760
    %898 = vmatpush1.xpose.msra.mxu0 %v897
    %899 = vmatprep.subr.mxu0 0.0
    %v900 = vand.u32 %v64, 4294901760
    %901 = vmatpush1.xpose.msra.mxu0 %v900
    %902 = vmatprep.subr.mxu0 0.0
    %v903 = vand.u32 %v65, 4294901760
    %904 = vmatpush1.xpose.msra.mxu0 %v903
    %905 = vmatprep.subr.mxu0 0.0
    %v906 = vand.u32 %v66, 4294901760
    %907 = vmatpush1.xpose.msra.mxu0 %v906
    %908 = vmatprep.subr.mxu0 0.0
    %909 = vmatpush1.xpose.msra.mxu0 0.0
    %910 = vmatprep.subr.mxu0 0.0
    %911 = vmatpush1.xpose.msra.mxu0 0.0
    %912 = vmatprep.subr.mxu0 0.0
    %913 = vmatpush1.xpose.msra.mxu0 0.0
    %914 = vmatprep.subr.mxu0 0.0
    %915 = vmatpush1.xpose.msra.mxu0 0.0
    %916 = vmatprep.subr.mxu0 0.0
    %917 = vmatpush1.xpose.msra.mxu0 0.0
    %918 = vmatprep.subr.mxu0 0.0
    %919 = vmatpush1.xpose.msra.mxu0 0.0
    %920 = vmatprep.subr.mxu0 0.0
    %921 = vmatpush1.xpose.msra.mxu0 0.0
    %922 = vmatprep.subr.mxu0 0.0
    %923 = vmatpush1.xpose.msra.mxu0 0.0
    %924 = vmatprep.subr.mxu0 0.0
    %925 = vmatpush1.xpose.msra.mxu0 0.0
    %926 = vmatprep.subr.mxu0 0.0
    %927 = vmatpush1.xpose.msra.mxu0 0.0
    %928 = vmatprep.subr.mxu0 0.0
    %929 = vmatpush1.xpose.msra.mxu0 0.0
    %930 = vmatprep.subr.mxu0 0.0
    %931 = vmatpush1.xpose.msra.mxu0 0.0
    %932 = vmatprep.subr.mxu0 0.0
    %933 = vmatpush1.xpose.msra.mxu0 0.0
    %934 = vmatprep.subr.mxu0 0.0
    %935 = vmatpush1.xpose.msra.mxu0 0.0
    %936 = vmatprep.subr.mxu0 0.0
    %937 = vmatpush1.xpose.msra.mxu0 0.0
    %938 = vmatprep.subr.mxu0 0.0
    %939 = vmatpush1.xpose.msra.mxu0 0.0
    %940 = vmatprep.subr.mxu0 0.0
    %941 = vmatpush1.xpose.msra.mxu0 0.0
    %942 = vmatprep.subr.mxu0 0.0
    %943 = vmatpush1.xpose.msra.mxu0 0.0
    %944 = vmatprep.subr.mxu0 0.0
    %945 = vmatpush1.xpose.msra.mxu0 0.0
    %946 = vmatprep.subr.mxu0 0.0
    %947 = vmatpush1.xpose.msra.mxu0 0.0
    %948 = vmatprep.subr.mxu0 0.0
    %949 = vmatpush1.xpose.msra.mxu0 0.0
    %950 = vmatprep.subr.mxu0 0.0
    %951 = vmatpush1.xpose.msra.mxu0 0.0
    %952 = vmatprep.subr.mxu0 0.0
    %953 = vmatpush1.xpose.msra.mxu0 0.0
    %954 = vmatprep.subr.mxu0 0.0
    %955 = vmatpush1.xpose.msra.mxu0 0.0
    %956 = vmatprep.subr.mxu0 0.0
    %957 = vmatpush1.xpose.msra.mxu0 0.0
    %958 = vmatprep.subr.mxu0 0.0
    %959 = vmatpush1.xpose.msra.mxu0 0.0
    %960 = vmatprep.subr.mxu0 0.0
    %961 = vmatpush1.xpose.msra.mxu0 0.0
    %962 = vmatprep.subr.mxu0 0.0
    %963 = vmatpush1.xpose.msra.mxu0 0.0
    %964 = vmatprep.mubr.f32.mxu0 0.0
    %v965 = vand.u32 %v63, 4294901760
    %v966 = vsub.f32 %v63, %v965
    %v967 = vand.u32 %v966, 4294901760
    %v968 = vsub.f32 %v966, %v967
    %v969 = vand.u32 %v968, 4294901760
    %970 = vmatmul.mubr.f32.gmra.mrb[0].mxu0 %v969
    %v971 = vpop.f32.mrb[0].mxu0
    %v972 = vadd.f32 0.0, %v971
    %v973 = vpop.f32.mrb[0].mxu0
    %974 = vmatprep.mubr.f32.mxu0 0.0
    %v975 = vand.u32 %v64, 4294901760
    %v976 = vsub.f32 %v64, %v975
    %v977 = vand.u32 %v976, 4294901760
    %v978 = vsub.f32 %v976, %v977
    %v979 = vand.u32 %v978, 4294901760
    %980 = vmatmul.mubr.f32.gmra.mrb[0].mxu0 %v979
    %v981 = vpop.f32.mrb[0].mxu0
    %v982 = vadd.f32 0.0, %v981
    %v983 = vpop.f32.mrb[0].mxu0
    %984 = vmatprep.mubr.f32.mxu0 0.0
    %v985 = vand.u32 %v65, 4294901760
    %v986 = vsub.f32 %v65, %v985
    %v987 = vand.u32 %v986, 4294901760
    %v988 = vsub.f32 %v986, %v987
    %v989 = vand.u32 %v988, 4294901760
    %990 = vmatmul.mubr.f32.gmra.mrb[0].mxu0 %v989
    %v991 = vpop.f32.mrb[0].mxu0
    %v992 = vadd.f32 0.0, %v991
    %v993 = vpop.f32.mrb[0].mxu0
    %994 = vmatprep.mubr.f32.mxu0 0.0
    %v995 = vand.u32 %v66, 4294901760
    %v996 = vsub.f32 %v66, %v995
    %v997 = vand.u32 %v996, 4294901760
    %v998 = vsub.f32 %v996, %v997
    %v999 = vand.u32 %v998, 4294901760
    %1000 = vmatmul.mubr.f32.gmra.mrb[0].mxu0 %v999
    %v1001 = vpop.f32.mrb[0].mxu0
    %v1002 = vadd.f32 0.0, %v1001
    %v1003 = vpop.f32.mrb[0].mxu0
    %1004 = vdwg.mxu0
    %1005 = vmatprep.subr.mxu0 0.0
    %v1006 = vand.u32 %v63, 4294901760
    %v1007 = vsub.f32 %v63, %v1006
    %v1008 = vand.u32 %v1007, 4294901760
    %v1009 = vsub.f32 %v1007, %v1008
    %v1010 = vand.u32 %v1009, 4294901760
    %1011 = vmatpush1.xpose.msra.mxu0 %v1010
    %1012 = vmatprep.subr.mxu0 0.0
    %v1013 = vand.u32 %v64, 4294901760
    %v1014 = vsub.f32 %v64, %v1013
    %v1015 = vand.u32 %v1014, 4294901760
    %v1016 = vsub.f32 %v1014, %v1015
    %v1017 = vand.u32 %v1016, 4294901760
    %1018 = vmatpush1.xpose.msra.mxu0 %v1017
    %1019 = vmatprep.subr.mxu0 0.0
    %v1020 = vand.u32 %v65, 4294901760
    %v1021 = vsub.f32 %v65, %v1020
    %v1022 = vand.u32 %v1021, 4294901760
    %v1023 = vsub.f32 %v1021, %v1022
    %v1024 = vand.u32 %v1023, 4294901760
    %1025 = vmatpush1.xpose.msra.mxu0 %v1024
    %1026 = vmatprep.subr.mxu0 0.0
    %v1027 = vand.u32 %v66, 4294901760
    %v1028 = vsub.f32 %v66, %v1027
    %v1029 = vand.u32 %v1028, 4294901760
    %v1030 = vsub.f32 %v1028, %v1029
    %v1031 = vand.u32 %v1030, 4294901760
    %1032 = vmatpush1.xpose.msra.mxu0 %v1031
    %1033 = vmatprep.subr.mxu0 0.0
    %1034 = vmatpush1.xpose.msra.mxu0 0.0
    %1035 = vmatprep.subr.mxu0 0.0
    %1036 = vmatpush1.xpose.msra.mxu0 0.0
    %1037 = vmatprep.subr.mxu0 0.0
    %1038 = vmatpush1.xpose.msra.mxu0 0.0
    %1039 = vmatprep.subr.mxu0 0.0
    %1040 = vmatpush1.xpose.msra.mxu0 0.0
    %1041 = vmatprep.subr.mxu0 0.0
    %1042 = vmatpush1.xpose.msra.mxu0 0.0
    %1043 = vmatprep.subr.mxu0 0.0
    %1044 = vmatpush1.xpose.msra.mxu0 0.0
    %1045 = vmatprep.subr.mxu0 0.0
    %1046 = vmatpush1.xpose.msra.mxu0 0.0
    %1047 = vmatprep.subr.mxu0 0.0
    %1048 = vmatpush1.xpose.msra.mxu0 0.0
    %1049 = vmatprep.subr.mxu0 0.0
    %1050 = vmatpush1.xpose.msra.mxu0 0.0
    %1051 = vmatprep.subr.mxu0 0.0
    %1052 = vmatpush1.xpose.msra.mxu0 0.0
    %1053 = vmatprep.subr.mxu0 0.0
    %1054 = vmatpush1.xpose.msra.mxu0 0.0
    %1055 = vmatprep.subr.mxu0 0.0
    %1056 = vmatpush1.xpose.msra.mxu0 0.0
    %1057 = vmatprep.subr.mxu0 0.0
    %1058 = vmatpush1.xpose.msra.mxu0 0.0
    %1059 = vmatprep.subr.mxu0 0.0
    %1060 = vmatpush1.xpose.msra.mxu0 0.0
    %1061 = vmatprep.subr.mxu0 0.0
    %1062 = vmatpush1.xpose.msra.mxu0 0.0
    %1063 = vmatprep.subr.mxu0 0.0
    %1064 = vmatpush1.xpose.msra.mxu0 0.0
    %1065 = vmatprep.subr.mxu0 0.0
    %1066 = vmatpush1.xpose.msra.mxu0 0.0
    %1067 = vmatprep.subr.mxu0 0.0
    %1068 = vmatpush1.xpose.msra.mxu0 0.0
    %1069 = vmatprep.subr.mxu0 0.0
    %1070 = vmatpush1.xpose.msra.mxu0 0.0
    %1071 = vmatprep.subr.mxu0 0.0
    %1072 = vmatpush1.xpose.msra.mxu0 0.0
    %1073 = vmatprep.subr.mxu0 0.0
    %1074 = vmatpush1.xpose.msra.mxu0 0.0
    %1075 = vmatprep.subr.mxu0 0.0
    %1076 = vmatpush1.xpose.msra.mxu0 0.0
    %1077 = vmatprep.subr.mxu0 0.0
    %1078 = vmatpush1.xpose.msra.mxu0 0.0
    %1079 = vmatprep.subr.mxu0 0.0
    %1080 = vmatpush1.xpose.msra.mxu0 0.0
    %1081 = vmatprep.subr.mxu0 0.0
    %1082 = vmatpush1.xpose.msra.mxu0 0.0
    %1083 = vmatprep.subr.mxu0 0.0
    %1084 = vmatpush1.xpose.msra.mxu0 0.0
    %1085 = vmatprep.subr.mxu0 0.0
    %1086 = vmatpush1.xpose.msra.mxu0 0.0
    %1087 = vmatprep.subr.mxu0 0.0
    %1088 = vmatpush1.xpose.msra.mxu0 0.0
    %1089 = vmatprep.mubr.f32.mxu0 0.0
    %v1090 = vand.u32 %v63, 4294901760
    %1091 = vmatmul.mubr.f32.gmra.mrb[0].mxu0 %v1090
    %v1092 = vpop.f32.mrb[0].mxu0
    %v1093 = vadd.f32 %v972, %v1092
    %v1094 = vpop.f32.mrb[0].mxu0
    %1095 = vmatprep.mubr.f32.mxu0 0.0
    %v1096 = vand.u32 %v64, 4294901760
    %1097 = vmatmul.mubr.f32.gmra.mrb[0].mxu0 %v1096
    %v1098 = vpop.f32.mrb[0].mxu0
    %v1099 = vadd.f32 %v982, %v1098
    %v1100 = vpop.f32.mrb[0].mxu0
    %1101 = vmatprep.mubr.f32.mxu0 0.0
    %v1102 = vand.u32 %v65, 4294901760
    %1103 = vmatmul.mubr.f32.gmra.mrb[0].mxu0 %v1102
    %v1104 = vpop.f32.mrb[0].mxu0
    %v1105 = vadd.f32 %v992, %v1104
    %v1106 = vpop.f32.mrb[0].mxu0
    %1107 = vmatprep.mubr.f32.mxu0 0.0
    %v1108 = vand.u32 %v66, 4294901760
    %1109 = vmatmul.mubr.f32.gmra.mrb[0].mxu0 %v1108
    %v1110 = vpop.f32.mrb[0].mxu0
    %v1111 = vadd.f32 %v1002, %v1110
    %v1112 = vpop.f32.mrb[0].mxu0
    %1113 = vdwg.mxu0
    %1114 = vmatprep.subr.mxu0 0.0
    %v1115 = vand.u32 %v63, 4294901760
    %v1116 = vsub.f32 %v63, %v1115
    %1117 = vmatpush1.xpose.msra.mxu0 %v1116
    %1118 = vmatprep.subr.mxu0 0.0
    %v1119 = vand.u32 %v64, 4294901760
    %v1120 = vsub.f32 %v64, %v1119
    %1121 = vmatpush1.xpose.msra.mxu0 %v1120
    %1122 = vmatprep.subr.mxu0 0.0
    %v1123 = vand.u32 %v65, 4294901760
    %v1124 = vsub.f32 %v65, %v1123
    %1125 = vmatpush1.xpose.msra.mxu0 %v1124
    %1126 = vmatprep.subr.mxu0 0.0
    %v1127 = vand.u32 %v66, 4294901760
    %v1128 = vsub.f32 %v66, %v1127
    %1129 = vmatpush1.xpose.msra.mxu0 %v1128
    %1130 = vmatprep.subr.mxu0 0.0
    %1131 = vmatpush1.xpose.msra.mxu0 0.0
    %1132 = vmatprep.subr.mxu0 0.0
    %1133 = vmatpush1.xpose.msra.mxu0 0.0
    %1134 = vmatprep.subr.mxu0 0.0
    %1135 = vmatpush1.xpose.msra.mxu0 0.0
    %1136 = vmatprep.subr.mxu0 0.0
    %1137 = vmatpush1.xpose.msra.mxu0 0.0
    %1138 = vmatprep.subr.mxu0 0.0
    %1139 = vmatpush1.xpose.msra.mxu0 0.0
    %1140 = vmatprep.subr.mxu0 0.0
    %1141 = vmatpush1.xpose.msra.mxu0 0.0
    %1142 = vmatprep.subr.mxu0 0.0
    %1143 = vmatpush1.xpose.msra.mxu0 0.0
    %1144 = vmatprep.subr.mxu0 0.0
    %1145 = vmatpush1.xpose.msra.mxu0 0.0
    %1146 = vmatprep.subr.mxu0 0.0
    %1147 = vmatpush1.xpose.msra.mxu0 0.0
    %1148 = vmatprep.subr.mxu0 0.0
    %1149 = vmatpush1.xpose.msra.mxu0 0.0
    %1150 = vmatprep.subr.mxu0 0.0
    %1151 = vmatpush1.xpose.msra.mxu0 0.0
    %1152 = vmatprep.subr.mxu0 0.0
    %1153 = vmatpush1.xpose.msra.mxu0 0.0
    %1154 = vmatprep.subr.mxu0 0.0
    %1155 = vmatpush1.xpose.msra.mxu0 0.0
    %1156 = vmatprep.subr.mxu0 0.0
    %1157 = vmatpush1.xpose.msra.mxu0 0.0
    %1158 = vmatprep.subr.mxu0 0.0
    %1159 = vmatpush1.xpose.msra.mxu0 0.0
    %1160 = vmatprep.subr.mxu0 0.0
    %1161 = vmatpush1.xpose.msra.mxu0 0.0
    %1162 = vmatprep.subr.mxu0 0.0
    %1163 = vmatpush1.xpose.msra.mxu0 0.0
    %1164 = vmatprep.subr.mxu0 0.0
    %1165 = vmatpush1.xpose.msra.mxu0 0.0
    %1166 = vmatprep.subr.mxu0 0.0
    %1167 = vmatpush1.xpose.msra.mxu0 0.0
    %1168 = vmatprep.subr.mxu0 0.0
    %1169 = vmatpush1.xpose.msra.mxu0 0.0
    %1170 = vmatprep.subr.mxu0 0.0
    %1171 = vmatpush1.xpose.msra.mxu0 0.0
    %1172 = vmatprep.subr.mxu0 0.0
    %1173 = vmatpush1.xpose.msra.mxu0 0.0
    %1174 = vmatprep.subr.mxu0 0.0
    %1175 = vmatpush1.xpose.msra.mxu0 0.0
    %1176 = vmatprep.subr.mxu0 0.0
    %1177 = vmatpush1.xpose.msra.mxu0 0.0
    %1178 = vmatprep.subr.mxu0 0.0
    %1179 = vmatpush1.xpose.msra.mxu0 0.0
    %1180 = vmatprep.subr.mxu0 0.0
    %1181 = vmatpush1.xpose.msra.mxu0 0.0
    %1182 = vmatprep.subr.mxu0 0.0
    %1183 = vmatpush1.xpose.msra.mxu0 0.0
    %1184 = vmatprep.subr.mxu0 0.0
    %1185 = vmatpush1.xpose.msra.mxu0 0.0
    %1186 = vmatprep.mubr.f32.mxu0 0.0
    %v1187 = vand.u32 %v63, 4294901760
    %v1188 = vsub.f32 %v63, %v1187
    %1189 = vmatmul.mubr.f32.gmra.mrb[0].mxu0 %v1188
    %v1190 = vpop.f32.mrb[0].mxu0
    %v1191 = vadd.f32 %v1093, %v1190
    %v1192 = vpop.f32.mrb[0].mxu0
    %1193 = vmatprep.mubr.f32.mxu0 0.0
    %v1194 = vand.u32 %v64, 4294901760
    %v1195 = vsub.f32 %v64, %v1194
    %1196 = vmatmul.mubr.f32.gmra.mrb[0].mxu0 %v1195
    %v1197 = vpop.f32.mrb[0].mxu0
    %v1198 = vadd.f32 %v1099, %v1197
    %v1199 = vpop.f32.mrb[0].mxu0
    %1200 = vmatprep.mubr.f32.mxu0 0.0
    %v1201 = vand.u32 %v65, 4294901760
    %v1202 = vsub.f32 %v65, %v1201
    %1203 = vmatmul.mubr.f32.gmra.mrb[0].mxu0 %v1202
    %v1204 = vpop.f32.mrb[0].mxu0
    %v1205 = vadd.f32 %v1105, %v1204
    %v1206 = vpop.f32.mrb[0].mxu0
    %1207 = vmatprep.mubr.f32.mxu0 0.0
    %v1208 = vand.u32 %v66, 4294901760
    %v1209 = vsub.f32 %v66, %v1208
    %1210 = vmatmul.mubr.f32.gmra.mrb[0].mxu0 %v1209
    %v1211 = vpop.f32.mrb[0].mxu0
    %v1212 = vadd.f32 %v1111, %v1211
    %v1213 = vpop.f32.mrb[0].mxu0
    %1214 = vdwg.mxu0
    %1215 = vmatprep.subr.mxu0 0.0
    %v1216 = vand.u32 %v63, 4294901760
    %1217 = vmatpush1.xpose.msra.mxu0 %v1216
    %1218 = vmatprep.subr.mxu0 0.0
    %v1219 = vand.u32 %v64, 4294901760
    %1220 = vmatpush1.xpose.msra.mxu0 %v1219
    %1221 = vmatprep.subr.mxu0 0.0
    %v1222 = vand.u32 %v65, 4294901760
    %1223 = vmatpush1.xpose.msra.mxu0 %v1222
    %1224 = vmatprep.subr.mxu0 0.0
    %v1225 = vand.u32 %v66, 4294901760
    %1226 = vmatpush1.xpose.msra.mxu0 %v1225
    %1227 = vmatprep.subr.mxu0 0.0
    %1228 = vmatpush1.xpose.msra.mxu0 0.0
    %1229 = vmatprep.subr.mxu0 0.0
    %1230 = vmatpush1.xpose.msra.mxu0 0.0
    %1231 = vmatprep.subr.mxu0 0.0
    %1232 = vmatpush1.xpose.msra.mxu0 0.0
    %1233 = vmatprep.subr.mxu0 0.0
    %1234 = vmatpush1.xpose.msra.mxu0 0.0
    %1235 = vmatprep.subr.mxu0 0.0
    %1236 = vmatpush1.xpose.msra.mxu0 0.0
    %1237 = vmatprep.subr.mxu0 0.0
    %1238 = vmatpush1.xpose.msra.mxu0 0.0
    %1239 = vmatprep.subr.mxu0 0.0
    %1240 = vmatpush1.xpose.msra.mxu0 0.0
    %1241 = vmatprep.subr.mxu0 0.0
    %1242 = vmatpush1.xpose.msra.mxu0 0.0
    %1243 = vmatprep.subr.mxu0 0.0
    %1244 = vmatpush1.xpose.msra.mxu0 0.0
    %1245 = vmatprep.subr.mxu0 0.0
    %1246 = vmatpush1.xpose.msra.mxu0 0.0
    %1247 = vmatprep.subr.mxu0 0.0
    %1248 = vmatpush1.xpose.msra.mxu0 0.0
    %1249 = vmatprep.subr.mxu0 0.0
    %1250 = vmatpush1.xpose.msra.mxu0 0.0
    %1251 = vmatprep.subr.mxu0 0.0
    %1252 = vmatpush1.xpose.msra.mxu0 0.0
    %1253 = vmatprep.subr.mxu0 0.0
    %1254 = vmatpush1.xpose.msra.mxu0 0.0
    %1255 = vmatprep.subr.mxu0 0.0
    %1256 = vmatpush1.xpose.msra.mxu0 0.0
    %1257 = vmatprep.subr.mxu0 0.0
    %1258 = vmatpush1.xpose.msra.mxu0 0.0
    %1259 = vmatprep.subr.mxu0 0.0
    %1260 = vmatpush1.xpose.msra.mxu0 0.0
    %1261 = vmatprep.subr.mxu0 0.0
    %1262 = vmatpush1.xpose.msra.mxu0 0.0
    %1263 = vmatprep.subr.mxu0 0.0
    %1264 = vmatpush1.xpose.msra.mxu0 0.0
    %1265 = vmatprep.subr.mxu0 0.0
    %1266 = vmatpush1.xpose.msra.mxu0 0.0
    %1267 = vmatprep.subr.mxu0 0.0
    %1268 = vmatpush1.xpose.msra.mxu0 0.0
    %1269 = vmatprep.subr.mxu0 0.0
    %1270 = vmatpush1.xpose.msra.mxu0 0.0
    %1271 = vmatprep.subr.mxu0 0.0
    %1272 = vmatpush1.xpose.msra.mxu0 0.0
    %1273 = vmatprep.subr.mxu0 0.0
    %1274 = vmatpush1.xpose.msra.mxu0 0.0
    %1275 = vmatprep.subr.mxu0 0.0
    %1276 = vmatpush1.xpose.msra.mxu0 0.0
    %1277 = vmatprep.subr.mxu0 0.0
    %1278 = vmatpush1.xpose.msra.mxu0 0.0
    %1279 = vmatprep.subr.mxu0 0.0
    %1280 = vmatpush1.xpose.msra.mxu0 0.0
    %1281 = vmatprep.subr.mxu0 0.0
    %1282 = vmatpush1.xpose.msra.mxu0 0.0
    %1283 = vmatprep.mubr.f32.mxu0 0.0
    %v1284 = vand.u32 %v63, 4294901760
    %v1285 = vsub.f32 %v63, %v1284
    %v1286 = vand.u32 %v1285, 4294901760
    %1287 = vmatmul.mubr.f32.gmra.mrb[0].mxu0 %v1286
    %v1288 = vpop.f32.mrb[0].mxu0
    %v1289 = vadd.f32 %v1191, %v1288
    %v1290 = vpop.f32.mrb[0].mxu0
    %1291 = vmatprep.mubr.f32.mxu0 0.0
    %v1292 = vand.u32 %v64, 4294901760
    %v1293 = vsub.f32 %v64, %v1292
    %v1294 = vand.u32 %v1293, 4294901760
    %1295 = vmatmul.mubr.f32.gmra.mrb[0].mxu0 %v1294
    %v1296 = vpop.f32.mrb[0].mxu0
    %v1297 = vadd.f32 %v1198, %v1296
    %v1298 = vpop.f32.mrb[0].mxu0
    %1299 = vmatprep.mubr.f32.mxu0 0.0
    %v1300 = vand.u32 %v65, 4294901760
    %v1301 = vsub.f32 %v65, %v1300
    %v1302 = vand.u32 %v1301, 4294901760
    %1303 = vmatmul.mubr.f32.gmra.mrb[0].mxu0 %v1302
    %v1304 = vpop.f32.mrb[0].mxu0
    %v1305 = vadd.f32 %v1205, %v1304
    %v1306 = vpop.f32.mrb[0].mxu0
    %1307 = vmatprep.mubr.f32.mxu0 0.0
    %v1308 = vand.u32 %v66, 4294901760
    %v1309 = vsub.f32 %v66, %v1308
    %v1310 = vand.u32 %v1309, 4294901760
    %1311 = vmatmul.mubr.f32.gmra.mrb[0].mxu0 %v1310
    %v1312 = vpop.f32.mrb[0].mxu0
    %v1313 = vadd.f32 %v1212, %v1312
    %v1314 = vpop.f32.mrb[0].mxu0
    %1315 = vdwg.mxu0
    %1316 = vmatprep.subr.mxu0 0.0
    %v1317 = vand.u32 %v63, 4294901760
    %v1318 = vsub.f32 %v63, %v1317
    %v1319 = vand.u32 %v1318, 4294901760
    %1320 = vmatpush1.xpose.msra.mxu0 %v1319
    %1321 = vmatprep.subr.mxu0 0.0
    %v1322 = vand.u32 %v64, 4294901760
    %v1323 = vsub.f32 %v64, %v1322
    %v1324 = vand.u32 %v1323, 4294901760
    %1325 = vmatpush1.xpose.msra.mxu0 %v1324
    %1326 = vmatprep.subr.mxu0 0.0
    %v1327 = vand.u32 %v65, 4294901760
    %v1328 = vsub.f32 %v65, %v1327
    %v1329 = vand.u32 %v1328, 4294901760
    %1330 = vmatpush1.xpose.msra.mxu0 %v1329
    %1331 = vmatprep.subr.mxu0 0.0
    %v1332 = vand.u32 %v66, 4294901760
    %v1333 = vsub.f32 %v66, %v1332
    %v1334 = vand.u32 %v1333, 4294901760
    %1335 = vmatpush1.xpose.msra.mxu0 %v1334
    %1336 = vmatprep.subr.mxu0 0.0
    %1337 = vmatpush1.xpose.msra.mxu0 0.0
    %1338 = vmatprep.subr.mxu0 0.0
    %1339 = vmatpush1.xpose.msra.mxu0 0.0
    %1340 = vmatprep.subr.mxu0 0.0
    %1341 = vmatpush1.xpose.msra.mxu0 0.0
    %1342 = vmatprep.subr.mxu0 0.0
    %1343 = vmatpush1.xpose.msra.mxu0 0.0
    %1344 = vmatprep.subr.mxu0 0.0
    %1345 = vmatpush1.xpose.msra.mxu0 0.0
    %1346 = vmatprep.subr.mxu0 0.0
    %1347 = vmatpush1.xpose.msra.mxu0 0.0
    %1348 = vmatprep.subr.mxu0 0.0
    %1349 = vmatpush1.xpose.msra.mxu0 0.0
    %1350 = vmatprep.subr.mxu0 0.0
    %1351 = vmatpush1.xpose.msra.mxu0 0.0
    %1352 = vmatprep.subr.mxu0 0.0
    %1353 = vmatpush1.xpose.msra.mxu0 0.0
    %1354 = vmatprep.subr.mxu0 0.0
    %1355 = vmatpush1.xpose.msra.mxu0 0.0
    %1356 = vmatprep.subr.mxu0 0.0
    %1357 = vmatpush1.xpose.msra.mxu0 0.0
    %1358 = vmatprep.subr.mxu0 0.0
    %1359 = vmatpush1.xpose.msra.mxu0 0.0
    %1360 = vmatprep.subr.mxu0 0.0
    %1361 = vmatpush1.xpose.msra.mxu0 0.0
    %1362 = vmatprep.subr.mxu0 0.0
    %1363 = vmatpush1.xpose.msra.mxu0 0.0
    %1364 = vmatprep.subr.mxu0 0.0
    %1365 = vmatpush1.xpose.msra.mxu0 0.0
    %1366 = vmatprep.subr.mxu0 0.0
    %1367 = vmatpush1.xpose.msra.mxu0 0.0
    %1368 = vmatprep.subr.mxu0 0.0
    %1369 = vmatpush1.xpose.msra.mxu0 0.0
    %1370 = vmatprep.subr.mxu0 0.0
    %1371 = vmatpush1.xpose.msra.mxu0 0.0
    %1372 = vmatprep.subr.mxu0 0.0
    %1373 = vmatpush1.xpose.msra.mxu0 0.0
    %1374 = vmatprep.subr.mxu0 0.0
    %1375 = vmatpush1.xpose.msra.mxu0 0.0
    %1376 = vmatprep.subr.mxu0 0.0
    %1377 = vmatpush1.xpose.msra.mxu0 0.0
    %1378 = vmatprep.subr.mxu0 0.0
    %1379 = vmatpush1.xpose.msra.mxu0 0.0
    %1380 = vmatprep.subr.mxu0 0.0
    %1381 = vmatpush1.xpose.msra.mxu0 0.0
    %1382 = vmatprep.subr.mxu0 0.0
    %1383 = vmatpush1.xpose.msra.mxu0 0.0
    %1384 = vmatprep.subr.mxu0 0.0
    %1385 = vmatpush1.xpose.msra.mxu0 0.0
    %1386 = vmatprep.subr.mxu0 0.0
    %1387 = vmatpush1.xpose.msra.mxu0 0.0
    %1388 = vmatprep.subr.mxu0 0.0
    %1389 = vmatpush1.xpose.msra.mxu0 0.0
    %1390 = vmatprep.subr.mxu0 0.0
    %1391 = vmatpush1.xpose.msra.mxu0 0.0
    %1392 = vmatprep.mubr.f32.mxu0 0.0
    %v1393 = vand.u32 %v63, 4294901760
    %1394 = vmatmul.mubr.f32.gmra.mrb[0].mxu0 %v1393
    %v1395 = vpop.f32.mrb[0].mxu0
    %v1396 = vadd.f32 %v1289, %v1395
    %v1397 = vpop.f32.mrb[0].mxu0
    %1398 = vmatprep.mubr.f32.mxu0 0.0
    %v1399 = vand.u32 %v64, 4294901760
    %1400 = vmatmul.mubr.f32.gmra.mrb[0].mxu0 %v1399
    %v1401 = vpop.f32.mrb[0].mxu0
    %v1402 = vadd.f32 %v1297, %v1401
    %v1403 = vpop.f32.mrb[0].mxu0
    %1404 = vmatprep.mubr.f32.mxu0 0.0
    %v1405 = vand.u32 %v65, 4294901760
    %1406 = vmatmul.mubr.f32.gmra.mrb[0].mxu0 %v1405
    %v1407 = vpop.f32.mrb[0].mxu0
    %v1408 = vadd.f32 %v1305, %v1407
    %v1409 = vpop.f32.mrb[0].mxu0
    %1410 = vmatprep.mubr.f32.mxu0 0.0
    %v1411 = vand.u32 %v66, 4294901760
    %1412 = vmatmul.mubr.f32.gmra.mrb[0].mxu0 %v1411
    %v1413 = vpop.f32.mrb[0].mxu0
    %v1414 = vadd.f32 %v1313, %v1413
    %v1415 = vpop.f32.mrb[0].mxu0
    %1416 = vdwg.mxu0
    %1417 = vmatprep.subr.mxu0 0.0
    %v1418 = vand.u32 %v63, 4294901760
    %1419 = vmatpush1.xpose.msra.mxu0 %v1418
    %1420 = vmatprep.subr.mxu0 0.0
    %v1421 = vand.u32 %v64, 4294901760
    %1422 = vmatpush1.xpose.msra.mxu0 %v1421
    %1423 = vmatprep.subr.mxu0 0.0
    %v1424 = vand.u32 %v65, 4294901760
    %1425 = vmatpush1.xpose.msra.mxu0 %v1424
    %1426 = vmatprep.subr.mxu0 0.0
    %v1427 = vand.u32 %v66, 4294901760
    %1428 = vmatpush1.xpose.msra.mxu0 %v1427
    %1429 = vmatprep.subr.mxu0 0.0
    %1430 = vmatpush1.xpose.msra.mxu0 0.0
    %1431 = vmatprep.subr.mxu0 0.0
    %1432 = vmatpush1.xpose.msra.mxu0 0.0
    %1433 = vmatprep.subr.mxu0 0.0
    %1434 = vmatpush1.xpose.msra.mxu0 0.0
    %1435 = vmatprep.subr.mxu0 0.0
    %1436 = vmatpush1.xpose.msra.mxu0 0.0
    %1437 = vmatprep.subr.mxu0 0.0
    %1438 = vmatpush1.xpose.msra.mxu0 0.0
    %1439 = vmatprep.subr.mxu0 0.0
    %1440 = vmatpush1.xpose.msra.mxu0 0.0
    %1441 = vmatprep.subr.mxu0 0.0
    %1442 = vmatpush1.xpose.msra.mxu0 0.0
    %1443 = vmatprep.subr.mxu0 0.0
    %1444 = vmatpush1.xpose.msra.mxu0 0.0
    %1445 = vmatprep.subr.mxu0 0.0
    %1446 = vmatpush1.xpose.msra.mxu0 0.0
    %1447 = vmatprep.subr.mxu0 0.0
    %1448 = vmatpush1.xpose.msra.mxu0 0.0
    %1449 = vmatprep.subr.mxu0 0.0
    %1450 = vmatpush1.xpose.msra.mxu0 0.0
    %1451 = vmatprep.subr.mxu0 0.0
    %1452 = vmatpush1.xpose.msra.mxu0 0.0
    %1453 = vmatprep.subr.mxu0 0.0
    %1454 = vmatpush1.xpose.msra.mxu0 0.0
    %1455 = vmatprep.subr.mxu0 0.0
    %1456 = vmatpush1.xpose.msra.mxu0 0.0
    %1457 = vmatprep.subr.mxu0 0.0
    %1458 = vmatpush1.xpose.msra.mxu0 0.0
    %1459 = vmatprep.subr.mxu0 0.0
    %1460 = vmatpush1.xpose.msra.mxu0 0.0
    %1461 = vmatprep.subr.mxu0 0.0
    %1462 = vmatpush1.xpose.msra.mxu0 0.0
    %1463 = vmatprep.subr.mxu0 0.0
    %1464 = vmatpush1.xpose.msra.mxu0 0.0
    %1465 = vmatprep.subr.mxu0 0.0
    %1466 = vmatpush1.xpose.msra.mxu0 0.0
    %1467 = vmatprep.subr.mxu0 0.0
    %1468 = vmatpush1.xpose.msra.mxu0 0.0
    %1469 = vmatprep.subr.mxu0 0.0
    %1470 = vmatpush1.xpose.msra.mxu0 0.0
    %1471 = vmatprep.subr.mxu0 0.0
    %1472 = vmatpush1.xpose.msra.mxu0 0.0
    %1473 = vmatprep.subr.mxu0 0.0
    %1474 = vmatpush1.xpose.msra.mxu0 0.0
    %1475 = vmatprep.subr.mxu0 0.0
    %1476 = vmatpush1.xpose.msra.mxu0 0.0
    %1477 = vmatprep.subr.mxu0 0.0
    %1478 = vmatpush1.xpose.msra.mxu0 0.0
    %1479 = vmatprep.subr.mxu0 0.0
    %1480 = vmatpush1.xpose.msra.mxu0 0.0
    %1481 = vmatprep.subr.mxu0 0.0
    %1482 = vmatpush1.xpose.msra.mxu0 0.0
    %1483 = vmatprep.subr.mxu0 0.0
    %1484 = vmatpush1.xpose.msra.mxu0 0.0
    %1485 = vmatprep.mubr.f32.mxu0 0.0
    %v1486 = vand.u32 %v63, 4294901760
    %1487 = vmatmul.mubr.f32.gmra.mrb[0].mxu0 %v1486
    %v1488 = vpop.f32.mrb[0].mxu0
    %v1489 = vadd.f32 %v1396, %v1488
    %v1490 = vpop.f32.mrb[0].mxu0
    %1491 = vmatprep.mubr.f32.mxu0 0.0
    %v1492 = vand.u32 %v64, 4294901760
    %1493 = vmatmul.mubr.f32.gmra.mrb[0].mxu0 %v1492
    %v1494 = vpop.f32.mrb[0].mxu0
    %v1495 = vadd.f32 %v1402, %v1494
    %v1496 = vpop.f32.mrb[0].mxu0
    %1497 = vmatprep.mubr.f32.mxu0 0.0
    %v1498 = vand.u32 %v65, 4294901760
    %1499 = vmatmul.mubr.f32.gmra.mrb[0].mxu0 %v1498
    %v1500 = vpop.f32.mrb[0].mxu0
    %v1501 = vadd.f32 %v1408, %v1500
    %v1502 = vpop.f32.mrb[0].mxu0
    %1503 = vmatprep.mubr.f32.mxu0 0.0
    %v1504 = vand.u32 %v66, 4294901760
    %1505 = vmatmul.mubr.f32.gmra.mrb[0].mxu0 %v1504
    %v1506 = vpop.f32.mrb[0].mxu0
    %v1507 = vadd.f32 %v1414, %v1506
    %v1508 = vpop.f32.mrb[0].mxu0
    %1509 = vdwg.mxu0
    %v1510 = vmul.f32 %v875, 0.088388346
    %v1511 = vmul.f32 %v881, 0.088388346
    %v1512 = vmul.f32 %v887, 0.088388346
    %v1513 = vmul.f32 %v893, 0.088388346
    %v1514 = vmul.f32 %v1489, 0.088388346
    %v1515 = vmul.f32 %v1495, 0.088388346
    %v1516 = vmul.f32 %v1501, 0.088388346
    %v1517 = vmul.f32 %v1507, 0.088388346
    %vm1518 = vcmask 261120
    %v1519 = vsel %vm1518, %v1510, -inf
    %1520 = vmax.xlane.f32.xlu0 %v1519
    %v1521 = vpop.xlane.xlu0 %1520
    %v1522 = vsel %vm1518, %v1511, -inf
    %1523 = vmax.xlane.f32.xlu0 %v1522
    %v1524 = vpop.xlane.xlu0 %1523
    %v1525 = vsel %vm1518, %v1512, -inf
    %1526 = vmax.xlane.f32.xlu0 %v1525
    %v1527 = vpop.xlane.xlu0 %1526
    %v1528 = vsel %vm1518, %v1513, -inf
    %1529 = vmax.xlane.f32.xlu0 %v1528
    %v1530 = vpop.xlane.xlu0 %1529
    %v1531 = vsel %vm1518, %v1514, -inf
    %1532 = vmax.xlane.f32.xlu0 %v1531
    %v1533 = vpop.xlane.xlu0 %1532
    %v1534 = vsel %vm1518, %v1515, -inf
    %1535 = vmax.xlane.f32.xlu0 %v1534
    %v1536 = vpop.xlane.xlu0 %1535
    %v1537 = vsel %vm1518, %v1516, -inf
    %1538 = vmax.xlane.f32.xlu0 %v1537
    %v1539 = vpop.xlane.xlu0 %1538
    %v1540 = vsel %vm1518, %v1517, -inf
    %1541 = vmax.xlane.f32.xlu0 %v1540
    %v1542 = vpop.xlane.xlu0 %1541
    %v1543 = vsub.f32 %v1510, %v1521
    %v1544 = vsub.f32 %v1511, %v1524
    %v1545 = vsub.f32 %v1512, %v1527
    %v1546 = vsub.f32 %v1513, %v1530
    %v1547 = vsub.f32 %v1514, %v1533
    %v1548 = vsub.f32 %v1515, %v1536
    %v1549 = vsub.f32 %v1516, %v1539
    %v1550 = vsub.f32 %v1517, %v1542
    %v1551 = vmul.f32 %v1543, 1.442695
    %v1552 = vpow.pop %v1551
    %v1553 = vmul.f32 %v1544, 1.442695
    %v1554 = vpow.pop %v1553
    %v1555 = vmul.f32 %v1545, 1.442695
    %v1556 = vpow.pop %v1555
    %v1557 = vmul.f32 %v1546, 1.442695
    %v1558 = vpow.pop %v1557
    %v1559 = vmul.f32 %v1547, 1.442695
    %v1560 = vpow.pop %v1559
    %v1561 = vmul.f32 %v1548, 1.442695
    %v1562 = vpow.pop %v1561
    %v1563 = vmul.f32 %v1549, 1.442695
    %v1564 = vpow.pop %v1563
    %v1565 = vmul.f32 %v1550, 1.442695
    %v1566 = vpow.pop %v1565
    %v1567 = vsel %vm1518, %v1552, 0.0
    %1568 = vadd.xlane.f32.xlu0 %v1567
    %v1569 = vpop.xlane.xlu0 %1568
    %v1570 = vsel %vm1518, %v1554, 0.0
    %1571 = vadd.xlane.f32.xlu0 %v1570
    %v1572 = vpop.xlane.xlu0 %1571
    %v1573 = vsel %vm1518, %v1556, 0.0
    %1574 = vadd.xlane.f32.xlu0 %v1573
    %v1575 = vpop.xlane.xlu0 %1574
    %v1576 = vsel %vm1518, %v1558, 0.0
    %1577 = vadd.xlane.f32.xlu0 %v1576
    %v1578 = vpop.xlane.xlu0 %1577
    %v1579 = vsel %vm1518, %v1560, 0.0
    %1580 = vadd.xlane.f32.xlu0 %v1579
    %v1581 = vpop.xlane.xlu0 %1580
    %v1582 = vsel %vm1518, %v1562, 0.0
    %1583 = vadd.xlane.f32.xlu0 %v1582
    %v1584 = vpop.xlane.xlu0 %1583
    %v1585 = vsel %vm1518, %v1564, 0.0
    %1586 = vadd.xlane.f32.xlu0 %v1585
    %v1587 = vpop.xlane.xlu0 %1586
    %v1588 = vsel %vm1518, %v1566, 0.0
    %1589 = vadd.xlane.f32.xlu0 %v1588
    %v1590 = vpop.xlane.xlu0 %1589
    %v1591 = vrcp.pop %v1569
    %v1592 = vmul.f32 %v1552, %v1591
    %v1593 = vrcp.pop %v1572
    %v1594 = vmul.f32 %v1554, %v1593
    %v1595 = vrcp.pop %v1575
    %v1596 = vmul.f32 %v1556, %v1595
    %v1597 = vrcp.pop %v1578
    %v1598 = vmul.f32 %v1558, %v1597
    %v1599 = vrcp.pop %v1581
    %v1600 = vmul.f32 %v1560, %v1599
    %v1601 = vrcp.pop %v1584
    %v1602 = vmul.f32 %v1562, %v1601
    %v1603 = vrcp.pop %v1587
    %v1604 = vmul.f32 %v1564, %v1603
    %v1605 = vrcp.pop %v1590
    %v1606 = vmul.f32 %v1566, %v1605
    %v1608 = vsel %vm1518, %v1592, 0
    %v1611 = vsel %vm1518, %v1594, 0
    %v1614 = vsel %vm1518, %v1596, 0
    %v1617 = vsel %vm1518, %v1598, 0
    %1619 = vmatprep.subr.mxu0 0.0
    %v1620 = vand.u32 %v59, 4294901760
    %1621 = vmatpush1.msra.mxu0 %v1620
    %1622 = vmatprep.subr.mxu0 0.0
    %v1623 = vand.u32 %v60, 4294901760
    %1624 = vmatpush1.msra.mxu0 %v1623
    %1625 = vmatprep.subr.mxu0 0.0
    %v1626 = vand.u32 %v61, 4294901760
    %1627 = vmatpush1.msra.mxu0 %v1626
    %1628 = vmatprep.subr.mxu0 0.0
    %v1629 = vand.u32 %v62, 4294901760
    %1630 = vmatpush1.msra.mxu0 %v1629
    %1631 = vmatprep.subr.mxu0 0.0
    %1632 = vmatpush1.msra.mxu0 0.0
    %1633 = vmatprep.subr.mxu0 0.0
    %1634 = vmatpush1.msra.mxu0 0.0
    %1635 = vmatprep.subr.mxu0 0.0
    %1636 = vmatpush1.msra.mxu0 0.0
    %1637 = vmatprep.subr.mxu0 0.0
    %1638 = vmatpush1.msra.mxu0 0.0
    %1639 = vmatprep.subr.mxu0 0.0
    %1640 = vmatpush1.msra.mxu0 0.0
    %1641 = vmatprep.subr.mxu0 0.0
    %1642 = vmatpush1.msra.mxu0 0.0
    %1643 = vmatprep.subr.mxu0 0.0
    %1644 = vmatpush1.msra.mxu0 0.0
    %1645 = vmatprep.subr.mxu0 0.0
    %1646 = vmatpush1.msra.mxu0 0.0
    %1647 = vmatprep.subr.mxu0 0.0
    %1648 = vmatpush1.msra.mxu0 0.0
    %1649 = vmatprep.subr.mxu0 0.0
    %1650 = vmatpush1.msra.mxu0 0.0
    %1651 = vmatprep.subr.mxu0 0.0
    %1652 = vmatpush1.msra.mxu0 0.0
    %1653 = vmatprep.subr.mxu0 0.0
    %1654 = vmatpush1.msra.mxu0 0.0
    %1655 = vmatprep.subr.mxu0 0.0
    %1656 = vmatpush1.msra.mxu0 0.0
    %1657 = vmatprep.subr.mxu0 0.0
    %1658 = vmatpush1.msra.mxu0 0.0
    %1659 = vmatprep.subr.mxu0 0.0
    %1660 = vmatpush1.msra.mxu0 0.0
    %1661 = vmatprep.subr.mxu0 0.0
    %1662 = vmatpush1.msra.mxu0 0.0
    %1663 = vmatprep.subr.mxu0 0.0
    %1664 = vmatpush1.msra.mxu0 0.0
    %1665 = vmatprep.subr.mxu0 0.0
    %1666 = vmatpush1.msra.mxu0 0.0
    %1667 = vmatprep.subr.mxu0 0.0
    %1668 = vmatpush1.msra.mxu0 0.0
    %1669 = vmatprep.subr.mxu0 0.0
    %1670 = vmatpush1.msra.mxu0 0.0
    %1671 = vmatprep.subr.mxu0 0.0
    %1672 = vmatpush1.msra.mxu0 0.0
    %1673 = vmatprep.subr.mxu0 0.0
    %1674 = vmatpush1.msra.mxu0 0.0
    %1675 = vmatprep.subr.mxu0 0.0
    %1676 = vmatpush1.msra.mxu0 0.0
    %1677 = vmatprep.subr.mxu0 0.0
    %1678 = vmatpush1.msra.mxu0 0.0
    %1679 = vmatprep.subr.mxu0 0.0
    %1680 = vmatpush1.msra.mxu0 0.0
    %1681 = vmatprep.subr.mxu0 0.0
    %1682 = vmatpush1.msra.mxu0 0.0
    %1683 = vmatprep.subr.mxu0 0.0
    %1684 = vmatpush1.msra.mxu0 0.0
    %1685 = vmatprep.subr.mxu0 0.0
    %1686 = vmatpush1.msra.mxu0 0.0
    %1687 = vmatprep.mubr.f32.mxu0 0.0
    %v1688 = vand.u32 %v1608, 4294901760
    %v1689 = vsub.f32 %v1608, %v1688
    %v1690 = vand.u32 %v1689, 4294901760
    %v1691 = vsub.f32 %v1689, %v1690
    %v1692 = vand.u32 %v1691, 4294901760
    %1693 = vmatmul.mubr.f32.gmra.mrb[0].mxu0 %v1692
    %v1694 = vpop.f32.mrb[0].mxu0
    %v1695 = vadd.f32 0.0, %v1694
    %v1696 = vpop.f32.mrb[0].mxu0
    %1697 = vmatprep.mubr.f32.mxu0 0.0
    %v1698 = vand.u32 %v1611, 4294901760
    %v1699 = vsub.f32 %v1611, %v1698
    %v1700 = vand.u32 %v1699, 4294901760
    %v1701 = vsub.f32 %v1699, %v1700
    %v1702 = vand.u32 %v1701, 4294901760
    %1703 = vmatmul.mubr.f32.gmra.mrb[0].mxu0 %v1702
    %v1704 = vpop.f32.mrb[0].mxu0
    %v1705 = vadd.f32 0.0, %v1704
    %v1706 = vpop.f32.mrb[0].mxu0
    %1707 = vmatprep.mubr.f32.mxu0 0.0
    %v1708 = vand.u32 %v1614, 4294901760
    %v1709 = vsub.f32 %v1614, %v1708
    %v1710 = vand.u32 %v1709, 4294901760
    %v1711 = vsub.f32 %v1709, %v1710
    %v1712 = vand.u32 %v1711, 4294901760
    %1713 = vmatmul.mubr.f32.gmra.mrb[0].mxu0 %v1712
    %v1714 = vpop.f32.mrb[0].mxu0
    %v1715 = vadd.f32 0.0, %v1714
    %v1716 = vpop.f32.mrb[0].mxu0
    %1717 = vmatprep.mubr.f32.mxu0 0.0
    %v1718 = vand.u32 %v1617, 4294901760
    %v1719 = vsub.f32 %v1617, %v1718
    %v1720 = vand.u32 %v1719, 4294901760
    %v1721 = vsub.f32 %v1719, %v1720
    %v1722 = vand.u32 %v1721, 4294901760
    %1723 = vmatmul.mubr.f32.gmra.mrb[0].mxu0 %v1722
    %v1724 = vpop.f32.mrb[0].mxu0
    %v1725 = vadd.f32 0.0, %v1724
    %v1726 = vpop.f32.mrb[0].mxu0
    %1727 = vdwg.mxu0
    %1728 = vmatprep.subr.mxu0 0.0
    %v1729 = vand.u32 %v59, 4294901760
    %v1730 = vsub.f32 %v59, %v1729
    %v1731 = vand.u32 %v1730, 4294901760
    %v1732 = vsub.f32 %v1730, %v1731
    %v1733 = vand.u32 %v1732, 4294901760
    %1734 = vmatpush1.msra.mxu0 %v1733
    %1735 = vmatprep.subr.mxu0 0.0
    %v1736 = vand.u32 %v60, 4294901760
    %v1737 = vsub.f32 %v60, %v1736
    %v1738 = vand.u32 %v1737, 4294901760
    %v1739 = vsub.f32 %v1737, %v1738
    %v1740 = vand.u32 %v1739, 4294901760
    %1741 = vmatpush1.msra.mxu0 %v1740
    %1742 = vmatprep.subr.mxu0 0.0
    %v1743 = vand.u32 %v61, 4294901760
    %v1744 = vsub.f32 %v61, %v1743
    %v1745 = vand.u32 %v1744, 4294901760
    %v1746 = vsub.f32 %v1744, %v1745
    %v1747 = vand.u32 %v1746, 4294901760
    %1748 = vmatpush1.msra.mxu0 %v1747
    %1749 = vmatprep.subr.mxu0 0.0
    %v1750 = vand.u32 %v62, 4294901760
    %v1751 = vsub.f32 %v62, %v1750
    %v1752 = vand.u32 %v1751, 4294901760
    %v1753 = vsub.f32 %v1751, %v1752
    %v1754 = vand.u32 %v1753, 4294901760
    %1755 = vmatpush1.msra.mxu0 %v1754
    %1756 = vmatprep.subr.mxu0 0.0
    %1757 = vmatpush1.msra.mxu0 0.0
    %1758 = vmatprep.subr.mxu0 0.0
    %1759 = vmatpush1.msra.mxu0 0.0
    %1760 = vmatprep.subr.mxu0 0.0
    %1761 = vmatpush1.msra.mxu0 0.0
    %1762 = vmatprep.subr.mxu0 0.0
    %1763 = vmatpush1.msra.mxu0 0.0
    %1764 = vmatprep.subr.mxu0 0.0
    %1765 = vmatpush1.msra.mxu0 0.0
    %1766 = vmatprep.subr.mxu0 0.0
    %1767 = vmatpush1.msra.mxu0 0.0
    %1768 = vmatprep.subr.mxu0 0.0
    %1769 = vmatpush1.msra.mxu0 0.0
    %1770 = vmatprep.subr.mxu0 0.0
    %1771 = vmatpush1.msra.mxu0 0.0
    %1772 = vmatprep.subr.mxu0 0.0
    %1773 = vmatpush1.msra.mxu0 0.0
    %1774 = vmatprep.subr.mxu0 0.0
    %1775 = vmatpush1.msra.mxu0 0.0
    %1776 = vmatprep.subr.mxu0 0.0
    %1777 = vmatpush1.msra.mxu0 0.0
    %1778 = vmatprep.subr.mxu0 0.0
    %1779 = vmatpush1.msra.mxu0 0.0
    %1780 = vmatprep.subr.mxu0 0.0
    %1781 = vmatpush1.msra.mxu0 0.0
    %1782 = vmatprep.subr.mxu0 0.0
    %1783 = vmatpush1.msra.mxu0 0.0
    %1784 = vmatprep.subr.mxu0 0.0
    %1785 = vmatpush1.msra.mxu0 0.0
    %1786 = vmatprep.subr.mxu0 0.0
    %1787 = vmatpush1.msra.mxu0 0.0
    %1788 = vmatprep.subr.mxu0 0.0
    %1789 = vmatpush1.msra.mxu0 0.0
    %1790 = vmatprep.subr.mxu0 0.0
    %1791 = vmatpush1.msra.mxu0 0.0
    %1792 = vmatprep.subr.mxu0 0.0
    %1793 = vmatpush1.msra.mxu0 0.0
    %1794 = vmatprep.subr.mxu0 0.0
    %1795 = vmatpush1.msra.mxu0 0.0
    %1796 = vmatprep.subr.mxu0 0.0
    %1797 = vmatpush1.msra.mxu0 0.0
    %1798 = vmatprep.subr.mxu0 0.0
    %1799 = vmatpush1.msra.mxu0 0.0
    %1800 = vmatprep.subr.mxu0 0.0
    %1801 = vmatpush1.msra.mxu0 0.0
    %1802 = vmatprep.subr.mxu0 0.0
    %1803 = vmatpush1.msra.mxu0 0.0
    %1804 = vmatprep.subr.mxu0 0.0
    %1805 = vmatpush1.msra.mxu0 0.0
    %1806 = vmatprep.subr.mxu0 0.0
    %1807 = vmatpush1.msra.mxu0 0.0
    %1808 = vmatprep.subr.mxu0 0.0
    %1809 = vmatpush1.msra.mxu0 0.0
    %1810 = vmatprep.subr.mxu0 0.0
    %1811 = vmatpush1.msra.mxu0 0.0
    %1812 = vmatprep.mubr.f32.mxu0 0.0
    %v1813 = vand.u32 %v1608, 4294901760
    %1814 = vmatmul.mubr.f32.gmra.mrb[0].mxu0 %v1813
    %v1815 = vpop.f32.mrb[0].mxu0
    %v1816 = vadd.f32 %v1695, %v1815
    %v1817 = vpop.f32.mrb[0].mxu0
    %1818 = vmatprep.mubr.f32.mxu0 0.0
    %v1819 = vand.u32 %v1611, 4294901760
    %1820 = vmatmul.mubr.f32.gmra.mrb[0].mxu0 %v1819
    %v1821 = vpop.f32.mrb[0].mxu0
    %v1822 = vadd.f32 %v1705, %v1821
    %v1823 = vpop.f32.mrb[0].mxu0
    %1824 = vmatprep.mubr.f32.mxu0 0.0
    %v1825 = vand.u32 %v1614, 4294901760
    %1826 = vmatmul.mubr.f32.gmra.mrb[0].mxu0 %v1825
    %v1827 = vpop.f32.mrb[0].mxu0
    %v1828 = vadd.f32 %v1715, %v1827
    %v1829 = vpop.f32.mrb[0].mxu0
    %1830 = vmatprep.mubr.f32.mxu0 0.0
    %v1831 = vand.u32 %v1617, 4294901760
    %1832 = vmatmul.mubr.f32.gmra.mrb[0].mxu0 %v1831
    %v1833 = vpop.f32.mrb[0].mxu0
    %v1834 = vadd.f32 %v1725, %v1833
    %v1835 = vpop.f32.mrb[0].mxu0
    %1836 = vdwg.mxu0
    %1837 = vmatprep.subr.mxu0 0.0
    %v1838 = vand.u32 %v59, 4294901760
    %v1839 = vsub.f32 %v59, %v1838
    %1840 = vmatpush1.msra.mxu0 %v1839
    %1841 = vmatprep.subr.mxu0 0.0
    %v1842 = vand.u32 %v60, 4294901760
    %v1843 = vsub.f32 %v60, %v1842
    %1844 = vmatpush1.msra.mxu0 %v1843
    %1845 = vmatprep.subr.mxu0 0.0
    %v1846 = vand.u32 %v61, 4294901760
    %v1847 = vsub.f32 %v61, %v1846
    %1848 = vmatpush1.msra.mxu0 %v1847
    %1849 = vmatprep.subr.mxu0 0.0
    %v1850 = vand.u32 %v62, 4294901760
    %v1851 = vsub.f32 %v62, %v1850
    %1852 = vmatpush1.msra.mxu0 %v1851
    %1853 = vmatprep.subr.mxu0 0.0
    %1854 = vmatpush1.msra.mxu0 0.0
    %1855 = vmatprep.subr.mxu0 0.0
    %1856 = vmatpush1.msra.mxu0 0.0
    %1857 = vmatprep.subr.mxu0 0.0
    %1858 = vmatpush1.msra.mxu0 0.0
    %1859 = vmatprep.subr.mxu0 0.0
    %1860 = vmatpush1.msra.mxu0 0.0
    %1861 = vmatprep.subr.mxu0 0.0
    %1862 = vmatpush1.msra.mxu0 0.0
    %1863 = vmatprep.subr.mxu0 0.0
    %1864 = vmatpush1.msra.mxu0 0.0
    %1865 = vmatprep.subr.mxu0 0.0
    %1866 = vmatpush1.msra.mxu0 0.0
    %1867 = vmatprep.subr.mxu0 0.0
    %1868 = vmatpush1.msra.mxu0 0.0
    %1869 = vmatprep.subr.mxu0 0.0
    %1870 = vmatpush1.msra.mxu0 0.0
    %1871 = vmatprep.subr.mxu0 0.0
    %1872 = vmatpush1.msra.mxu0 0.0
    %1873 = vmatprep.subr.mxu0 0.0
    %1874 = vmatpush1.msra.mxu0 0.0
    %1875 = vmatprep.subr.mxu0 0.0
    %1876 = vmatpush1.msra.mxu0 0.0
    %1877 = vmatprep.subr.mxu0 0.0
    %1878 = vmatpush1.msra.mxu0 0.0
    %1879 = vmatprep.subr.mxu0 0.0
    %1880 = vmatpush1.msra.mxu0 0.0
    %1881 = vmatprep.subr.mxu0 0.0
    %1882 = vmatpush1.msra.mxu0 0.0
    %1883 = vmatprep.subr.mxu0 0.0
    %1884 = vmatpush1.msra.mxu0 0.0
    %1885 = vmatprep.subr.mxu0 0.0
    %1886 = vmatpush1.msra.mxu0 0.0
    %1887 = vmatprep.subr.mxu0 0.0
    %1888 = vmatpush1.msra.mxu0 0.0
    %1889 = vmatprep.subr.mxu0 0.0
    %1890 = vmatpush1.msra.mxu0 0.0
    %1891 = vmatprep.subr.mxu0 0.0
    %1892 = vmatpush1.msra.mxu0 0.0
    %1893 = vmatprep.subr.mxu0 0.0
    %1894 = vmatpush1.msra.mxu0 0.0
    %1895 = vmatprep.subr.mxu0 0.0
    %1896 = vmatpush1.msra.mxu0 0.0
    %1897 = vmatprep.subr.mxu0 0.0
    %1898 = vmatpush1.msra.mxu0 0.0
    %1899 = vmatprep.subr.mxu0 0.0
    %1900 = vmatpush1.msra.mxu0 0.0
    %1901 = vmatprep.subr.mxu0 0.0
    %1902 = vmatpush1.msra.mxu0 0.0
    %1903 = vmatprep.subr.mxu0 0.0
    %1904 = vmatpush1.msra.mxu0 0.0
    %1905 = vmatprep.subr.mxu0 0.0
    %1906 = vmatpush1.msra.mxu0 0.0
    %1907 = vmatprep.subr.mxu0 0.0
    %1908 = vmatpush1.msra.mxu0 0.0
    %1909 = vmatprep.mubr.f32.mxu0 0.0
    %v1910 = vand.u32 %v1608, 4294901760
    %v1911 = vsub.f32 %v1608, %v1910
    %1912 = vmatmul.mubr.f32.gmra.mrb[0].mxu0 %v1911
    %v1913 = vpop.f32.mrb[0].mxu0
    %v1914 = vadd.f32 %v1816, %v1913
    %v1915 = vpop.f32.mrb[0].mxu0
    %1916 = vmatprep.mubr.f32.mxu0 0.0
    %v1917 = vand.u32 %v1611, 4294901760
    %v1918 = vsub.f32 %v1611, %v1917
    %1919 = vmatmul.mubr.f32.gmra.mrb[0].mxu0 %v1918
    %v1920 = vpop.f32.mrb[0].mxu0
    %v1921 = vadd.f32 %v1822, %v1920
    %v1922 = vpop.f32.mrb[0].mxu0
    %1923 = vmatprep.mubr.f32.mxu0 0.0
    %v1924 = vand.u32 %v1614, 4294901760
    %v1925 = vsub.f32 %v1614, %v1924
    %1926 = vmatmul.mubr.f32.gmra.mrb[0].mxu0 %v1925
    %v1927 = vpop.f32.mrb[0].mxu0
    %v1928 = vadd.f32 %v1828, %v1927
    %v1929 = vpop.f32.mrb[0].mxu0
    %1930 = vmatprep.mubr.f32.mxu0 0.0
    %v1931 = vand.u32 %v1617, 4294901760
    %v1932 = vsub.f32 %v1617, %v1931
    %1933 = vmatmul.mubr.f32.gmra.mrb[0].mxu0 %v1932
    %v1934 = vpop.f32.mrb[0].mxu0
    %v1935 = vadd.f32 %v1834, %v1934
    %v1936 = vpop.f32.mrb[0].mxu0
    %1937 = vdwg.mxu0
    %1938 = vmatprep.subr.mxu0 0.0
    %v1939 = vand.u32 %v59, 4294901760
    %1940 = vmatpush1.msra.mxu0 %v1939
    %1941 = vmatprep.subr.mxu0 0.0
    %v1942 = vand.u32 %v60, 4294901760
    %1943 = vmatpush1.msra.mxu0 %v1942
    %1944 = vmatprep.subr.mxu0 0.0
    %v1945 = vand.u32 %v61, 4294901760
    %1946 = vmatpush1.msra.mxu0 %v1945
    %1947 = vmatprep.subr.mxu0 0.0
    %v1948 = vand.u32 %v62, 4294901760
    %1949 = vmatpush1.msra.mxu0 %v1948
    %1950 = vmatprep.subr.mxu0 0.0
    %1951 = vmatpush1.msra.mxu0 0.0
    %1952 = vmatprep.subr.mxu0 0.0
    %1953 = vmatpush1.msra.mxu0 0.0
    %1954 = vmatprep.subr.mxu0 0.0
    %1955 = vmatpush1.msra.mxu0 0.0
    %1956 = vmatprep.subr.mxu0 0.0
    %1957 = vmatpush1.msra.mxu0 0.0
    %1958 = vmatprep.subr.mxu0 0.0
    %1959 = vmatpush1.msra.mxu0 0.0
    %1960 = vmatprep.subr.mxu0 0.0
    %1961 = vmatpush1.msra.mxu0 0.0
    %1962 = vmatprep.subr.mxu0 0.0
    %1963 = vmatpush1.msra.mxu0 0.0
    %1964 = vmatprep.subr.mxu0 0.0
    %1965 = vmatpush1.msra.mxu0 0.0
    %1966 = vmatprep.subr.mxu0 0.0
    %1967 = vmatpush1.msra.mxu0 0.0
    %1968 = vmatprep.subr.mxu0 0.0
    %1969 = vmatpush1.msra.mxu0 0.0
    %1970 = vmatprep.subr.mxu0 0.0
    %1971 = vmatpush1.msra.mxu0 0.0
    %1972 = vmatprep.subr.mxu0 0.0
    %1973 = vmatpush1.msra.mxu0 0.0
    %1974 = vmatprep.subr.mxu0 0.0
    %1975 = vmatpush1.msra.mxu0 0.0
    %1976 = vmatprep.subr.mxu0 0.0
    %1977 = vmatpush1.msra.mxu0 0.0
    %1978 = vmatprep.subr.mxu0 0.0
    %1979 = vmatpush1.msra.mxu0 0.0
    %1980 = vmatprep.subr.mxu0 0.0
    %1981 = vmatpush1.msra.mxu0 0.0
    %1982 = vmatprep.subr.mxu0 0.0
    %1983 = vmatpush1.msra.mxu0 0.0
    %1984 = vmatprep.subr.mxu0 0.0
    %1985 = vmatpush1.msra.mxu0 0.0
    %1986 = vmatprep.subr.mxu0 0.0
    %1987 = vmatpush1.msra.mxu0 0.0
    %1988 = vmatprep.subr.mxu0 0.0
    %1989 = vmatpush1.msra.mxu0 0.0
    %1990 = vmatprep.subr.mxu0 0.0
    %1991 = vmatpush1.msra.mxu0 0.0
    %1992 = vmatprep.subr.mxu0 0.0
    %1993 = vmatpush1.msra.mxu0 0.0
    %1994 = vmatprep.subr.mxu0 0.0
    %1995 = vmatpush1.msra.mxu0 0.0
    %1996 = vmatprep.subr.mxu0 0.0
    %1997 = vmatpush1.msra.mxu0 0.0
    %1998 = vmatprep.subr.mxu0 0.0
    %1999 = vmatpush1.msra.mxu0 0.0
    %2000 = vmatprep.subr.mxu0 0.0
    %2001 = vmatpush1.msra.mxu0 0.0
    %2002 = vmatprep.subr.mxu0 0.0
    %2003 = vmatpush1.msra.mxu0 0.0
    %2004 = vmatprep.subr.mxu0 0.0
    %2005 = vmatpush1.msra.mxu0 0.0
    %2006 = vmatprep.mubr.f32.mxu0 0.0
    %v2007 = vand.u32 %v1608, 4294901760
    %v2008 = vsub.f32 %v1608, %v2007
    %v2009 = vand.u32 %v2008, 4294901760
    %2010 = vmatmul.mubr.f32.gmra.mrb[0].mxu0 %v2009
    %v2011 = vpop.f32.mrb[0].mxu0
    %v2012 = vadd.f32 %v1914, %v2011
    %v2013 = vpop.f32.mrb[0].mxu0
    %2014 = vmatprep.mubr.f32.mxu0 0.0
    %v2015 = vand.u32 %v1611, 4294901760
    %v2016 = vsub.f32 %v1611, %v2015
    %v2017 = vand.u32 %v2016, 4294901760
    %2018 = vmatmul.mubr.f32.gmra.mrb[0].mxu0 %v2017
    %v2019 = vpop.f32.mrb[0].mxu0
    %v2020 = vadd.f32 %v1921, %v2019
    %v2021 = vpop.f32.mrb[0].mxu0
    %2022 = vmatprep.mubr.f32.mxu0 0.0
    %v2023 = vand.u32 %v1614, 4294901760
    %v2024 = vsub.f32 %v1614, %v2023
    %v2025 = vand.u32 %v2024, 4294901760
    %2026 = vmatmul.mubr.f32.gmra.mrb[0].mxu0 %v2025
    %v2027 = vpop.f32.mrb[0].mxu0
    %v2028 = vadd.f32 %v1928, %v2027
    %v2029 = vpop.f32.mrb[0].mxu0
    %2030 = vmatprep.mubr.f32.mxu0 0.0
    %v2031 = vand.u32 %v1617, 4294901760
    %v2032 = vsub.f32 %v1617, %v2031
    %v2033 = vand.u32 %v2032, 4294901760
    %2034 = vmatmul.mubr.f32.gmra.mrb[0].mxu0 %v2033
    %v2035 = vpop.f32.mrb[0].mxu0
    %v2036 = vadd.f32 %v1935, %v2035
    %v2037 = vpop.f32.mrb[0].mxu0
    %2038 = vdwg.mxu0
    %2039 = vmatprep.subr.mxu0 0.0
    %v2040 = vand.u32 %v59, 4294901760
    %v2041 = vsub.f32 %v59, %v2040
    %v2042 = vand.u32 %v2041, 4294901760
    %2043 = vmatpush1.msra.mxu0 %v2042
    %2044 = vmatprep.subr.mxu0 0.0
    %v2045 = vand.u32 %v60, 4294901760
    %v2046 = vsub.f32 %v60, %v2045
    %v2047 = vand.u32 %v2046, 4294901760
    %2048 = vmatpush1.msra.mxu0 %v2047
    %2049 = vmatprep.subr.mxu0 0.0
    %v2050 = vand.u32 %v61, 4294901760
    %v2051 = vsub.f32 %v61, %v2050
    %v2052 = vand.u32 %v2051, 4294901760
    %2053 = vmatpush1.msra.mxu0 %v2052
    %2054 = vmatprep.subr.mxu0 0.0
    %v2055 = vand.u32 %v62, 4294901760
    %v2056 = vsub.f32 %v62, %v2055
    %v2057 = vand.u32 %v2056, 4294901760
    %2058 = vmatpush1.msra.mxu0 %v2057
    %2059 = vmatprep.subr.mxu0 0.0
    %2060 = vmatpush1.msra.mxu0 0.0
    %2061 = vmatprep.subr.mxu0 0.0
    %2062 = vmatpush1.msra.mxu0 0.0
    %2063 = vmatprep.subr.mxu0 0.0
    %2064 = vmatpush1.msra.mxu0 0.0
    %2065 = vmatprep.subr.mxu0 0.0
    %2066 = vmatpush1.msra.mxu0 0.0
    %2067 = vmatprep.subr.mxu0 0.0
    %2068 = vmatpush1.msra.mxu0 0.0
    %2069 = vmatprep.subr.mxu0 0.0
    %2070 = vmatpush1.msra.mxu0 0.0
    %2071 = vmatprep.subr.mxu0 0.0
    %2072 = vmatpush1.msra.mxu0 0.0
    %2073 = vmatprep.subr.mxu0 0.0
    %2074 = vmatpush1.msra.mxu0 0.0
    %2075 = vmatprep.subr.mxu0 0.0
    %2076 = vmatpush1.msra.mxu0 0.0
    %2077 = vmatprep.subr.mxu0 0.0
    %2078 = vmatpush1.msra.mxu0 0.0
    %2079 = vmatprep.subr.mxu0 0.0
    %2080 = vmatpush1.msra.mxu0 0.0
    %2081 = vmatprep.subr.mxu0 0.0
    %2082 = vmatpush1.msra.mxu0 0.0
    %2083 = vmatprep.subr.mxu0 0.0
    %2084 = vmatpush1.msra.mxu0 0.0
    %2085 = vmatprep.subr.mxu0 0.0
    %2086 = vmatpush1.msra.mxu0 0.0
    %2087 = vmatprep.subr.mxu0 0.0
    %2088 = vmatpush1.msra.mxu0 0.0
    %2089 = vmatprep.subr.mxu0 0.0
    %2090 = vmatpush1.msra.mxu0 0.0
    %2091 = vmatprep.subr.mxu0 0.0
    %2092 = vmatpush1.msra.mxu0 0.0
    %2093 = vmatprep.subr.mxu0 0.0
    %2094 = vmatpush1.msra.mxu0 0.0
    %2095 = vmatprep.subr.mxu0 0.0
    %2096 = vmatpush1.msra.mxu0 0.0
    %2097 = vmatprep.subr.mxu0 0.0
    %2098 = vmatpush1.msra.mxu0 0.0
    %2099 = vmatprep.subr.mxu0 0.0
    %2100 = vmatpush1.msra.mxu0 0.0
    %2101 = vmatprep.subr.mxu0 0.0
    %2102 = vmatpush1.msra.mxu0 0.0
    %2103 = vmatprep.subr.mxu0 0.0
    %2104 = vmatpush1.msra.mxu0 0.0
    %2105 = vmatprep.subr.mxu0 0.0
    %2106 = vmatpush1.msra.mxu0 0.0
    %2107 = vmatprep.subr.mxu0 0.0
    %2108 = vmatpush1.msra.mxu0 0.0
    %2109 = vmatprep.subr.mxu0 0.0
    %2110 = vmatpush1.msra.mxu0 0.0
    %2111 = vmatprep.subr.mxu0 0.0
    %2112 = vmatpush1.msra.mxu0 0.0
    %2113 = vmatprep.subr.mxu0 0.0
    %2114 = vmatpush1.msra.mxu0 0.0
    %2115 = vmatprep.mubr.f32.mxu0 0.0
    %v2116 = vand.u32 %v1608, 4294901760
    %2117 = vmatmul.mubr.f32.gmra.mrb[0].mxu0 %v2116
    %v2118 = vpop.f32.mrb[0].mxu0
    %v2119 = vadd.f32 %v2012, %v2118
    %v2120 = vpop.f32.mrb[0].mxu0
    %2121 = vmatprep.mubr.f32.mxu0 0.0
    %v2122 = vand.u32 %v1611, 4294901760
    %2123 = vmatmul.mubr.f32.gmra.mrb[0].mxu0 %v2122
    %v2124 = vpop.f32.mrb[0].mxu0
    %v2125 = vadd.f32 %v2020, %v2124
    %v2126 = vpop.f32.mrb[0].mxu0
    %2127 = vmatprep.mubr.f32.mxu0 0.0
    %v2128 = vand.u32 %v1614, 4294901760
    %2129 = vmatmul.mubr.f32.gmra.mrb[0].mxu0 %v2128
    %v2130 = vpop.f32.mrb[0].mxu0
    %v2131 = vadd.f32 %v2028, %v2130
    %v2132 = vpop.f32.mrb[0].mxu0
    %2133 = vmatprep.mubr.f32.mxu0 0.0
    %v2134 = vand.u32 %v1617, 4294901760
    %2135 = vmatmul.mubr.f32.gmra.mrb[0].mxu0 %v2134
    %v2136 = vpop.f32.mrb[0].mxu0
    %v2137 = vadd.f32 %v2036, %v2136
    %v2138 = vpop.f32.mrb[0].mxu0
    %2139 = vdwg.mxu0
    %2140 = vmatprep.subr.mxu0 0.0
    %v2141 = vand.u32 %v59, 4294901760
    %2142 = vmatpush1.msra.mxu0 %v2141
    %2143 = vmatprep.subr.mxu0 0.0
    %v2144 = vand.u32 %v60, 4294901760
    %2145 = vmatpush1.msra.mxu0 %v2144
    %2146 = vmatprep.subr.mxu0 0.0
    %v2147 = vand.u32 %v61, 4294901760
    %2148 = vmatpush1.msra.mxu0 %v2147
    %2149 = vmatprep.subr.mxu0 0.0
    %v2150 = vand.u32 %v62, 4294901760
    %2151 = vmatpush1.msra.mxu0 %v2150
    %2152 = vmatprep.subr.mxu0 0.0
    %2153 = vmatpush1.msra.mxu0 0.0
    %2154 = vmatprep.subr.mxu0 0.0
    %2155 = vmatpush1.msra.mxu0 0.0
    %2156 = vmatprep.subr.mxu0 0.0
    %2157 = vmatpush1.msra.mxu0 0.0
    %2158 = vmatprep.subr.mxu0 0.0
    %2159 = vmatpush1.msra.mxu0 0.0
    %2160 = vmatprep.subr.mxu0 0.0
    %2161 = vmatpush1.msra.mxu0 0.0
    %2162 = vmatprep.subr.mxu0 0.0
    %2163 = vmatpush1.msra.mxu0 0.0
    %2164 = vmatprep.subr.mxu0 0.0
    %2165 = vmatpush1.msra.mxu0 0.0
    %2166 = vmatprep.subr.mxu0 0.0
    %2167 = vmatpush1.msra.mxu0 0.0
    %2168 = vmatprep.subr.mxu0 0.0
    %2169 = vmatpush1.msra.mxu0 0.0
    %2170 = vmatprep.subr.mxu0 0.0
    %2171 = vmatpush1.msra.mxu0 0.0
    %2172 = vmatprep.subr.mxu0 0.0
    %2173 = vmatpush1.msra.mxu0 0.0
    %2174 = vmatprep.subr.mxu0 0.0
    %2175 = vmatpush1.msra.mxu0 0.0
    %2176 = vmatprep.subr.mxu0 0.0
    %2177 = vmatpush1.msra.mxu0 0.0
    %2178 = vmatprep.subr.mxu0 0.0
    %2179 = vmatpush1.msra.mxu0 0.0
    %2180 = vmatprep.subr.mxu0 0.0
    %2181 = vmatpush1.msra.mxu0 0.0
    %2182 = vmatprep.subr.mxu0 0.0
    %2183 = vmatpush1.msra.mxu0 0.0
    %2184 = vmatprep.subr.mxu0 0.0
    %2185 = vmatpush1.msra.mxu0 0.0
    %2186 = vmatprep.subr.mxu0 0.0
    %2187 = vmatpush1.msra.mxu0 0.0
    %2188 = vmatprep.subr.mxu0 0.0
    %2189 = vmatpush1.msra.mxu0 0.0
    %2190 = vmatprep.subr.mxu0 0.0
    %2191 = vmatpush1.msra.mxu0 0.0
    %2192 = vmatprep.subr.mxu0 0.0
    %2193 = vmatpush1.msra.mxu0 0.0
    %2194 = vmatprep.subr.mxu0 0.0
    %2195 = vmatpush1.msra.mxu0 0.0
    %2196 = vmatprep.subr.mxu0 0.0
    %2197 = vmatpush1.msra.mxu0 0.0
    %2198 = vmatprep.subr.mxu0 0.0
    %2199 = vmatpush1.msra.mxu0 0.0
    %2200 = vmatprep.subr.mxu0 0.0
    %2201 = vmatpush1.msra.mxu0 0.0
    %2202 = vmatprep.subr.mxu0 0.0
    %2203 = vmatpush1.msra.mxu0 0.0
    %2204 = vmatprep.subr.mxu0 0.0
    %2205 = vmatpush1.msra.mxu0 0.0
    %2206 = vmatprep.subr.mxu0 0.0
    %2207 = vmatpush1.msra.mxu0 0.0
    %2208 = vmatprep.mubr.f32.mxu0 0.0
    %v2209 = vand.u32 %v1608, 4294901760
    %2210 = vmatmul.mubr.f32.gmra.mrb[0].mxu0 %v2209
    %v2211 = vpop.f32.mrb[0].mxu0
    %v2212 = vadd.f32 %v2119, %v2211
    %v2213 = vpop.f32.mrb[0].mxu0
    %2214 = vmatprep.mubr.f32.mxu0 0.0
    %v2215 = vand.u32 %v1611, 4294901760
    %2216 = vmatmul.mubr.f32.gmra.mrb[0].mxu0 %v2215
    %v2217 = vpop.f32.mrb[0].mxu0
    %v2218 = vadd.f32 %v2125, %v2217
    %v2219 = vpop.f32.mrb[0].mxu0
    %2220 = vmatprep.mubr.f32.mxu0 0.0
    %v2221 = vand.u32 %v1614, 4294901760
    %2222 = vmatmul.mubr.f32.gmra.mrb[0].mxu0 %v2221
    %v2223 = vpop.f32.mrb[0].mxu0
    %v2224 = vadd.f32 %v2131, %v2223
    %v2225 = vpop.f32.mrb[0].mxu0
    %2226 = vmatprep.mubr.f32.mxu0 0.0
    %v2227 = vand.u32 %v1617, 4294901760
    %2228 = vmatmul.mubr.f32.gmra.mrb[0].mxu0 %v2227
    %v2229 = vpop.f32.mrb[0].mxu0
    %v2230 = vadd.f32 %v2137, %v2229
    %v2231 = vpop.f32.mrb[0].mxu0
    %2232 = vdwg.mxu0
    %v2234 = vsel %vm1518, %v1600, 0
    %v2237 = vsel %vm1518, %v1602, 0
    %v2240 = vsel %vm1518, %v1604, 0
    %v2243 = vsel %vm1518, %v1606, 0
    %2245 = vmatprep.subr.mxu0 0.0
    %v2246 = vand.u32 %v63, 4294901760
    %2247 = vmatpush1.msra.mxu0 %v2246
    %2248 = vmatprep.subr.mxu0 0.0
    %v2249 = vand.u32 %v64, 4294901760
    %2250 = vmatpush1.msra.mxu0 %v2249
    %2251 = vmatprep.subr.mxu0 0.0
    %v2252 = vand.u32 %v65, 4294901760
    %2253 = vmatpush1.msra.mxu0 %v2252
    %2254 = vmatprep.subr.mxu0 0.0
    %v2255 = vand.u32 %v66, 4294901760
    %2256 = vmatpush1.msra.mxu0 %v2255
    %2257 = vmatprep.subr.mxu0 0.0
    %2258 = vmatpush1.msra.mxu0 0.0
    %2259 = vmatprep.subr.mxu0 0.0
    %2260 = vmatpush1.msra.mxu0 0.0
    %2261 = vmatprep.subr.mxu0 0.0
    %2262 = vmatpush1.msra.mxu0 0.0
    %2263 = vmatprep.subr.mxu0 0.0
    %2264 = vmatpush1.msra.mxu0 0.0
    %2265 = vmatprep.subr.mxu0 0.0
    %2266 = vmatpush1.msra.mxu0 0.0
    %2267 = vmatprep.subr.mxu0 0.0
    %2268 = vmatpush1.msra.mxu0 0.0
    %2269 = vmatprep.subr.mxu0 0.0
    %2270 = vmatpush1.msra.mxu0 0.0
    %2271 = vmatprep.subr.mxu0 0.0
    %2272 = vmatpush1.msra.mxu0 0.0
    %2273 = vmatprep.subr.mxu0 0.0
    %2274 = vmatpush1.msra.mxu0 0.0
    %2275 = vmatprep.subr.mxu0 0.0
    %2276 = vmatpush1.msra.mxu0 0.0
    %2277 = vmatprep.subr.mxu0 0.0
    %2278 = vmatpush1.msra.mxu0 0.0
    %2279 = vmatprep.subr.mxu0 0.0
    %2280 = vmatpush1.msra.mxu0 0.0
    %2281 = vmatprep.subr.mxu0 0.0
    %2282 = vmatpush1.msra.mxu0 0.0
    %2283 = vmatprep.subr.mxu0 0.0
    %2284 = vmatpush1.msra.mxu0 0.0
    %2285 = vmatprep.subr.mxu0 0.0
    %2286 = vmatpush1.msra.mxu0 0.0
    %2287 = vmatprep.subr.mxu0 0.0
    %2288 = vmatpush1.msra.mxu0 0.0
    %2289 = vmatprep.subr.mxu0 0.0
    %2290 = vmatpush1.msra.mxu0 0.0
    %2291 = vmatprep.subr.mxu0 0.0
    %2292 = vmatpush1.msra.mxu0 0.0
    %2293 = vmatprep.subr.mxu0 0.0
    %2294 = vmatpush1.msra.mxu0 0.0
    %2295 = vmatprep.subr.mxu0 0.0
    %2296 = vmatpush1.msra.mxu0 0.0
    %2297 = vmatprep.subr.mxu0 0.0
    %2298 = vmatpush1.msra.mxu0 0.0
    %2299 = vmatprep.subr.mxu0 0.0
    %2300 = vmatpush1.msra.mxu0 0.0
    %2301 = vmatprep.subr.mxu0 0.0
    %2302 = vmatpush1.msra.mxu0 0.0
    %2303 = vmatprep.subr.mxu0 0.0
    %2304 = vmatpush1.msra.mxu0 0.0
    %2305 = vmatprep.subr.mxu0 0.0
    %2306 = vmatpush1.msra.mxu0 0.0
    %2307 = vmatprep.subr.mxu0 0.0
    %2308 = vmatpush1.msra.mxu0 0.0
    %2309 = vmatprep.subr.mxu0 0.0
    %2310 = vmatpush1.msra.mxu0 0.0
    %2311 = vmatprep.subr.mxu0 0.0
    %2312 = vmatpush1.msra.mxu0 0.0
    %2313 = vmatprep.mubr.f32.mxu0 0.0
    %v2314 = vand.u32 %v2234, 4294901760
    %v2315 = vsub.f32 %v2234, %v2314
    %v2316 = vand.u32 %v2315, 4294901760
    %v2317 = vsub.f32 %v2315, %v2316
    %v2318 = vand.u32 %v2317, 4294901760
    %2319 = vmatmul.mubr.f32.gmra.mrb[0].mxu0 %v2318
    %v2320 = vpop.f32.mrb[0].mxu0
    %v2321 = vadd.f32 0.0, %v2320
    %v2322 = vpop.f32.mrb[0].mxu0
    %2323 = vmatprep.mubr.f32.mxu0 0.0
    %v2324 = vand.u32 %v2237, 4294901760
    %v2325 = vsub.f32 %v2237, %v2324
    %v2326 = vand.u32 %v2325, 4294901760
    %v2327 = vsub.f32 %v2325, %v2326
    %v2328 = vand.u32 %v2327, 4294901760
    %2329 = vmatmul.mubr.f32.gmra.mrb[0].mxu0 %v2328
    %v2330 = vpop.f32.mrb[0].mxu0
    %v2331 = vadd.f32 0.0, %v2330
    %v2332 = vpop.f32.mrb[0].mxu0
    %2333 = vmatprep.mubr.f32.mxu0 0.0
    %v2334 = vand.u32 %v2240, 4294901760
    %v2335 = vsub.f32 %v2240, %v2334
    %v2336 = vand.u32 %v2335, 4294901760
    %v2337 = vsub.f32 %v2335, %v2336
    %v2338 = vand.u32 %v2337, 4294901760
    %2339 = vmatmul.mubr.f32.gmra.mrb[0].mxu0 %v2338
    %v2340 = vpop.f32.mrb[0].mxu0
    %v2341 = vadd.f32 0.0, %v2340
    %v2342 = vpop.f32.mrb[0].mxu0
    %2343 = vmatprep.mubr.f32.mxu0 0.0
    %v2344 = vand.u32 %v2243, 4294901760
    %v2345 = vsub.f32 %v2243, %v2344
    %v2346 = vand.u32 %v2345, 4294901760
    %v2347 = vsub.f32 %v2345, %v2346
    %v2348 = vand.u32 %v2347, 4294901760
    %2349 = vmatmul.mubr.f32.gmra.mrb[0].mxu0 %v2348
    %v2350 = vpop.f32.mrb[0].mxu0
    %v2351 = vadd.f32 0.0, %v2350
    %v2352 = vpop.f32.mrb[0].mxu0
    %2353 = vdwg.mxu0
    %2354 = vmatprep.subr.mxu0 0.0
    %v2355 = vand.u32 %v63, 4294901760
    %v2356 = vsub.f32 %v63, %v2355
    %v2357 = vand.u32 %v2356, 4294901760
    %v2358 = vsub.f32 %v2356, %v2357
    %v2359 = vand.u32 %v2358, 4294901760
    %2360 = vmatpush1.msra.mxu0 %v2359
    %2361 = vmatprep.subr.mxu0 0.0
    %v2362 = vand.u32 %v64, 4294901760
    %v2363 = vsub.f32 %v64, %v2362
    %v2364 = vand.u32 %v2363, 4294901760
    %v2365 = vsub.f32 %v2363, %v2364
    %v2366 = vand.u32 %v2365, 4294901760
    %2367 = vmatpush1.msra.mxu0 %v2366
    %2368 = vmatprep.subr.mxu0 0.0
    %v2369 = vand.u32 %v65, 4294901760
    %v2370 = vsub.f32 %v65, %v2369
    %v2371 = vand.u32 %v2370, 4294901760
    %v2372 = vsub.f32 %v2370, %v2371
    %v2373 = vand.u32 %v2372, 4294901760
    %2374 = vmatpush1.msra.mxu0 %v2373
    %2375 = vmatprep.subr.mxu0 0.0
    %v2376 = vand.u32 %v66, 4294901760
    %v2377 = vsub.f32 %v66, %v2376
    %v2378 = vand.u32 %v2377, 4294901760
    %v2379 = vsub.f32 %v2377, %v2378
    %v2380 = vand.u32 %v2379, 4294901760
    %2381 = vmatpush1.msra.mxu0 %v2380
    %2382 = vmatprep.subr.mxu0 0.0
    %2383 = vmatpush1.msra.mxu0 0.0
    %2384 = vmatprep.subr.mxu0 0.0
    %2385 = vmatpush1.msra.mxu0 0.0
    %2386 = vmatprep.subr.mxu0 0.0
    %2387 = vmatpush1.msra.mxu0 0.0
    %2388 = vmatprep.subr.mxu0 0.0
    %2389 = vmatpush1.msra.mxu0 0.0
    %2390 = vmatprep.subr.mxu0 0.0
    %2391 = vmatpush1.msra.mxu0 0.0
    %2392 = vmatprep.subr.mxu0 0.0
    %2393 = vmatpush1.msra.mxu0 0.0
    %2394 = vmatprep.subr.mxu0 0.0
    %2395 = vmatpush1.msra.mxu0 0.0
    %2396 = vmatprep.subr.mxu0 0.0
    %2397 = vmatpush1.msra.mxu0 0.0
    %2398 = vmatprep.subr.mxu0 0.0
    %2399 = vmatpush1.msra.mxu0 0.0
    %2400 = vmatprep.subr.mxu0 0.0
    %2401 = vmatpush1.msra.mxu0 0.0
    %2402 = vmatprep.subr.mxu0 0.0
    %2403 = vmatpush1.msra.mxu0 0.0
    %2404 = vmatprep.subr.mxu0 0.0
    %2405 = vmatpush1.msra.mxu0 0.0
    %2406 = vmatprep.subr.mxu0 0.0
    %2407 = vmatpush1.msra.mxu0 0.0
    %2408 = vmatprep.subr.mxu0 0.0
    %2409 = vmatpush1.msra.mxu0 0.0
    %2410 = vmatprep.subr.mxu0 0.0
    %2411 = vmatpush1.msra.mxu0 0.0
    %2412 = vmatprep.subr.mxu0 0.0
    %2413 = vmatpush1.msra.mxu0 0.0
    %2414 = vmatprep.subr.mxu0 0.0
    %2415 = vmatpush1.msra.mxu0 0.0
    %2416 = vmatprep.subr.mxu0 0.0
    %2417 = vmatpush1.msra.mxu0 0.0
    %2418 = vmatprep.subr.mxu0 0.0
    %2419 = vmatpush1.msra.mxu0 0.0
    %2420 = vmatprep.subr.mxu0 0.0
    %2421 = vmatpush1.msra.mxu0 0.0
    %2422 = vmatprep.subr.mxu0 0.0
    %2423 = vmatpush1.msra.mxu0 0.0
    %2424 = vmatprep.subr.mxu0 0.0
    %2425 = vmatpush1.msra.mxu0 0.0
    %2426 = vmatprep.subr.mxu0 0.0
    %2427 = vmatpush1.msra.mxu0 0.0
    %2428 = vmatprep.subr.mxu0 0.0
    %2429 = vmatpush1.msra.mxu0 0.0
    %2430 = vmatprep.subr.mxu0 0.0
    %2431 = vmatpush1.msra.mxu0 0.0
    %2432 = vmatprep.subr.mxu0 0.0
    %2433 = vmatpush1.msra.mxu0 0.0
    %2434 = vmatprep.subr.mxu0 0.0
    %2435 = vmatpush1.msra.mxu0 0.0
    %2436 = vmatprep.subr.mxu0 0.0
    %2437 = vmatpush1.msra.mxu0 0.0
    %2438 = vmatprep.mubr.f32.mxu0 0.0
    %v2439 = vand.u32 %v2234, 4294901760
    %2440 = vmatmul.mubr.f32.gmra.mrb[0].mxu0 %v2439
    %v2441 = vpop.f32.mrb[0].mxu0
    %v2442 = vadd.f32 %v2321, %v2441
    %v2443 = vpop.f32.mrb[0].mxu0
    %2444 = vmatprep.mubr.f32.mxu0 0.0
    %v2445 = vand.u32 %v2237, 4294901760
    %2446 = vmatmul.mubr.f32.gmra.mrb[0].mxu0 %v2445
    %v2447 = vpop.f32.mrb[0].mxu0
    %v2448 = vadd.f32 %v2331, %v2447
    %v2449 = vpop.f32.mrb[0].mxu0
    %2450 = vmatprep.mubr.f32.mxu0 0.0
    %v2451 = vand.u32 %v2240, 4294901760
    %2452 = vmatmul.mubr.f32.gmra.mrb[0].mxu0 %v2451
    %v2453 = vpop.f32.mrb[0].mxu0
    %v2454 = vadd.f32 %v2341, %v2453
    %v2455 = vpop.f32.mrb[0].mxu0
    %2456 = vmatprep.mubr.f32.mxu0 0.0
    %v2457 = vand.u32 %v2243, 4294901760
    %2458 = vmatmul.mubr.f32.gmra.mrb[0].mxu0 %v2457
    %v2459 = vpop.f32.mrb[0].mxu0
    %v2460 = vadd.f32 %v2351, %v2459
    %v2461 = vpop.f32.mrb[0].mxu0
    %2462 = vdwg.mxu0
    %2463 = vmatprep.subr.mxu0 0.0
    %v2464 = vand.u32 %v63, 4294901760
    %v2465 = vsub.f32 %v63, %v2464
    %2466 = vmatpush1.msra.mxu0 %v2465
    %2467 = vmatprep.subr.mxu0 0.0
    %v2468 = vand.u32 %v64, 4294901760
    %v2469 = vsub.f32 %v64, %v2468
    %2470 = vmatpush1.msra.mxu0 %v2469
    %2471 = vmatprep.subr.mxu0 0.0
    %v2472 = vand.u32 %v65, 4294901760
    %v2473 = vsub.f32 %v65, %v2472
    %2474 = vmatpush1.msra.mxu0 %v2473
    %2475 = vmatprep.subr.mxu0 0.0
    %v2476 = vand.u32 %v66, 4294901760
    %v2477 = vsub.f32 %v66, %v2476
    %2478 = vmatpush1.msra.mxu0 %v2477
    %2479 = vmatprep.subr.mxu0 0.0
    %2480 = vmatpush1.msra.mxu0 0.0
    %2481 = vmatprep.subr.mxu0 0.0
    %2482 = vmatpush1.msra.mxu0 0.0
    %2483 = vmatprep.subr.mxu0 0.0
    %2484 = vmatpush1.msra.mxu0 0.0
    %2485 = vmatprep.subr.mxu0 0.0
    %2486 = vmatpush1.msra.mxu0 0.0
    %2487 = vmatprep.subr.mxu0 0.0
    %2488 = vmatpush1.msra.mxu0 0.0
    %2489 = vmatprep.subr.mxu0 0.0
    %2490 = vmatpush1.msra.mxu0 0.0
    %2491 = vmatprep.subr.mxu0 0.0
    %2492 = vmatpush1.msra.mxu0 0.0
    %2493 = vmatprep.subr.mxu0 0.0
    %2494 = vmatpush1.msra.mxu0 0.0
    %2495 = vmatprep.subr.mxu0 0.0
    %2496 = vmatpush1.msra.mxu0 0.0
    %2497 = vmatprep.subr.mxu0 0.0
    %2498 = vmatpush1.msra.mxu0 0.0
    %2499 = vmatprep.subr.mxu0 0.0
    %2500 = vmatpush1.msra.mxu0 0.0
    %2501 = vmatprep.subr.mxu0 0.0
    %2502 = vmatpush1.msra.mxu0 0.0
    %2503 = vmatprep.subr.mxu0 0.0
    %2504 = vmatpush1.msra.mxu0 0.0
    %2505 = vmatprep.subr.mxu0 0.0
    %2506 = vmatpush1.msra.mxu0 0.0
    %2507 = vmatprep.subr.mxu0 0.0
    %2508 = vmatpush1.msra.mxu0 0.0
    %2509 = vmatprep.subr.mxu0 0.0
    %2510 = vmatpush1.msra.mxu0 0.0
    %2511 = vmatprep.subr.mxu0 0.0
    %2512 = vmatpush1.msra.mxu0 0.0
    %2513 = vmatprep.subr.mxu0 0.0
    %2514 = vmatpush1.msra.mxu0 0.0
    %2515 = vmatprep.subr.mxu0 0.0
    %2516 = vmatpush1.msra.mxu0 0.0
    %2517 = vmatprep.subr.mxu0 0.0
    %2518 = vmatpush1.msra.mxu0 0.0
    %2519 = vmatprep.subr.mxu0 0.0
    %2520 = vmatpush1.msra.mxu0 0.0
    %2521 = vmatprep.subr.mxu0 0.0
    %2522 = vmatpush1.msra.mxu0 0.0
    %2523 = vmatprep.subr.mxu0 0.0
    %2524 = vmatpush1.msra.mxu0 0.0
    %2525 = vmatprep.subr.mxu0 0.0
    %2526 = vmatpush1.msra.mxu0 0.0
    %2527 = vmatprep.subr.mxu0 0.0
    %2528 = vmatpush1.msra.mxu0 0.0
    %2529 = vmatprep.subr.mxu0 0.0
    %2530 = vmatpush1.msra.mxu0 0.0
    %2531 = vmatprep.subr.mxu0 0.0
    %2532 = vmatpush1.msra.mxu0 0.0
    %2533 = vmatprep.subr.mxu0 0.0
    %2534 = vmatpush1.msra.mxu0 0.0
    %2535 = vmatprep.mubr.f32.mxu0 0.0
    %v2536 = vand.u32 %v2234, 4294901760
    %v2537 = vsub.f32 %v2234, %v2536
    %2538 = vmatmul.mubr.f32.gmra.mrb[0].mxu0 %v2537
    %v2539 = vpop.f32.mrb[0].mxu0
    %v2540 = vadd.f32 %v2442, %v2539
    %v2541 = vpop.f32.mrb[0].mxu0
    %2542 = vmatprep.mubr.f32.mxu0 0.0
    %v2543 = vand.u32 %v2237, 4294901760
    %v2544 = vsub.f32 %v2237, %v2543
    %2545 = vmatmul.mubr.f32.gmra.mrb[0].mxu0 %v2544
    %v2546 = vpop.f32.mrb[0].mxu0
    %v2547 = vadd.f32 %v2448, %v2546
    %v2548 = vpop.f32.mrb[0].mxu0
    %2549 = vmatprep.mubr.f32.mxu0 0.0
    %v2550 = vand.u32 %v2240, 4294901760
    %v2551 = vsub.f32 %v2240, %v2550
    %2552 = vmatmul.mubr.f32.gmra.mrb[0].mxu0 %v2551
    %v2553 = vpop.f32.mrb[0].mxu0
    %v2554 = vadd.f32 %v2454, %v2553
    %v2555 = vpop.f32.mrb[0].mxu0
    %2556 = vmatprep.mubr.f32.mxu0 0.0
    %v2557 = vand.u32 %v2243, 4294901760
    %v2558 = vsub.f32 %v2243, %v2557
    %2559 = vmatmul.mubr.f32.gmra.mrb[0].mxu0 %v2558
    %v2560 = vpop.f32.mrb[0].mxu0
    %v2561 = vadd.f32 %v2460, %v2560
    %v2562 = vpop.f32.mrb[0].mxu0
    %2563 = vdwg.mxu0
    %2564 = vmatprep.subr.mxu0 0.0
    %v2565 = vand.u32 %v63, 4294901760
    %2566 = vmatpush1.msra.mxu0 %v2565
    %2567 = vmatprep.subr.mxu0 0.0
    %v2568 = vand.u32 %v64, 4294901760
    %2569 = vmatpush1.msra.mxu0 %v2568
    %2570 = vmatprep.subr.mxu0 0.0
    %v2571 = vand.u32 %v65, 4294901760
    %2572 = vmatpush1.msra.mxu0 %v2571
    %2573 = vmatprep.subr.mxu0 0.0
    %v2574 = vand.u32 %v66, 4294901760
    %2575 = vmatpush1.msra.mxu0 %v2574
    %2576 = vmatprep.subr.mxu0 0.0
    %2577 = vmatpush1.msra.mxu0 0.0
    %2578 = vmatprep.subr.mxu0 0.0
    %2579 = vmatpush1.msra.mxu0 0.0
    %2580 = vmatprep.subr.mxu0 0.0
    %2581 = vmatpush1.msra.mxu0 0.0
    %2582 = vmatprep.subr.mxu0 0.0
    %2583 = vmatpush1.msra.mxu0 0.0
    %2584 = vmatprep.subr.mxu0 0.0
    %2585 = vmatpush1.msra.mxu0 0.0
    %2586 = vmatprep.subr.mxu0 0.0
    %2587 = vmatpush1.msra.mxu0 0.0
    %2588 = vmatprep.subr.mxu0 0.0
    %2589 = vmatpush1.msra.mxu0 0.0
    %2590 = vmatprep.subr.mxu0 0.0
    %2591 = vmatpush1.msra.mxu0 0.0
    %2592 = vmatprep.subr.mxu0 0.0
    %2593 = vmatpush1.msra.mxu0 0.0
    %2594 = vmatprep.subr.mxu0 0.0
    %2595 = vmatpush1.msra.mxu0 0.0
    %2596 = vmatprep.subr.mxu0 0.0
    %2597 = vmatpush1.msra.mxu0 0.0
    %2598 = vmatprep.subr.mxu0 0.0
    %2599 = vmatpush1.msra.mxu0 0.0
    %2600 = vmatprep.subr.mxu0 0.0
    %2601 = vmatpush1.msra.mxu0 0.0
    %2602 = vmatprep.subr.mxu0 0.0
    %2603 = vmatpush1.msra.mxu0 0.0
    %2604 = vmatprep.subr.mxu0 0.0
    %2605 = vmatpush1.msra.mxu0 0.0
    %2606 = vmatprep.subr.mxu0 0.0
    %2607 = vmatpush1.msra.mxu0 0.0
    %2608 = vmatprep.subr.mxu0 0.0
    %2609 = vmatpush1.msra.mxu0 0.0
    %2610 = vmatprep.subr.mxu0 0.0
    %2611 = vmatpush1.msra.mxu0 0.0
    %2612 = vmatprep.subr.mxu0 0.0
    %2613 = vmatpush1.msra.mxu0 0.0
    %2614 = vmatprep.subr.mxu0 0.0
    %2615 = vmatpush1.msra.mxu0 0.0
    %2616 = vmatprep.subr.mxu0 0.0
    %2617 = vmatpush1.msra.mxu0 0.0
    %2618 = vmatprep.subr.mxu0 0.0
    %2619 = vmatpush1.msra.mxu0 0.0
    %2620 = vmatprep.subr.mxu0 0.0
    %2621 = vmatpush1.msra.mxu0 0.0
    %2622 = vmatprep.subr.mxu0 0.0
    %2623 = vmatpush1.msra.mxu0 0.0
    %2624 = vmatprep.subr.mxu0 0.0
    %2625 = vmatpush1.msra.mxu0 0.0
    %2626 = vmatprep.subr.mxu0 0.0
    %2627 = vmatpush1.msra.mxu0 0.0
    %2628 = vmatprep.subr.mxu0 0.0
    %2629 = vmatpush1.msra.mxu0 0.0
    %2630 = vmatprep.subr.mxu0 0.0
    %2631 = vmatpush1.msra.mxu0 0.0
    %2632 = vmatprep.mubr.f32.mxu0 0.0
    %v2633 = vand.u32 %v2234, 4294901760
    %v2634 = vsub.f32 %v2234, %v2633
    %v2635 = vand.u32 %v2634, 4294901760
    %2636 = vmatmul.mubr.f32.gmra.mrb[0].mxu0 %v2635
    %v2637 = vpop.f32.mrb[0].mxu0
    %v2638 = vadd.f32 %v2540, %v2637
    %v2639 = vpop.f32.mrb[0].mxu0
    %2640 = vmatprep.mubr.f32.mxu0 0.0
    %v2641 = vand.u32 %v2237, 4294901760
    %v2642 = vsub.f32 %v2237, %v2641
    %v2643 = vand.u32 %v2642, 4294901760
    %2644 = vmatmul.mubr.f32.gmra.mrb[0].mxu0 %v2643
    %v2645 = vpop.f32.mrb[0].mxu0
    %v2646 = vadd.f32 %v2547, %v2645
    %v2647 = vpop.f32.mrb[0].mxu0
    %2648 = vmatprep.mubr.f32.mxu0 0.0
    %v2649 = vand.u32 %v2240, 4294901760
    %v2650 = vsub.f32 %v2240, %v2649
    %v2651 = vand.u32 %v2650, 4294901760
    %2652 = vmatmul.mubr.f32.gmra.mrb[0].mxu0 %v2651
    %v2653 = vpop.f32.mrb[0].mxu0
    %v2654 = vadd.f32 %v2554, %v2653
    %v2655 = vpop.f32.mrb[0].mxu0
    %2656 = vmatprep.mubr.f32.mxu0 0.0
    %v2657 = vand.u32 %v2243, 4294901760
    %v2658 = vsub.f32 %v2243, %v2657
    %v2659 = vand.u32 %v2658, 4294901760
    %2660 = vmatmul.mubr.f32.gmra.mrb[0].mxu0 %v2659
    %v2661 = vpop.f32.mrb[0].mxu0
    %v2662 = vadd.f32 %v2561, %v2661
    %v2663 = vpop.f32.mrb[0].mxu0
    %2664 = vdwg.mxu0
    %2665 = vmatprep.subr.mxu0 0.0
    %v2666 = vand.u32 %v63, 4294901760
    %v2667 = vsub.f32 %v63, %v2666
    %v2668 = vand.u32 %v2667, 4294901760
    %2669 = vmatpush1.msra.mxu0 %v2668
    %2670 = vmatprep.subr.mxu0 0.0
    %v2671 = vand.u32 %v64, 4294901760
    %v2672 = vsub.f32 %v64, %v2671
    %v2673 = vand.u32 %v2672, 4294901760
    %2674 = vmatpush1.msra.mxu0 %v2673
    %2675 = vmatprep.subr.mxu0 0.0
    %v2676 = vand.u32 %v65, 4294901760
    %v2677 = vsub.f32 %v65, %v2676
    %v2678 = vand.u32 %v2677, 4294901760
    %2679 = vmatpush1.msra.mxu0 %v2678
    %2680 = vmatprep.subr.mxu0 0.0
    %v2681 = vand.u32 %v66, 4294901760
    %v2682 = vsub.f32 %v66, %v2681
    %v2683 = vand.u32 %v2682, 4294901760
    %2684 = vmatpush1.msra.mxu0 %v2683
    %2685 = vmatprep.subr.mxu0 0.0
    %2686 = vmatpush1.msra.mxu0 0.0
    %2687 = vmatprep.subr.mxu0 0.0
    %2688 = vmatpush1.msra.mxu0 0.0
    %2689 = vmatprep.subr.mxu0 0.0
    %2690 = vmatpush1.msra.mxu0 0.0
    %2691 = vmatprep.subr.mxu0 0.0
    %2692 = vmatpush1.msra.mxu0 0.0
    %2693 = vmatprep.subr.mxu0 0.0
    %2694 = vmatpush1.msra.mxu0 0.0
    %2695 = vmatprep.subr.mxu0 0.0
    %2696 = vmatpush1.msra.mxu0 0.0
    %2697 = vmatprep.subr.mxu0 0.0
    %2698 = vmatpush1.msra.mxu0 0.0
    %2699 = vmatprep.subr.mxu0 0.0
    %2700 = vmatpush1.msra.mxu0 0.0
    %2701 = vmatprep.subr.mxu0 0.0
    %2702 = vmatpush1.msra.mxu0 0.0
    %2703 = vmatprep.subr.mxu0 0.0
    %2704 = vmatpush1.msra.mxu0 0.0
    %2705 = vmatprep.subr.mxu0 0.0
    %2706 = vmatpush1.msra.mxu0 0.0
    %2707 = vmatprep.subr.mxu0 0.0
    %2708 = vmatpush1.msra.mxu0 0.0
    %2709 = vmatprep.subr.mxu0 0.0
    %2710 = vmatpush1.msra.mxu0 0.0
    %2711 = vmatprep.subr.mxu0 0.0
    %2712 = vmatpush1.msra.mxu0 0.0
    %2713 = vmatprep.subr.mxu0 0.0
    %2714 = vmatpush1.msra.mxu0 0.0
    %2715 = vmatprep.subr.mxu0 0.0
    %2716 = vmatpush1.msra.mxu0 0.0
    %2717 = vmatprep.subr.mxu0 0.0
    %2718 = vmatpush1.msra.mxu0 0.0
    %2719 = vmatprep.subr.mxu0 0.0
    %2720 = vmatpush1.msra.mxu0 0.0
    %2721 = vmatprep.subr.mxu0 0.0
    %2722 = vmatpush1.msra.mxu0 0.0
    %2723 = vmatprep.subr.mxu0 0.0
    %2724 = vmatpush1.msra.mxu0 0.0
    %2725 = vmatprep.subr.mxu0 0.0
    %2726 = vmatpush1.msra.mxu0 0.0
    %2727 = vmatprep.subr.mxu0 0.0
    %2728 = vmatpush1.msra.mxu0 0.0
    %2729 = vmatprep.subr.mxu0 0.0
    %2730 = vmatpush1.msra.mxu0 0.0
    %2731 = vmatprep.subr.mxu0 0.0
    %2732 = vmatpush1.msra.mxu0 0.0
    %2733 = vmatprep.subr.mxu0 0.0
    %2734 = vmatpush1.msra.mxu0 0.0
    %2735 = vmatprep.subr.mxu0 0.0
    %2736 = vmatpush1.msra.mxu0 0.0
    %2737 = vmatprep.subr.mxu0 0.0
    %2738 = vmatpush1.msra.mxu0 0.0
    %2739 = vmatprep.subr.mxu0 0.0
    %2740 = vmatpush1.msra.mxu0 0.0
    %2741 = vmatprep.mubr.f32.mxu0 0.0
    %v2742 = vand.u32 %v2234, 4294901760
    %2743 = vmatmul.mubr.f32.gmra.mrb[0].mxu0 %v2742
    %v2744 = vpop.f32.mrb[0].mxu0
    %v2745 = vadd.f32 %v2638, %v2744
    %v2746 = vpop.f32.mrb[0].mxu0
    %2747 = vmatprep.mubr.f32.mxu0 0.0
    %v2748 = vand.u32 %v2237, 4294901760
    %2749 = vmatmul.mubr.f32.gmra.mrb[0].mxu0 %v2748
    %v2750 = vpop.f32.mrb[0].mxu0
    %v2751 = vadd.f32 %v2646, %v2750
    %v2752 = vpop.f32.mrb[0].mxu0
    %2753 = vmatprep.mubr.f32.mxu0 0.0
    %v2754 = vand.u32 %v2240, 4294901760
    %2755 = vmatmul.mubr.f32.gmra.mrb[0].mxu0 %v2754
    %v2756 = vpop.f32.mrb[0].mxu0
    %v2757 = vadd.f32 %v2654, %v2756
    %v2758 = vpop.f32.mrb[0].mxu0
    %2759 = vmatprep.mubr.f32.mxu0 0.0
    %v2760 = vand.u32 %v2243, 4294901760
    %2761 = vmatmul.mubr.f32.gmra.mrb[0].mxu0 %v2760
    %v2762 = vpop.f32.mrb[0].mxu0
    %v2763 = vadd.f32 %v2662, %v2762
    %v2764 = vpop.f32.mrb[0].mxu0
    %2765 = vdwg.mxu0
    %2766 = vmatprep.subr.mxu0 0.0
    %v2767 = vand.u32 %v63, 4294901760
    %2768 = vmatpush1.msra.mxu0 %v2767
    %2769 = vmatprep.subr.mxu0 0.0
    %v2770 = vand.u32 %v64, 4294901760
    %2771 = vmatpush1.msra.mxu0 %v2770
    %2772 = vmatprep.subr.mxu0 0.0
    %v2773 = vand.u32 %v65, 4294901760
    %2774 = vmatpush1.msra.mxu0 %v2773
    %2775 = vmatprep.subr.mxu0 0.0
    %v2776 = vand.u32 %v66, 4294901760
    %2777 = vmatpush1.msra.mxu0 %v2776
    %2778 = vmatprep.subr.mxu0 0.0
    %2779 = vmatpush1.msra.mxu0 0.0
    %2780 = vmatprep.subr.mxu0 0.0
    %2781 = vmatpush1.msra.mxu0 0.0
    %2782 = vmatprep.subr.mxu0 0.0
    %2783 = vmatpush1.msra.mxu0 0.0
    %2784 = vmatprep.subr.mxu0 0.0
    %2785 = vmatpush1.msra.mxu0 0.0
    %2786 = vmatprep.subr.mxu0 0.0
    %2787 = vmatpush1.msra.mxu0 0.0
    %2788 = vmatprep.subr.mxu0 0.0
    %2789 = vmatpush1.msra.mxu0 0.0
    %2790 = vmatprep.subr.mxu0 0.0
    %2791 = vmatpush1.msra.mxu0 0.0
    %2792 = vmatprep.subr.mxu0 0.0
    %2793 = vmatpush1.msra.mxu0 0.0
    %2794 = vmatprep.subr.mxu0 0.0
    %2795 = vmatpush1.msra.mxu0 0.0
    %2796 = vmatprep.subr.mxu0 0.0
    %2797 = vmatpush1.msra.mxu0 0.0
    %2798 = vmatprep.subr.mxu0 0.0
    %2799 = vmatpush1.msra.mxu0 0.0
    %2800 = vmatprep.subr.mxu0 0.0
    %2801 = vmatpush1.msra.mxu0 0.0
    %2802 = vmatprep.subr.mxu0 0.0
    %2803 = vmatpush1.msra.mxu0 0.0
    %2804 = vmatprep.subr.mxu0 0.0
    %2805 = vmatpush1.msra.mxu0 0.0
    %2806 = vmatprep.subr.mxu0 0.0
    %2807 = vmatpush1.msra.mxu0 0.0
    %2808 = vmatprep.subr.mxu0 0.0
    %2809 = vmatpush1.msra.mxu0 0.0
    %2810 = vmatprep.subr.mxu0 0.0
    %2811 = vmatpush1.msra.mxu0 0.0
    %2812 = vmatprep.subr.mxu0 0.0
    %2813 = vmatpush1.msra.mxu0 0.0
    %2814 = vmatprep.subr.mxu0 0.0
    %2815 = vmatpush1.msra.mxu0 0.0
    %2816 = vmatprep.subr.mxu0 0.0
    %2817 = vmatpush1.msra.mxu0 0.0
    %2818 = vmatprep.subr.mxu0 0.0
    %2819 = vmatpush1.msra.mxu0 0.0
    %2820 = vmatprep.subr.mxu0 0.0
    %2821 = vmatpush1.msra.mxu0 0.0
    %2822 = vmatprep.subr.mxu0 0.0
    %2823 = vmatpush1.msra.mxu0 0.0
    %2824 = vmatprep.subr.mxu0 0.0
    %2825 = vmatpush1.msra.mxu0 0.0
    %2826 = vmatprep.subr.mxu0 0.0
    %2827 = vmatpush1.msra.mxu0 0.0
    %2828 = vmatprep.subr.mxu0 0.0
    %2829 = vmatpush1.msra.mxu0 0.0
    %2830 = vmatprep.subr.mxu0 0.0
    %2831 = vmatpush1.msra.mxu0 0.0
    %2832 = vmatprep.subr.mxu0 0.0
    %2833 = vmatpush1.msra.mxu0 0.0
    %2834 = vmatprep.mubr.f32.mxu0 0.0
    %v2835 = vand.u32 %v2234, 4294901760
    %2836 = vmatmul.mubr.f32.gmra.mrb[0].mxu0 %v2835
    %v2837 = vpop.f32.mrb[0].mxu0
    %v2838 = vadd.f32 %v2745, %v2837
    %v2839 = vpop.f32.mrb[0].mxu0
    %2840 = vmatprep.mubr.f32.mxu0 0.0
    %v2841 = vand.u32 %v2237, 4294901760
    %2842 = vmatmul.mubr.f32.gmra.mrb[0].mxu0 %v2841
    %v2843 = vpop.f32.mrb[0].mxu0
    %v2844 = vadd.f32 %v2751, %v2843
    %v2845 = vpop.f32.mrb[0].mxu0
    %2846 = vmatprep.mubr.f32.mxu0 0.0
    %v2847 = vand.u32 %v2240, 4294901760
    %2848 = vmatmul.mubr.f32.gmra.mrb[0].mxu0 %v2847
    %v2849 = vpop.f32.mrb[0].mxu0
    %v2850 = vadd.f32 %v2757, %v2849
    %v2851 = vpop.f32.mrb[0].mxu0
    %2852 = vmatprep.mubr.f32.mxu0 0.0
    %v2853 = vand.u32 %v2243, 4294901760
    %2854 = vmatmul.mubr.f32.gmra.mrb[0].mxu0 %v2853
    %v2855 = vpop.f32.mrb[0].mxu0
    %v2856 = vadd.f32 %v2763, %v2855
    %v2857 = vpop.f32.mrb[0].mxu0
    %2858 = vdwg.mxu0
    %v2859 = vadd.f32 %v59, %v2212
    %v2860 = vadd.f32 %v60, %v2218
    %v2861 = vadd.f32 %v61, %v2224
    %v2862 = vadd.f32 %v62, %v2230
    %v2863 = vadd.f32 %v63, %v2838
    %v2864 = vadd.f32 %v64, %v2844
    %v2865 = vadd.f32 %v65, %v2850
    %v2866 = vadd.f32 %v66, %v2856
    %v2869 = vrot.slane %v2859, 7
    %v2870 = vrot.slane %v2863, 7
    %v2873 = vsub.f32 %v2859, %v2869
    %v2874 = vsub.f32 %v2863, %v2870
    %v2875 = vmul.f32 %v2873, 0.07692308
    %v2876 = vmul.f32 %v2874, 0.07692308
    %v2879 = vrot.slane %v2862, 7
    %v2880 = vrot.slane %v2866, 7
    %v2883 = vsub.f32 %v2862, %v2879
    %v2884 = vsub.f32 %v2866, %v2880
    %v2885 = vmul.f32 %v2883, 0.07692308
    %v2886 = vmul.f32 %v2884, 0.07692308
    %v2887 = vlaneseq
    %v2888 = vshrl.u32 %v2887, 7
    %v2889 = vsub.s32 0, %v2888
    %v2890 = vrot.slane %v2859, %v2889
    %v2891 = vlaneseq
    %v2892 = vshrl.u32 %v2891, 7
    %v2893 = vsub.s32 0, %v2892
    %v2894 = vrot.slane %v2863, %v2893
    %v2895 = vmul.f32 %v234, %v2890
    %v2896 = vmul.f32 %v235, %v2890
    %v2897 = vmul.f32 %v236, %v2890
    %v2898 = vmul.f32 %v237, %v2890
    %v2899 = vmul.f32 %v234, %v2894
    %v2900 = vmul.f32 %v235, %v2894
    %v2901 = vmul.f32 %v236, %v2894
    %v2902 = vmul.f32 %v237, %v2894
    %v2903 = vlaneseq
    %v2904 = vshrl.u32 %v2903, 7
    %v2905 = vsub.s32 1, %v2904
    %v2906 = vrot.slane %v2875, %v2905
    %v2907 = vlaneseq
    %v2908 = vshrl.u32 %v2907, 7
    %v2909 = vsub.s32 1, %v2908
    %v2910 = vrot.slane %v2876, %v2909
    %v2911 = vmul.f32 %v250, %v2906
    %v2912 = vmul.f32 %v251, %v2906
    %v2913 = vmul.f32 %v252, %v2906
    %v2914 = vmul.f32 %v253, %v2906
    %v2915 = vmul.f32 %v250, %v2910
    %v2916 = vmul.f32 %v251, %v2910
    %v2917 = vmul.f32 %v252, %v2910
    %v2918 = vmul.f32 %v253, %v2910
    %v2919 = vadd.f32 %v2895, %v2911
    %v2920 = vadd.f32 %v2896, %v2912
    %v2921 = vadd.f32 %v2897, %v2913
    %v2922 = vadd.f32 %v2898, %v2914
    %v2923 = vadd.f32 %v2899, %v2915
    %v2924 = vadd.f32 %v2900, %v2916
    %v2925 = vadd.f32 %v2901, %v2917
    %v2926 = vadd.f32 %v2902, %v2918
    %v2927 = vlaneseq
    %v2928 = vshrl.u32 %v2927, 7
    %v2929 = vsub.s32 7, %v2928
    %v2930 = vrot.slane %v2862, %v2929
    %v2931 = vlaneseq
    %v2932 = vshrl.u32 %v2931, 7
    %v2933 = vsub.s32 7, %v2932
    %v2934 = vrot.slane %v2866, %v2933
    %v2935 = vmul.f32 %v266, %v2930
    %v2936 = vmul.f32 %v267, %v2930
    %v2937 = vmul.f32 %v268, %v2930
    %v2938 = vmul.f32 %v269, %v2930
    %v2939 = vmul.f32 %v266, %v2934
    %v2940 = vmul.f32 %v267, %v2934
    %v2941 = vmul.f32 %v268, %v2934
    %v2942 = vmul.f32 %v269, %v2934
    %v2943 = vlaneseq
    %v2944 = vshrl.u32 %v2943, 7
    %v2945 = vsub.s32 7, %v2944
    %v2946 = vrot.slane %v2885, %v2945
    %v2947 = vlaneseq
    %v2948 = vshrl.u32 %v2947, 7
    %v2949 = vsub.s32 7, %v2948
    %v2950 = vrot.slane %v2886, %v2949
    %v2951 = vmul.f32 %v278, %v2946
    %v2952 = vmul.f32 %v279, %v2946
    %v2953 = vmul.f32 %v280, %v2946
    %v2954 = vmul.f32 %v281, %v2946
    %v2955 = vmul.f32 %v278, %v2950
    %v2956 = vmul.f32 %v279, %v2950
    %v2957 = vmul.f32 %v280, %v2950
    %v2958 = vmul.f32 %v281, %v2950
    %v2959 = vsub.f32 %v2935, %v2951
    %v2960 = vsub.f32 %v2936, %v2952
    %v2961 = vsub.f32 %v2937, %v2953
    %v2962 = vsub.f32 %v2938, %v2954
    %v2963 = vsub.f32 %v2939, %v2955
    %v2964 = vsub.f32 %v2940, %v2956
    %v2965 = vsub.f32 %v2941, %v2957
    %v2966 = vsub.f32 %v2942, %v2958
    %v2968 = vsel %vm1518, %v222, 0
    %v2971 = vsel %vm1518, %v223, 0
    %v2974 = vsel %vm1518, %v224, 0
    %v2977 = vsel %vm1518, %v225, 0
    %2979 = vmatprep.subr.mxu0 0.0
    %v2980 = vand.u32 %v2859, 4294901760
    %2981 = vmatpush1.msra.mxu0 %v2980
    %2982 = vmatprep.subr.mxu0 0.0
    %v2983 = vand.u32 %v2860, 4294901760
    %2984 = vmatpush1.msra.mxu0 %v2983
    %2985 = vmatprep.subr.mxu0 0.0
    %v2986 = vand.u32 %v2861, 4294901760
    %2987 = vmatpush1.msra.mxu0 %v2986
    %2988 = vmatprep.subr.mxu0 0.0
    %v2989 = vand.u32 %v2862, 4294901760
    %2990 = vmatpush1.msra.mxu0 %v2989
    %2991 = vmatprep.subr.mxu0 0.0
    %2992 = vmatpush1.msra.mxu0 0.0
    %2993 = vmatprep.subr.mxu0 0.0
    %2994 = vmatpush1.msra.mxu0 0.0
    %2995 = vmatprep.subr.mxu0 0.0
    %2996 = vmatpush1.msra.mxu0 0.0
    %2997 = vmatprep.subr.mxu0 0.0
    %2998 = vmatpush1.msra.mxu0 0.0
    %2999 = vmatprep.subr.mxu0 0.0
    %3000 = vmatpush1.msra.mxu0 0.0
    %3001 = vmatprep.subr.mxu0 0.0
    %3002 = vmatpush1.msra.mxu0 0.0
    %3003 = vmatprep.subr.mxu0 0.0
    %3004 = vmatpush1.msra.mxu0 0.0
    %3005 = vmatprep.subr.mxu0 0.0
    %3006 = vmatpush1.msra.mxu0 0.0
    %3007 = vmatprep.subr.mxu0 0.0
    %3008 = vmatpush1.msra.mxu0 0.0
    %3009 = vmatprep.subr.mxu0 0.0
    %3010 = vmatpush1.msra.mxu0 0.0
    %3011 = vmatprep.subr.mxu0 0.0
    %3012 = vmatpush1.msra.mxu0 0.0
    %3013 = vmatprep.subr.mxu0 0.0
    %3014 = vmatpush1.msra.mxu0 0.0
    %3015 = vmatprep.subr.mxu0 0.0
    %3016 = vmatpush1.msra.mxu0 0.0
    %3017 = vmatprep.subr.mxu0 0.0
    %3018 = vmatpush1.msra.mxu0 0.0
    %3019 = vmatprep.subr.mxu0 0.0
    %3020 = vmatpush1.msra.mxu0 0.0
    %3021 = vmatprep.subr.mxu0 0.0
    %3022 = vmatpush1.msra.mxu0 0.0
    %3023 = vmatprep.subr.mxu0 0.0
    %3024 = vmatpush1.msra.mxu0 0.0
    %3025 = vmatprep.subr.mxu0 0.0
    %3026 = vmatpush1.msra.mxu0 0.0
    %3027 = vmatprep.subr.mxu0 0.0
    %3028 = vmatpush1.msra.mxu0 0.0
    %3029 = vmatprep.subr.mxu0 0.0
    %3030 = vmatpush1.msra.mxu0 0.0
    %3031 = vmatprep.subr.mxu0 0.0
    %3032 = vmatpush1.msra.mxu0 0.0
    %3033 = vmatprep.subr.mxu0 0.0
    %3034 = vmatpush1.msra.mxu0 0.0
    %3035 = vmatprep.subr.mxu0 0.0
    %3036 = vmatpush1.msra.mxu0 0.0
    %3037 = vmatprep.subr.mxu0 0.0
    %3038 = vmatpush1.msra.mxu0 0.0
    %3039 = vmatprep.subr.mxu0 0.0
    %3040 = vmatpush1.msra.mxu0 0.0
    %3041 = vmatprep.subr.mxu0 0.0
    %3042 = vmatpush1.msra.mxu0 0.0
    %3043 = vmatprep.subr.mxu0 0.0
    %3044 = vmatpush1.msra.mxu0 0.0
    %3045 = vmatprep.subr.mxu0 0.0
    %3046 = vmatpush1.msra.mxu0 0.0
    %3047 = vmatprep.mubr.f32.mxu0 0.0
    %v3048 = vand.u32 %v2968, 4294901760
    %v3049 = vsub.f32 %v2968, %v3048
    %v3050 = vand.u32 %v3049, 4294901760
    %v3051 = vsub.f32 %v3049, %v3050
    %v3052 = vand.u32 %v3051, 4294901760
    %3053 = vmatmul.mubr.f32.gmra.mrb[0].mxu0 %v3052
    %v3054 = vpop.f32.mrb[0].mxu0
    %v3055 = vadd.f32 0.0, %v3054
    %v3056 = vpop.f32.mrb[0].mxu0
    %3057 = vmatprep.mubr.f32.mxu0 0.0
    %v3058 = vand.u32 %v2971, 4294901760
    %v3059 = vsub.f32 %v2971, %v3058
    %v3060 = vand.u32 %v3059, 4294901760
    %v3061 = vsub.f32 %v3059, %v3060
    %v3062 = vand.u32 %v3061, 4294901760
    %3063 = vmatmul.mubr.f32.gmra.mrb[0].mxu0 %v3062
    %v3064 = vpop.f32.mrb[0].mxu0
    %v3065 = vadd.f32 0.0, %v3064
    %v3066 = vpop.f32.mrb[0].mxu0
    %3067 = vmatprep.mubr.f32.mxu0 0.0
    %v3068 = vand.u32 %v2974, 4294901760
    %v3069 = vsub.f32 %v2974, %v3068
    %v3070 = vand.u32 %v3069, 4294901760
    %v3071 = vsub.f32 %v3069, %v3070
    %v3072 = vand.u32 %v3071, 4294901760
    %3073 = vmatmul.mubr.f32.gmra.mrb[0].mxu0 %v3072
    %v3074 = vpop.f32.mrb[0].mxu0
    %v3075 = vadd.f32 0.0, %v3074
    %v3076 = vpop.f32.mrb[0].mxu0
    %3077 = vmatprep.mubr.f32.mxu0 0.0
    %v3078 = vand.u32 %v2977, 4294901760
    %v3079 = vsub.f32 %v2977, %v3078
    %v3080 = vand.u32 %v3079, 4294901760
    %v3081 = vsub.f32 %v3079, %v3080
    %v3082 = vand.u32 %v3081, 4294901760
    %3083 = vmatmul.mubr.f32.gmra.mrb[0].mxu0 %v3082
    %v3084 = vpop.f32.mrb[0].mxu0
    %v3085 = vadd.f32 0.0, %v3084
    %v3086 = vpop.f32.mrb[0].mxu0
    %3087 = vdwg.mxu0
    %3088 = vmatprep.subr.mxu0 0.0
    %v3089 = vand.u32 %v2859, 4294901760
    %v3090 = vsub.f32 %v2859, %v3089
    %v3091 = vand.u32 %v3090, 4294901760
    %v3092 = vsub.f32 %v3090, %v3091
    %v3093 = vand.u32 %v3092, 4294901760
    %3094 = vmatpush1.msra.mxu0 %v3093
    %3095 = vmatprep.subr.mxu0 0.0
    %v3096 = vand.u32 %v2860, 4294901760
    %v3097 = vsub.f32 %v2860, %v3096
    %v3098 = vand.u32 %v3097, 4294901760
    %v3099 = vsub.f32 %v3097, %v3098
    %v3100 = vand.u32 %v3099, 4294901760
    %3101 = vmatpush1.msra.mxu0 %v3100
    %3102 = vmatprep.subr.mxu0 0.0
    %v3103 = vand.u32 %v2861, 4294901760
    %v3104 = vsub.f32 %v2861, %v3103
    %v3105 = vand.u32 %v3104, 4294901760
    %v3106 = vsub.f32 %v3104, %v3105
    %v3107 = vand.u32 %v3106, 4294901760
    %3108 = vmatpush1.msra.mxu0 %v3107
    %3109 = vmatprep.subr.mxu0 0.0
    %v3110 = vand.u32 %v2862, 4294901760
    %v3111 = vsub.f32 %v2862, %v3110
    %v3112 = vand.u32 %v3111, 4294901760
    %v3113 = vsub.f32 %v3111, %v3112
    %v3114 = vand.u32 %v3113, 4294901760
    %3115 = vmatpush1.msra.mxu0 %v3114
    %3116 = vmatprep.subr.mxu0 0.0
    %3117 = vmatpush1.msra.mxu0 0.0
    %3118 = vmatprep.subr.mxu0 0.0
    %3119 = vmatpush1.msra.mxu0 0.0
    %3120 = vmatprep.subr.mxu0 0.0
    %3121 = vmatpush1.msra.mxu0 0.0
    %3122 = vmatprep.subr.mxu0 0.0
    %3123 = vmatpush1.msra.mxu0 0.0
    %3124 = vmatprep.subr.mxu0 0.0
    %3125 = vmatpush1.msra.mxu0 0.0
    %3126 = vmatprep.subr.mxu0 0.0
    %3127 = vmatpush1.msra.mxu0 0.0
    %3128 = vmatprep.subr.mxu0 0.0
    %3129 = vmatpush1.msra.mxu0 0.0
    %3130 = vmatprep.subr.mxu0 0.0
    %3131 = vmatpush1.msra.mxu0 0.0
    %3132 = vmatprep.subr.mxu0 0.0
    %3133 = vmatpush1.msra.mxu0 0.0
    %3134 = vmatprep.subr.mxu0 0.0
    %3135 = vmatpush1.msra.mxu0 0.0
    %3136 = vmatprep.subr.mxu0 0.0
    %3137 = vmatpush1.msra.mxu0 0.0
    %3138 = vmatprep.subr.mxu0 0.0
    %3139 = vmatpush1.msra.mxu0 0.0
    %3140 = vmatprep.subr.mxu0 0.0
    %3141 = vmatpush1.msra.mxu0 0.0
    %3142 = vmatprep.subr.mxu0 0.0
    %3143 = vmatpush1.msra.mxu0 0.0
    %3144 = vmatprep.subr.mxu0 0.0
    %3145 = vmatpush1.msra.mxu0 0.0
    %3146 = vmatprep.subr.mxu0 0.0
    %3147 = vmatpush1.msra.mxu0 0.0
    %3148 = vmatprep.subr.mxu0 0.0
    %3149 = vmatpush1.msra.mxu0 0.0
    %3150 = vmatprep.subr.mxu0 0.0
    %3151 = vmatpush1.msra.mxu0 0.0
    %3152 = vmatprep.subr.mxu0 0.0
    %3153 = vmatpush1.msra.mxu0 0.0
    %3154 = vmatprep.subr.mxu0 0.0
    %3155 = vmatpush1.msra.mxu0 0.0
    %3156 = vmatprep.subr.mxu0 0.0
    %3157 = vmatpush1.msra.mxu0 0.0
    %3158 = vmatprep.subr.mxu0 0.0
    %3159 = vmatpush1.msra.mxu0 0.0
    %3160 = vmatprep.subr.mxu0 0.0
    %3161 = vmatpush1.msra.mxu0 0.0
    %3162 = vmatprep.subr.mxu0 0.0
    %3163 = vmatpush1.msra.mxu0 0.0
    %3164 = vmatprep.subr.mxu0 0.0
    %3165 = vmatpush1.msra.mxu0 0.0
    %3166 = vmatprep.subr.mxu0 0.0
    %3167 = vmatpush1.msra.mxu0 0.0
    %3168 = vmatprep.subr.mxu0 0.0
    %3169 = vmatpush1.msra.mxu0 0.0
    %3170 = vmatprep.subr.mxu0 0.0
    %3171 = vmatpush1.msra.mxu0 0.0
    %3172 = vmatprep.mubr.f32.mxu0 0.0
    %v3173 = vand.u32 %v2968, 4294901760
    %3174 = vmatmul.mubr.f32.gmra.mrb[0].mxu0 %v3173
    %v3175 = vpop.f32.mrb[0].mxu0
    %v3176 = vadd.f32 %v3055, %v3175
    %v3177 = vpop.f32.mrb[0].mxu0
    %3178 = vmatprep.mubr.f32.mxu0 0.0
    %v3179 = vand.u32 %v2971, 4294901760
    %3180 = vmatmul.mubr.f32.gmra.mrb[0].mxu0 %v3179
    %v3181 = vpop.f32.mrb[0].mxu0
    %v3182 = vadd.f32 %v3065, %v3181
    %v3183 = vpop.f32.mrb[0].mxu0
    %3184 = vmatprep.mubr.f32.mxu0 0.0
    %v3185 = vand.u32 %v2974, 4294901760
    %3186 = vmatmul.mubr.f32.gmra.mrb[0].mxu0 %v3185
    %v3187 = vpop.f32.mrb[0].mxu0
    %v3188 = vadd.f32 %v3075, %v3187
    %v3189 = vpop.f32.mrb[0].mxu0
    %3190 = vmatprep.mubr.f32.mxu0 0.0
    %v3191 = vand.u32 %v2977, 4294901760
    %3192 = vmatmul.mubr.f32.gmra.mrb[0].mxu0 %v3191
    %v3193 = vpop.f32.mrb[0].mxu0
    %v3194 = vadd.f32 %v3085, %v3193
    %v3195 = vpop.f32.mrb[0].mxu0
    %3196 = vdwg.mxu0
    %3197 = vmatprep.subr.mxu0 0.0
    %v3198 = vand.u32 %v2859, 4294901760
    %v3199 = vsub.f32 %v2859, %v3198
    %3200 = vmatpush1.msra.mxu0 %v3199
    %3201 = vmatprep.subr.mxu0 0.0
    %v3202 = vand.u32 %v2860, 4294901760
    %v3203 = vsub.f32 %v2860, %v3202
    %3204 = vmatpush1.msra.mxu0 %v3203
    %3205 = vmatprep.subr.mxu0 0.0
    %v3206 = vand.u32 %v2861, 4294901760
    %v3207 = vsub.f32 %v2861, %v3206
    %3208 = vmatpush1.msra.mxu0 %v3207
    %3209 = vmatprep.subr.mxu0 0.0
    %v3210 = vand.u32 %v2862, 4294901760
    %v3211 = vsub.f32 %v2862, %v3210
    %3212 = vmatpush1.msra.mxu0 %v3211
    %3213 = vmatprep.subr.mxu0 0.0
    %3214 = vmatpush1.msra.mxu0 0.0
    %3215 = vmatprep.subr.mxu0 0.0
    %3216 = vmatpush1.msra.mxu0 0.0
    %3217 = vmatprep.subr.mxu0 0.0
    %3218 = vmatpush1.msra.mxu0 0.0
    %3219 = vmatprep.subr.mxu0 0.0
    %3220 = vmatpush1.msra.mxu0 0.0
    %3221 = vmatprep.subr.mxu0 0.0
    %3222 = vmatpush1.msra.mxu0 0.0
    %3223 = vmatprep.subr.mxu0 0.0
    %3224 = vmatpush1.msra.mxu0 0.0
    %3225 = vmatprep.subr.mxu0 0.0
    %3226 = vmatpush1.msra.mxu0 0.0
    %3227 = vmatprep.subr.mxu0 0.0
    %3228 = vmatpush1.msra.mxu0 0.0
    %3229 = vmatprep.subr.mxu0 0.0
    %3230 = vmatpush1.msra.mxu0 0.0
    %3231 = vmatprep.subr.mxu0 0.0
    %3232 = vmatpush1.msra.mxu0 0.0
    %3233 = vmatprep.subr.mxu0 0.0
    %3234 = vmatpush1.msra.mxu0 0.0
    %3235 = vmatprep.subr.mxu0 0.0
    %3236 = vmatpush1.msra.mxu0 0.0
    %3237 = vmatprep.subr.mxu0 0.0
    %3238 = vmatpush1.msra.mxu0 0.0
    %3239 = vmatprep.subr.mxu0 0.0
    %3240 = vmatpush1.msra.mxu0 0.0
    %3241 = vmatprep.subr.mxu0 0.0
    %3242 = vmatpush1.msra.mxu0 0.0
    %3243 = vmatprep.subr.mxu0 0.0
    %3244 = vmatpush1.msra.mxu0 0.0
    %3245 = vmatprep.subr.mxu0 0.0
    %3246 = vmatpush1.msra.mxu0 0.0
    %3247 = vmatprep.subr.mxu0 0.0
    %3248 = vmatpush1.msra.mxu0 0.0
    %3249 = vmatprep.subr.mxu0 0.0
    %3250 = vmatpush1.msra.mxu0 0.0
    %3251 = vmatprep.subr.mxu0 0.0
    %3252 = vmatpush1.msra.mxu0 0.0
    %3253 = vmatprep.subr.mxu0 0.0
    %3254 = vmatpush1.msra.mxu0 0.0
    %3255 = vmatprep.subr.mxu0 0.0
    %3256 = vmatpush1.msra.mxu0 0.0
    %3257 = vmatprep.subr.mxu0 0.0
    %3258 = vmatpush1.msra.mxu0 0.0
    %3259 = vmatprep.subr.mxu0 0.0
    %3260 = vmatpush1.msra.mxu0 0.0
    %3261 = vmatprep.subr.mxu0 0.0
    %3262 = vmatpush1.msra.mxu0 0.0
    %3263 = vmatprep.subr.mxu0 0.0
    %3264 = vmatpush1.msra.mxu0 0.0
    %3265 = vmatprep.subr.mxu0 0.0
    %3266 = vmatpush1.msra.mxu0 0.0
    %3267 = vmatprep.subr.mxu0 0.0
    %3268 = vmatpush1.msra.mxu0 0.0
    %3269 = vmatprep.mubr.f32.mxu0 0.0
    %v3270 = vand.u32 %v2968, 4294901760
    %v3271 = vsub.f32 %v2968, %v3270
    %3272 = vmatmul.mubr.f32.gmra.mrb[0].mxu0 %v3271
    %v3273 = vpop.f32.mrb[0].mxu0
    %v3274 = vadd.f32 %v3176, %v3273
    %v3275 = vpop.f32.mrb[0].mxu0
    %3276 = vmatprep.mubr.f32.mxu0 0.0
    %v3277 = vand.u32 %v2971, 4294901760
    %v3278 = vsub.f32 %v2971, %v3277
    %3279 = vmatmul.mubr.f32.gmra.mrb[0].mxu0 %v3278
    %v3280 = vpop.f32.mrb[0].mxu0
    %v3281 = vadd.f32 %v3182, %v3280
    %v3282 = vpop.f32.mrb[0].mxu0
    %3283 = vmatprep.mubr.f32.mxu0 0.0
    %v3284 = vand.u32 %v2974, 4294901760
    %v3285 = vsub.f32 %v2974, %v3284
    %3286 = vmatmul.mubr.f32.gmra.mrb[0].mxu0 %v3285
    %v3287 = vpop.f32.mrb[0].mxu0
    %v3288 = vadd.f32 %v3188, %v3287
    %v3289 = vpop.f32.mrb[0].mxu0
    %3290 = vmatprep.mubr.f32.mxu0 0.0
    %v3291 = vand.u32 %v2977, 4294901760
    %v3292 = vsub.f32 %v2977, %v3291
    %3293 = vmatmul.mubr.f32.gmra.mrb[0].mxu0 %v3292
    %v3294 = vpop.f32.mrb[0].mxu0
    %v3295 = vadd.f32 %v3194, %v3294
    %v3296 = vpop.f32.mrb[0].mxu0
    %3297 = vdwg.mxu0
    %3298 = vmatprep.subr.mxu0 0.0
    %v3299 = vand.u32 %v2859, 4294901760
    %3300 = vmatpush1.msra.mxu0 %v3299
    %3301 = vmatprep.subr.mxu0 0.0
    %v3302 = vand.u32 %v2860, 4294901760
    %3303 = vmatpush1.msra.mxu0 %v3302
    %3304 = vmatprep.subr.mxu0 0.0
    %v3305 = vand.u32 %v2861, 4294901760
    %3306 = vmatpush1.msra.mxu0 %v3305
    %3307 = vmatprep.subr.mxu0 0.0
    %v3308 = vand.u32 %v2862, 4294901760
    %3309 = vmatpush1.msra.mxu0 %v3308
    %3310 = vmatprep.subr.mxu0 0.0
    %3311 = vmatpush1.msra.mxu0 0.0
    %3312 = vmatprep.subr.mxu0 0.0
    %3313 = vmatpush1.msra.mxu0 0.0
    %3314 = vmatprep.subr.mxu0 0.0
    %3315 = vmatpush1.msra.mxu0 0.0
    %3316 = vmatprep.subr.mxu0 0.0
    %3317 = vmatpush1.msra.mxu0 0.0
    %3318 = vmatprep.subr.mxu0 0.0
    %3319 = vmatpush1.msra.mxu0 0.0
    %3320 = vmatprep.subr.mxu0 0.0
    %3321 = vmatpush1.msra.mxu0 0.0
    %3322 = vmatprep.subr.mxu0 0.0
    %3323 = vmatpush1.msra.mxu0 0.0
    %3324 = vmatprep.subr.mxu0 0.0
    %3325 = vmatpush1.msra.mxu0 0.0
    %3326 = vmatprep.subr.mxu0 0.0
    %3327 = vmatpush1.msra.mxu0 0.0
    %3328 = vmatprep.subr.mxu0 0.0
    %3329 = vmatpush1.msra.mxu0 0.0
    %3330 = vmatprep.subr.mxu0 0.0
    %3331 = vmatpush1.msra.mxu0 0.0
    %3332 = vmatprep.subr.mxu0 0.0
    %3333 = vmatpush1.msra.mxu0 0.0
    %3334 = vmatprep.subr.mxu0 0.0
    %3335 = vmatpush1.msra.mxu0 0.0
    %3336 = vmatprep.subr.mxu0 0.0
    %3337 = vmatpush1.msra.mxu0 0.0
    %3338 = vmatprep.subr.mxu0 0.0
    %3339 = vmatpush1.msra.mxu0 0.0
    %3340 = vmatprep.subr.mxu0 0.0
    %3341 = vmatpush1.msra.mxu0 0.0
    %3342 = vmatprep.subr.mxu0 0.0
    %3343 = vmatpush1.msra.mxu0 0.0
    %3344 = vmatprep.subr.mxu0 0.0
    %3345 = vmatpush1.msra.mxu0 0.0
    %3346 = vmatprep.subr.mxu0 0.0
    %3347 = vmatpush1.msra.mxu0 0.0
    %3348 = vmatprep.subr.mxu0 0.0
    %3349 = vmatpush1.msra.mxu0 0.0
    %3350 = vmatprep.subr.mxu0 0.0
    %3351 = vmatpush1.msra.mxu0 0.0
    %3352 = vmatprep.subr.mxu0 0.0
    %3353 = vmatpush1.msra.mxu0 0.0
    %3354 = vmatprep.subr.mxu0 0.0
    %3355 = vmatpush1.msra.mxu0 0.0
    %3356 = vmatprep.subr.mxu0 0.0
    %3357 = vmatpush1.msra.mxu0 0.0
    %3358 = vmatprep.subr.mxu0 0.0
    %3359 = vmatpush1.msra.mxu0 0.0
    %3360 = vmatprep.subr.mxu0 0.0
    %3361 = vmatpush1.msra.mxu0 0.0
    %3362 = vmatprep.subr.mxu0 0.0
    %3363 = vmatpush1.msra.mxu0 0.0
    %3364 = vmatprep.subr.mxu0 0.0
    %3365 = vmatpush1.msra.mxu0 0.0
    %3366 = vmatprep.mubr.f32.mxu0 0.0
    %v3367 = vand.u32 %v2968, 4294901760
    %v3368 = vsub.f32 %v2968, %v3367
    %v3369 = vand.u32 %v3368, 4294901760
    %3370 = vmatmul.mubr.f32.gmra.mrb[0].mxu0 %v3369
    %v3371 = vpop.f32.mrb[0].mxu0
    %v3372 = vadd.f32 %v3274, %v3371
    %v3373 = vpop.f32.mrb[0].mxu0
    %3374 = vmatprep.mubr.f32.mxu0 0.0
    %v3375 = vand.u32 %v2971, 4294901760
    %v3376 = vsub.f32 %v2971, %v3375
    %v3377 = vand.u32 %v3376, 4294901760
    %3378 = vmatmul.mubr.f32.gmra.mrb[0].mxu0 %v3377
    %v3379 = vpop.f32.mrb[0].mxu0
    %v3380 = vadd.f32 %v3281, %v3379
    %v3381 = vpop.f32.mrb[0].mxu0
    %3382 = vmatprep.mubr.f32.mxu0 0.0
    %v3383 = vand.u32 %v2974, 4294901760
    %v3384 = vsub.f32 %v2974, %v3383
    %v3385 = vand.u32 %v3384, 4294901760
    %3386 = vmatmul.mubr.f32.gmra.mrb[0].mxu0 %v3385
    %v3387 = vpop.f32.mrb[0].mxu0
    %v3388 = vadd.f32 %v3288, %v3387
    %v3389 = vpop.f32.mrb[0].mxu0
    %3390 = vmatprep.mubr.f32.mxu0 0.0
    %v3391 = vand.u32 %v2977, 4294901760
    %v3392 = vsub.f32 %v2977, %v3391
    %v3393 = vand.u32 %v3392, 4294901760
    %3394 = vmatmul.mubr.f32.gmra.mrb[0].mxu0 %v3393
    %v3395 = vpop.f32.mrb[0].mxu0
    %v3396 = vadd.f32 %v3295, %v3395
    %v3397 = vpop.f32.mrb[0].mxu0
    %3398 = vdwg.mxu0
    %3399 = vmatprep.subr.mxu0 0.0
    %v3400 = vand.u32 %v2859, 4294901760
    %v3401 = vsub.f32 %v2859, %v3400
    %v3402 = vand.u32 %v3401, 4294901760
    %3403 = vmatpush1.msra.mxu0 %v3402
    %3404 = vmatprep.subr.mxu0 0.0
    %v3405 = vand.u32 %v2860, 4294901760
    %v3406 = vsub.f32 %v2860, %v3405
    %v3407 = vand.u32 %v3406, 4294901760
    %3408 = vmatpush1.msra.mxu0 %v3407
    %3409 = vmatprep.subr.mxu0 0.0
    %v3410 = vand.u32 %v2861, 4294901760
    %v3411 = vsub.f32 %v2861, %v3410
    %v3412 = vand.u32 %v3411, 4294901760
    %3413 = vmatpush1.msra.mxu0 %v3412
    %3414 = vmatprep.subr.mxu0 0.0
    %v3415 = vand.u32 %v2862, 4294901760
    %v3416 = vsub.f32 %v2862, %v3415
    %v3417 = vand.u32 %v3416, 4294901760
    %3418 = vmatpush1.msra.mxu0 %v3417
    %3419 = vmatprep.subr.mxu0 0.0
    %3420 = vmatpush1.msra.mxu0 0.0
    %3421 = vmatprep.subr.mxu0 0.0
    %3422 = vmatpush1.msra.mxu0 0.0
    %3423 = vmatprep.subr.mxu0 0.0
    %3424 = vmatpush1.msra.mxu0 0.0
    %3425 = vmatprep.subr.mxu0 0.0
    %3426 = vmatpush1.msra.mxu0 0.0
    %3427 = vmatprep.subr.mxu0 0.0
    %3428 = vmatpush1.msra.mxu0 0.0
    %3429 = vmatprep.subr.mxu0 0.0
    %3430 = vmatpush1.msra.mxu0 0.0
    %3431 = vmatprep.subr.mxu0 0.0
    %3432 = vmatpush1.msra.mxu0 0.0
    %3433 = vmatprep.subr.mxu0 0.0
    %3434 = vmatpush1.msra.mxu0 0.0
    %3435 = vmatprep.subr.mxu0 0.0
    %3436 = vmatpush1.msra.mxu0 0.0
    %3437 = vmatprep.subr.mxu0 0.0
    %3438 = vmatpush1.msra.mxu0 0.0
    %3439 = vmatprep.subr.mxu0 0.0
    %3440 = vmatpush1.msra.mxu0 0.0
    %3441 = vmatprep.subr.mxu0 0.0
    %3442 = vmatpush1.msra.mxu0 0.0
    %3443 = vmatprep.subr.mxu0 0.0
    %3444 = vmatpush1.msra.mxu0 0.0
    %3445 = vmatprep.subr.mxu0 0.0
    %3446 = vmatpush1.msra.mxu0 0.0
    %3447 = vmatprep.subr.mxu0 0.0
    %3448 = vmatpush1.msra.mxu0 0.0
    %3449 = vmatprep.subr.mxu0 0.0
    %3450 = vmatpush1.msra.mxu0 0.0
    %3451 = vmatprep.subr.mxu0 0.0
    %3452 = vmatpush1.msra.mxu0 0.0
    %3453 = vmatprep.subr.mxu0 0.0
    %3454 = vmatpush1.msra.mxu0 0.0
    %3455 = vmatprep.subr.mxu0 0.0
    %3456 = vmatpush1.msra.mxu0 0.0
    %3457 = vmatprep.subr.mxu0 0.0
    %3458 = vmatpush1.msra.mxu0 0.0
    %3459 = vmatprep.subr.mxu0 0.0
    %3460 = vmatpush1.msra.mxu0 0.0
    %3461 = vmatprep.subr.mxu0 0.0
    %3462 = vmatpush1.msra.mxu0 0.0
    %3463 = vmatprep.subr.mxu0 0.0
    %3464 = vmatpush1.msra.mxu0 0.0
    %3465 = vmatprep.subr.mxu0 0.0
    %3466 = vmatpush1.msra.mxu0 0.0
    %3467 = vmatprep.subr.mxu0 0.0
    %3468 = vmatpush1.msra.mxu0 0.0
    %3469 = vmatprep.subr.mxu0 0.0
    %3470 = vmatpush1.msra.mxu0 0.0
    %3471 = vmatprep.subr.mxu0 0.0
    %3472 = vmatpush1.msra.mxu0 0.0
    %3473 = vmatprep.subr.mxu0 0.0
    %3474 = vmatpush1.msra.mxu0 0.0
    %3475 = vmatprep.mubr.f32.mxu0 0.0
    %v3476 = vand.u32 %v2968, 4294901760
    %3477 = vmatmul.mubr.f32.gmra.mrb[0].mxu0 %v3476
    %v3478 = vpop.f32.mrb[0].mxu0
    %v3479 = vadd.f32 %v3372, %v3478
    %v3480 = vpop.f32.mrb[0].mxu0
    %3481 = vmatprep.mubr.f32.mxu0 0.0
    %v3482 = vand.u32 %v2971, 4294901760
    %3483 = vmatmul.mubr.f32.gmra.mrb[0].mxu0 %v3482
    %v3484 = vpop.f32.mrb[0].mxu0
    %v3485 = vadd.f32 %v3380, %v3484
    %v3486 = vpop.f32.mrb[0].mxu0
    %3487 = vmatprep.mubr.f32.mxu0 0.0
    %v3488 = vand.u32 %v2974, 4294901760
    %3489 = vmatmul.mubr.f32.gmra.mrb[0].mxu0 %v3488
    %v3490 = vpop.f32.mrb[0].mxu0
    %v3491 = vadd.f32 %v3388, %v3490
    %v3492 = vpop.f32.mrb[0].mxu0
    %3493 = vmatprep.mubr.f32.mxu0 0.0
    %v3494 = vand.u32 %v2977, 4294901760
    %3495 = vmatmul.mubr.f32.gmra.mrb[0].mxu0 %v3494
    %v3496 = vpop.f32.mrb[0].mxu0
    %v3497 = vadd.f32 %v3396, %v3496
    %v3498 = vpop.f32.mrb[0].mxu0
    %3499 = vdwg.mxu0
    %3500 = vmatprep.subr.mxu0 0.0
    %v3501 = vand.u32 %v2859, 4294901760
    %3502 = vmatpush1.msra.mxu0 %v3501
    %3503 = vmatprep.subr.mxu0 0.0
    %v3504 = vand.u32 %v2860, 4294901760
    %3505 = vmatpush1.msra.mxu0 %v3504
    %3506 = vmatprep.subr.mxu0 0.0
    %v3507 = vand.u32 %v2861, 4294901760
    %3508 = vmatpush1.msra.mxu0 %v3507
    %3509 = vmatprep.subr.mxu0 0.0
    %v3510 = vand.u32 %v2862, 4294901760
    %3511 = vmatpush1.msra.mxu0 %v3510
    %3512 = vmatprep.subr.mxu0 0.0
    %3513 = vmatpush1.msra.mxu0 0.0
    %3514 = vmatprep.subr.mxu0 0.0
    %3515 = vmatpush1.msra.mxu0 0.0
    %3516 = vmatprep.subr.mxu0 0.0
    %3517 = vmatpush1.msra.mxu0 0.0
    %3518 = vmatprep.subr.mxu0 0.0
    %3519 = vmatpush1.msra.mxu0 0.0
    %3520 = vmatprep.subr.mxu0 0.0
    %3521 = vmatpush1.msra.mxu0 0.0
    %3522 = vmatprep.subr.mxu0 0.0
    %3523 = vmatpush1.msra.mxu0 0.0
    %3524 = vmatprep.subr.mxu0 0.0
    %3525 = vmatpush1.msra.mxu0 0.0
    %3526 = vmatprep.subr.mxu0 0.0
    %3527 = vmatpush1.msra.mxu0 0.0
    %3528 = vmatprep.subr.mxu0 0.0
    %3529 = vmatpush1.msra.mxu0 0.0
    %3530 = vmatprep.subr.mxu0 0.0
    %3531 = vmatpush1.msra.mxu0 0.0
    %3532 = vmatprep.subr.mxu0 0.0
    %3533 = vmatpush1.msra.mxu0 0.0
    %3534 = vmatprep.subr.mxu0 0.0
    %3535 = vmatpush1.msra.mxu0 0.0
    %3536 = vmatprep.subr.mxu0 0.0
    %3537 = vmatpush1.msra.mxu0 0.0
    %3538 = vmatprep.subr.mxu0 0.0
    %3539 = vmatpush1.msra.mxu0 0.0
    %3540 = vmatprep.subr.mxu0 0.0
    %3541 = vmatpush1.msra.mxu0 0.0
    %3542 = vmatprep.subr.mxu0 0.0
    %3543 = vmatpush1.msra.mxu0 0.0
    %3544 = vmatprep.subr.mxu0 0.0
    %3545 = vmatpush1.msra.mxu0 0.0
    %3546 = vmatprep.subr.mxu0 0.0
    %3547 = vmatpush1.msra.mxu0 0.0
    %3548 = vmatprep.subr.mxu0 0.0
    %3549 = vmatpush1.msra.mxu0 0.0
    %3550 = vmatprep.subr.mxu0 0.0
    %3551 = vmatpush1.msra.mxu0 0.0
    %3552 = vmatprep.subr.mxu0 0.0
    %3553 = vmatpush1.msra.mxu0 0.0
    %3554 = vmatprep.subr.mxu0 0.0
    %3555 = vmatpush1.msra.mxu0 0.0
    %3556 = vmatprep.subr.mxu0 0.0
    %3557 = vmatpush1.msra.mxu0 0.0
    %3558 = vmatprep.subr.mxu0 0.0
    %3559 = vmatpush1.msra.mxu0 0.0
    %3560 = vmatprep.subr.mxu0 0.0
    %3561 = vmatpush1.msra.mxu0 0.0
    %3562 = vmatprep.subr.mxu0 0.0
    %3563 = vmatpush1.msra.mxu0 0.0
    %3564 = vmatprep.subr.mxu0 0.0
    %3565 = vmatpush1.msra.mxu0 0.0
    %3566 = vmatprep.subr.mxu0 0.0
    %3567 = vmatpush1.msra.mxu0 0.0
    %3568 = vmatprep.mubr.f32.mxu0 0.0
    %v3569 = vand.u32 %v2968, 4294901760
    %3570 = vmatmul.mubr.f32.gmra.mrb[0].mxu0 %v3569
    %v3571 = vpop.f32.mrb[0].mxu0
    %v3572 = vadd.f32 %v3479, %v3571
    %v3573 = vpop.f32.mrb[0].mxu0
    %3574 = vmatprep.mubr.f32.mxu0 0.0
    %v3575 = vand.u32 %v2971, 4294901760
    %3576 = vmatmul.mubr.f32.gmra.mrb[0].mxu0 %v3575
    %v3577 = vpop.f32.mrb[0].mxu0
    %v3578 = vadd.f32 %v3485, %v3577
    %v3579 = vpop.f32.mrb[0].mxu0
    %3580 = vmatprep.mubr.f32.mxu0 0.0
    %v3581 = vand.u32 %v2974, 4294901760
    %3582 = vmatmul.mubr.f32.gmra.mrb[0].mxu0 %v3581
    %v3583 = vpop.f32.mrb[0].mxu0
    %v3584 = vadd.f32 %v3491, %v3583
    %v3585 = vpop.f32.mrb[0].mxu0
    %3586 = vmatprep.mubr.f32.mxu0 0.0
    %v3587 = vand.u32 %v2977, 4294901760
    %3588 = vmatmul.mubr.f32.gmra.mrb[0].mxu0 %v3587
    %v3589 = vpop.f32.mrb[0].mxu0
    %v3590 = vadd.f32 %v3497, %v3589
    %v3591 = vpop.f32.mrb[0].mxu0
    %3592 = vdwg.mxu0
    %3593 = vmatprep.subr.mxu0 0.0
    %v3594 = vand.u32 %v2863, 4294901760
    %3595 = vmatpush1.msra.mxu0 %v3594
    %3596 = vmatprep.subr.mxu0 0.0
    %v3597 = vand.u32 %v2864, 4294901760
    %3598 = vmatpush1.msra.mxu0 %v3597
    %3599 = vmatprep.subr.mxu0 0.0
    %v3600 = vand.u32 %v2865, 4294901760
    %3601 = vmatpush1.msra.mxu0 %v3600
    %3602 = vmatprep.subr.mxu0 0.0
    %v3603 = vand.u32 %v2866, 4294901760
    %3604 = vmatpush1.msra.mxu0 %v3603
    %3605 = vmatprep.subr.mxu0 0.0
    %3606 = vmatpush1.msra.mxu0 0.0
    %3607 = vmatprep.subr.mxu0 0.0
    %3608 = vmatpush1.msra.mxu0 0.0
    %3609 = vmatprep.subr.mxu0 0.0
    %3610 = vmatpush1.msra.mxu0 0.0
    %3611 = vmatprep.subr.mxu0 0.0
    %3612 = vmatpush1.msra.mxu0 0.0
    %3613 = vmatprep.subr.mxu0 0.0
    %3614 = vmatpush1.msra.mxu0 0.0
    %3615 = vmatprep.subr.mxu0 0.0
    %3616 = vmatpush1.msra.mxu0 0.0
    %3617 = vmatprep.subr.mxu0 0.0
    %3618 = vmatpush1.msra.mxu0 0.0
    %3619 = vmatprep.subr.mxu0 0.0
    %3620 = vmatpush1.msra.mxu0 0.0
    %3621 = vmatprep.subr.mxu0 0.0
    %3622 = vmatpush1.msra.mxu0 0.0
    %3623 = vmatprep.subr.mxu0 0.0
    %3624 = vmatpush1.msra.mxu0 0.0
    %3625 = vmatprep.subr.mxu0 0.0
    %3626 = vmatpush1.msra.mxu0 0.0
    %3627 = vmatprep.subr.mxu0 0.0
    %3628 = vmatpush1.msra.mxu0 0.0
    %3629 = vmatprep.subr.mxu0 0.0
    %3630 = vmatpush1.msra.mxu0 0.0
    %3631 = vmatprep.subr.mxu0 0.0
    %3632 = vmatpush1.msra.mxu0 0.0
    %3633 = vmatprep.subr.mxu0 0.0
    %3634 = vmatpush1.msra.mxu0 0.0
    %3635 = vmatprep.subr.mxu0 0.0
    %3636 = vmatpush1.msra.mxu0 0.0
    %3637 = vmatprep.subr.mxu0 0.0
    %3638 = vmatpush1.msra.mxu0 0.0
    %3639 = vmatprep.subr.mxu0 0.0
    %3640 = vmatpush1.msra.mxu0 0.0
    %3641 = vmatprep.subr.mxu0 0.0
    %3642 = vmatpush1.msra.mxu0 0.0
    %3643 = vmatprep.subr.mxu0 0.0
    %3644 = vmatpush1.msra.mxu0 0.0
    %3645 = vmatprep.subr.mxu0 0.0
    %3646 = vmatpush1.msra.mxu0 0.0
    %3647 = vmatprep.subr.mxu0 0.0
    %3648 = vmatpush1.msra.mxu0 0.0
    %3649 = vmatprep.subr.mxu0 0.0
    %3650 = vmatpush1.msra.mxu0 0.0
    %3651 = vmatprep.subr.mxu0 0.0
    %3652 = vmatpush1.msra.mxu0 0.0
    %3653 = vmatprep.subr.mxu0 0.0
    %3654 = vmatpush1.msra.mxu0 0.0
    %3655 = vmatprep.subr.mxu0 0.0
    %3656 = vmatpush1.msra.mxu0 0.0
    %3657 = vmatprep.subr.mxu0 0.0
    %3658 = vmatpush1.msra.mxu0 0.0
    %3659 = vmatprep.subr.mxu0 0.0
    %3660 = vmatpush1.msra.mxu0 0.0
    %3661 = vmatprep.mubr.f32.mxu0 0.0
    %v3662 = vand.u32 %v2968, 4294901760
    %v3663 = vsub.f32 %v2968, %v3662
    %v3664 = vand.u32 %v3663, 4294901760
    %v3665 = vsub.f32 %v3663, %v3664
    %v3666 = vand.u32 %v3665, 4294901760
    %3667 = vmatmul.mubr.f32.gmra.mrb[0].mxu0 %v3666
    %v3668 = vpop.f32.mrb[0].mxu0
    %v3669 = vadd.f32 0.0, %v3668
    %v3670 = vpop.f32.mrb[0].mxu0
    %3671 = vmatprep.mubr.f32.mxu0 0.0
    %v3672 = vand.u32 %v2971, 4294901760
    %v3673 = vsub.f32 %v2971, %v3672
    %v3674 = vand.u32 %v3673, 4294901760
    %v3675 = vsub.f32 %v3673, %v3674
    %v3676 = vand.u32 %v3675, 4294901760
    %3677 = vmatmul.mubr.f32.gmra.mrb[0].mxu0 %v3676
    %v3678 = vpop.f32.mrb[0].mxu0
    %v3679 = vadd.f32 0.0, %v3678
    %v3680 = vpop.f32.mrb[0].mxu0
    %3681 = vmatprep.mubr.f32.mxu0 0.0
    %v3682 = vand.u32 %v2974, 4294901760
    %v3683 = vsub.f32 %v2974, %v3682
    %v3684 = vand.u32 %v3683, 4294901760
    %v3685 = vsub.f32 %v3683, %v3684
    %v3686 = vand.u32 %v3685, 4294901760
    %3687 = vmatmul.mubr.f32.gmra.mrb[0].mxu0 %v3686
    %v3688 = vpop.f32.mrb[0].mxu0
    %v3689 = vadd.f32 0.0, %v3688
    %v3690 = vpop.f32.mrb[0].mxu0
    %3691 = vmatprep.mubr.f32.mxu0 0.0
    %v3692 = vand.u32 %v2977, 4294901760
    %v3693 = vsub.f32 %v2977, %v3692
    %v3694 = vand.u32 %v3693, 4294901760
    %v3695 = vsub.f32 %v3693, %v3694
    %v3696 = vand.u32 %v3695, 4294901760
    %3697 = vmatmul.mubr.f32.gmra.mrb[0].mxu0 %v3696
    %v3698 = vpop.f32.mrb[0].mxu0
    %v3699 = vadd.f32 0.0, %v3698
    %v3700 = vpop.f32.mrb[0].mxu0
    %3701 = vdwg.mxu0
    %3702 = vmatprep.subr.mxu0 0.0
    %v3703 = vand.u32 %v2863, 4294901760
    %v3704 = vsub.f32 %v2863, %v3703
    %v3705 = vand.u32 %v3704, 4294901760
    %v3706 = vsub.f32 %v3704, %v3705
    %v3707 = vand.u32 %v3706, 4294901760
    %3708 = vmatpush1.msra.mxu0 %v3707
    %3709 = vmatprep.subr.mxu0 0.0
    %v3710 = vand.u32 %v2864, 4294901760
    %v3711 = vsub.f32 %v2864, %v3710
    %v3712 = vand.u32 %v3711, 4294901760
    %v3713 = vsub.f32 %v3711, %v3712
    %v3714 = vand.u32 %v3713, 4294901760
    %3715 = vmatpush1.msra.mxu0 %v3714
    %3716 = vmatprep.subr.mxu0 0.0
    %v3717 = vand.u32 %v2865, 4294901760
    %v3718 = vsub.f32 %v2865, %v3717
    %v3719 = vand.u32 %v3718, 4294901760
    %v3720 = vsub.f32 %v3718, %v3719
    %v3721 = vand.u32 %v3720, 4294901760
    %3722 = vmatpush1.msra.mxu0 %v3721
    %3723 = vmatprep.subr.mxu0 0.0
    %v3724 = vand.u32 %v2866, 4294901760
    %v3725 = vsub.f32 %v2866, %v3724
    %v3726 = vand.u32 %v3725, 4294901760
    %v3727 = vsub.f32 %v3725, %v3726
    %v3728 = vand.u32 %v3727, 4294901760
    %3729 = vmatpush1.msra.mxu0 %v3728
    %3730 = vmatprep.subr.mxu0 0.0
    %3731 = vmatpush1.msra.mxu0 0.0
    %3732 = vmatprep.subr.mxu0 0.0
    %3733 = vmatpush1.msra.mxu0 0.0
    %3734 = vmatprep.subr.mxu0 0.0
    %3735 = vmatpush1.msra.mxu0 0.0
    %3736 = vmatprep.subr.mxu0 0.0
    %3737 = vmatpush1.msra.mxu0 0.0
    %3738 = vmatprep.subr.mxu0 0.0
    %3739 = vmatpush1.msra.mxu0 0.0
    %3740 = vmatprep.subr.mxu0 0.0
    %3741 = vmatpush1.msra.mxu0 0.0
    %3742 = vmatprep.subr.mxu0 0.0
    %3743 = vmatpush1.msra.mxu0 0.0
    %3744 = vmatprep.subr.mxu0 0.0
    %3745 = vmatpush1.msra.mxu0 0.0
    %3746 = vmatprep.subr.mxu0 0.0
    %3747 = vmatpush1.msra.mxu0 0.0
    %3748 = vmatprep.subr.mxu0 0.0
    %3749 = vmatpush1.msra.mxu0 0.0
    %3750 = vmatprep.subr.mxu0 0.0
    %3751 = vmatpush1.msra.mxu0 0.0
    %3752 = vmatprep.subr.mxu0 0.0
    %3753 = vmatpush1.msra.mxu0 0.0
    %3754 = vmatprep.subr.mxu0 0.0
    %3755 = vmatpush1.msra.mxu0 0.0
    %3756 = vmatprep.subr.mxu0 0.0
    %3757 = vmatpush1.msra.mxu0 0.0
    %3758 = vmatprep.subr.mxu0 0.0
    %3759 = vmatpush1.msra.mxu0 0.0
    %3760 = vmatprep.subr.mxu0 0.0
    %3761 = vmatpush1.msra.mxu0 0.0
    %3762 = vmatprep.subr.mxu0 0.0
    %3763 = vmatpush1.msra.mxu0 0.0
    %3764 = vmatprep.subr.mxu0 0.0
    %3765 = vmatpush1.msra.mxu0 0.0
    %3766 = vmatprep.subr.mxu0 0.0
    %3767 = vmatpush1.msra.mxu0 0.0
    %3768 = vmatprep.subr.mxu0 0.0
    %3769 = vmatpush1.msra.mxu0 0.0
    %3770 = vmatprep.subr.mxu0 0.0
    %3771 = vmatpush1.msra.mxu0 0.0
    %3772 = vmatprep.subr.mxu0 0.0
    %3773 = vmatpush1.msra.mxu0 0.0
    %3774 = vmatprep.subr.mxu0 0.0
    %3775 = vmatpush1.msra.mxu0 0.0
    %3776 = vmatprep.subr.mxu0 0.0
    %3777 = vmatpush1.msra.mxu0 0.0
    %3778 = vmatprep.subr.mxu0 0.0
    %3779 = vmatpush1.msra.mxu0 0.0
    %3780 = vmatprep.subr.mxu0 0.0
    %3781 = vmatpush1.msra.mxu0 0.0
    %3782 = vmatprep.subr.mxu0 0.0
    %3783 = vmatpush1.msra.mxu0 0.0
    %3784 = vmatprep.subr.mxu0 0.0
    %3785 = vmatpush1.msra.mxu0 0.0
    %3786 = vmatprep.mubr.f32.mxu0 0.0
    %v3787 = vand.u32 %v2968, 4294901760
    %3788 = vmatmul.mubr.f32.gmra.mrb[0].mxu0 %v3787
    %v3789 = vpop.f32.mrb[0].mxu0
    %v3790 = vadd.f32 %v3669, %v3789
    %v3791 = vpop.f32.mrb[0].mxu0
    %3792 = vmatprep.mubr.f32.mxu0 0.0
    %v3793 = vand.u32 %v2971, 4294901760
    %3794 = vmatmul.mubr.f32.gmra.mrb[0].mxu0 %v3793
    %v3795 = vpop.f32.mrb[0].mxu0
    %v3796 = vadd.f32 %v3679, %v3795
    %v3797 = vpop.f32.mrb[0].mxu0
    %3798 = vmatprep.mubr.f32.mxu0 0.0
    %v3799 = vand.u32 %v2974, 4294901760
    %3800 = vmatmul.mubr.f32.gmra.mrb[0].mxu0 %v3799
    %v3801 = vpop.f32.mrb[0].mxu0
    %v3802 = vadd.f32 %v3689, %v3801
    %v3803 = vpop.f32.mrb[0].mxu0
    %3804 = vmatprep.mubr.f32.mxu0 0.0
    %v3805 = vand.u32 %v2977, 4294901760
    %3806 = vmatmul.mubr.f32.gmra.mrb[0].mxu0 %v3805
    %v3807 = vpop.f32.mrb[0].mxu0
    %v3808 = vadd.f32 %v3699, %v3807
    %v3809 = vpop.f32.mrb[0].mxu0
    %3810 = vdwg.mxu0
    %3811 = vmatprep.subr.mxu0 0.0
    %v3812 = vand.u32 %v2863, 4294901760
    %v3813 = vsub.f32 %v2863, %v3812
    %3814 = vmatpush1.msra.mxu0 %v3813
    %3815 = vmatprep.subr.mxu0 0.0
    %v3816 = vand.u32 %v2864, 4294901760
    %v3817 = vsub.f32 %v2864, %v3816
    %3818 = vmatpush1.msra.mxu0 %v3817
    %3819 = vmatprep.subr.mxu0 0.0
    %v3820 = vand.u32 %v2865, 4294901760
    %v3821 = vsub.f32 %v2865, %v3820
    %3822 = vmatpush1.msra.mxu0 %v3821
    %3823 = vmatprep.subr.mxu0 0.0
    %v3824 = vand.u32 %v2866, 4294901760
    %v3825 = vsub.f32 %v2866, %v3824
    %3826 = vmatpush1.msra.mxu0 %v3825
    %3827 = vmatprep.subr.mxu0 0.0
    %3828 = vmatpush1.msra.mxu0 0.0
    %3829 = vmatprep.subr.mxu0 0.0
    %3830 = vmatpush1.msra.mxu0 0.0
    %3831 = vmatprep.subr.mxu0 0.0
    %3832 = vmatpush1.msra.mxu0 0.0
    %3833 = vmatprep.subr.mxu0 0.0
    %3834 = vmatpush1.msra.mxu0 0.0
    %3835 = vmatprep.subr.mxu0 0.0
    %3836 = vmatpush1.msra.mxu0 0.0
    %3837 = vmatprep.subr.mxu0 0.0
    %3838 = vmatpush1.msra.mxu0 0.0
    %3839 = vmatprep.subr.mxu0 0.0
    %3840 = vmatpush1.msra.mxu0 0.0
    %3841 = vmatprep.subr.mxu0 0.0
    %3842 = vmatpush1.msra.mxu0 0.0
    %3843 = vmatprep.subr.mxu0 0.0
    %3844 = vmatpush1.msra.mxu0 0.0
    %3845 = vmatprep.subr.mxu0 0.0
    %3846 = vmatpush1.msra.mxu0 0.0
    %3847 = vmatprep.subr.mxu0 0.0
    %3848 = vmatpush1.msra.mxu0 0.0
    %3849 = vmatprep.subr.mxu0 0.0
    %3850 = vmatpush1.msra.mxu0 0.0
    %3851 = vmatprep.subr.mxu0 0.0
    %3852 = vmatpush1.msra.mxu0 0.0
    %3853 = vmatprep.subr.mxu0 0.0
    %3854 = vmatpush1.msra.mxu0 0.0
    %3855 = vmatprep.subr.mxu0 0.0
    %3856 = vmatpush1.msra.mxu0 0.0
    %3857 = vmatprep.subr.mxu0 0.0
    %3858 = vmatpush1.msra.mxu0 0.0
    %3859 = vmatprep.subr.mxu0 0.0
    %3860 = vmatpush1.msra.mxu0 0.0
    %3861 = vmatprep.subr.mxu0 0.0
    %3862 = vmatpush1.msra.mxu0 0.0
    %3863 = vmatprep.subr.mxu0 0.0
    %3864 = vmatpush1.msra.mxu0 0.0
    %3865 = vmatprep.subr.mxu0 0.0
    %3866 = vmatpush1.msra.mxu0 0.0
    %3867 = vmatprep.subr.mxu0 0.0
    %3868 = vmatpush1.msra.mxu0 0.0
    %3869 = vmatprep.subr.mxu0 0.0
    %3870 = vmatpush1.msra.mxu0 0.0
    %3871 = vmatprep.subr.mxu0 0.0
    %3872 = vmatpush1.msra.mxu0 0.0
    %3873 = vmatprep.subr.mxu0 0.0
    %3874 = vmatpush1.msra.mxu0 0.0
    %3875 = vmatprep.subr.mxu0 0.0
    %3876 = vmatpush1.msra.mxu0 0.0
    %3877 = vmatprep.subr.mxu0 0.0
    %3878 = vmatpush1.msra.mxu0 0.0
    %3879 = vmatprep.subr.mxu0 0.0
    %3880 = vmatpush1.msra.mxu0 0.0
    %3881 = vmatprep.subr.mxu0 0.0
    %3882 = vmatpush1.msra.mxu0 0.0
    %3883 = vmatprep.mubr.f32.mxu0 0.0
    %v3884 = vand.u32 %v2968, 4294901760
    %v3885 = vsub.f32 %v2968, %v3884
    %3886 = vmatmul.mubr.f32.gmra.mrb[0].mxu0 %v3885
    %v3887 = vpop.f32.mrb[0].mxu0
    %v3888 = vadd.f32 %v3790, %v3887
    %v3889 = vpop.f32.mrb[0].mxu0
    %3890 = vmatprep.mubr.f32.mxu0 0.0
    %v3891 = vand.u32 %v2971, 4294901760
    %v3892 = vsub.f32 %v2971, %v3891
    %3893 = vmatmul.mubr.f32.gmra.mrb[0].mxu0 %v3892
    %v3894 = vpop.f32.mrb[0].mxu0
    %v3895 = vadd.f32 %v3796, %v3894
    %v3896 = vpop.f32.mrb[0].mxu0
    %3897 = vmatprep.mubr.f32.mxu0 0.0
    %v3898 = vand.u32 %v2974, 4294901760
    %v3899 = vsub.f32 %v2974, %v3898
    %3900 = vmatmul.mubr.f32.gmra.mrb[0].mxu0 %v3899
    %v3901 = vpop.f32.mrb[0].mxu0
    %v3902 = vadd.f32 %v3802, %v3901
    %v3903 = vpop.f32.mrb[0].mxu0
    %3904 = vmatprep.mubr.f32.mxu0 0.0
    %v3905 = vand.u32 %v2977, 4294901760
    %v3906 = vsub.f32 %v2977, %v3905
    %3907 = vmatmul.mubr.f32.gmra.mrb[0].mxu0 %v3906
    %v3908 = vpop.f32.mrb[0].mxu0
    %v3909 = vadd.f32 %v3808, %v3908
    %v3910 = vpop.f32.mrb[0].mxu0
    %3911 = vdwg.mxu0
    %3912 = vmatprep.subr.mxu0 0.0
    %v3913 = vand.u32 %v2863, 4294901760
    %3914 = vmatpush1.msra.mxu0 %v3913
    %3915 = vmatprep.subr.mxu0 0.0
    %v3916 = vand.u32 %v2864, 4294901760
    %3917 = vmatpush1.msra.mxu0 %v3916
    %3918 = vmatprep.subr.mxu0 0.0
    %v3919 = vand.u32 %v2865, 4294901760
    %3920 = vmatpush1.msra.mxu0 %v3919
    %3921 = vmatprep.subr.mxu0 0.0
    %v3922 = vand.u32 %v2866, 4294901760
    %3923 = vmatpush1.msra.mxu0 %v3922
    %3924 = vmatprep.subr.mxu0 0.0
    %3925 = vmatpush1.msra.mxu0 0.0
    %3926 = vmatprep.subr.mxu0 0.0
    %3927 = vmatpush1.msra.mxu0 0.0
    %3928 = vmatprep.subr.mxu0 0.0
    %3929 = vmatpush1.msra.mxu0 0.0
    %3930 = vmatprep.subr.mxu0 0.0
    %3931 = vmatpush1.msra.mxu0 0.0
    %3932 = vmatprep.subr.mxu0 0.0
    %3933 = vmatpush1.msra.mxu0 0.0
    %3934 = vmatprep.subr.mxu0 0.0
    %3935 = vmatpush1.msra.mxu0 0.0
    %3936 = vmatprep.subr.mxu0 0.0
    %3937 = vmatpush1.msra.mxu0 0.0
    %3938 = vmatprep.subr.mxu0 0.0
    %3939 = vmatpush1.msra.mxu0 0.0
    %3940 = vmatprep.subr.mxu0 0.0
    %3941 = vmatpush1.msra.mxu0 0.0
    %3942 = vmatprep.subr.mxu0 0.0
    %3943 = vmatpush1.msra.mxu0 0.0
    %3944 = vmatprep.subr.mxu0 0.0
    %3945 = vmatpush1.msra.mxu0 0.0
    %3946 = vmatprep.subr.mxu0 0.0
    %3947 = vmatpush1.msra.mxu0 0.0
    %3948 = vmatprep.subr.mxu0 0.0
    %3949 = vmatpush1.msra.mxu0 0.0
    %3950 = vmatprep.subr.mxu0 0.0
    %3951 = vmatpush1.msra.mxu0 0.0
    %3952 = vmatprep.subr.mxu0 0.0
    %3953 = vmatpush1.msra.mxu0 0.0
    %3954 = vmatprep.subr.mxu0 0.0
    %3955 = vmatpush1.msra.mxu0 0.0
    %3956 = vmatprep.subr.mxu0 0.0
    %3957 = vmatpush1.msra.mxu0 0.0
    %3958 = vmatprep.subr.mxu0 0.0
    %3959 = vmatpush1.msra.mxu0 0.0
    %3960 = vmatprep.subr.mxu0 0.0
    %3961 = vmatpush1.msra.mxu0 0.0
    %3962 = vmatprep.subr.mxu0 0.0
    %3963 = vmatpush1.msra.mxu0 0.0
    %3964 = vmatprep.subr.mxu0 0.0
    %3965 = vmatpush1.msra.mxu0 0.0
    %3966 = vmatprep.subr.mxu0 0.0
    %3967 = vmatpush1.msra.mxu0 0.0
    %3968 = vmatprep.subr.mxu0 0.0
    %3969 = vmatpush1.msra.mxu0 0.0
    %3970 = vmatprep.subr.mxu0 0.0
    %3971 = vmatpush1.msra.mxu0 0.0
    %3972 = vmatprep.subr.mxu0 0.0
    %3973 = vmatpush1.msra.mxu0 0.0
    %3974 = vmatprep.subr.mxu0 0.0
    %3975 = vmatpush1.msra.mxu0 0.0
    %3976 = vmatprep.subr.mxu0 0.0
    %3977 = vmatpush1.msra.mxu0 0.0
    %3978 = vmatprep.subr.mxu0 0.0
    %3979 = vmatpush1.msra.mxu0 0.0
    %3980 = vmatprep.mubr.f32.mxu0 0.0
    %v3981 = vand.u32 %v2968, 4294901760
    %v3982 = vsub.f32 %v2968, %v3981
    %v3983 = vand.u32 %v3982, 4294901760
    %3984 = vmatmul.mubr.f32.gmra.mrb[0].mxu0 %v3983
    %v3985 = vpop.f32.mrb[0].mxu0
    %v3986 = vadd.f32 %v3888, %v3985
    %v3987 = vpop.f32.mrb[0].mxu0
    %3988 = vmatprep.mubr.f32.mxu0 0.0
    %v3989 = vand.u32 %v2971, 4294901760
    %v3990 = vsub.f32 %v2971, %v3989
    %v3991 = vand.u32 %v3990, 4294901760
    %3992 = vmatmul.mubr.f32.gmra.mrb[0].mxu0 %v3991
    %v3993 = vpop.f32.mrb[0].mxu0
    %v3994 = vadd.f32 %v3895, %v3993
    %v3995 = vpop.f32.mrb[0].mxu0
    %3996 = vmatprep.mubr.f32.mxu0 0.0
    %v3997 = vand.u32 %v2974, 4294901760
    %v3998 = vsub.f32 %v2974, %v3997
    %v3999 = vand.u32 %v3998, 4294901760
    %4000 = vmatmul.mubr.f32.gmra.mrb[0].mxu0 %v3999
    %v4001 = vpop.f32.mrb[0].mxu0
    %v4002 = vadd.f32 %v3902, %v4001
    %v4003 = vpop.f32.mrb[0].mxu0
    %4004 = vmatprep.mubr.f32.mxu0 0.0
    %v4005 = vand.u32 %v2977, 4294901760
    %v4006 = vsub.f32 %v2977, %v4005
    %v4007 = vand.u32 %v4006, 4294901760
    %4008 = vmatmul.mubr.f32.gmra.mrb[0].mxu0 %v4007
    %v4009 = vpop.f32.mrb[0].mxu0
    %v4010 = vadd.f32 %v3909, %v4009
    %v4011 = vpop.f32.mrb[0].mxu0
    %4012 = vdwg.mxu0
    %4013 = vmatprep.subr.mxu0 0.0
    %v4014 = vand.u32 %v2863, 4294901760
    %v4015 = vsub.f32 %v2863, %v4014
    %v4016 = vand.u32 %v4015, 4294901760
    %4017 = vmatpush1.msra.mxu0 %v4016
    %4018 = vmatprep.subr.mxu0 0.0
    %v4019 = vand.u32 %v2864, 4294901760
    %v4020 = vsub.f32 %v2864, %v4019
    %v4021 = vand.u32 %v4020, 4294901760
    %4022 = vmatpush1.msra.mxu0 %v4021
    %4023 = vmatprep.subr.mxu0 0.0
    %v4024 = vand.u32 %v2865, 4294901760
    %v4025 = vsub.f32 %v2865, %v4024
    %v4026 = vand.u32 %v4025, 4294901760
    %4027 = vmatpush1.msra.mxu0 %v4026
    %4028 = vmatprep.subr.mxu0 0.0
    %v4029 = vand.u32 %v2866, 4294901760
    %v4030 = vsub.f32 %v2866, %v4029
    %v4031 = vand.u32 %v4030, 4294901760
    %4032 = vmatpush1.msra.mxu0 %v4031
    %4033 = vmatprep.subr.mxu0 0.0
    %4034 = vmatpush1.msra.mxu0 0.0
    %4035 = vmatprep.subr.mxu0 0.0
    %4036 = vmatpush1.msra.mxu0 0.0
    %4037 = vmatprep.subr.mxu0 0.0
    %4038 = vmatpush1.msra.mxu0 0.0
    %4039 = vmatprep.subr.mxu0 0.0
    %4040 = vmatpush1.msra.mxu0 0.0
    %4041 = vmatprep.subr.mxu0 0.0
    %4042 = vmatpush1.msra.mxu0 0.0
    %4043 = vmatprep.subr.mxu0 0.0
    %4044 = vmatpush1.msra.mxu0 0.0
    %4045 = vmatprep.subr.mxu0 0.0
    %4046 = vmatpush1.msra.mxu0 0.0
    %4047 = vmatprep.subr.mxu0 0.0
    %4048 = vmatpush1.msra.mxu0 0.0
    %4049 = vmatprep.subr.mxu0 0.0
    %4050 = vmatpush1.msra.mxu0 0.0
    %4051 = vmatprep.subr.mxu0 0.0
    %4052 = vmatpush1.msra.mxu0 0.0
    %4053 = vmatprep.subr.mxu0 0.0
    %4054 = vmatpush1.msra.mxu0 0.0
    %4055 = vmatprep.subr.mxu0 0.0
    %4056 = vmatpush1.msra.mxu0 0.0
    %4057 = vmatprep.subr.mxu0 0.0
    %4058 = vmatpush1.msra.mxu0 0.0
    %4059 = vmatprep.subr.mxu0 0.0
    %4060 = vmatpush1.msra.mxu0 0.0
    %4061 = vmatprep.subr.mxu0 0.0
    %4062 = vmatpush1.msra.mxu0 0.0
    %4063 = vmatprep.subr.mxu0 0.0
    %4064 = vmatpush1.msra.mxu0 0.0
    %4065 = vmatprep.subr.mxu0 0.0
    %4066 = vmatpush1.msra.mxu0 0.0
    %4067 = vmatprep.subr.mxu0 0.0
    %4068 = vmatpush1.msra.mxu0 0.0
    %4069 = vmatprep.subr.mxu0 0.0
    %4070 = vmatpush1.msra.mxu0 0.0
    %4071 = vmatprep.subr.mxu0 0.0
    %4072 = vmatpush1.msra.mxu0 0.0
    %4073 = vmatprep.subr.mxu0 0.0
    %4074 = vmatpush1.msra.mxu0 0.0
    %4075 = vmatprep.subr.mxu0 0.0
    %4076 = vmatpush1.msra.mxu0 0.0
    %4077 = vmatprep.subr.mxu0 0.0
    %4078 = vmatpush1.msra.mxu0 0.0
    %4079 = vmatprep.subr.mxu0 0.0
    %4080 = vmatpush1.msra.mxu0 0.0
    %4081 = vmatprep.subr.mxu0 0.0
    %4082 = vmatpush1.msra.mxu0 0.0
    %4083 = vmatprep.subr.mxu0 0.0
    %4084 = vmatpush1.msra.mxu0 0.0
    %4085 = vmatprep.subr.mxu0 0.0
    %4086 = vmatpush1.msra.mxu0 0.0
    %4087 = vmatprep.subr.mxu0 0.0
    %4088 = vmatpush1.msra.mxu0 0.0
    %4089 = vmatprep.mubr.f32.mxu0 0.0
    %v4090 = vand.u32 %v2968, 4294901760
    %4091 = vmatmul.mubr.f32.gmra.mrb[0].mxu0 %v4090
    %v4092 = vpop.f32.mrb[0].mxu0
    %v4093 = vadd.f32 %v3986, %v4092
    %v4094 = vpop.f32.mrb[0].mxu0
    %4095 = vmatprep.mubr.f32.mxu0 0.0
    %v4096 = vand.u32 %v2971, 4294901760
    %4097 = vmatmul.mubr.f32.gmra.mrb[0].mxu0 %v4096
    %v4098 = vpop.f32.mrb[0].mxu0
    %v4099 = vadd.f32 %v3994, %v4098
    %v4100 = vpop.f32.mrb[0].mxu0
    %4101 = vmatprep.mubr.f32.mxu0 0.0
    %v4102 = vand.u32 %v2974, 4294901760
    %4103 = vmatmul.mubr.f32.gmra.mrb[0].mxu0 %v4102
    %v4104 = vpop.f32.mrb[0].mxu0
    %v4105 = vadd.f32 %v4002, %v4104
    %v4106 = vpop.f32.mrb[0].mxu0
    %4107 = vmatprep.mubr.f32.mxu0 0.0
    %v4108 = vand.u32 %v2977, 4294901760
    %4109 = vmatmul.mubr.f32.gmra.mrb[0].mxu0 %v4108
    %v4110 = vpop.f32.mrb[0].mxu0
    %v4111 = vadd.f32 %v4010, %v4110
    %v4112 = vpop.f32.mrb[0].mxu0
    %4113 = vdwg.mxu0
    %4114 = vmatprep.subr.mxu0 0.0
    %v4115 = vand.u32 %v2863, 4294901760
    %4116 = vmatpush1.msra.mxu0 %v4115
    %4117 = vmatprep.subr.mxu0 0.0
    %v4118 = vand.u32 %v2864, 4294901760
    %4119 = vmatpush1.msra.mxu0 %v4118
    %4120 = vmatprep.subr.mxu0 0.0
    %v4121 = vand.u32 %v2865, 4294901760
    %4122 = vmatpush1.msra.mxu0 %v4121
    %4123 = vmatprep.subr.mxu0 0.0
    %v4124 = vand.u32 %v2866, 4294901760
    %4125 = vmatpush1.msra.mxu0 %v4124
    %4126 = vmatprep.subr.mxu0 0.0
    %4127 = vmatpush1.msra.mxu0 0.0
    %4128 = vmatprep.subr.mxu0 0.0
    %4129 = vmatpush1.msra.mxu0 0.0
    %4130 = vmatprep.subr.mxu0 0.0
    %4131 = vmatpush1.msra.mxu0 0.0
    %4132 = vmatprep.subr.mxu0 0.0
    %4133 = vmatpush1.msra.mxu0 0.0
    %4134 = vmatprep.subr.mxu0 0.0
    %4135 = vmatpush1.msra.mxu0 0.0
    %4136 = vmatprep.subr.mxu0 0.0
    %4137 = vmatpush1.msra.mxu0 0.0
    %4138 = vmatprep.subr.mxu0 0.0
    %4139 = vmatpush1.msra.mxu0 0.0
    %4140 = vmatprep.subr.mxu0 0.0
    %4141 = vmatpush1.msra.mxu0 0.0
    %4142 = vmatprep.subr.mxu0 0.0
    %4143 = vmatpush1.msra.mxu0 0.0
    %4144 = vmatprep.subr.mxu0 0.0
    %4145 = vmatpush1.msra.mxu0 0.0
    %4146 = vmatprep.subr.mxu0 0.0
    %4147 = vmatpush1.msra.mxu0 0.0
    %4148 = vmatprep.subr.mxu0 0.0
    %4149 = vmatpush1.msra.mxu0 0.0
    %4150 = vmatprep.subr.mxu0 0.0
    %4151 = vmatpush1.msra.mxu0 0.0
    %4152 = vmatprep.subr.mxu0 0.0
    %4153 = vmatpush1.msra.mxu0 0.0
    %4154 = vmatprep.subr.mxu0 0.0
    %4155 = vmatpush1.msra.mxu0 0.0
    %4156 = vmatprep.subr.mxu0 0.0
    %4157 = vmatpush1.msra.mxu0 0.0
    %4158 = vmatprep.subr.mxu0 0.0
    %4159 = vmatpush1.msra.mxu0 0.0
    %4160 = vmatprep.subr.mxu0 0.0
    %4161 = vmatpush1.msra.mxu0 0.0
    %4162 = vmatprep.subr.mxu0 0.0
    %4163 = vmatpush1.msra.mxu0 0.0
    %4164 = vmatprep.subr.mxu0 0.0
    %4165 = vmatpush1.msra.mxu0 0.0
    %4166 = vmatprep.subr.mxu0 0.0
    %4167 = vmatpush1.msra.mxu0 0.0
    %4168 = vmatprep.subr.mxu0 0.0
    %4169 = vmatpush1.msra.mxu0 0.0
    %4170 = vmatprep.subr.mxu0 0.0
    %4171 = vmatpush1.msra.mxu0 0.0
    %4172 = vmatprep.subr.mxu0 0.0
    %4173 = vmatpush1.msra.mxu0 0.0
    %4174 = vmatprep.subr.mxu0 0.0
    %4175 = vmatpush1.msra.mxu0 0.0
    %4176 = vmatprep.subr.mxu0 0.0
    %4177 = vmatpush1.msra.mxu0 0.0
    %4178 = vmatprep.subr.mxu0 0.0
    %4179 = vmatpush1.msra.mxu0 0.0
    %4180 = vmatprep.subr.mxu0 0.0
    %4181 = vmatpush1.msra.mxu0 0.0
    %4182 = vmatprep.mubr.f32.mxu0 0.0
    %v4183 = vand.u32 %v2968, 4294901760
    %4184 = vmatmul.mubr.f32.gmra.mrb[0].mxu0 %v4183
    %v4185 = vpop.f32.mrb[0].mxu0
    %v4186 = vadd.f32 %v4093, %v4185
    %v4187 = vpop.f32.mrb[0].mxu0
    %4188 = vmatprep.mubr.f32.mxu0 0.0
    %v4189 = vand.u32 %v2971, 4294901760
    %4190 = vmatmul.mubr.f32.gmra.mrb[0].mxu0 %v4189
    %v4191 = vpop.f32.mrb[0].mxu0
    %v4192 = vadd.f32 %v4099, %v4191
    %v4193 = vpop.f32.mrb[0].mxu0
    %4194 = vmatprep.mubr.f32.mxu0 0.0
    %v4195 = vand.u32 %v2974, 4294901760
    %4196 = vmatmul.mubr.f32.gmra.mrb[0].mxu0 %v4195
    %v4197 = vpop.f32.mrb[0].mxu0
    %v4198 = vadd.f32 %v4105, %v4197
    %v4199 = vpop.f32.mrb[0].mxu0
    %4200 = vmatprep.mubr.f32.mxu0 0.0
    %v4201 = vand.u32 %v2977, 4294901760
    %4202 = vmatmul.mubr.f32.gmra.mrb[0].mxu0 %v4201
    %v4203 = vpop.f32.mrb[0].mxu0
    %v4204 = vadd.f32 %v4111, %v4203
    %v4205 = vpop.f32.mrb[0].mxu0
    %4206 = vdwg.mxu0
    %v4207 = vadd.f32 %v2919, %v3572
    %v4208 = vadd.f32 %v2920, %v3578
    %v4209 = vadd.f32 %v2921, %v3584
    %v4210 = vadd.f32 %v2922, %v3590
    %v4211 = vadd.f32 %v2923, %v4186
    %v4212 = vadd.f32 %v2924, %v4192
    %v4213 = vadd.f32 %v2925, %v4198
    %v4214 = vadd.f32 %v2926, %v4204
    %v4215 = vadd.f32 %v4207, %v2959
    %v4216 = vadd.f32 %v4208, %v2960
    %v4217 = vadd.f32 %v4209, %v2961
    %v4218 = vadd.f32 %v4210, %v2962
    %v4219 = vadd.f32 %v4211, %v2963
    %v4220 = vadd.f32 %v4212, %v2964
    %v4221 = vadd.f32 %v4213, %v2965
    %v4222 = vadd.f32 %v4214, %v2966
    %v4223 = vmul.f32 %v4215, 0.04
    %v4224 = vmul.f32 %v4216, 0.04
    %v4225 = vmul.f32 %v4217, 0.04
    %v4226 = vmul.f32 %v4218, 0.04
    %v4227 = vmul.f32 %v4219, 0.04
    %v4228 = vmul.f32 %v4220, 0.04
    %v4229 = vmul.f32 %v4221, 0.04
    %v4230 = vmul.f32 %v4222, 0.04
    %v4231 = vsub.f32 %v2859, %v4223
    %v4232 = vsub.f32 %v2860, %v4224
    %v4233 = vsub.f32 %v2861, %v4225
    %v4234 = vsub.f32 %v2862, %v4226
    %v4235 = vsub.f32 %v2863, %v4227
    %v4236 = vsub.f32 %v2864, %v4228
    %v4237 = vsub.f32 %v2865, %v4229
    %v4238 = vsub.f32 %v2866, %v4230
    %v4239 = vand.u32 %v68, 4294901760
    %4240 = vmatprep.subr.mxu0 %v4239
    %v4241 = vand.u32 %v67, 4294901760
    %4242 = vmatpush1.msra.mxu0 %v4241
    %v4243 = vand.u32 %v72, 4294901760
    %4244 = vmatprep.subr.mxu0 %v4243
    %v4245 = vand.u32 %v71, 4294901760
    %4246 = vmatpush1.msra.mxu0 %v4245
    %v4247 = vand.u32 %v76, 4294901760
    %4248 = vmatprep.subr.mxu0 %v4247
    %v4249 = vand.u32 %v75, 4294901760
    %4250 = vmatpush1.msra.mxu0 %v4249
    %v4251 = vand.u32 %v80, 4294901760
    %4252 = vmatprep.subr.mxu0 %v4251
    %v4253 = vand.u32 %v79, 4294901760
    %4254 = vmatpush1.msra.mxu0 %v4253
    %v4255 = vand.u32 %v84, 4294901760
    %4256 = vmatprep.subr.mxu0 %v4255
    %v4257 = vand.u32 %v83, 4294901760
    %4258 = vmatpush1.msra.mxu0 %v4257
    %v4259 = vand.u32 %v88, 4294901760
    %4260 = vmatprep.subr.mxu0 %v4259
    %v4261 = vand.u32 %v87, 4294901760
    %4262 = vmatpush1.msra.mxu0 %v4261
    %v4263 = vand.u32 %v92, 4294901760
    %4264 = vmatprep.subr.mxu0 %v4263
    %v4265 = vand.u32 %v91, 4294901760
    %4266 = vmatpush1.msra.mxu0 %v4265
    %v4267 = vand.u32 %v96, 4294901760
    %4268 = vmatprep.subr.mxu0 %v4267
    %v4269 = vand.u32 %v95, 4294901760
    %4270 = vmatpush1.msra.mxu0 %v4269
    %v4271 = vand.u32 %v100, 4294901760
    %4272 = vmatprep.subr.mxu0 %v4271
    %v4273 = vand.u32 %v99, 4294901760
    %4274 = vmatpush1.msra.mxu0 %v4273
    %v4275 = vand.u32 %v104, 4294901760
    %4276 = vmatprep.subr.mxu0 %v4275
    %v4277 = vand.u32 %v103, 4294901760
    %4278 = vmatpush1.msra.mxu0 %v4277
    %v4279 = vand.u32 %v108, 4294901760
    %4280 = vmatprep.subr.mxu0 %v4279
    %v4281 = vand.u32 %v107, 4294901760
    %4282 = vmatpush1.msra.mxu0 %v4281
    %v4283 = vand.u32 %v112, 4294901760
    %4284 = vmatprep.subr.mxu0 %v4283
    %v4285 = vand.u32 %v111, 4294901760
    %4286 = vmatpush1.msra.mxu0 %v4285
    %v4287 = vand.u32 %v116, 4294901760
    %4288 = vmatprep.subr.mxu0 %v4287
    %v4289 = vand.u32 %v115, 4294901760
    %4290 = vmatpush1.msra.mxu0 %v4289
    %v4291 = vand.u32 %v120, 4294901760
    %4292 = vmatprep.subr.mxu0 %v4291
    %v4293 = vand.u32 %v119, 4294901760
    %4294 = vmatpush1.msra.mxu0 %v4293
    %v4295 = vand.u32 %v124, 4294901760
    %4296 = vmatprep.subr.mxu0 %v4295
    %v4297 = vand.u32 %v123, 4294901760
    %4298 = vmatpush1.msra.mxu0 %v4297
    %v4299 = vand.u32 %v128, 4294901760
    %4300 = vmatprep.subr.mxu0 %v4299
    %v4301 = vand.u32 %v127, 4294901760
    %4302 = vmatpush1.msra.mxu0 %v4301
    %4303 = vmatprep.subr.mxu0 0.0
    %4304 = vmatpush1.msra.mxu0 0.0
    %4305 = vmatprep.subr.mxu0 0.0
    %4306 = vmatpush1.msra.mxu0 0.0
    %4307 = vmatprep.subr.mxu0 0.0
    %4308 = vmatpush1.msra.mxu0 0.0
    %4309 = vmatprep.subr.mxu0 0.0
    %4310 = vmatpush1.msra.mxu0 0.0
    %4311 = vmatprep.subr.mxu0 0.0
    %4312 = vmatpush1.msra.mxu0 0.0
    %4313 = vmatprep.subr.mxu0 0.0
    %4314 = vmatpush1.msra.mxu0 0.0
    %4315 = vmatprep.subr.mxu0 0.0
    %4316 = vmatpush1.msra.mxu0 0.0
    %4317 = vmatprep.subr.mxu0 0.0
    %4318 = vmatpush1.msra.mxu0 0.0
    %4319 = vmatprep.subr.mxu0 0.0
    %4320 = vmatpush1.msra.mxu0 0.0
    %4321 = vmatprep.subr.mxu0 0.0
    %4322 = vmatpush1.msra.mxu0 0.0
    %4323 = vmatprep.subr.mxu0 0.0
    %4324 = vmatpush1.msra.mxu0 0.0
    %4325 = vmatprep.subr.mxu0 0.0
    %4326 = vmatpush1.msra.mxu0 0.0
    %4327 = vmatprep.subr.mxu0 0.0
    %4328 = vmatpush1.msra.mxu0 0.0
    %4329 = vmatprep.subr.mxu0 0.0
    %4330 = vmatpush1.msra.mxu0 0.0
    %4331 = vmatprep.subr.mxu0 0.0
    %4332 = vmatpush1.msra.mxu0 0.0
    %4333 = vmatprep.subr.mxu0 0.0
    %4334 = vmatpush1.msra.mxu0 0.0
    %4335 = vmatprep.mubr.f32.mxu0 0.0
    %v4336 = vand.u32 %v4231, 4294901760
    %v4337 = vsub.f32 %v4231, %v4336
    %v4338 = vand.u32 %v4337, 4294901760
    %v4339 = vsub.f32 %v4337, %v4338
    %v4340 = vand.u32 %v4339, 4294901760
    %4341 = vmatmul.mubr.f32.gmra.mrb[0].mxu0 %v4340
    %v4342 = vpop.f32.mrb[0].mxu0
    %v4343 = vadd.f32 0.0, %v4342
    %v4344 = vpop.f32.mrb[0].mxu0
    %v4345 = vadd.f32 0.0, %v4344
    %4346 = vmatprep.mubr.f32.mxu0 0.0
    %v4347 = vand.u32 %v4232, 4294901760
    %v4348 = vsub.f32 %v4232, %v4347
    %v4349 = vand.u32 %v4348, 4294901760
    %v4350 = vsub.f32 %v4348, %v4349
    %v4351 = vand.u32 %v4350, 4294901760
    %4352 = vmatmul.mubr.f32.gmra.mrb[0].mxu0 %v4351
    %v4353 = vpop.f32.mrb[0].mxu0
    %v4354 = vadd.f32 0.0, %v4353
    %v4355 = vpop.f32.mrb[0].mxu0
    %v4356 = vadd.f32 0.0, %v4355
    %4357 = vmatprep.mubr.f32.mxu0 0.0
    %v4358 = vand.u32 %v4233, 4294901760
    %v4359 = vsub.f32 %v4233, %v4358
    %v4360 = vand.u32 %v4359, 4294901760
    %v4361 = vsub.f32 %v4359, %v4360
    %v4362 = vand.u32 %v4361, 4294901760
    %4363 = vmatmul.mubr.f32.gmra.mrb[0].mxu0 %v4362
    %v4364 = vpop.f32.mrb[0].mxu0
    %v4365 = vadd.f32 0.0, %v4364
    %v4366 = vpop.f32.mrb[0].mxu0
    %v4367 = vadd.f32 0.0, %v4366
    %4368 = vmatprep.mubr.f32.mxu0 0.0
    %v4369 = vand.u32 %v4234, 4294901760
    %v4370 = vsub.f32 %v4234, %v4369
    %v4371 = vand.u32 %v4370, 4294901760
    %v4372 = vsub.f32 %v4370, %v4371
    %v4373 = vand.u32 %v4372, 4294901760
    %4374 = vmatmul.mubr.f32.gmra.mrb[0].mxu0 %v4373
    %v4375 = vpop.f32.mrb[0].mxu0
    %v4376 = vadd.f32 0.0, %v4375
    %v4377 = vpop.f32.mrb[0].mxu0
    %v4378 = vadd.f32 0.0, %v4377
    %4379 = vmatprep.mubr.f32.mxu0 0.0
    %v4380 = vand.u32 %v4235, 4294901760
    %v4381 = vsub.f32 %v4235, %v4380
    %v4382 = vand.u32 %v4381, 4294901760
    %v4383 = vsub.f32 %v4381, %v4382
    %v4384 = vand.u32 %v4383, 4294901760
    %4385 = vmatmul.mubr.f32.gmra.mrb[0].mxu0 %v4384
    %v4386 = vpop.f32.mrb[0].mxu0
    %v4387 = vadd.f32 0.0, %v4386
    %v4388 = vpop.f32.mrb[0].mxu0
    %v4389 = vadd.f32 0.0, %v4388
    %4390 = vmatprep.mubr.f32.mxu0 0.0
    %v4391 = vand.u32 %v4236, 4294901760
    %v4392 = vsub.f32 %v4236, %v4391
    %v4393 = vand.u32 %v4392, 4294901760
    %v4394 = vsub.f32 %v4392, %v4393
    %v4395 = vand.u32 %v4394, 4294901760
    %4396 = vmatmul.mubr.f32.gmra.mrb[0].mxu0 %v4395
    %v4397 = vpop.f32.mrb[0].mxu0
    %v4398 = vadd.f32 0.0, %v4397
    %v4399 = vpop.f32.mrb[0].mxu0
    %v4400 = vadd.f32 0.0, %v4399
    %4401 = vmatprep.mubr.f32.mxu0 0.0
    %v4402 = vand.u32 %v4237, 4294901760
    %v4403 = vsub.f32 %v4237, %v4402
    %v4404 = vand.u32 %v4403, 4294901760
    %v4405 = vsub.f32 %v4403, %v4404
    %v4406 = vand.u32 %v4405, 4294901760
    %4407 = vmatmul.mubr.f32.gmra.mrb[0].mxu0 %v4406
    %v4408 = vpop.f32.mrb[0].mxu0
    %v4409 = vadd.f32 0.0, %v4408
    %v4410 = vpop.f32.mrb[0].mxu0
    %v4411 = vadd.f32 0.0, %v4410
    %4412 = vmatprep.mubr.f32.mxu0 0.0
    %v4413 = vand.u32 %v4238, 4294901760
    %v4414 = vsub.f32 %v4238, %v4413
    %v4415 = vand.u32 %v4414, 4294901760
    %v4416 = vsub.f32 %v4414, %v4415
    %v4417 = vand.u32 %v4416, 4294901760
    %4418 = vmatmul.mubr.f32.gmra.mrb[0].mxu0 %v4417
    %v4419 = vpop.f32.mrb[0].mxu0
    %v4420 = vadd.f32 0.0, %v4419
    %v4421 = vpop.f32.mrb[0].mxu0
    %v4422 = vadd.f32 0.0, %v4421
    %4423 = vdwg.mxu0
    %v4424 = vand.u32 %v68, 4294901760
    %v4425 = vsub.f32 %v68, %v4424
    %v4426 = vand.u32 %v4425, 4294901760
    %v4427 = vsub.f32 %v4425, %v4426
    %v4428 = vand.u32 %v4427, 4294901760
    %4429 = vmatprep.subr.mxu0 %v4428
    %v4430 = vand.u32 %v67, 4294901760
    %v4431 = vsub.f32 %v67, %v4430
    %v4432 = vand.u32 %v4431, 4294901760
    %v4433 = vsub.f32 %v4431, %v4432
    %v4434 = vand.u32 %v4433, 4294901760
    %4435 = vmatpush1.msra.mxu0 %v4434
    %v4436 = vand.u32 %v72, 4294901760
    %v4437 = vsub.f32 %v72, %v4436
    %v4438 = vand.u32 %v4437, 4294901760
    %v4439 = vsub.f32 %v4437, %v4438
    %v4440 = vand.u32 %v4439, 4294901760
    %4441 = vmatprep.subr.mxu0 %v4440
    %v4442 = vand.u32 %v71, 4294901760
    %v4443 = vsub.f32 %v71, %v4442
    %v4444 = vand.u32 %v4443, 4294901760
    %v4445 = vsub.f32 %v4443, %v4444
    %v4446 = vand.u32 %v4445, 4294901760
    %4447 = vmatpush1.msra.mxu0 %v4446
    %v4448 = vand.u32 %v76, 4294901760
    %v4449 = vsub.f32 %v76, %v4448
    %v4450 = vand.u32 %v4449, 4294901760
    %v4451 = vsub.f32 %v4449, %v4450
    %v4452 = vand.u32 %v4451, 4294901760
    %4453 = vmatprep.subr.mxu0 %v4452
    %v4454 = vand.u32 %v75, 4294901760
    %v4455 = vsub.f32 %v75, %v4454
    %v4456 = vand.u32 %v4455, 4294901760
    %v4457 = vsub.f32 %v4455, %v4456
    %v4458 = vand.u32 %v4457, 4294901760
    %4459 = vmatpush1.msra.mxu0 %v4458
    %v4460 = vand.u32 %v80, 4294901760
    %v4461 = vsub.f32 %v80, %v4460
    %v4462 = vand.u32 %v4461, 4294901760
    %v4463 = vsub.f32 %v4461, %v4462
    %v4464 = vand.u32 %v4463, 4294901760
    %4465 = vmatprep.subr.mxu0 %v4464
    %v4466 = vand.u32 %v79, 4294901760
    %v4467 = vsub.f32 %v79, %v4466
    %v4468 = vand.u32 %v4467, 4294901760
    %v4469 = vsub.f32 %v4467, %v4468
    %v4470 = vand.u32 %v4469, 4294901760
    %4471 = vmatpush1.msra.mxu0 %v4470
    %v4472 = vand.u32 %v84, 4294901760
    %v4473 = vsub.f32 %v84, %v4472
    %v4474 = vand.u32 %v4473, 4294901760
    %v4475 = vsub.f32 %v4473, %v4474
    %v4476 = vand.u32 %v4475, 4294901760
    %4477 = vmatprep.subr.mxu0 %v4476
    %v4478 = vand.u32 %v83, 4294901760
    %v4479 = vsub.f32 %v83, %v4478
    %v4480 = vand.u32 %v4479, 4294901760
    %v4481 = vsub.f32 %v4479, %v4480
    %v4482 = vand.u32 %v4481, 4294901760
    %4483 = vmatpush1.msra.mxu0 %v4482
    %v4484 = vand.u32 %v88, 4294901760
    %v4485 = vsub.f32 %v88, %v4484
    %v4486 = vand.u32 %v4485, 4294901760
    %v4487 = vsub.f32 %v4485, %v4486
    %v4488 = vand.u32 %v4487, 4294901760
    %4489 = vmatprep.subr.mxu0 %v4488
    %v4490 = vand.u32 %v87, 4294901760
    %v4491 = vsub.f32 %v87, %v4490
    %v4492 = vand.u32 %v4491, 4294901760
    %v4493 = vsub.f32 %v4491, %v4492
    %v4494 = vand.u32 %v4493, 4294901760
    %4495 = vmatpush1.msra.mxu0 %v4494
    %v4496 = vand.u32 %v92, 4294901760
    %v4497 = vsub.f32 %v92, %v4496
    %v4498 = vand.u32 %v4497, 4294901760
    %v4499 = vsub.f32 %v4497, %v4498
    %v4500 = vand.u32 %v4499, 4294901760
    %4501 = vmatprep.subr.mxu0 %v4500
    %v4502 = vand.u32 %v91, 4294901760
    %v4503 = vsub.f32 %v91, %v4502
    %v4504 = vand.u32 %v4503, 4294901760
    %v4505 = vsub.f32 %v4503, %v4504
    %v4506 = vand.u32 %v4505, 4294901760
    %4507 = vmatpush1.msra.mxu0 %v4506
    %v4508 = vand.u32 %v96, 4294901760
    %v4509 = vsub.f32 %v96, %v4508
    %v4510 = vand.u32 %v4509, 4294901760
    %v4511 = vsub.f32 %v4509, %v4510
    %v4512 = vand.u32 %v4511, 4294901760
    %4513 = vmatprep.subr.mxu0 %v4512
    %v4514 = vand.u32 %v95, 4294901760
    %v4515 = vsub.f32 %v95, %v4514
    %v4516 = vand.u32 %v4515, 4294901760
    %v4517 = vsub.f32 %v4515, %v4516
    %v4518 = vand.u32 %v4517, 4294901760
    %4519 = vmatpush1.msra.mxu0 %v4518
    %v4520 = vand.u32 %v100, 4294901760
    %v4521 = vsub.f32 %v100, %v4520
    %v4522 = vand.u32 %v4521, 4294901760
    %v4523 = vsub.f32 %v4521, %v4522
    %v4524 = vand.u32 %v4523, 4294901760
    %4525 = vmatprep.subr.mxu0 %v4524
    %v4526 = vand.u32 %v99, 4294901760
    %v4527 = vsub.f32 %v99, %v4526
    %v4528 = vand.u32 %v4527, 4294901760
    %v4529 = vsub.f32 %v4527, %v4528
    %v4530 = vand.u32 %v4529, 4294901760
    %4531 = vmatpush1.msra.mxu0 %v4530
    %v4532 = vand.u32 %v104, 4294901760
    %v4533 = vsub.f32 %v104, %v4532
    %v4534 = vand.u32 %v4533, 4294901760
    %v4535 = vsub.f32 %v4533, %v4534
    %v4536 = vand.u32 %v4535, 4294901760
    %4537 = vmatprep.subr.mxu0 %v4536
    %v4538 = vand.u32 %v103, 4294901760
    %v4539 = vsub.f32 %v103, %v4538
    %v4540 = vand.u32 %v4539, 4294901760
    %v4541 = vsub.f32 %v4539, %v4540
    %v4542 = vand.u32 %v4541, 4294901760
    %4543 = vmatpush1.msra.mxu0 %v4542
    %v4544 = vand.u32 %v108, 4294901760
    %v4545 = vsub.f32 %v108, %v4544
    %v4546 = vand.u32 %v4545, 4294901760
    %v4547 = vsub.f32 %v4545, %v4546
    %v4548 = vand.u32 %v4547, 4294901760
    %4549 = vmatprep.subr.mxu0 %v4548
    %v4550 = vand.u32 %v107, 4294901760
    %v4551 = vsub.f32 %v107, %v4550
    %v4552 = vand.u32 %v4551, 4294901760
    %v4553 = vsub.f32 %v4551, %v4552
    %v4554 = vand.u32 %v4553, 4294901760
    %4555 = vmatpush1.msra.mxu0 %v4554
    %v4556 = vand.u32 %v112, 4294901760
    %v4557 = vsub.f32 %v112, %v4556
    %v4558 = vand.u32 %v4557, 4294901760
    %v4559 = vsub.f32 %v4557, %v4558
    %v4560 = vand.u32 %v4559, 4294901760
    %4561 = vmatprep.subr.mxu0 %v4560
    %v4562 = vand.u32 %v111, 4294901760
    %v4563 = vsub.f32 %v111, %v4562
    %v4564 = vand.u32 %v4563, 4294901760
    %v4565 = vsub.f32 %v4563, %v4564
    %v4566 = vand.u32 %v4565, 4294901760
    %4567 = vmatpush1.msra.mxu0 %v4566
    %v4568 = vand.u32 %v116, 4294901760
    %v4569 = vsub.f32 %v116, %v4568
    %v4570 = vand.u32 %v4569, 4294901760
    %v4571 = vsub.f32 %v4569, %v4570
    %v4572 = vand.u32 %v4571, 4294901760
    %4573 = vmatprep.subr.mxu0 %v4572
    %v4574 = vand.u32 %v115, 4294901760
    %v4575 = vsub.f32 %v115, %v4574
    %v4576 = vand.u32 %v4575, 4294901760
    %v4577 = vsub.f32 %v4575, %v4576
    %v4578 = vand.u32 %v4577, 4294901760
    %4579 = vmatpush1.msra.mxu0 %v4578
    %v4580 = vand.u32 %v120, 4294901760
    %v4581 = vsub.f32 %v120, %v4580
    %v4582 = vand.u32 %v4581, 4294901760
    %v4583 = vsub.f32 %v4581, %v4582
    %v4584 = vand.u32 %v4583, 4294901760
    %4585 = vmatprep.subr.mxu0 %v4584
    %v4586 = vand.u32 %v119, 4294901760
    %v4587 = vsub.f32 %v119, %v4586
    %v4588 = vand.u32 %v4587, 4294901760
    %v4589 = vsub.f32 %v4587, %v4588
    %v4590 = vand.u32 %v4589, 4294901760
    %4591 = vmatpush1.msra.mxu0 %v4590
    %v4592 = vand.u32 %v124, 4294901760
    %v4593 = vsub.f32 %v124, %v4592
    %v4594 = vand.u32 %v4593, 4294901760
    %v4595 = vsub.f32 %v4593, %v4594
    %v4596 = vand.u32 %v4595, 4294901760
    %4597 = vmatprep.subr.mxu0 %v4596
    %v4598 = vand.u32 %v123, 4294901760
    %v4599 = vsub.f32 %v123, %v4598
    %v4600 = vand.u32 %v4599, 4294901760
    %v4601 = vsub.f32 %v4599, %v4600
    %v4602 = vand.u32 %v4601, 4294901760
    %4603 = vmatpush1.msra.mxu0 %v4602
    %v4604 = vand.u32 %v128, 4294901760
    %v4605 = vsub.f32 %v128, %v4604
    %v4606 = vand.u32 %v4605, 4294901760
    %v4607 = vsub.f32 %v4605, %v4606
    %v4608 = vand.u32 %v4607, 4294901760
    %4609 = vmatprep.subr.mxu0 %v4608
    %v4610 = vand.u32 %v127, 4294901760
    %v4611 = vsub.f32 %v127, %v4610
    %v4612 = vand.u32 %v4611, 4294901760
    %v4613 = vsub.f32 %v4611, %v4612
    %v4614 = vand.u32 %v4613, 4294901760
    %4615 = vmatpush1.msra.mxu0 %v4614
    %4616 = vmatprep.subr.mxu0 0.0
    %4617 = vmatpush1.msra.mxu0 0.0
    %4618 = vmatprep.subr.mxu0 0.0
    %4619 = vmatpush1.msra.mxu0 0.0
    %4620 = vmatprep.subr.mxu0 0.0
    %4621 = vmatpush1.msra.mxu0 0.0
    %4622 = vmatprep.subr.mxu0 0.0
    %4623 = vmatpush1.msra.mxu0 0.0
    %4624 = vmatprep.subr.mxu0 0.0
    %4625 = vmatpush1.msra.mxu0 0.0
    %4626 = vmatprep.subr.mxu0 0.0
    %4627 = vmatpush1.msra.mxu0 0.0
    %4628 = vmatprep.subr.mxu0 0.0
    %4629 = vmatpush1.msra.mxu0 0.0
    %4630 = vmatprep.subr.mxu0 0.0
    %4631 = vmatpush1.msra.mxu0 0.0
    %4632 = vmatprep.subr.mxu0 0.0
    %4633 = vmatpush1.msra.mxu0 0.0
    %4634 = vmatprep.subr.mxu0 0.0
    %4635 = vmatpush1.msra.mxu0 0.0
    %4636 = vmatprep.subr.mxu0 0.0
    %4637 = vmatpush1.msra.mxu0 0.0
    %4638 = vmatprep.subr.mxu0 0.0
    %4639 = vmatpush1.msra.mxu0 0.0
    %4640 = vmatprep.subr.mxu0 0.0
    %4641 = vmatpush1.msra.mxu0 0.0
    %4642 = vmatprep.subr.mxu0 0.0
    %4643 = vmatpush1.msra.mxu0 0.0
    %4644 = vmatprep.subr.mxu0 0.0
    %4645 = vmatpush1.msra.mxu0 0.0
    %4646 = vmatprep.subr.mxu0 0.0
    %4647 = vmatpush1.msra.mxu0 0.0
    %4648 = vmatprep.mubr.f32.mxu0 0.0
    %v4649 = vand.u32 %v4231, 4294901760
    %4650 = vmatmul.mubr.f32.gmra.mrb[0].mxu0 %v4649
    %v4651 = vpop.f32.mrb[0].mxu0
    %v4652 = vadd.f32 %v4343, %v4651
    %v4653 = vpop.f32.mrb[0].mxu0
    %v4654 = vadd.f32 %v4345, %v4653
    %4655 = vmatprep.mubr.f32.mxu0 0.0
    %v4656 = vand.u32 %v4232, 4294901760
    %4657 = vmatmul.mubr.f32.gmra.mrb[0].mxu0 %v4656
    %v4658 = vpop.f32.mrb[0].mxu0
    %v4659 = vadd.f32 %v4354, %v4658
    %v4660 = vpop.f32.mrb[0].mxu0
    %v4661 = vadd.f32 %v4356, %v4660
    %4662 = vmatprep.mubr.f32.mxu0 0.0
    %v4663 = vand.u32 %v4233, 4294901760
    %4664 = vmatmul.mubr.f32.gmra.mrb[0].mxu0 %v4663
    %v4665 = vpop.f32.mrb[0].mxu0
    %v4666 = vadd.f32 %v4365, %v4665
    %v4667 = vpop.f32.mrb[0].mxu0
    %v4668 = vadd.f32 %v4367, %v4667
    %4669 = vmatprep.mubr.f32.mxu0 0.0
    %v4670 = vand.u32 %v4234, 4294901760
    %4671 = vmatmul.mubr.f32.gmra.mrb[0].mxu0 %v4670
    %v4672 = vpop.f32.mrb[0].mxu0
    %v4673 = vadd.f32 %v4376, %v4672
    %v4674 = vpop.f32.mrb[0].mxu0
    %v4675 = vadd.f32 %v4378, %v4674
    %4676 = vmatprep.mubr.f32.mxu0 0.0
    %v4677 = vand.u32 %v4235, 4294901760
    %4678 = vmatmul.mubr.f32.gmra.mrb[0].mxu0 %v4677
    %v4679 = vpop.f32.mrb[0].mxu0
    %v4680 = vadd.f32 %v4387, %v4679
    %v4681 = vpop.f32.mrb[0].mxu0
    %v4682 = vadd.f32 %v4389, %v4681
    %4683 = vmatprep.mubr.f32.mxu0 0.0
    %v4684 = vand.u32 %v4236, 4294901760
    %4685 = vmatmul.mubr.f32.gmra.mrb[0].mxu0 %v4684
    %v4686 = vpop.f32.mrb[0].mxu0
    %v4687 = vadd.f32 %v4398, %v4686
    %v4688 = vpop.f32.mrb[0].mxu0
    %v4689 = vadd.f32 %v4400, %v4688
    %4690 = vmatprep.mubr.f32.mxu0 0.0
    %v4691 = vand.u32 %v4237, 4294901760
    %4692 = vmatmul.mubr.f32.gmra.mrb[0].mxu0 %v4691
    %v4693 = vpop.f32.mrb[0].mxu0
    %v4694 = vadd.f32 %v4409, %v4693
    %v4695 = vpop.f32.mrb[0].mxu0
    %v4696 = vadd.f32 %v4411, %v4695
    %4697 = vmatprep.mubr.f32.mxu0 0.0
    %v4698 = vand.u32 %v4238, 4294901760
    %4699 = vmatmul.mubr.f32.gmra.mrb[0].mxu0 %v4698
    %v4700 = vpop.f32.mrb[0].mxu0
    %v4701 = vadd.f32 %v4420, %v4700
    %v4702 = vpop.f32.mrb[0].mxu0
    %v4703 = vadd.f32 %v4422, %v4702
    %4704 = vdwg.mxu0
    %v4705 = vand.u32 %v68, 4294901760
    %v4706 = vsub.f32 %v68, %v4705
    %4707 = vmatprep.subr.mxu0 %v4706
    %v4708 = vand.u32 %v67, 4294901760
    %v4709 = vsub.f32 %v67, %v4708
    %4710 = vmatpush1.msra.mxu0 %v4709
    %v4711 = vand.u32 %v72, 4294901760
    %v4712 = vsub.f32 %v72, %v4711
    %4713 = vmatprep.subr.mxu0 %v4712
    %v4714 = vand.u32 %v71, 4294901760
    %v4715 = vsub.f32 %v71, %v4714
    %4716 = vmatpush1.msra.mxu0 %v4715
    %v4717 = vand.u32 %v76, 4294901760
    %v4718 = vsub.f32 %v76, %v4717
    %4719 = vmatprep.subr.mxu0 %v4718
    %v4720 = vand.u32 %v75, 4294901760
    %v4721 = vsub.f32 %v75, %v4720
    %4722 = vmatpush1.msra.mxu0 %v4721
    %v4723 = vand.u32 %v80, 4294901760
    %v4724 = vsub.f32 %v80, %v4723
    %4725 = vmatprep.subr.mxu0 %v4724
    %v4726 = vand.u32 %v79, 4294901760
    %v4727 = vsub.f32 %v79, %v4726
    %4728 = vmatpush1.msra.mxu0 %v4727
    %v4729 = vand.u32 %v84, 4294901760
    %v4730 = vsub.f32 %v84, %v4729
    %4731 = vmatprep.subr.mxu0 %v4730
    %v4732 = vand.u32 %v83, 4294901760
    %v4733 = vsub.f32 %v83, %v4732
    %4734 = vmatpush1.msra.mxu0 %v4733
    %v4735 = vand.u32 %v88, 4294901760
    %v4736 = vsub.f32 %v88, %v4735
    %4737 = vmatprep.subr.mxu0 %v4736
    %v4738 = vand.u32 %v87, 4294901760
    %v4739 = vsub.f32 %v87, %v4738
    %4740 = vmatpush1.msra.mxu0 %v4739
    %v4741 = vand.u32 %v92, 4294901760
    %v4742 = vsub.f32 %v92, %v4741
    %4743 = vmatprep.subr.mxu0 %v4742
    %v4744 = vand.u32 %v91, 4294901760
    %v4745 = vsub.f32 %v91, %v4744
    %4746 = vmatpush1.msra.mxu0 %v4745
    %v4747 = vand.u32 %v96, 4294901760
    %v4748 = vsub.f32 %v96, %v4747
    %4749 = vmatprep.subr.mxu0 %v4748
    %v4750 = vand.u32 %v95, 4294901760
    %v4751 = vsub.f32 %v95, %v4750
    %4752 = vmatpush1.msra.mxu0 %v4751
    %v4753 = vand.u32 %v100, 4294901760
    %v4754 = vsub.f32 %v100, %v4753
    %4755 = vmatprep.subr.mxu0 %v4754
    %v4756 = vand.u32 %v99, 4294901760
    %v4757 = vsub.f32 %v99, %v4756
    %4758 = vmatpush1.msra.mxu0 %v4757
    %v4759 = vand.u32 %v104, 4294901760
    %v4760 = vsub.f32 %v104, %v4759
    %4761 = vmatprep.subr.mxu0 %v4760
    %v4762 = vand.u32 %v103, 4294901760
    %v4763 = vsub.f32 %v103, %v4762
    %4764 = vmatpush1.msra.mxu0 %v4763
    %v4765 = vand.u32 %v108, 4294901760
    %v4766 = vsub.f32 %v108, %v4765
    %4767 = vmatprep.subr.mxu0 %v4766
    %v4768 = vand.u32 %v107, 4294901760
    %v4769 = vsub.f32 %v107, %v4768
    %4770 = vmatpush1.msra.mxu0 %v4769
    %v4771 = vand.u32 %v112, 4294901760
    %v4772 = vsub.f32 %v112, %v4771
    %4773 = vmatprep.subr.mxu0 %v4772
    %v4774 = vand.u32 %v111, 4294901760
    %v4775 = vsub.f32 %v111, %v4774
    %4776 = vmatpush1.msra.mxu0 %v4775
    %v4777 = vand.u32 %v116, 4294901760
    %v4778 = vsub.f32 %v116, %v4777
    %4779 = vmatprep.subr.mxu0 %v4778
    %v4780 = vand.u32 %v115, 4294901760
    %v4781 = vsub.f32 %v115, %v4780
    %4782 = vmatpush1.msra.mxu0 %v4781
    %v4783 = vand.u32 %v120, 4294901760
    %v4784 = vsub.f32 %v120, %v4783
    %4785 = vmatprep.subr.mxu0 %v4784
    %v4786 = vand.u32 %v119, 4294901760
    %v4787 = vsub.f32 %v119, %v4786
    %4788 = vmatpush1.msra.mxu0 %v4787
    %v4789 = vand.u32 %v124, 4294901760
    %v4790 = vsub.f32 %v124, %v4789
    %4791 = vmatprep.subr.mxu0 %v4790
    %v4792 = vand.u32 %v123, 4294901760
    %v4793 = vsub.f32 %v123, %v4792
    %4794 = vmatpush1.msra.mxu0 %v4793
    %v4795 = vand.u32 %v128, 4294901760
    %v4796 = vsub.f32 %v128, %v4795
    %4797 = vmatprep.subr.mxu0 %v4796
    %v4798 = vand.u32 %v127, 4294901760
    %v4799 = vsub.f32 %v127, %v4798
    %4800 = vmatpush1.msra.mxu0 %v4799
    %4801 = vmatprep.subr.mxu0 0.0
    %4802 = vmatpush1.msra.mxu0 0.0
    %4803 = vmatprep.subr.mxu0 0.0
    %4804 = vmatpush1.msra.mxu0 0.0
    %4805 = vmatprep.subr.mxu0 0.0
    %4806 = vmatpush1.msra.mxu0 0.0
    %4807 = vmatprep.subr.mxu0 0.0
    %4808 = vmatpush1.msra.mxu0 0.0
    %4809 = vmatprep.subr.mxu0 0.0
    %4810 = vmatpush1.msra.mxu0 0.0
    %4811 = vmatprep.subr.mxu0 0.0
    %4812 = vmatpush1.msra.mxu0 0.0
    %4813 = vmatprep.subr.mxu0 0.0
    %4814 = vmatpush1.msra.mxu0 0.0
    %4815 = vmatprep.subr.mxu0 0.0
    %4816 = vmatpush1.msra.mxu0 0.0
    %4817 = vmatprep.subr.mxu0 0.0
    %4818 = vmatpush1.msra.mxu0 0.0
    %4819 = vmatprep.subr.mxu0 0.0
    %4820 = vmatpush1.msra.mxu0 0.0
    %4821 = vmatprep.subr.mxu0 0.0
    %4822 = vmatpush1.msra.mxu0 0.0
    %4823 = vmatprep.subr.mxu0 0.0
    %4824 = vmatpush1.msra.mxu0 0.0
    %4825 = vmatprep.subr.mxu0 0.0
    %4826 = vmatpush1.msra.mxu0 0.0
    %4827 = vmatprep.subr.mxu0 0.0
    %4828 = vmatpush1.msra.mxu0 0.0
    %4829 = vmatprep.subr.mxu0 0.0
    %4830 = vmatpush1.msra.mxu0 0.0
    %4831 = vmatprep.subr.mxu0 0.0
    %4832 = vmatpush1.msra.mxu0 0.0
    %4833 = vmatprep.mubr.f32.mxu0 0.0
    %v4834 = vand.u32 %v4231, 4294901760
    %v4835 = vsub.f32 %v4231, %v4834
    %4836 = vmatmul.mubr.f32.gmra.mrb[0].mxu0 %v4835
    %v4837 = vpop.f32.mrb[0].mxu0
    %v4838 = vadd.f32 %v4652, %v4837
    %v4839 = vpop.f32.mrb[0].mxu0
    %v4840 = vadd.f32 %v4654, %v4839
    %4841 = vmatprep.mubr.f32.mxu0 0.0
    %v4842 = vand.u32 %v4232, 4294901760
    %v4843 = vsub.f32 %v4232, %v4842
    %4844 = vmatmul.mubr.f32.gmra.mrb[0].mxu0 %v4843
    %v4845 = vpop.f32.mrb[0].mxu0
    %v4846 = vadd.f32 %v4659, %v4845
    %v4847 = vpop.f32.mrb[0].mxu0
    %v4848 = vadd.f32 %v4661, %v4847
    %4849 = vmatprep.mubr.f32.mxu0 0.0
    %v4850 = vand.u32 %v4233, 4294901760
    %v4851 = vsub.f32 %v4233, %v4850
    %4852 = vmatmul.mubr.f32.gmra.mrb[0].mxu0 %v4851
    %v4853 = vpop.f32.mrb[0].mxu0
    %v4854 = vadd.f32 %v4666, %v4853
    %v4855 = vpop.f32.mrb[0].mxu0
    %v4856 = vadd.f32 %v4668, %v4855
    %4857 = vmatprep.mubr.f32.mxu0 0.0
    %v4858 = vand.u32 %v4234, 4294901760
    %v4859 = vsub.f32 %v4234, %v4858
    %4860 = vmatmul.mubr.f32.gmra.mrb[0].mxu0 %v4859
    %v4861 = vpop.f32.mrb[0].mxu0
    %v4862 = vadd.f32 %v4673, %v4861
    %v4863 = vpop.f32.mrb[0].mxu0
    %v4864 = vadd.f32 %v4675, %v4863
    %4865 = vmatprep.mubr.f32.mxu0 0.0
    %v4866 = vand.u32 %v4235, 4294901760
    %v4867 = vsub.f32 %v4235, %v4866
    %4868 = vmatmul.mubr.f32.gmra.mrb[0].mxu0 %v4867
    %v4869 = vpop.f32.mrb[0].mxu0
    %v4870 = vadd.f32 %v4680, %v4869
    %v4871 = vpop.f32.mrb[0].mxu0
    %v4872 = vadd.f32 %v4682, %v4871
    %4873 = vmatprep.mubr.f32.mxu0 0.0
    %v4874 = vand.u32 %v4236, 4294901760
    %v4875 = vsub.f32 %v4236, %v4874
    %4876 = vmatmul.mubr.f32.gmra.mrb[0].mxu0 %v4875
    %v4877 = vpop.f32.mrb[0].mxu0
    %v4878 = vadd.f32 %v4687, %v4877
    %v4879 = vpop.f32.mrb[0].mxu0
    %v4880 = vadd.f32 %v4689, %v4879
    %4881 = vmatprep.mubr.f32.mxu0 0.0
    %v4882 = vand.u32 %v4237, 4294901760
    %v4883 = vsub.f32 %v4237, %v4882
    %4884 = vmatmul.mubr.f32.gmra.mrb[0].mxu0 %v4883
    %v4885 = vpop.f32.mrb[0].mxu0
    %v4886 = vadd.f32 %v4694, %v4885
    %v4887 = vpop.f32.mrb[0].mxu0
    %v4888 = vadd.f32 %v4696, %v4887
    %4889 = vmatprep.mubr.f32.mxu0 0.0
    %v4890 = vand.u32 %v4238, 4294901760
    %v4891 = vsub.f32 %v4238, %v4890
    %4892 = vmatmul.mubr.f32.gmra.mrb[0].mxu0 %v4891
    %v4893 = vpop.f32.mrb[0].mxu0
    %v4894 = vadd.f32 %v4701, %v4893
    %v4895 = vpop.f32.mrb[0].mxu0
    %v4896 = vadd.f32 %v4703, %v4895
    %4897 = vdwg.mxu0
    %v4898 = vand.u32 %v68, 4294901760
    %4899 = vmatprep.subr.mxu0 %v4898
    %v4900 = vand.u32 %v67, 4294901760
    %4901 = vmatpush1.msra.mxu0 %v4900
    %v4902 = vand.u32 %v72, 4294901760
    %4903 = vmatprep.subr.mxu0 %v4902
    %v4904 = vand.u32 %v71, 4294901760
    %4905 = vmatpush1.msra.mxu0 %v4904
    %v4906 = vand.u32 %v76, 4294901760
    %4907 = vmatprep.subr.mxu0 %v4906
    %v4908 = vand.u32 %v75, 4294901760
    %4909 = vmatpush1.msra.mxu0 %v4908
    %v4910 = vand.u32 %v80, 4294901760
    %4911 = vmatprep.subr.mxu0 %v4910
    %v4912 = vand.u32 %v79, 4294901760
    %4913 = vmatpush1.msra.mxu0 %v4912
    %v4914 = vand.u32 %v84, 4294901760
    %4915 = vmatprep.subr.mxu0 %v4914
    %v4916 = vand.u32 %v83, 4294901760
    %4917 = vmatpush1.msra.mxu0 %v4916
    %v4918 = vand.u32 %v88, 4294901760
    %4919 = vmatprep.subr.mxu0 %v4918
    %v4920 = vand.u32 %v87, 4294901760
    %4921 = vmatpush1.msra.mxu0 %v4920
    %v4922 = vand.u32 %v92, 4294901760
    %4923 = vmatprep.subr.mxu0 %v4922
    %v4924 = vand.u32 %v91, 4294901760
    %4925 = vmatpush1.msra.mxu0 %v4924
    %v4926 = vand.u32 %v96, 4294901760
    %4927 = vmatprep.subr.mxu0 %v4926
    %v4928 = vand.u32 %v95, 4294901760
    %4929 = vmatpush1.msra.mxu0 %v4928
    %v4930 = vand.u32 %v100, 4294901760
    %4931 = vmatprep.subr.mxu0 %v4930
    %v4932 = vand.u32 %v99, 4294901760
    %4933 = vmatpush1.msra.mxu0 %v4932
    %v4934 = vand.u32 %v104, 4294901760
    %4935 = vmatprep.subr.mxu0 %v4934
    %v4936 = vand.u32 %v103, 4294901760
    %4937 = vmatpush1.msra.mxu0 %v4936
    %v4938 = vand.u32 %v108, 4294901760
    %4939 = vmatprep.subr.mxu0 %v4938
    %v4940 = vand.u32 %v107, 4294901760
    %4941 = vmatpush1.msra.mxu0 %v4940
    %v4942 = vand.u32 %v112, 4294901760
    %4943 = vmatprep.subr.mxu0 %v4942
    %v4944 = vand.u32 %v111, 4294901760
    %4945 = vmatpush1.msra.mxu0 %v4944
    %v4946 = vand.u32 %v116, 4294901760
    %4947 = vmatprep.subr.mxu0 %v4946
    %v4948 = vand.u32 %v115, 4294901760
    %4949 = vmatpush1.msra.mxu0 %v4948
    %v4950 = vand.u32 %v120, 4294901760
    %4951 = vmatprep.subr.mxu0 %v4950
    %v4952 = vand.u32 %v119, 4294901760
    %4953 = vmatpush1.msra.mxu0 %v4952
    %v4954 = vand.u32 %v124, 4294901760
    %4955 = vmatprep.subr.mxu0 %v4954
    %v4956 = vand.u32 %v123, 4294901760
    %4957 = vmatpush1.msra.mxu0 %v4956
    %v4958 = vand.u32 %v128, 4294901760
    %4959 = vmatprep.subr.mxu0 %v4958
    %v4960 = vand.u32 %v127, 4294901760
    %4961 = vmatpush1.msra.mxu0 %v4960
    %4962 = vmatprep.subr.mxu0 0.0
    %4963 = vmatpush1.msra.mxu0 0.0
    %4964 = vmatprep.subr.mxu0 0.0
    %4965 = vmatpush1.msra.mxu0 0.0
    %4966 = vmatprep.subr.mxu0 0.0
    %4967 = vmatpush1.msra.mxu0 0.0
    %4968 = vmatprep.subr.mxu0 0.0
    %4969 = vmatpush1.msra.mxu0 0.0
    %4970 = vmatprep.subr.mxu0 0.0
    %4971 = vmatpush1.msra.mxu0 0.0
    %4972 = vmatprep.subr.mxu0 0.0
    %4973 = vmatpush1.msra.mxu0 0.0
    %4974 = vmatprep.subr.mxu0 0.0
    %4975 = vmatpush1.msra.mxu0 0.0
    %4976 = vmatprep.subr.mxu0 0.0
    %4977 = vmatpush1.msra.mxu0 0.0
    %4978 = vmatprep.subr.mxu0 0.0
    %4979 = vmatpush1.msra.mxu0 0.0
    %4980 = vmatprep.subr.mxu0 0.0
    %4981 = vmatpush1.msra.mxu0 0.0
    %4982 = vmatprep.subr.mxu0 0.0
    %4983 = vmatpush1.msra.mxu0 0.0
    %4984 = vmatprep.subr.mxu0 0.0
    %4985 = vmatpush1.msra.mxu0 0.0
    %4986 = vmatprep.subr.mxu0 0.0
    %4987 = vmatpush1.msra.mxu0 0.0
    %4988 = vmatprep.subr.mxu0 0.0
    %4989 = vmatpush1.msra.mxu0 0.0
    %4990 = vmatprep.subr.mxu0 0.0
    %4991 = vmatpush1.msra.mxu0 0.0
    %4992 = vmatprep.subr.mxu0 0.0
    %4993 = vmatpush1.msra.mxu0 0.0
    %4994 = vmatprep.mubr.f32.mxu0 0.0
    %v4995 = vand.u32 %v4231, 4294901760
    %v4996 = vsub.f32 %v4231, %v4995
    %v4997 = vand.u32 %v4996, 4294901760
    %4998 = vmatmul.mubr.f32.gmra.mrb[0].mxu0 %v4997
    %v4999 = vpop.f32.mrb[0].mxu0
    %v5000 = vadd.f32 %v4838, %v4999
    %v5001 = vpop.f32.mrb[0].mxu0
    %v5002 = vadd.f32 %v4840, %v5001
    %5003 = vmatprep.mubr.f32.mxu0 0.0
    %v5004 = vand.u32 %v4232, 4294901760
    %v5005 = vsub.f32 %v4232, %v5004
    %v5006 = vand.u32 %v5005, 4294901760
    %5007 = vmatmul.mubr.f32.gmra.mrb[0].mxu0 %v5006
    %v5008 = vpop.f32.mrb[0].mxu0
    %v5009 = vadd.f32 %v4846, %v5008
    %v5010 = vpop.f32.mrb[0].mxu0
    %v5011 = vadd.f32 %v4848, %v5010
    %5012 = vmatprep.mubr.f32.mxu0 0.0
    %v5013 = vand.u32 %v4233, 4294901760
    %v5014 = vsub.f32 %v4233, %v5013
    %v5015 = vand.u32 %v5014, 4294901760
    %5016 = vmatmul.mubr.f32.gmra.mrb[0].mxu0 %v5015
    %v5017 = vpop.f32.mrb[0].mxu0
    %v5018 = vadd.f32 %v4854, %v5017
    %v5019 = vpop.f32.mrb[0].mxu0
    %v5020 = vadd.f32 %v4856, %v5019
    %5021 = vmatprep.mubr.f32.mxu0 0.0
    %v5022 = vand.u32 %v4234, 4294901760
    %v5023 = vsub.f32 %v4234, %v5022
    %v5024 = vand.u32 %v5023, 4294901760
    %5025 = vmatmul.mubr.f32.gmra.mrb[0].mxu0 %v5024
    %v5026 = vpop.f32.mrb[0].mxu0
    %v5027 = vadd.f32 %v4862, %v5026
    %v5028 = vpop.f32.mrb[0].mxu0
    %v5029 = vadd.f32 %v4864, %v5028
    %5030 = vmatprep.mubr.f32.mxu0 0.0
    %v5031 = vand.u32 %v4235, 4294901760
    %v5032 = vsub.f32 %v4235, %v5031
    %v5033 = vand.u32 %v5032, 4294901760
    %5034 = vmatmul.mubr.f32.gmra.mrb[0].mxu0 %v5033
    %v5035 = vpop.f32.mrb[0].mxu0
    %v5036 = vadd.f32 %v4870, %v5035
    %v5037 = vpop.f32.mrb[0].mxu0
    %v5038 = vadd.f32 %v4872, %v5037
    %5039 = vmatprep.mubr.f32.mxu0 0.0
    %v5040 = vand.u32 %v4236, 4294901760
    %v5041 = vsub.f32 %v4236, %v5040
    %v5042 = vand.u32 %v5041, 4294901760
    %5043 = vmatmul.mubr.f32.gmra.mrb[0].mxu0 %v5042
    %v5044 = vpop.f32.mrb[0].mxu0
    %v5045 = vadd.f32 %v4878, %v5044
    %v5046 = vpop.f32.mrb[0].mxu0
    %v5047 = vadd.f32 %v4880, %v5046
    %5048 = vmatprep.mubr.f32.mxu0 0.0
    %v5049 = vand.u32 %v4237, 4294901760
    %v5050 = vsub.f32 %v4237, %v5049
    %v5051 = vand.u32 %v5050, 4294901760
    %5052 = vmatmul.mubr.f32.gmra.mrb[0].mxu0 %v5051
    %v5053 = vpop.f32.mrb[0].mxu0
    %v5054 = vadd.f32 %v4886, %v5053
    %v5055 = vpop.f32.mrb[0].mxu0
    %v5056 = vadd.f32 %v4888, %v5055
    %5057 = vmatprep.mubr.f32.mxu0 0.0
    %v5058 = vand.u32 %v4238, 4294901760
    %v5059 = vsub.f32 %v4238, %v5058
    %v5060 = vand.u32 %v5059, 4294901760
    %5061 = vmatmul.mubr.f32.gmra.mrb[0].mxu0 %v5060
    %v5062 = vpop.f32.mrb[0].mxu0
    %v5063 = vadd.f32 %v4894, %v5062
    %v5064 = vpop.f32.mrb[0].mxu0
    %v5065 = vadd.f32 %v4896, %v5064
    %5066 = vdwg.mxu0
    %v5067 = vand.u32 %v68, 4294901760
    %v5068 = vsub.f32 %v68, %v5067
    %v5069 = vand.u32 %v5068, 4294901760
    %5070 = vmatprep.subr.mxu0 %v5069
    %v5071 = vand.u32 %v67, 4294901760
    %v5072 = vsub.f32 %v67, %v5071
    %v5073 = vand.u32 %v5072, 4294901760
    %5074 = vmatpush1.msra.mxu0 %v5073
    %v5075 = vand.u32 %v72, 4294901760
    %v5076 = vsub.f32 %v72, %v5075
    %v5077 = vand.u32 %v5076, 4294901760
    %5078 = vmatprep.subr.mxu0 %v5077
    %v5079 = vand.u32 %v71, 4294901760
    %v5080 = vsub.f32 %v71, %v5079
    %v5081 = vand.u32 %v5080, 4294901760
    %5082 = vmatpush1.msra.mxu0 %v5081
    %v5083 = vand.u32 %v76, 4294901760
    %v5084 = vsub.f32 %v76, %v5083
    %v5085 = vand.u32 %v5084, 4294901760
    %5086 = vmatprep.subr.mxu0 %v5085
    %v5087 = vand.u32 %v75, 4294901760
    %v5088 = vsub.f32 %v75, %v5087
    %v5089 = vand.u32 %v5088, 4294901760
    %5090 = vmatpush1.msra.mxu0 %v5089
    %v5091 = vand.u32 %v80, 4294901760
    %v5092 = vsub.f32 %v80, %v5091
    %v5093 = vand.u32 %v5092, 4294901760
    %5094 = vmatprep.subr.mxu0 %v5093
    %v5095 = vand.u32 %v79, 4294901760
    %v5096 = vsub.f32 %v79, %v5095
    %v5097 = vand.u32 %v5096, 4294901760
    %5098 = vmatpush1.msra.mxu0 %v5097
    %v5099 = vand.u32 %v84, 4294901760
    %v5100 = vsub.f32 %v84, %v5099
    %v5101 = vand.u32 %v5100, 4294901760
    %5102 = vmatprep.subr.mxu0 %v5101
    %v5103 = vand.u32 %v83, 4294901760
    %v5104 = vsub.f32 %v83, %v5103
    %v5105 = vand.u32 %v5104, 4294901760
    %5106 = vmatpush1.msra.mxu0 %v5105
    %v5107 = vand.u32 %v88, 4294901760
    %v5108 = vsub.f32 %v88, %v5107
    %v5109 = vand.u32 %v5108, 4294901760
    %5110 = vmatprep.subr.mxu0 %v5109
    %v5111 = vand.u32 %v87, 4294901760
    %v5112 = vsub.f32 %v87, %v5111
    %v5113 = vand.u32 %v5112, 4294901760
    %5114 = vmatpush1.msra.mxu0 %v5113
    %v5115 = vand.u32 %v92, 4294901760
    %v5116 = vsub.f32 %v92, %v5115
    %v5117 = vand.u32 %v5116, 4294901760
    %5118 = vmatprep.subr.mxu0 %v5117
    %v5119 = vand.u32 %v91, 4294901760
    %v5120 = vsub.f32 %v91, %v5119
    %v5121 = vand.u32 %v5120, 4294901760
    %5122 = vmatpush1.msra.mxu0 %v5121
    %v5123 = vand.u32 %v96, 4294901760
    %v5124 = vsub.f32 %v96, %v5123
    %v5125 = vand.u32 %v5124, 4294901760
    %5126 = vmatprep.subr.mxu0 %v5125
    %v5127 = vand.u32 %v95, 4294901760
    %v5128 = vsub.f32 %v95, %v5127
    %v5129 = vand.u32 %v5128, 4294901760
    %5130 = vmatpush1.msra.mxu0 %v5129
    %v5131 = vand.u32 %v100, 4294901760
    %v5132 = vsub.f32 %v100, %v5131
    %v5133 = vand.u32 %v5132, 4294901760
    %5134 = vmatprep.subr.mxu0 %v5133
    %v5135 = vand.u32 %v99, 4294901760
    %v5136 = vsub.f32 %v99, %v5135
    %v5137 = vand.u32 %v5136, 4294901760
    %5138 = vmatpush1.msra.mxu0 %v5137
    %v5139 = vand.u32 %v104, 4294901760
    %v5140 = vsub.f32 %v104, %v5139
    %v5141 = vand.u32 %v5140, 4294901760
    %5142 = vmatprep.subr.mxu0 %v5141
    %v5143 = vand.u32 %v103, 4294901760
    %v5144 = vsub.f32 %v103, %v5143
    %v5145 = vand.u32 %v5144, 4294901760
    %5146 = vmatpush1.msra.mxu0 %v5145
    %v5147 = vand.u32 %v108, 4294901760
    %v5148 = vsub.f32 %v108, %v5147
    %v5149 = vand.u32 %v5148, 4294901760
    %5150 = vmatprep.subr.mxu0 %v5149
    %v5151 = vand.u32 %v107, 4294901760
    %v5152 = vsub.f32 %v107, %v5151
    %v5153 = vand.u32 %v5152, 4294901760
    %5154 = vmatpush1.msra.mxu0 %v5153
    %v5155 = vand.u32 %v112, 4294901760
    %v5156 = vsub.f32 %v112, %v5155
    %v5157 = vand.u32 %v5156, 4294901760
    %5158 = vmatprep.subr.mxu0 %v5157
    %v5159 = vand.u32 %v111, 4294901760
    %v5160 = vsub.f32 %v111, %v5159
    %v5161 = vand.u32 %v5160, 4294901760
    %5162 = vmatpush1.msra.mxu0 %v5161
    %v5163 = vand.u32 %v116, 4294901760
    %v5164 = vsub.f32 %v116, %v5163
    %v5165 = vand.u32 %v5164, 4294901760
    %5166 = vmatprep.subr.mxu0 %v5165
    %v5167 = vand.u32 %v115, 4294901760
    %v5168 = vsub.f32 %v115, %v5167
    %v5169 = vand.u32 %v5168, 4294901760
    %5170 = vmatpush1.msra.mxu0 %v5169
    %v5171 = vand.u32 %v120, 4294901760
    %v5172 = vsub.f32 %v120, %v5171
    %v5173 = vand.u32 %v5172, 4294901760
    %5174 = vmatprep.subr.mxu0 %v5173
    %v5175 = vand.u32 %v119, 4294901760
    %v5176 = vsub.f32 %v119, %v5175
    %v5177 = vand.u32 %v5176, 4294901760
    %5178 = vmatpush1.msra.mxu0 %v5177
    %v5179 = vand.u32 %v124, 4294901760
    %v5180 = vsub.f32 %v124, %v5179
    %v5181 = vand.u32 %v5180, 4294901760
    %5182 = vmatprep.subr.mxu0 %v5181
    %v5183 = vand.u32 %v123, 4294901760
    %v5184 = vsub.f32 %v123, %v5183
    %v5185 = vand.u32 %v5184, 4294901760
    %5186 = vmatpush1.msra.mxu0 %v5185
    %v5187 = vand.u32 %v128, 4294901760
    %v5188 = vsub.f32 %v128, %v5187
    %v5189 = vand.u32 %v5188, 4294901760
    %5190 = vmatprep.subr.mxu0 %v5189
    %v5191 = vand.u32 %v127, 4294901760
    %v5192 = vsub.f32 %v127, %v5191
    %v5193 = vand.u32 %v5192, 4294901760
    %5194 = vmatpush1.msra.mxu0 %v5193
    %5195 = vmatprep.subr.mxu0 0.0
    %5196 = vmatpush1.msra.mxu0 0.0
    %5197 = vmatprep.subr.mxu0 0.0
    %5198 = vmatpush1.msra.mxu0 0.0
    %5199 = vmatprep.subr.mxu0 0.0
    %5200 = vmatpush1.msra.mxu0 0.0
    %5201 = vmatprep.subr.mxu0 0.0
    %5202 = vmatpush1.msra.mxu0 0.0
    %5203 = vmatprep.subr.mxu0 0.0
    %5204 = vmatpush1.msra.mxu0 0.0
    %5205 = vmatprep.subr.mxu0 0.0
    %5206 = vmatpush1.msra.mxu0 0.0
    %5207 = vmatprep.subr.mxu0 0.0
    %5208 = vmatpush1.msra.mxu0 0.0
    %5209 = vmatprep.subr.mxu0 0.0
    %5210 = vmatpush1.msra.mxu0 0.0
    %5211 = vmatprep.subr.mxu0 0.0
    %5212 = vmatpush1.msra.mxu0 0.0
    %5213 = vmatprep.subr.mxu0 0.0
    %5214 = vmatpush1.msra.mxu0 0.0
    %5215 = vmatprep.subr.mxu0 0.0
    %5216 = vmatpush1.msra.mxu0 0.0
    %5217 = vmatprep.subr.mxu0 0.0
    %5218 = vmatpush1.msra.mxu0 0.0
    %5219 = vmatprep.subr.mxu0 0.0
    %5220 = vmatpush1.msra.mxu0 0.0
    %5221 = vmatprep.subr.mxu0 0.0
    %5222 = vmatpush1.msra.mxu0 0.0
    %5223 = vmatprep.subr.mxu0 0.0
    %5224 = vmatpush1.msra.mxu0 0.0
    %5225 = vmatprep.subr.mxu0 0.0
    %5226 = vmatpush1.msra.mxu0 0.0
    %5227 = vmatprep.mubr.f32.mxu0 0.0
    %v5228 = vand.u32 %v4231, 4294901760
    %5229 = vmatmul.mubr.f32.gmra.mrb[0].mxu0 %v5228
    %v5230 = vpop.f32.mrb[0].mxu0
    %v5231 = vadd.f32 %v5000, %v5230
    %v5232 = vpop.f32.mrb[0].mxu0
    %v5233 = vadd.f32 %v5002, %v5232
    %5234 = vmatprep.mubr.f32.mxu0 0.0
    %v5235 = vand.u32 %v4232, 4294901760
    %5236 = vmatmul.mubr.f32.gmra.mrb[0].mxu0 %v5235
    %v5237 = vpop.f32.mrb[0].mxu0
    %v5238 = vadd.f32 %v5009, %v5237
    %v5239 = vpop.f32.mrb[0].mxu0
    %v5240 = vadd.f32 %v5011, %v5239
    %5241 = vmatprep.mubr.f32.mxu0 0.0
    %v5242 = vand.u32 %v4233, 4294901760
    %5243 = vmatmul.mubr.f32.gmra.mrb[0].mxu0 %v5242
    %v5244 = vpop.f32.mrb[0].mxu0
    %v5245 = vadd.f32 %v5018, %v5244
    %v5246 = vpop.f32.mrb[0].mxu0
    %v5247 = vadd.f32 %v5020, %v5246
    %5248 = vmatprep.mubr.f32.mxu0 0.0
    %v5249 = vand.u32 %v4234, 4294901760
    %5250 = vmatmul.mubr.f32.gmra.mrb[0].mxu0 %v5249
    %v5251 = vpop.f32.mrb[0].mxu0
    %v5252 = vadd.f32 %v5027, %v5251
    %v5253 = vpop.f32.mrb[0].mxu0
    %v5254 = vadd.f32 %v5029, %v5253
    %5255 = vmatprep.mubr.f32.mxu0 0.0
    %v5256 = vand.u32 %v4235, 4294901760
    %5257 = vmatmul.mubr.f32.gmra.mrb[0].mxu0 %v5256
    %v5258 = vpop.f32.mrb[0].mxu0
    %v5259 = vadd.f32 %v5036, %v5258
    %v5260 = vpop.f32.mrb[0].mxu0
    %v5261 = vadd.f32 %v5038, %v5260
    %5262 = vmatprep.mubr.f32.mxu0 0.0
    %v5263 = vand.u32 %v4236, 4294901760
    %5264 = vmatmul.mubr.f32.gmra.mrb[0].mxu0 %v5263
    %v5265 = vpop.f32.mrb[0].mxu0
    %v5266 = vadd.f32 %v5045, %v5265
    %v5267 = vpop.f32.mrb[0].mxu0
    %v5268 = vadd.f32 %v5047, %v5267
    %5269 = vmatprep.mubr.f32.mxu0 0.0
    %v5270 = vand.u32 %v4237, 4294901760
    %5271 = vmatmul.mubr.f32.gmra.mrb[0].mxu0 %v5270
    %v5272 = vpop.f32.mrb[0].mxu0
    %v5273 = vadd.f32 %v5054, %v5272
    %v5274 = vpop.f32.mrb[0].mxu0
    %v5275 = vadd.f32 %v5056, %v5274
    %5276 = vmatprep.mubr.f32.mxu0 0.0
    %v5277 = vand.u32 %v4238, 4294901760
    %5278 = vmatmul.mubr.f32.gmra.mrb[0].mxu0 %v5277
    %v5279 = vpop.f32.mrb[0].mxu0
    %v5280 = vadd.f32 %v5063, %v5279
    %v5281 = vpop.f32.mrb[0].mxu0
    %v5282 = vadd.f32 %v5065, %v5281
    %5283 = vdwg.mxu0
    %v5284 = vand.u32 %v68, 4294901760
    %5285 = vmatprep.subr.mxu0 %v5284
    %v5286 = vand.u32 %v67, 4294901760
    %5287 = vmatpush1.msra.mxu0 %v5286
    %v5288 = vand.u32 %v72, 4294901760
    %5289 = vmatprep.subr.mxu0 %v5288
    %v5290 = vand.u32 %v71, 4294901760
    %5291 = vmatpush1.msra.mxu0 %v5290
    %v5292 = vand.u32 %v76, 4294901760
    %5293 = vmatprep.subr.mxu0 %v5292
    %v5294 = vand.u32 %v75, 4294901760
    %5295 = vmatpush1.msra.mxu0 %v5294
    %v5296 = vand.u32 %v80, 4294901760
    %5297 = vmatprep.subr.mxu0 %v5296
    %v5298 = vand.u32 %v79, 4294901760
    %5299 = vmatpush1.msra.mxu0 %v5298
    %v5300 = vand.u32 %v84, 4294901760
    %5301 = vmatprep.subr.mxu0 %v5300
    %v5302 = vand.u32 %v83, 4294901760
    %5303 = vmatpush1.msra.mxu0 %v5302
    %v5304 = vand.u32 %v88, 4294901760
    %5305 = vmatprep.subr.mxu0 %v5304
    %v5306 = vand.u32 %v87, 4294901760
    %5307 = vmatpush1.msra.mxu0 %v5306
    %v5308 = vand.u32 %v92, 4294901760
    %5309 = vmatprep.subr.mxu0 %v5308
    %v5310 = vand.u32 %v91, 4294901760
    %5311 = vmatpush1.msra.mxu0 %v5310
    %v5312 = vand.u32 %v96, 4294901760
    %5313 = vmatprep.subr.mxu0 %v5312
    %v5314 = vand.u32 %v95, 4294901760
    %5315 = vmatpush1.msra.mxu0 %v5314
    %v5316 = vand.u32 %v100, 4294901760
    %5317 = vmatprep.subr.mxu0 %v5316
    %v5318 = vand.u32 %v99, 4294901760
    %5319 = vmatpush1.msra.mxu0 %v5318
    %v5320 = vand.u32 %v104, 4294901760
    %5321 = vmatprep.subr.mxu0 %v5320
    %v5322 = vand.u32 %v103, 4294901760
    %5323 = vmatpush1.msra.mxu0 %v5322
    %v5324 = vand.u32 %v108, 4294901760
    %5325 = vmatprep.subr.mxu0 %v5324
    %v5326 = vand.u32 %v107, 4294901760
    %5327 = vmatpush1.msra.mxu0 %v5326
    %v5328 = vand.u32 %v112, 4294901760
    %5329 = vmatprep.subr.mxu0 %v5328
    %v5330 = vand.u32 %v111, 4294901760
    %5331 = vmatpush1.msra.mxu0 %v5330
    %v5332 = vand.u32 %v116, 4294901760
    %5333 = vmatprep.subr.mxu0 %v5332
    %v5334 = vand.u32 %v115, 4294901760
    %5335 = vmatpush1.msra.mxu0 %v5334
    %v5336 = vand.u32 %v120, 4294901760
    %5337 = vmatprep.subr.mxu0 %v5336
    %v5338 = vand.u32 %v119, 4294901760
    %5339 = vmatpush1.msra.mxu0 %v5338
    %v5340 = vand.u32 %v124, 4294901760
    %5341 = vmatprep.subr.mxu0 %v5340
    %v5342 = vand.u32 %v123, 4294901760
    %5343 = vmatpush1.msra.mxu0 %v5342
    %v5344 = vand.u32 %v128, 4294901760
    %5345 = vmatprep.subr.mxu0 %v5344
    %v5346 = vand.u32 %v127, 4294901760
    %5347 = vmatpush1.msra.mxu0 %v5346
    %5348 = vmatprep.subr.mxu0 0.0
    %5349 = vmatpush1.msra.mxu0 0.0
    %5350 = vmatprep.subr.mxu0 0.0
    %5351 = vmatpush1.msra.mxu0 0.0
    %5352 = vmatprep.subr.mxu0 0.0
    %5353 = vmatpush1.msra.mxu0 0.0
    %5354 = vmatprep.subr.mxu0 0.0
    %5355 = vmatpush1.msra.mxu0 0.0
    %5356 = vmatprep.subr.mxu0 0.0
    %5357 = vmatpush1.msra.mxu0 0.0
    %5358 = vmatprep.subr.mxu0 0.0
    %5359 = vmatpush1.msra.mxu0 0.0
    %5360 = vmatprep.subr.mxu0 0.0
    %5361 = vmatpush1.msra.mxu0 0.0
    %5362 = vmatprep.subr.mxu0 0.0
    %5363 = vmatpush1.msra.mxu0 0.0
    %5364 = vmatprep.subr.mxu0 0.0
    %5365 = vmatpush1.msra.mxu0 0.0
    %5366 = vmatprep.subr.mxu0 0.0
    %5367 = vmatpush1.msra.mxu0 0.0
    %5368 = vmatprep.subr.mxu0 0.0
    %5369 = vmatpush1.msra.mxu0 0.0
    %5370 = vmatprep.subr.mxu0 0.0
    %5371 = vmatpush1.msra.mxu0 0.0
    %5372 = vmatprep.subr.mxu0 0.0
    %5373 = vmatpush1.msra.mxu0 0.0
    %5374 = vmatprep.subr.mxu0 0.0
    %5375 = vmatpush1.msra.mxu0 0.0
    %5376 = vmatprep.subr.mxu0 0.0
    %5377 = vmatpush1.msra.mxu0 0.0
    %5378 = vmatprep.subr.mxu0 0.0
    %5379 = vmatpush1.msra.mxu0 0.0
    %5380 = vmatprep.mubr.f32.mxu0 0.0
    %v5381 = vand.u32 %v4231, 4294901760
    %5382 = vmatmul.mubr.f32.gmra.mrb[0].mxu0 %v5381
    %v5383 = vpop.f32.mrb[0].mxu0
    %v5384 = vadd.f32 %v5231, %v5383
    %v5385 = vpop.f32.mrb[0].mxu0
    %v5386 = vadd.f32 %v5233, %v5385
    %5387 = vmatprep.mubr.f32.mxu0 0.0
    %v5388 = vand.u32 %v4232, 4294901760
    %5389 = vmatmul.mubr.f32.gmra.mrb[0].mxu0 %v5388
    %v5390 = vpop.f32.mrb[0].mxu0
    %v5391 = vadd.f32 %v5238, %v5390
    %v5392 = vpop.f32.mrb[0].mxu0
    %v5393 = vadd.f32 %v5240, %v5392
    %5394 = vmatprep.mubr.f32.mxu0 0.0
    %v5395 = vand.u32 %v4233, 4294901760
    %5396 = vmatmul.mubr.f32.gmra.mrb[0].mxu0 %v5395
    %v5397 = vpop.f32.mrb[0].mxu0
    %v5398 = vadd.f32 %v5245, %v5397
    %v5399 = vpop.f32.mrb[0].mxu0
    %v5400 = vadd.f32 %v5247, %v5399
    %5401 = vmatprep.mubr.f32.mxu0 0.0
    %v5402 = vand.u32 %v4234, 4294901760
    %5403 = vmatmul.mubr.f32.gmra.mrb[0].mxu0 %v5402
    %v5404 = vpop.f32.mrb[0].mxu0
    %v5405 = vadd.f32 %v5252, %v5404
    %v5406 = vpop.f32.mrb[0].mxu0
    %v5407 = vadd.f32 %v5254, %v5406
    %5408 = vmatprep.mubr.f32.mxu0 0.0
    %v5409 = vand.u32 %v4235, 4294901760
    %5410 = vmatmul.mubr.f32.gmra.mrb[0].mxu0 %v5409
    %v5411 = vpop.f32.mrb[0].mxu0
    %v5412 = vadd.f32 %v5259, %v5411
    %v5413 = vpop.f32.mrb[0].mxu0
    %v5414 = vadd.f32 %v5261, %v5413
    %5415 = vmatprep.mubr.f32.mxu0 0.0
    %v5416 = vand.u32 %v4236, 4294901760
    %5417 = vmatmul.mubr.f32.gmra.mrb[0].mxu0 %v5416
    %v5418 = vpop.f32.mrb[0].mxu0
    %v5419 = vadd.f32 %v5266, %v5418
    %v5420 = vpop.f32.mrb[0].mxu0
    %v5421 = vadd.f32 %v5268, %v5420
    %5422 = vmatprep.mubr.f32.mxu0 0.0
    %v5423 = vand.u32 %v4237, 4294901760
    %5424 = vmatmul.mubr.f32.gmra.mrb[0].mxu0 %v5423
    %v5425 = vpop.f32.mrb[0].mxu0
    %v5426 = vadd.f32 %v5273, %v5425
    %v5427 = vpop.f32.mrb[0].mxu0
    %v5428 = vadd.f32 %v5275, %v5427
    %5429 = vmatprep.mubr.f32.mxu0 0.0
    %v5430 = vand.u32 %v4238, 4294901760
    %5431 = vmatmul.mubr.f32.gmra.mrb[0].mxu0 %v5430
    %v5432 = vpop.f32.mrb[0].mxu0
    %v5433 = vadd.f32 %v5280, %v5432
    %v5434 = vpop.f32.mrb[0].mxu0
    %v5435 = vadd.f32 %v5282, %v5434
    %5436 = vdwg.mxu0
    %v5437 = vand.u32 %v70, 4294901760
    %5438 = vmatprep.subr.mxu0 %v5437
    %v5439 = vand.u32 %v69, 4294901760
    %5440 = vmatpush1.msra.mxu0 %v5439
    %v5441 = vand.u32 %v74, 4294901760
    %5442 = vmatprep.subr.mxu0 %v5441
    %v5443 = vand.u32 %v73, 4294901760
    %5444 = vmatpush1.msra.mxu0 %v5443
    %v5445 = vand.u32 %v78, 4294901760
    %5446 = vmatprep.subr.mxu0 %v5445
    %v5447 = vand.u32 %v77, 4294901760
    %5448 = vmatpush1.msra.mxu0 %v5447
    %v5449 = vand.u32 %v82, 4294901760
    %5450 = vmatprep.subr.mxu0 %v5449
    %v5451 = vand.u32 %v81, 4294901760
    %5452 = vmatpush1.msra.mxu0 %v5451
    %v5453 = vand.u32 %v86, 4294901760
    %5454 = vmatprep.subr.mxu0 %v5453
    %v5455 = vand.u32 %v85, 4294901760
    %5456 = vmatpush1.msra.mxu0 %v5455
    %v5457 = vand.u32 %v90, 4294901760
    %5458 = vmatprep.subr.mxu0 %v5457
    %v5459 = vand.u32 %v89, 4294901760
    %5460 = vmatpush1.msra.mxu0 %v5459
    %v5461 = vand.u32 %v94, 4294901760
    %5462 = vmatprep.subr.mxu0 %v5461
    %v5463 = vand.u32 %v93, 4294901760
    %5464 = vmatpush1.msra.mxu0 %v5463
    %v5465 = vand.u32 %v98, 4294901760
    %5466 = vmatprep.subr.mxu0 %v5465
    %v5467 = vand.u32 %v97, 4294901760
    %5468 = vmatpush1.msra.mxu0 %v5467
    %v5469 = vand.u32 %v102, 4294901760
    %5470 = vmatprep.subr.mxu0 %v5469
    %v5471 = vand.u32 %v101, 4294901760
    %5472 = vmatpush1.msra.mxu0 %v5471
    %v5473 = vand.u32 %v106, 4294901760
    %5474 = vmatprep.subr.mxu0 %v5473
    %v5475 = vand.u32 %v105, 4294901760
    %5476 = vmatpush1.msra.mxu0 %v5475
    %v5477 = vand.u32 %v110, 4294901760
    %5478 = vmatprep.subr.mxu0 %v5477
    %v5479 = vand.u32 %v109, 4294901760
    %5480 = vmatpush1.msra.mxu0 %v5479
    %v5481 = vand.u32 %v114, 4294901760
    %5482 = vmatprep.subr.mxu0 %v5481
    %v5483 = vand.u32 %v113, 4294901760
    %5484 = vmatpush1.msra.mxu0 %v5483
    %v5485 = vand.u32 %v118, 4294901760
    %5486 = vmatprep.subr.mxu0 %v5485
    %v5487 = vand.u32 %v117, 4294901760
    %5488 = vmatpush1.msra.mxu0 %v5487
    %v5489 = vand.u32 %v122, 4294901760
    %5490 = vmatprep.subr.mxu0 %v5489
    %v5491 = vand.u32 %v121, 4294901760
    %5492 = vmatpush1.msra.mxu0 %v5491
    %v5493 = vand.u32 %v126, 4294901760
    %5494 = vmatprep.subr.mxu0 %v5493
    %v5495 = vand.u32 %v125, 4294901760
    %5496 = vmatpush1.msra.mxu0 %v5495
    %v5497 = vand.u32 %v130, 4294901760
    %5498 = vmatprep.subr.mxu0 %v5497
    %v5499 = vand.u32 %v129, 4294901760
    %5500 = vmatpush1.msra.mxu0 %v5499
    %5501 = vmatprep.subr.mxu0 0.0
    %5502 = vmatpush1.msra.mxu0 0.0
    %5503 = vmatprep.subr.mxu0 0.0
    %5504 = vmatpush1.msra.mxu0 0.0
    %5505 = vmatprep.subr.mxu0 0.0
    %5506 = vmatpush1.msra.mxu0 0.0
    %5507 = vmatprep.subr.mxu0 0.0
    %5508 = vmatpush1.msra.mxu0 0.0
    %5509 = vmatprep.subr.mxu0 0.0
    %5510 = vmatpush1.msra.mxu0 0.0
    %5511 = vmatprep.subr.mxu0 0.0
    %5512 = vmatpush1.msra.mxu0 0.0
    %5513 = vmatprep.subr.mxu0 0.0
    %5514 = vmatpush1.msra.mxu0 0.0
    %5515 = vmatprep.subr.mxu0 0.0
    %5516 = vmatpush1.msra.mxu0 0.0
    %5517 = vmatprep.subr.mxu0 0.0
    %5518 = vmatpush1.msra.mxu0 0.0
    %5519 = vmatprep.subr.mxu0 0.0
    %5520 = vmatpush1.msra.mxu0 0.0
    %5521 = vmatprep.subr.mxu0 0.0
    %5522 = vmatpush1.msra.mxu0 0.0
    %5523 = vmatprep.subr.mxu0 0.0
    %5524 = vmatpush1.msra.mxu0 0.0
    %5525 = vmatprep.subr.mxu0 0.0
    %5526 = vmatpush1.msra.mxu0 0.0
    %5527 = vmatprep.subr.mxu0 0.0
    %5528 = vmatpush1.msra.mxu0 0.0
    %5529 = vmatprep.subr.mxu0 0.0
    %5530 = vmatpush1.msra.mxu0 0.0
    %5531 = vmatprep.subr.mxu0 0.0
    %5532 = vmatpush1.msra.mxu0 0.0
    %5533 = vmatprep.mubr.f32.mxu0 0.0
    %v5534 = vand.u32 %v4231, 4294901760
    %v5535 = vsub.f32 %v4231, %v5534
    %v5536 = vand.u32 %v5535, 4294901760
    %v5537 = vsub.f32 %v5535, %v5536
    %v5538 = vand.u32 %v5537, 4294901760
    %5539 = vmatmul.mubr.f32.gmra.mrb[0].mxu0 %v5538
    %v5540 = vpop.f32.mrb[0].mxu0
    %v5541 = vadd.f32 0.0, %v5540
    %v5542 = vpop.f32.mrb[0].mxu0
    %v5543 = vadd.f32 0.0, %v5542
    %5544 = vmatprep.mubr.f32.mxu0 0.0
    %v5545 = vand.u32 %v4232, 4294901760
    %v5546 = vsub.f32 %v4232, %v5545
    %v5547 = vand.u32 %v5546, 4294901760
    %v5548 = vsub.f32 %v5546, %v5547
    %v5549 = vand.u32 %v5548, 4294901760
    %5550 = vmatmul.mubr.f32.gmra.mrb[0].mxu0 %v5549
    %v5551 = vpop.f32.mrb[0].mxu0
    %v5552 = vadd.f32 0.0, %v5551
    %v5553 = vpop.f32.mrb[0].mxu0
    %v5554 = vadd.f32 0.0, %v5553
    %5555 = vmatprep.mubr.f32.mxu0 0.0
    %v5556 = vand.u32 %v4233, 4294901760
    %v5557 = vsub.f32 %v4233, %v5556
    %v5558 = vand.u32 %v5557, 4294901760
    %v5559 = vsub.f32 %v5557, %v5558
    %v5560 = vand.u32 %v5559, 4294901760
    %5561 = vmatmul.mubr.f32.gmra.mrb[0].mxu0 %v5560
    %v5562 = vpop.f32.mrb[0].mxu0
    %v5563 = vadd.f32 0.0, %v5562
    %v5564 = vpop.f32.mrb[0].mxu0
    %v5565 = vadd.f32 0.0, %v5564
    %5566 = vmatprep.mubr.f32.mxu0 0.0
    %v5567 = vand.u32 %v4234, 4294901760
    %v5568 = vsub.f32 %v4234, %v5567
    %v5569 = vand.u32 %v5568, 4294901760
    %v5570 = vsub.f32 %v5568, %v5569
    %v5571 = vand.u32 %v5570, 4294901760
    %5572 = vmatmul.mubr.f32.gmra.mrb[0].mxu0 %v5571
    %v5573 = vpop.f32.mrb[0].mxu0
    %v5574 = vadd.f32 0.0, %v5573
    %v5575 = vpop.f32.mrb[0].mxu0
    %v5576 = vadd.f32 0.0, %v5575
    %5577 = vmatprep.mubr.f32.mxu0 0.0
    %v5578 = vand.u32 %v4235, 4294901760
    %v5579 = vsub.f32 %v4235, %v5578
    %v5580 = vand.u32 %v5579, 4294901760
    %v5581 = vsub.f32 %v5579, %v5580
    %v5582 = vand.u32 %v5581, 4294901760
    %5583 = vmatmul.mubr.f32.gmra.mrb[0].mxu0 %v5582
    %v5584 = vpop.f32.mrb[0].mxu0
    %v5585 = vadd.f32 0.0, %v5584
    %v5586 = vpop.f32.mrb[0].mxu0
    %v5587 = vadd.f32 0.0, %v5586
    %5588 = vmatprep.mubr.f32.mxu0 0.0
    %v5589 = vand.u32 %v4236, 4294901760
    %v5590 = vsub.f32 %v4236, %v5589
    %v5591 = vand.u32 %v5590, 4294901760
    %v5592 = vsub.f32 %v5590, %v5591
    %v5593 = vand.u32 %v5592, 4294901760
    %5594 = vmatmul.mubr.f32.gmra.mrb[0].mxu0 %v5593
    %v5595 = vpop.f32.mrb[0].mxu0
    %v5596 = vadd.f32 0.0, %v5595
    %v5597 = vpop.f32.mrb[0].mxu0
    %v5598 = vadd.f32 0.0, %v5597
    %5599 = vmatprep.mubr.f32.mxu0 0.0
    %v5600 = vand.u32 %v4237, 4294901760
    %v5601 = vsub.f32 %v4237, %v5600
    %v5602 = vand.u32 %v5601, 4294901760
    %v5603 = vsub.f32 %v5601, %v5602
    %v5604 = vand.u32 %v5603, 4294901760
    %5605 = vmatmul.mubr.f32.gmra.mrb[0].mxu0 %v5604
    %v5606 = vpop.f32.mrb[0].mxu0
    %v5607 = vadd.f32 0.0, %v5606
    %v5608 = vpop.f32.mrb[0].mxu0
    %v5609 = vadd.f32 0.0, %v5608
    %5610 = vmatprep.mubr.f32.mxu0 0.0
    %v5611 = vand.u32 %v4238, 4294901760
    %v5612 = vsub.f32 %v4238, %v5611
    %v5613 = vand.u32 %v5612, 4294901760
    %v5614 = vsub.f32 %v5612, %v5613
    %v5615 = vand.u32 %v5614, 4294901760
    %5616 = vmatmul.mubr.f32.gmra.mrb[0].mxu0 %v5615
    %v5617 = vpop.f32.mrb[0].mxu0
    %v5618 = vadd.f32 0.0, %v5617
    %v5619 = vpop.f32.mrb[0].mxu0
    %v5620 = vadd.f32 0.0, %v5619
    %5621 = vdwg.mxu0
    %v5622 = vand.u32 %v70, 4294901760
    %v5623 = vsub.f32 %v70, %v5622
    %v5624 = vand.u32 %v5623, 4294901760
    %v5625 = vsub.f32 %v5623, %v5624
    %v5626 = vand.u32 %v5625, 4294901760
    %5627 = vmatprep.subr.mxu0 %v5626
    %v5628 = vand.u32 %v69, 4294901760
    %v5629 = vsub.f32 %v69, %v5628
    %v5630 = vand.u32 %v5629, 4294901760
    %v5631 = vsub.f32 %v5629, %v5630
    %v5632 = vand.u32 %v5631, 4294901760
    %5633 = vmatpush1.msra.mxu0 %v5632
    %v5634 = vand.u32 %v74, 4294901760
    %v5635 = vsub.f32 %v74, %v5634
    %v5636 = vand.u32 %v5635, 4294901760
    %v5637 = vsub.f32 %v5635, %v5636
    %v5638 = vand.u32 %v5637, 4294901760
    %5639 = vmatprep.subr.mxu0 %v5638
    %v5640 = vand.u32 %v73, 4294901760
    %v5641 = vsub.f32 %v73, %v5640
    %v5642 = vand.u32 %v5641, 4294901760
    %v5643 = vsub.f32 %v5641, %v5642
    %v5644 = vand.u32 %v5643, 4294901760
    %5645 = vmatpush1.msra.mxu0 %v5644
    %v5646 = vand.u32 %v78, 4294901760
    %v5647 = vsub.f32 %v78, %v5646
    %v5648 = vand.u32 %v5647, 4294901760
    %v5649 = vsub.f32 %v5647, %v5648
    %v5650 = vand.u32 %v5649, 4294901760
    %5651 = vmatprep.subr.mxu0 %v5650
    %v5652 = vand.u32 %v77, 4294901760
    %v5653 = vsub.f32 %v77, %v5652
    %v5654 = vand.u32 %v5653, 4294901760
    %v5655 = vsub.f32 %v5653, %v5654
    %v5656 = vand.u32 %v5655, 4294901760
    %5657 = vmatpush1.msra.mxu0 %v5656
    %v5658 = vand.u32 %v82, 4294901760
    %v5659 = vsub.f32 %v82, %v5658
    %v5660 = vand.u32 %v5659, 4294901760
    %v5661 = vsub.f32 %v5659, %v5660
    %v5662 = vand.u32 %v5661, 4294901760
    %5663 = vmatprep.subr.mxu0 %v5662
    %v5664 = vand.u32 %v81, 4294901760
    %v5665 = vsub.f32 %v81, %v5664
    %v5666 = vand.u32 %v5665, 4294901760
    %v5667 = vsub.f32 %v5665, %v5666
    %v5668 = vand.u32 %v5667, 4294901760
    %5669 = vmatpush1.msra.mxu0 %v5668
    %v5670 = vand.u32 %v86, 4294901760
    %v5671 = vsub.f32 %v86, %v5670
    %v5672 = vand.u32 %v5671, 4294901760
    %v5673 = vsub.f32 %v5671, %v5672
    %v5674 = vand.u32 %v5673, 4294901760
    %5675 = vmatprep.subr.mxu0 %v5674
    %v5676 = vand.u32 %v85, 4294901760
    %v5677 = vsub.f32 %v85, %v5676
    %v5678 = vand.u32 %v5677, 4294901760
    %v5679 = vsub.f32 %v5677, %v5678
    %v5680 = vand.u32 %v5679, 4294901760
    %5681 = vmatpush1.msra.mxu0 %v5680
    %v5682 = vand.u32 %v90, 4294901760
    %v5683 = vsub.f32 %v90, %v5682
    %v5684 = vand.u32 %v5683, 4294901760
    %v5685 = vsub.f32 %v5683, %v5684
    %v5686 = vand.u32 %v5685, 4294901760
    %5687 = vmatprep.subr.mxu0 %v5686
    %v5688 = vand.u32 %v89, 4294901760
    %v5689 = vsub.f32 %v89, %v5688
    %v5690 = vand.u32 %v5689, 4294901760
    %v5691 = vsub.f32 %v5689, %v5690
    %v5692 = vand.u32 %v5691, 4294901760
    %5693 = vmatpush1.msra.mxu0 %v5692
    %v5694 = vand.u32 %v94, 4294901760
    %v5695 = vsub.f32 %v94, %v5694
    %v5696 = vand.u32 %v5695, 4294901760
    %v5697 = vsub.f32 %v5695, %v5696
    %v5698 = vand.u32 %v5697, 4294901760
    %5699 = vmatprep.subr.mxu0 %v5698
    %v5700 = vand.u32 %v93, 4294901760
    %v5701 = vsub.f32 %v93, %v5700
    %v5702 = vand.u32 %v5701, 4294901760
    %v5703 = vsub.f32 %v5701, %v5702
    %v5704 = vand.u32 %v5703, 4294901760
    %5705 = vmatpush1.msra.mxu0 %v5704
    %v5706 = vand.u32 %v98, 4294901760
    %v5707 = vsub.f32 %v98, %v5706
    %v5708 = vand.u32 %v5707, 4294901760
    %v5709 = vsub.f32 %v5707, %v5708
    %v5710 = vand.u32 %v5709, 4294901760
    %5711 = vmatprep.subr.mxu0 %v5710
    %v5712 = vand.u32 %v97, 4294901760
    %v5713 = vsub.f32 %v97, %v5712
    %v5714 = vand.u32 %v5713, 4294901760
    %v5715 = vsub.f32 %v5713, %v5714
    %v5716 = vand.u32 %v5715, 4294901760
    %5717 = vmatpush1.msra.mxu0 %v5716
    %v5718 = vand.u32 %v102, 4294901760
    %v5719 = vsub.f32 %v102, %v5718
    %v5720 = vand.u32 %v5719, 4294901760
    %v5721 = vsub.f32 %v5719, %v5720
    %v5722 = vand.u32 %v5721, 4294901760
    %5723 = vmatprep.subr.mxu0 %v5722
    %v5724 = vand.u32 %v101, 4294901760
    %v5725 = vsub.f32 %v101, %v5724
    %v5726 = vand.u32 %v5725, 4294901760
    %v5727 = vsub.f32 %v5725, %v5726
    %v5728 = vand.u32 %v5727, 4294901760
    %5729 = vmatpush1.msra.mxu0 %v5728
    %v5730 = vand.u32 %v106, 4294901760
    %v5731 = vsub.f32 %v106, %v5730
    %v5732 = vand.u32 %v5731, 4294901760
    %v5733 = vsub.f32 %v5731, %v5732
    %v5734 = vand.u32 %v5733, 4294901760
    %5735 = vmatprep.subr.mxu0 %v5734
    %v5736 = vand.u32 %v105, 4294901760
    %v5737 = vsub.f32 %v105, %v5736
    %v5738 = vand.u32 %v5737, 4294901760
    %v5739 = vsub.f32 %v5737, %v5738
    %v5740 = vand.u32 %v5739, 4294901760
    %5741 = vmatpush1.msra.mxu0 %v5740
    %v5742 = vand.u32 %v110, 4294901760
    %v5743 = vsub.f32 %v110, %v5742
    %v5744 = vand.u32 %v5743, 4294901760
    %v5745 = vsub.f32 %v5743, %v5744
    %v5746 = vand.u32 %v5745, 4294901760
    %5747 = vmatprep.subr.mxu0 %v5746
    %v5748 = vand.u32 %v109, 4294901760
    %v5749 = vsub.f32 %v109, %v5748
    %v5750 = vand.u32 %v5749, 4294901760
    %v5751 = vsub.f32 %v5749, %v5750
    %v5752 = vand.u32 %v5751, 4294901760
    %5753 = vmatpush1.msra.mxu0 %v5752
    %v5754 = vand.u32 %v114, 4294901760
    %v5755 = vsub.f32 %v114, %v5754
    %v5756 = vand.u32 %v5755, 4294901760
    %v5757 = vsub.f32 %v5755, %v5756
    %v5758 = vand.u32 %v5757, 4294901760
    %5759 = vmatprep.subr.mxu0 %v5758
    %v5760 = vand.u32 %v113, 4294901760
    %v5761 = vsub.f32 %v113, %v5760
    %v5762 = vand.u32 %v5761, 4294901760
    %v5763 = vsub.f32 %v5761, %v5762
    %v5764 = vand.u32 %v5763, 4294901760
    %5765 = vmatpush1.msra.mxu0 %v5764
    %v5766 = vand.u32 %v118, 4294901760
    %v5767 = vsub.f32 %v118, %v5766
    %v5768 = vand.u32 %v5767, 4294901760
    %v5769 = vsub.f32 %v5767, %v5768
    %v5770 = vand.u32 %v5769, 4294901760
    %5771 = vmatprep.subr.mxu0 %v5770
    %v5772 = vand.u32 %v117, 4294901760
    %v5773 = vsub.f32 %v117, %v5772
    %v5774 = vand.u32 %v5773, 4294901760
    %v5775 = vsub.f32 %v5773, %v5774
    %v5776 = vand.u32 %v5775, 4294901760
    %5777 = vmatpush1.msra.mxu0 %v5776
    %v5778 = vand.u32 %v122, 4294901760
    %v5779 = vsub.f32 %v122, %v5778
    %v5780 = vand.u32 %v5779, 4294901760
    %v5781 = vsub.f32 %v5779, %v5780
    %v5782 = vand.u32 %v5781, 4294901760
    %5783 = vmatprep.subr.mxu0 %v5782
    %v5784 = vand.u32 %v121, 4294901760
    %v5785 = vsub.f32 %v121, %v5784
    %v5786 = vand.u32 %v5785, 4294901760
    %v5787 = vsub.f32 %v5785, %v5786
    %v5788 = vand.u32 %v5787, 4294901760
    %5789 = vmatpush1.msra.mxu0 %v5788
    %v5790 = vand.u32 %v126, 4294901760
    %v5791 = vsub.f32 %v126, %v5790
    %v5792 = vand.u32 %v5791, 4294901760
    %v5793 = vsub.f32 %v5791, %v5792
    %v5794 = vand.u32 %v5793, 4294901760
    %5795 = vmatprep.subr.mxu0 %v5794
    %v5796 = vand.u32 %v125, 4294901760
    %v5797 = vsub.f32 %v125, %v5796
    %v5798 = vand.u32 %v5797, 4294901760
    %v5799 = vsub.f32 %v5797, %v5798
    %v5800 = vand.u32 %v5799, 4294901760
    %5801 = vmatpush1.msra.mxu0 %v5800
    %v5802 = vand.u32 %v130, 4294901760
    %v5803 = vsub.f32 %v130, %v5802
    %v5804 = vand.u32 %v5803, 4294901760
    %v5805 = vsub.f32 %v5803, %v5804
    %v5806 = vand.u32 %v5805, 4294901760
    %5807 = vmatprep.subr.mxu0 %v5806
    %v5808 = vand.u32 %v129, 4294901760
    %v5809 = vsub.f32 %v129, %v5808
    %v5810 = vand.u32 %v5809, 4294901760
    %v5811 = vsub.f32 %v5809, %v5810
    %v5812 = vand.u32 %v5811, 4294901760
    %5813 = vmatpush1.msra.mxu0 %v5812
    %5814 = vmatprep.subr.mxu0 0.0
    %5815 = vmatpush1.msra.mxu0 0.0
    %5816 = vmatprep.subr.mxu0 0.0
    %5817 = vmatpush1.msra.mxu0 0.0
    %5818 = vmatprep.subr.mxu0 0.0
    %5819 = vmatpush1.msra.mxu0 0.0
    %5820 = vmatprep.subr.mxu0 0.0
    %5821 = vmatpush1.msra.mxu0 0.0
    %5822 = vmatprep.subr.mxu0 0.0
    %5823 = vmatpush1.msra.mxu0 0.0
    %5824 = vmatprep.subr.mxu0 0.0
    %5825 = vmatpush1.msra.mxu0 0.0
    %5826 = vmatprep.subr.mxu0 0.0
    %5827 = vmatpush1.msra.mxu0 0.0
    %5828 = vmatprep.subr.mxu0 0.0
    %5829 = vmatpush1.msra.mxu0 0.0
    %5830 = vmatprep.subr.mxu0 0.0
    %5831 = vmatpush1.msra.mxu0 0.0
    %5832 = vmatprep.subr.mxu0 0.0
    %5833 = vmatpush1.msra.mxu0 0.0
    %5834 = vmatprep.subr.mxu0 0.0
    %5835 = vmatpush1.msra.mxu0 0.0
    %5836 = vmatprep.subr.mxu0 0.0
    %5837 = vmatpush1.msra.mxu0 0.0
    %5838 = vmatprep.subr.mxu0 0.0
    %5839 = vmatpush1.msra.mxu0 0.0
    %5840 = vmatprep.subr.mxu0 0.0
    %5841 = vmatpush1.msra.mxu0 0.0
    %5842 = vmatprep.subr.mxu0 0.0
    %5843 = vmatpush1.msra.mxu0 0.0
    %5844 = vmatprep.subr.mxu0 0.0
    %5845 = vmatpush1.msra.mxu0 0.0
    %5846 = vmatprep.mubr.f32.mxu0 0.0
    %v5847 = vand.u32 %v4231, 4294901760
    %5848 = vmatmul.mubr.f32.gmra.mrb[0].mxu0 %v5847
    %v5849 = vpop.f32.mrb[0].mxu0
    %v5850 = vadd.f32 %v5541, %v5849
    %v5851 = vpop.f32.mrb[0].mxu0
    %v5852 = vadd.f32 %v5543, %v5851
    %5853 = vmatprep.mubr.f32.mxu0 0.0
    %v5854 = vand.u32 %v4232, 4294901760
    %5855 = vmatmul.mubr.f32.gmra.mrb[0].mxu0 %v5854
    %v5856 = vpop.f32.mrb[0].mxu0
    %v5857 = vadd.f32 %v5552, %v5856
    %v5858 = vpop.f32.mrb[0].mxu0
    %v5859 = vadd.f32 %v5554, %v5858
    %5860 = vmatprep.mubr.f32.mxu0 0.0
    %v5861 = vand.u32 %v4233, 4294901760
    %5862 = vmatmul.mubr.f32.gmra.mrb[0].mxu0 %v5861
    %v5863 = vpop.f32.mrb[0].mxu0
    %v5864 = vadd.f32 %v5563, %v5863
    %v5865 = vpop.f32.mrb[0].mxu0
    %v5866 = vadd.f32 %v5565, %v5865
    %5867 = vmatprep.mubr.f32.mxu0 0.0
    %v5868 = vand.u32 %v4234, 4294901760
    %5869 = vmatmul.mubr.f32.gmra.mrb[0].mxu0 %v5868
    %v5870 = vpop.f32.mrb[0].mxu0
    %v5871 = vadd.f32 %v5574, %v5870
    %v5872 = vpop.f32.mrb[0].mxu0
    %v5873 = vadd.f32 %v5576, %v5872
    %5874 = vmatprep.mubr.f32.mxu0 0.0
    %v5875 = vand.u32 %v4235, 4294901760
    %5876 = vmatmul.mubr.f32.gmra.mrb[0].mxu0 %v5875
    %v5877 = vpop.f32.mrb[0].mxu0
    %v5878 = vadd.f32 %v5585, %v5877
    %v5879 = vpop.f32.mrb[0].mxu0
    %v5880 = vadd.f32 %v5587, %v5879
    %5881 = vmatprep.mubr.f32.mxu0 0.0
    %v5882 = vand.u32 %v4236, 4294901760
    %5883 = vmatmul.mubr.f32.gmra.mrb[0].mxu0 %v5882
    %v5884 = vpop.f32.mrb[0].mxu0
    %v5885 = vadd.f32 %v5596, %v5884
    %v5886 = vpop.f32.mrb[0].mxu0
    %v5887 = vadd.f32 %v5598, %v5886
    %5888 = vmatprep.mubr.f32.mxu0 0.0
    %v5889 = vand.u32 %v4237, 4294901760
    %5890 = vmatmul.mubr.f32.gmra.mrb[0].mxu0 %v5889
    %v5891 = vpop.f32.mrb[0].mxu0
    %v5892 = vadd.f32 %v5607, %v5891
    %v5893 = vpop.f32.mrb[0].mxu0
    %v5894 = vadd.f32 %v5609, %v5893
    %5895 = vmatprep.mubr.f32.mxu0 0.0
    %v5896 = vand.u32 %v4238, 4294901760
    %5897 = vmatmul.mubr.f32.gmra.mrb[0].mxu0 %v5896
    %v5898 = vpop.f32.mrb[0].mxu0
    %v5899 = vadd.f32 %v5618, %v5898
    %v5900 = vpop.f32.mrb[0].mxu0
    %v5901 = vadd.f32 %v5620, %v5900
    %5902 = vdwg.mxu0
    %v5903 = vand.u32 %v70, 4294901760
    %v5904 = vsub.f32 %v70, %v5903
    %5905 = vmatprep.subr.mxu0 %v5904
    %v5906 = vand.u32 %v69, 4294901760
    %v5907 = vsub.f32 %v69, %v5906
    %5908 = vmatpush1.msra.mxu0 %v5907
    %v5909 = vand.u32 %v74, 4294901760
    %v5910 = vsub.f32 %v74, %v5909
    %5911 = vmatprep.subr.mxu0 %v5910
    %v5912 = vand.u32 %v73, 4294901760
    %v5913 = vsub.f32 %v73, %v5912
    %5914 = vmatpush1.msra.mxu0 %v5913
    %v5915 = vand.u32 %v78, 4294901760
    %v5916 = vsub.f32 %v78, %v5915
    %5917 = vmatprep.subr.mxu0 %v5916
    %v5918 = vand.u32 %v77, 4294901760
    %v5919 = vsub.f32 %v77, %v5918
    %5920 = vmatpush1.msra.mxu0 %v5919
    %v5921 = vand.u32 %v82, 4294901760
    %v5922 = vsub.f32 %v82, %v5921
    %5923 = vmatprep.subr.mxu0 %v5922
    %v5924 = vand.u32 %v81, 4294901760
    %v5925 = vsub.f32 %v81, %v5924
    %5926 = vmatpush1.msra.mxu0 %v5925
    %v5927 = vand.u32 %v86, 4294901760
    %v5928 = vsub.f32 %v86, %v5927
    %5929 = vmatprep.subr.mxu0 %v5928
    %v5930 = vand.u32 %v85, 4294901760
    %v5931 = vsub.f32 %v85, %v5930
    %5932 = vmatpush1.msra.mxu0 %v5931
    %v5933 = vand.u32 %v90, 4294901760
    %v5934 = vsub.f32 %v90, %v5933
    %5935 = vmatprep.subr.mxu0 %v5934
    %v5936 = vand.u32 %v89, 4294901760
    %v5937 = vsub.f32 %v89, %v5936
    %5938 = vmatpush1.msra.mxu0 %v5937
    %v5939 = vand.u32 %v94, 4294901760
    %v5940 = vsub.f32 %v94, %v5939
    %5941 = vmatprep.subr.mxu0 %v5940
    %v5942 = vand.u32 %v93, 4294901760
    %v5943 = vsub.f32 %v93, %v5942
    %5944 = vmatpush1.msra.mxu0 %v5943
    %v5945 = vand.u32 %v98, 4294901760
    %v5946 = vsub.f32 %v98, %v5945
    %5947 = vmatprep.subr.mxu0 %v5946
    %v5948 = vand.u32 %v97, 4294901760
    %v5949 = vsub.f32 %v97, %v5948
    %5950 = vmatpush1.msra.mxu0 %v5949
    %v5951 = vand.u32 %v102, 4294901760
    %v5952 = vsub.f32 %v102, %v5951
    %5953 = vmatprep.subr.mxu0 %v5952
    %v5954 = vand.u32 %v101, 4294901760
    %v5955 = vsub.f32 %v101, %v5954
    %5956 = vmatpush1.msra.mxu0 %v5955
    %v5957 = vand.u32 %v106, 4294901760
    %v5958 = vsub.f32 %v106, %v5957
    %5959 = vmatprep.subr.mxu0 %v5958
    %v5960 = vand.u32 %v105, 4294901760
    %v5961 = vsub.f32 %v105, %v5960
    %5962 = vmatpush1.msra.mxu0 %v5961
    %v5963 = vand.u32 %v110, 4294901760
    %v5964 = vsub.f32 %v110, %v5963
    %5965 = vmatprep.subr.mxu0 %v5964
    %v5966 = vand.u32 %v109, 4294901760
    %v5967 = vsub.f32 %v109, %v5966
    %5968 = vmatpush1.msra.mxu0 %v5967
    %v5969 = vand.u32 %v114, 4294901760
    %v5970 = vsub.f32 %v114, %v5969
    %5971 = vmatprep.subr.mxu0 %v5970
    %v5972 = vand.u32 %v113, 4294901760
    %v5973 = vsub.f32 %v113, %v5972
    %5974 = vmatpush1.msra.mxu0 %v5973
    %v5975 = vand.u32 %v118, 4294901760
    %v5976 = vsub.f32 %v118, %v5975
    %5977 = vmatprep.subr.mxu0 %v5976
    %v5978 = vand.u32 %v117, 4294901760
    %v5979 = vsub.f32 %v117, %v5978
    %5980 = vmatpush1.msra.mxu0 %v5979
    %v5981 = vand.u32 %v122, 4294901760
    %v5982 = vsub.f32 %v122, %v5981
    %5983 = vmatprep.subr.mxu0 %v5982
    %v5984 = vand.u32 %v121, 4294901760
    %v5985 = vsub.f32 %v121, %v5984
    %5986 = vmatpush1.msra.mxu0 %v5985
    %v5987 = vand.u32 %v126, 4294901760
    %v5988 = vsub.f32 %v126, %v5987
    %5989 = vmatprep.subr.mxu0 %v5988
    %v5990 = vand.u32 %v125, 4294901760
    %v5991 = vsub.f32 %v125, %v5990
    %5992 = vmatpush1.msra.mxu0 %v5991
    %v5993 = vand.u32 %v130, 4294901760
    %v5994 = vsub.f32 %v130, %v5993
    %5995 = vmatprep.subr.mxu0 %v5994
    %v5996 = vand.u32 %v129, 4294901760
    %v5997 = vsub.f32 %v129, %v5996
    %5998 = vmatpush1.msra.mxu0 %v5997
    %5999 = vmatprep.subr.mxu0 0.0
    %6000 = vmatpush1.msra.mxu0 0.0
    %6001 = vmatprep.subr.mxu0 0.0
    %6002 = vmatpush1.msra.mxu0 0.0
    %6003 = vmatprep.subr.mxu0 0.0
    %6004 = vmatpush1.msra.mxu0 0.0
    %6005 = vmatprep.subr.mxu0 0.0
    %6006 = vmatpush1.msra.mxu0 0.0
    %6007 = vmatprep.subr.mxu0 0.0
    %6008 = vmatpush1.msra.mxu0 0.0
    %6009 = vmatprep.subr.mxu0 0.0
    %6010 = vmatpush1.msra.mxu0 0.0
    %6011 = vmatprep.subr.mxu0 0.0
    %6012 = vmatpush1.msra.mxu0 0.0
    %6013 = vmatprep.subr.mxu0 0.0
    %6014 = vmatpush1.msra.mxu0 0.0
    %6015 = vmatprep.subr.mxu0 0.0
    %6016 = vmatpush1.msra.mxu0 0.0
    %6017 = vmatprep.subr.mxu0 0.0
    %6018 = vmatpush1.msra.mxu0 0.0
    %6019 = vmatprep.subr.mxu0 0.0
    %6020 = vmatpush1.msra.mxu0 0.0
    %6021 = vmatprep.subr.mxu0 0.0
    %6022 = vmatpush1.msra.mxu0 0.0
    %6023 = vmatprep.subr.mxu0 0.0
    %6024 = vmatpush1.msra.mxu0 0.0
    %6025 = vmatprep.subr.mxu0 0.0
    %6026 = vmatpush1.msra.mxu0 0.0
    %6027 = vmatprep.subr.mxu0 0.0
    %6028 = vmatpush1.msra.mxu0 0.0
    %6029 = vmatprep.subr.mxu0 0.0
    %6030 = vmatpush1.msra.mxu0 0.0
    %6031 = vmatprep.mubr.f32.mxu0 0.0
    %v6032 = vand.u32 %v4231, 4294901760
    %v6033 = vsub.f32 %v4231, %v6032
    %6034 = vmatmul.mubr.f32.gmra.mrb[0].mxu0 %v6033
    %v6035 = vpop.f32.mrb[0].mxu0
    %v6036 = vadd.f32 %v5850, %v6035
    %v6037 = vpop.f32.mrb[0].mxu0
    %v6038 = vadd.f32 %v5852, %v6037
    %6039 = vmatprep.mubr.f32.mxu0 0.0
    %v6040 = vand.u32 %v4232, 4294901760
    %v6041 = vsub.f32 %v4232, %v6040
    %6042 = vmatmul.mubr.f32.gmra.mrb[0].mxu0 %v6041
    %v6043 = vpop.f32.mrb[0].mxu0
    %v6044 = vadd.f32 %v5857, %v6043
    %v6045 = vpop.f32.mrb[0].mxu0
    %v6046 = vadd.f32 %v5859, %v6045
    %6047 = vmatprep.mubr.f32.mxu0 0.0
    %v6048 = vand.u32 %v4233, 4294901760
    %v6049 = vsub.f32 %v4233, %v6048
    %6050 = vmatmul.mubr.f32.gmra.mrb[0].mxu0 %v6049
    %v6051 = vpop.f32.mrb[0].mxu0
    %v6052 = vadd.f32 %v5864, %v6051
    %v6053 = vpop.f32.mrb[0].mxu0
    %v6054 = vadd.f32 %v5866, %v6053
    %6055 = vmatprep.mubr.f32.mxu0 0.0
    %v6056 = vand.u32 %v4234, 4294901760
    %v6057 = vsub.f32 %v4234, %v6056
    %6058 = vmatmul.mubr.f32.gmra.mrb[0].mxu0 %v6057
    %v6059 = vpop.f32.mrb[0].mxu0
    %v6060 = vadd.f32 %v5871, %v6059
    %v6061 = vpop.f32.mrb[0].mxu0
    %v6062 = vadd.f32 %v5873, %v6061
    %6063 = vmatprep.mubr.f32.mxu0 0.0
    %v6064 = vand.u32 %v4235, 4294901760
    %v6065 = vsub.f32 %v4235, %v6064
    %6066 = vmatmul.mubr.f32.gmra.mrb[0].mxu0 %v6065
    %v6067 = vpop.f32.mrb[0].mxu0
    %v6068 = vadd.f32 %v5878, %v6067
    %v6069 = vpop.f32.mrb[0].mxu0
    %v6070 = vadd.f32 %v5880, %v6069
    %6071 = vmatprep.mubr.f32.mxu0 0.0
    %v6072 = vand.u32 %v4236, 4294901760
    %v6073 = vsub.f32 %v4236, %v6072
    %6074 = vmatmul.mubr.f32.gmra.mrb[0].mxu0 %v6073
    %v6075 = vpop.f32.mrb[0].mxu0
    %v6076 = vadd.f32 %v5885, %v6075
    %v6077 = vpop.f32.mrb[0].mxu0
    %v6078 = vadd.f32 %v5887, %v6077
    %6079 = vmatprep.mubr.f32.mxu0 0.0
    %v6080 = vand.u32 %v4237, 4294901760
    %v6081 = vsub.f32 %v4237, %v6080
    %6082 = vmatmul.mubr.f32.gmra.mrb[0].mxu0 %v6081
    %v6083 = vpop.f32.mrb[0].mxu0
    %v6084 = vadd.f32 %v5892, %v6083
    %v6085 = vpop.f32.mrb[0].mxu0
    %v6086 = vadd.f32 %v5894, %v6085
    %6087 = vmatprep.mubr.f32.mxu0 0.0
    %v6088 = vand.u32 %v4238, 4294901760
    %v6089 = vsub.f32 %v4238, %v6088
    %6090 = vmatmul.mubr.f32.gmra.mrb[0].mxu0 %v6089
    %v6091 = vpop.f32.mrb[0].mxu0
    %v6092 = vadd.f32 %v5899, %v6091
    %v6093 = vpop.f32.mrb[0].mxu0
    %v6094 = vadd.f32 %v5901, %v6093
    %6095 = vdwg.mxu0
    %v6096 = vand.u32 %v70, 4294901760
    %6097 = vmatprep.subr.mxu0 %v6096
    %v6098 = vand.u32 %v69, 4294901760
    %6099 = vmatpush1.msra.mxu0 %v6098
    %v6100 = vand.u32 %v74, 4294901760
    %6101 = vmatprep.subr.mxu0 %v6100
    %v6102 = vand.u32 %v73, 4294901760
    %6103 = vmatpush1.msra.mxu0 %v6102
    %v6104 = vand.u32 %v78, 4294901760
    %6105 = vmatprep.subr.mxu0 %v6104
    %v6106 = vand.u32 %v77, 4294901760
    %6107 = vmatpush1.msra.mxu0 %v6106
    %v6108 = vand.u32 %v82, 4294901760
    %6109 = vmatprep.subr.mxu0 %v6108
    %v6110 = vand.u32 %v81, 4294901760
    %6111 = vmatpush1.msra.mxu0 %v6110
    %v6112 = vand.u32 %v86, 4294901760
    %6113 = vmatprep.subr.mxu0 %v6112
    %v6114 = vand.u32 %v85, 4294901760
    %6115 = vmatpush1.msra.mxu0 %v6114
    %v6116 = vand.u32 %v90, 4294901760
    %6117 = vmatprep.subr.mxu0 %v6116
    %v6118 = vand.u32 %v89, 4294901760
    %6119 = vmatpush1.msra.mxu0 %v6118
    %v6120 = vand.u32 %v94, 4294901760
    %6121 = vmatprep.subr.mxu0 %v6120
    %v6122 = vand.u32 %v93, 4294901760
    %6123 = vmatpush1.msra.mxu0 %v6122
    %v6124 = vand.u32 %v98, 4294901760
    %6125 = vmatprep.subr.mxu0 %v6124
    %v6126 = vand.u32 %v97, 4294901760
    %6127 = vmatpush1.msra.mxu0 %v6126
    %v6128 = vand.u32 %v102, 4294901760
    %6129 = vmatprep.subr.mxu0 %v6128
    %v6130 = vand.u32 %v101, 4294901760
    %6131 = vmatpush1.msra.mxu0 %v6130
    %v6132 = vand.u32 %v106, 4294901760
    %6133 = vmatprep.subr.mxu0 %v6132
    %v6134 = vand.u32 %v105, 4294901760
    %6135 = vmatpush1.msra.mxu0 %v6134
    %v6136 = vand.u32 %v110, 4294901760
    %6137 = vmatprep.subr.mxu0 %v6136
    %v6138 = vand.u32 %v109, 4294901760
    %6139 = vmatpush1.msra.mxu0 %v6138
    %v6140 = vand.u32 %v114, 4294901760
    %6141 = vmatprep.subr.mxu0 %v6140
    %v6142 = vand.u32 %v113, 4294901760
    %6143 = vmatpush1.msra.mxu0 %v6142
    %v6144 = vand.u32 %v118, 4294901760
    %6145 = vmatprep.subr.mxu0 %v6144
    %v6146 = vand.u32 %v117, 4294901760
    %6147 = vmatpush1.msra.mxu0 %v6146
    %v6148 = vand.u32 %v122, 4294901760
    %6149 = vmatprep.subr.mxu0 %v6148
    %v6150 = vand.u32 %v121, 4294901760
    %6151 = vmatpush1.msra.mxu0 %v6150
    %v6152 = vand.u32 %v126, 4294901760
    %6153 = vmatprep.subr.mxu0 %v6152
    %v6154 = vand.u32 %v125, 4294901760
    %6155 = vmatpush1.msra.mxu0 %v6154
    %v6156 = vand.u32 %v130, 4294901760
    %6157 = vmatprep.subr.mxu0 %v6156
    %v6158 = vand.u32 %v129, 4294901760
    %6159 = vmatpush1.msra.mxu0 %v6158
    %6160 = vmatprep.subr.mxu0 0.0
    %6161 = vmatpush1.msra.mxu0 0.0
    %6162 = vmatprep.subr.mxu0 0.0
    %6163 = vmatpush1.msra.mxu0 0.0
    %6164 = vmatprep.subr.mxu0 0.0
    %6165 = vmatpush1.msra.mxu0 0.0
    %6166 = vmatprep.subr.mxu0 0.0
    %6167 = vmatpush1.msra.mxu0 0.0
    %6168 = vmatprep.subr.mxu0 0.0
    %6169 = vmatpush1.msra.mxu0 0.0
    %6170 = vmatprep.subr.mxu0 0.0
    %6171 = vmatpush1.msra.mxu0 0.0
    %6172 = vmatprep.subr.mxu0 0.0
    %6173 = vmatpush1.msra.mxu0 0.0
    %6174 = vmatprep.subr.mxu0 0.0
    %6175 = vmatpush1.msra.mxu0 0.0
    %6176 = vmatprep.subr.mxu0 0.0
    %6177 = vmatpush1.msra.mxu0 0.0
    %6178 = vmatprep.subr.mxu0 0.0
    %6179 = vmatpush1.msra.mxu0 0.0
    %6180 = vmatprep.subr.mxu0 0.0
    %6181 = vmatpush1.msra.mxu0 0.0
    %6182 = vmatprep.subr.mxu0 0.0
    %6183 = vmatpush1.msra.mxu0 0.0
    %6184 = vmatprep.subr.mxu0 0.0
    %6185 = vmatpush1.msra.mxu0 0.0
    %6186 = vmatprep.subr.mxu0 0.0
    %6187 = vmatpush1.msra.mxu0 0.0
    %6188 = vmatprep.subr.mxu0 0.0
    %6189 = vmatpush1.msra.mxu0 0.0
    %6190 = vmatprep.subr.mxu0 0.0
    %6191 = vmatpush1.msra.mxu0 0.0
    %6192 = vmatprep.mubr.f32.mxu0 0.0
    %v6193 = vand.u32 %v4231, 4294901760
    %v6194 = vsub.f32 %v4231, %v6193
    %v6195 = vand.u32 %v6194, 4294901760
    %6196 = vmatmul.mubr.f32.gmra.mrb[0].mxu0 %v6195
    %v6197 = vpop.f32.mrb[0].mxu0
    %v6198 = vadd.f32 %v6036, %v6197
    %v6199 = vpop.f32.mrb[0].mxu0
    %v6200 = vadd.f32 %v6038, %v6199
    %6201 = vmatprep.mubr.f32.mxu0 0.0
    %v6202 = vand.u32 %v4232, 4294901760
    %v6203 = vsub.f32 %v4232, %v6202
    %v6204 = vand.u32 %v6203, 4294901760
    %6205 = vmatmul.mubr.f32.gmra.mrb[0].mxu0 %v6204
    %v6206 = vpop.f32.mrb[0].mxu0
    %v6207 = vadd.f32 %v6044, %v6206
    %v6208 = vpop.f32.mrb[0].mxu0
    %v6209 = vadd.f32 %v6046, %v6208
    %6210 = vmatprep.mubr.f32.mxu0 0.0
    %v6211 = vand.u32 %v4233, 4294901760
    %v6212 = vsub.f32 %v4233, %v6211
    %v6213 = vand.u32 %v6212, 4294901760
    %6214 = vmatmul.mubr.f32.gmra.mrb[0].mxu0 %v6213
    %v6215 = vpop.f32.mrb[0].mxu0
    %v6216 = vadd.f32 %v6052, %v6215
    %v6217 = vpop.f32.mrb[0].mxu0
    %v6218 = vadd.f32 %v6054, %v6217
    %6219 = vmatprep.mubr.f32.mxu0 0.0
    %v6220 = vand.u32 %v4234, 4294901760
    %v6221 = vsub.f32 %v4234, %v6220
    %v6222 = vand.u32 %v6221, 4294901760
    %6223 = vmatmul.mubr.f32.gmra.mrb[0].mxu0 %v6222
    %v6224 = vpop.f32.mrb[0].mxu0
    %v6225 = vadd.f32 %v6060, %v6224
    %v6226 = vpop.f32.mrb[0].mxu0
    %v6227 = vadd.f32 %v6062, %v6226
    %6228 = vmatprep.mubr.f32.mxu0 0.0
    %v6229 = vand.u32 %v4235, 4294901760
    %v6230 = vsub.f32 %v4235, %v6229
    %v6231 = vand.u32 %v6230, 4294901760
    %6232 = vmatmul.mubr.f32.gmra.mrb[0].mxu0 %v6231
    %v6233 = vpop.f32.mrb[0].mxu0
    %v6234 = vadd.f32 %v6068, %v6233
    %v6235 = vpop.f32.mrb[0].mxu0
    %v6236 = vadd.f32 %v6070, %v6235
    %6237 = vmatprep.mubr.f32.mxu0 0.0
    %v6238 = vand.u32 %v4236, 4294901760
    %v6239 = vsub.f32 %v4236, %v6238
    %v6240 = vand.u32 %v6239, 4294901760
    %6241 = vmatmul.mubr.f32.gmra.mrb[0].mxu0 %v6240
    %v6242 = vpop.f32.mrb[0].mxu0
    %v6243 = vadd.f32 %v6076, %v6242
    %v6244 = vpop.f32.mrb[0].mxu0
    %v6245 = vadd.f32 %v6078, %v6244
    %6246 = vmatprep.mubr.f32.mxu0 0.0
    %v6247 = vand.u32 %v4237, 4294901760
    %v6248 = vsub.f32 %v4237, %v6247
    %v6249 = vand.u32 %v6248, 4294901760
    %6250 = vmatmul.mubr.f32.gmra.mrb[0].mxu0 %v6249
    %v6251 = vpop.f32.mrb[0].mxu0
    %v6252 = vadd.f32 %v6084, %v6251
    %v6253 = vpop.f32.mrb[0].mxu0
    %v6254 = vadd.f32 %v6086, %v6253
    %6255 = vmatprep.mubr.f32.mxu0 0.0
    %v6256 = vand.u32 %v4238, 4294901760
    %v6257 = vsub.f32 %v4238, %v6256
    %v6258 = vand.u32 %v6257, 4294901760
    %6259 = vmatmul.mubr.f32.gmra.mrb[0].mxu0 %v6258
    %v6260 = vpop.f32.mrb[0].mxu0
    %v6261 = vadd.f32 %v6092, %v6260
    %v6262 = vpop.f32.mrb[0].mxu0
    %v6263 = vadd.f32 %v6094, %v6262
    %6264 = vdwg.mxu0
    %v6265 = vand.u32 %v70, 4294901760
    %v6266 = vsub.f32 %v70, %v6265
    %v6267 = vand.u32 %v6266, 4294901760
    %6268 = vmatprep.subr.mxu0 %v6267
    %v6269 = vand.u32 %v69, 4294901760
    %v6270 = vsub.f32 %v69, %v6269
    %v6271 = vand.u32 %v6270, 4294901760
    %6272 = vmatpush1.msra.mxu0 %v6271
    %v6273 = vand.u32 %v74, 4294901760
    %v6274 = vsub.f32 %v74, %v6273
    %v6275 = vand.u32 %v6274, 4294901760
    %6276 = vmatprep.subr.mxu0 %v6275
    %v6277 = vand.u32 %v73, 4294901760
    %v6278 = vsub.f32 %v73, %v6277
    %v6279 = vand.u32 %v6278, 4294901760
    %6280 = vmatpush1.msra.mxu0 %v6279
    %v6281 = vand.u32 %v78, 4294901760
    %v6282 = vsub.f32 %v78, %v6281
    %v6283 = vand.u32 %v6282, 4294901760
    %6284 = vmatprep.subr.mxu0 %v6283
    %v6285 = vand.u32 %v77, 4294901760
    %v6286 = vsub.f32 %v77, %v6285
    %v6287 = vand.u32 %v6286, 4294901760
    %6288 = vmatpush1.msra.mxu0 %v6287
    %v6289 = vand.u32 %v82, 4294901760
    %v6290 = vsub.f32 %v82, %v6289
    %v6291 = vand.u32 %v6290, 4294901760
    %6292 = vmatprep.subr.mxu0 %v6291
    %v6293 = vand.u32 %v81, 4294901760
    %v6294 = vsub.f32 %v81, %v6293
    %v6295 = vand.u32 %v6294, 4294901760
    %6296 = vmatpush1.msra.mxu0 %v6295
    %v6297 = vand.u32 %v86, 4294901760
    %v6298 = vsub.f32 %v86, %v6297
    %v6299 = vand.u32 %v6298, 4294901760
    %6300 = vmatprep.subr.mxu0 %v6299
    %v6301 = vand.u32 %v85, 4294901760
    %v6302 = vsub.f32 %v85, %v6301
    %v6303 = vand.u32 %v6302, 4294901760
    %6304 = vmatpush1.msra.mxu0 %v6303
    %v6305 = vand.u32 %v90, 4294901760
    %v6306 = vsub.f32 %v90, %v6305
    %v6307 = vand.u32 %v6306, 4294901760
    %6308 = vmatprep.subr.mxu0 %v6307
    %v6309 = vand.u32 %v89, 4294901760
    %v6310 = vsub.f32 %v89, %v6309
    %v6311 = vand.u32 %v6310, 4294901760
    %6312 = vmatpush1.msra.mxu0 %v6311
    %v6313 = vand.u32 %v94, 4294901760
    %v6314 = vsub.f32 %v94, %v6313
    %v6315 = vand.u32 %v6314, 4294901760
    %6316 = vmatprep.subr.mxu0 %v6315
    %v6317 = vand.u32 %v93, 4294901760
    %v6318 = vsub.f32 %v93, %v6317
    %v6319 = vand.u32 %v6318, 4294901760
    %6320 = vmatpush1.msra.mxu0 %v6319
    %v6321 = vand.u32 %v98, 4294901760
    %v6322 = vsub.f32 %v98, %v6321
    %v6323 = vand.u32 %v6322, 4294901760
    %6324 = vmatprep.subr.mxu0 %v6323
    %v6325 = vand.u32 %v97, 4294901760
    %v6326 = vsub.f32 %v97, %v6325
    %v6327 = vand.u32 %v6326, 4294901760
    %6328 = vmatpush1.msra.mxu0 %v6327
    %v6329 = vand.u32 %v102, 4294901760
    %v6330 = vsub.f32 %v102, %v6329
    %v6331 = vand.u32 %v6330, 4294901760
    %6332 = vmatprep.subr.mxu0 %v6331
    %v6333 = vand.u32 %v101, 4294901760
    %v6334 = vsub.f32 %v101, %v6333
    %v6335 = vand.u32 %v6334, 4294901760
    %6336 = vmatpush1.msra.mxu0 %v6335
    %v6337 = vand.u32 %v106, 4294901760
    %v6338 = vsub.f32 %v106, %v6337
    %v6339 = vand.u32 %v6338, 4294901760
    %6340 = vmatprep.subr.mxu0 %v6339
    %v6341 = vand.u32 %v105, 4294901760
    %v6342 = vsub.f32 %v105, %v6341
    %v6343 = vand.u32 %v6342, 4294901760
    %6344 = vmatpush1.msra.mxu0 %v6343
    %v6345 = vand.u32 %v110, 4294901760
    %v6346 = vsub.f32 %v110, %v6345
    %v6347 = vand.u32 %v6346, 4294901760
    %6348 = vmatprep.subr.mxu0 %v6347
    %v6349 = vand.u32 %v109, 4294901760
    %v6350 = vsub.f32 %v109, %v6349
    %v6351 = vand.u32 %v6350, 4294901760
    %6352 = vmatpush1.msra.mxu0 %v6351
    %v6353 = vand.u32 %v114, 4294901760
    %v6354 = vsub.f32 %v114, %v6353
    %v6355 = vand.u32 %v6354, 4294901760
    %6356 = vmatprep.subr.mxu0 %v6355
    %v6357 = vand.u32 %v113, 4294901760
    %v6358 = vsub.f32 %v113, %v6357
    %v6359 = vand.u32 %v6358, 4294901760
    %6360 = vmatpush1.msra.mxu0 %v6359
    %v6361 = vand.u32 %v118, 4294901760
    %v6362 = vsub.f32 %v118, %v6361
    %v6363 = vand.u32 %v6362, 4294901760
    %6364 = vmatprep.subr.mxu0 %v6363
    %v6365 = vand.u32 %v117, 4294901760
    %v6366 = vsub.f32 %v117, %v6365
    %v6367 = vand.u32 %v6366, 4294901760
    %6368 = vmatpush1.msra.mxu0 %v6367
    %v6369 = vand.u32 %v122, 4294901760
    %v6370 = vsub.f32 %v122, %v6369
    %v6371 = vand.u32 %v6370, 4294901760
    %6372 = vmatprep.subr.mxu0 %v6371
    %v6373 = vand.u32 %v121, 4294901760
    %v6374 = vsub.f32 %v121, %v6373
    %v6375 = vand.u32 %v6374, 4294901760
    %6376 = vmatpush1.msra.mxu0 %v6375
    %v6377 = vand.u32 %v126, 4294901760
    %v6378 = vsub.f32 %v126, %v6377
    %v6379 = vand.u32 %v6378, 4294901760
    %6380 = vmatprep.subr.mxu0 %v6379
    %v6381 = vand.u32 %v125, 4294901760
    %v6382 = vsub.f32 %v125, %v6381
    %v6383 = vand.u32 %v6382, 4294901760
    %6384 = vmatpush1.msra.mxu0 %v6383
    %v6385 = vand.u32 %v130, 4294901760
    %v6386 = vsub.f32 %v130, %v6385
    %v6387 = vand.u32 %v6386, 4294901760
    %6388 = vmatprep.subr.mxu0 %v6387
    %v6389 = vand.u32 %v129, 4294901760
    %v6390 = vsub.f32 %v129, %v6389
    %v6391 = vand.u32 %v6390, 4294901760
    %6392 = vmatpush1.msra.mxu0 %v6391
    %6393 = vmatprep.subr.mxu0 0.0
    %6394 = vmatpush1.msra.mxu0 0.0
    %6395 = vmatprep.subr.mxu0 0.0
    %6396 = vmatpush1.msra.mxu0 0.0
    %6397 = vmatprep.subr.mxu0 0.0
    %6398 = vmatpush1.msra.mxu0 0.0
    %6399 = vmatprep.subr.mxu0 0.0
    %6400 = vmatpush1.msra.mxu0 0.0
    %6401 = vmatprep.subr.mxu0 0.0
    %6402 = vmatpush1.msra.mxu0 0.0
    %6403 = vmatprep.subr.mxu0 0.0
    %6404 = vmatpush1.msra.mxu0 0.0
    %6405 = vmatprep.subr.mxu0 0.0
    %6406 = vmatpush1.msra.mxu0 0.0
    %6407 = vmatprep.subr.mxu0 0.0
    %6408 = vmatpush1.msra.mxu0 0.0
    %6409 = vmatprep.subr.mxu0 0.0
    %6410 = vmatpush1.msra.mxu0 0.0
    %6411 = vmatprep.subr.mxu0 0.0
    %6412 = vmatpush1.msra.mxu0 0.0
    %6413 = vmatprep.subr.mxu0 0.0
    %6414 = vmatpush1.msra.mxu0 0.0
    %6415 = vmatprep.subr.mxu0 0.0
    %6416 = vmatpush1.msra.mxu0 0.0
    %6417 = vmatprep.subr.mxu0 0.0
    %6418 = vmatpush1.msra.mxu0 0.0
    %6419 = vmatprep.subr.mxu0 0.0
    %6420 = vmatpush1.msra.mxu0 0.0
    %6421 = vmatprep.subr.mxu0 0.0
    %6422 = vmatpush1.msra.mxu0 0.0
    %6423 = vmatprep.subr.mxu0 0.0
    %6424 = vmatpush1.msra.mxu0 0.0
    %6425 = vmatprep.mubr.f32.mxu0 0.0
    %v6426 = vand.u32 %v4231, 4294901760
    %6427 = vmatmul.mubr.f32.gmra.mrb[0].mxu0 %v6426
    %v6428 = vpop.f32.mrb[0].mxu0
    %v6429 = vadd.f32 %v6198, %v6428
    %v6430 = vpop.f32.mrb[0].mxu0
    %v6431 = vadd.f32 %v6200, %v6430
    %6432 = vmatprep.mubr.f32.mxu0 0.0
    %v6433 = vand.u32 %v4232, 4294901760
    %6434 = vmatmul.mubr.f32.gmra.mrb[0].mxu0 %v6433
    %v6435 = vpop.f32.mrb[0].mxu0
    %v6436 = vadd.f32 %v6207, %v6435
    %v6437 = vpop.f32.mrb[0].mxu0
    %v6438 = vadd.f32 %v6209, %v6437
    %6439 = vmatprep.mubr.f32.mxu0 0.0
    %v6440 = vand.u32 %v4233, 4294901760
    %6441 = vmatmul.mubr.f32.gmra.mrb[0].mxu0 %v6440
    %v6442 = vpop.f32.mrb[0].mxu0
    %v6443 = vadd.f32 %v6216, %v6442
    %v6444 = vpop.f32.mrb[0].mxu0
    %v6445 = vadd.f32 %v6218, %v6444
    %6446 = vmatprep.mubr.f32.mxu0 0.0
    %v6447 = vand.u32 %v4234, 4294901760
    %6448 = vmatmul.mubr.f32.gmra.mrb[0].mxu0 %v6447
    %v6449 = vpop.f32.mrb[0].mxu0
    %v6450 = vadd.f32 %v6225, %v6449
    %v6451 = vpop.f32.mrb[0].mxu0
    %v6452 = vadd.f32 %v6227, %v6451
    %6453 = vmatprep.mubr.f32.mxu0 0.0
    %v6454 = vand.u32 %v4235, 4294901760
    %6455 = vmatmul.mubr.f32.gmra.mrb[0].mxu0 %v6454
    %v6456 = vpop.f32.mrb[0].mxu0
    %v6457 = vadd.f32 %v6234, %v6456
    %v6458 = vpop.f32.mrb[0].mxu0
    %v6459 = vadd.f32 %v6236, %v6458
    %6460 = vmatprep.mubr.f32.mxu0 0.0
    %v6461 = vand.u32 %v4236, 4294901760
    %6462 = vmatmul.mubr.f32.gmra.mrb[0].mxu0 %v6461
    %v6463 = vpop.f32.mrb[0].mxu0
    %v6464 = vadd.f32 %v6243, %v6463
    %v6465 = vpop.f32.mrb[0].mxu0
    %v6466 = vadd.f32 %v6245, %v6465
    %6467 = vmatprep.mubr.f32.mxu0 0.0
    %v6468 = vand.u32 %v4237, 4294901760
    %6469 = vmatmul.mubr.f32.gmra.mrb[0].mxu0 %v6468
    %v6470 = vpop.f32.mrb[0].mxu0
    %v6471 = vadd.f32 %v6252, %v6470
    %v6472 = vpop.f32.mrb[0].mxu0
    %v6473 = vadd.f32 %v6254, %v6472
    %6474 = vmatprep.mubr.f32.mxu0 0.0
    %v6475 = vand.u32 %v4238, 4294901760
    %6476 = vmatmul.mubr.f32.gmra.mrb[0].mxu0 %v6475
    %v6477 = vpop.f32.mrb[0].mxu0
    %v6478 = vadd.f32 %v6261, %v6477
    %v6479 = vpop.f32.mrb[0].mxu0
    %v6480 = vadd.f32 %v6263, %v6479
    %6481 = vdwg.mxu0
    %v6482 = vand.u32 %v70, 4294901760
    %6483 = vmatprep.subr.mxu0 %v6482
    %v6484 = vand.u32 %v69, 4294901760
    %6485 = vmatpush1.msra.mxu0 %v6484
    %v6486 = vand.u32 %v74, 4294901760
    %6487 = vmatprep.subr.mxu0 %v6486
    %v6488 = vand.u32 %v73, 4294901760
    %6489 = vmatpush1.msra.mxu0 %v6488
    %v6490 = vand.u32 %v78, 4294901760
    %6491 = vmatprep.subr.mxu0 %v6490
    %v6492 = vand.u32 %v77, 4294901760
    %6493 = vmatpush1.msra.mxu0 %v6492
    %v6494 = vand.u32 %v82, 4294901760
    %6495 = vmatprep.subr.mxu0 %v6494
    %v6496 = vand.u32 %v81, 4294901760
    %6497 = vmatpush1.msra.mxu0 %v6496
    %v6498 = vand.u32 %v86, 4294901760
    %6499 = vmatprep.subr.mxu0 %v6498
    %v6500 = vand.u32 %v85, 4294901760
    %6501 = vmatpush1.msra.mxu0 %v6500
    %v6502 = vand.u32 %v90, 4294901760
    %6503 = vmatprep.subr.mxu0 %v6502
    %v6504 = vand.u32 %v89, 4294901760
    %6505 = vmatpush1.msra.mxu0 %v6504
    %v6506 = vand.u32 %v94, 4294901760
    %6507 = vmatprep.subr.mxu0 %v6506
    %v6508 = vand.u32 %v93, 4294901760
    %6509 = vmatpush1.msra.mxu0 %v6508
    %v6510 = vand.u32 %v98, 4294901760
    %6511 = vmatprep.subr.mxu0 %v6510
    %v6512 = vand.u32 %v97, 4294901760
    %6513 = vmatpush1.msra.mxu0 %v6512
    %v6514 = vand.u32 %v102, 4294901760
    %6515 = vmatprep.subr.mxu0 %v6514
    %v6516 = vand.u32 %v101, 4294901760
    %6517 = vmatpush1.msra.mxu0 %v6516
    %v6518 = vand.u32 %v106, 4294901760
    %6519 = vmatprep.subr.mxu0 %v6518
    %v6520 = vand.u32 %v105, 4294901760
    %6521 = vmatpush1.msra.mxu0 %v6520
    %v6522 = vand.u32 %v110, 4294901760
    %6523 = vmatprep.subr.mxu0 %v6522
    %v6524 = vand.u32 %v109, 4294901760
    %6525 = vmatpush1.msra.mxu0 %v6524
    %v6526 = vand.u32 %v114, 4294901760
    %6527 = vmatprep.subr.mxu0 %v6526
    %v6528 = vand.u32 %v113, 4294901760
    %6529 = vmatpush1.msra.mxu0 %v6528
    %v6530 = vand.u32 %v118, 4294901760
    %6531 = vmatprep.subr.mxu0 %v6530
    %v6532 = vand.u32 %v117, 4294901760
    %6533 = vmatpush1.msra.mxu0 %v6532
    %v6534 = vand.u32 %v122, 4294901760
    %6535 = vmatprep.subr.mxu0 %v6534
    %v6536 = vand.u32 %v121, 4294901760
    %6537 = vmatpush1.msra.mxu0 %v6536
    %v6538 = vand.u32 %v126, 4294901760
    %6539 = vmatprep.subr.mxu0 %v6538
    %v6540 = vand.u32 %v125, 4294901760
    %6541 = vmatpush1.msra.mxu0 %v6540
    %v6542 = vand.u32 %v130, 4294901760
    %6543 = vmatprep.subr.mxu0 %v6542
    %v6544 = vand.u32 %v129, 4294901760
    %6545 = vmatpush1.msra.mxu0 %v6544
    %6546 = vmatprep.subr.mxu0 0.0
    %6547 = vmatpush1.msra.mxu0 0.0
    %6548 = vmatprep.subr.mxu0 0.0
    %6549 = vmatpush1.msra.mxu0 0.0
    %6550 = vmatprep.subr.mxu0 0.0
    %6551 = vmatpush1.msra.mxu0 0.0
    %6552 = vmatprep.subr.mxu0 0.0
    %6553 = vmatpush1.msra.mxu0 0.0
    %6554 = vmatprep.subr.mxu0 0.0
    %6555 = vmatpush1.msra.mxu0 0.0
    %6556 = vmatprep.subr.mxu0 0.0
    %6557 = vmatpush1.msra.mxu0 0.0
    %6558 = vmatprep.subr.mxu0 0.0
    %6559 = vmatpush1.msra.mxu0 0.0
    %6560 = vmatprep.subr.mxu0 0.0
    %6561 = vmatpush1.msra.mxu0 0.0
    %6562 = vmatprep.subr.mxu0 0.0
    %6563 = vmatpush1.msra.mxu0 0.0
    %6564 = vmatprep.subr.mxu0 0.0
    %6565 = vmatpush1.msra.mxu0 0.0
    %6566 = vmatprep.subr.mxu0 0.0
    %6567 = vmatpush1.msra.mxu0 0.0
    %6568 = vmatprep.subr.mxu0 0.0
    %6569 = vmatpush1.msra.mxu0 0.0
    %6570 = vmatprep.subr.mxu0 0.0
    %6571 = vmatpush1.msra.mxu0 0.0
    %6572 = vmatprep.subr.mxu0 0.0
    %6573 = vmatpush1.msra.mxu0 0.0
    %6574 = vmatprep.subr.mxu0 0.0
    %6575 = vmatpush1.msra.mxu0 0.0
    %6576 = vmatprep.subr.mxu0 0.0
    %6577 = vmatpush1.msra.mxu0 0.0
    %6578 = vmatprep.mubr.f32.mxu0 0.0
    %v6579 = vand.u32 %v4231, 4294901760
    %6580 = vmatmul.mubr.f32.gmra.mrb[0].mxu0 %v6579
    %v6581 = vpop.f32.mrb[0].mxu0
    %v6582 = vadd.f32 %v6429, %v6581
    %v6583 = vpop.f32.mrb[0].mxu0
    %v6584 = vadd.f32 %v6431, %v6583
    %6585 = vmatprep.mubr.f32.mxu0 0.0
    %v6586 = vand.u32 %v4232, 4294901760
    %6587 = vmatmul.mubr.f32.gmra.mrb[0].mxu0 %v6586
    %v6588 = vpop.f32.mrb[0].mxu0
    %v6589 = vadd.f32 %v6436, %v6588
    %v6590 = vpop.f32.mrb[0].mxu0
    %v6591 = vadd.f32 %v6438, %v6590
    %6592 = vmatprep.mubr.f32.mxu0 0.0
    %v6593 = vand.u32 %v4233, 4294901760
    %6594 = vmatmul.mubr.f32.gmra.mrb[0].mxu0 %v6593
    %v6595 = vpop.f32.mrb[0].mxu0
    %v6596 = vadd.f32 %v6443, %v6595
    %v6597 = vpop.f32.mrb[0].mxu0
    %v6598 = vadd.f32 %v6445, %v6597
    %6599 = vmatprep.mubr.f32.mxu0 0.0
    %v6600 = vand.u32 %v4234, 4294901760
    %6601 = vmatmul.mubr.f32.gmra.mrb[0].mxu0 %v6600
    %v6602 = vpop.f32.mrb[0].mxu0
    %v6603 = vadd.f32 %v6450, %v6602
    %v6604 = vpop.f32.mrb[0].mxu0
    %v6605 = vadd.f32 %v6452, %v6604
    %6606 = vmatprep.mubr.f32.mxu0 0.0
    %v6607 = vand.u32 %v4235, 4294901760
    %6608 = vmatmul.mubr.f32.gmra.mrb[0].mxu0 %v6607
    %v6609 = vpop.f32.mrb[0].mxu0
    %v6610 = vadd.f32 %v6457, %v6609
    %v6611 = vpop.f32.mrb[0].mxu0
    %v6612 = vadd.f32 %v6459, %v6611
    %6613 = vmatprep.mubr.f32.mxu0 0.0
    %v6614 = vand.u32 %v4236, 4294901760
    %6615 = vmatmul.mubr.f32.gmra.mrb[0].mxu0 %v6614
    %v6616 = vpop.f32.mrb[0].mxu0
    %v6617 = vadd.f32 %v6464, %v6616
    %v6618 = vpop.f32.mrb[0].mxu0
    %v6619 = vadd.f32 %v6466, %v6618
    %6620 = vmatprep.mubr.f32.mxu0 0.0
    %v6621 = vand.u32 %v4237, 4294901760
    %6622 = vmatmul.mubr.f32.gmra.mrb[0].mxu0 %v6621
    %v6623 = vpop.f32.mrb[0].mxu0
    %v6624 = vadd.f32 %v6471, %v6623
    %v6625 = vpop.f32.mrb[0].mxu0
    %v6626 = vadd.f32 %v6473, %v6625
    %6627 = vmatprep.mubr.f32.mxu0 0.0
    %v6628 = vand.u32 %v4238, 4294901760
    %6629 = vmatmul.mubr.f32.gmra.mrb[0].mxu0 %v6628
    %v6630 = vpop.f32.mrb[0].mxu0
    %v6631 = vadd.f32 %v6478, %v6630
    %v6632 = vpop.f32.mrb[0].mxu0
    %v6633 = vadd.f32 %v6480, %v6632
    %6634 = vdwg.mxu0
    %v6635 = vmax.f32 %v5384, 0.0
    %v6636 = vmax.f32 %v5386, 0.0
    %v6637 = vmax.f32 %v6582, 0.0
    %v6638 = vmax.f32 %v6584, 0.0
    %v6639 = vmax.f32 %v5391, 0.0
    %v6640 = vmax.f32 %v5393, 0.0
    %v6641 = vmax.f32 %v6589, 0.0
    %v6642 = vmax.f32 %v6591, 0.0
    %v6643 = vmax.f32 %v5398, 0.0
    %v6644 = vmax.f32 %v5400, 0.0
    %v6645 = vmax.f32 %v6596, 0.0
    %v6646 = vmax.f32 %v6598, 0.0
    %v6647 = vmax.f32 %v5405, 0.0
    %v6648 = vmax.f32 %v5407, 0.0
    %v6649 = vmax.f32 %v6603, 0.0
    %v6650 = vmax.f32 %v6605, 0.0
    %v6651 = vmax.f32 %v5412, 0.0
    %v6652 = vmax.f32 %v5414, 0.0
    %v6653 = vmax.f32 %v6610, 0.0
    %v6654 = vmax.f32 %v6612, 0.0
    %v6655 = vmax.f32 %v5419, 0.0
    %v6656 = vmax.f32 %v5421, 0.0
    %v6657 = vmax.f32 %v6617, 0.0
    %v6658 = vmax.f32 %v6619, 0.0
    %v6659 = vmax.f32 %v5426, 0.0
    %v6660 = vmax.f32 %v5428, 0.0
    %v6661 = vmax.f32 %v6624, 0.0
    %v6662 = vmax.f32 %v6626, 0.0
    %v6663 = vmax.f32 %v5433, 0.0
    %v6664 = vmax.f32 %v5435, 0.0
    %v6665 = vmax.f32 %v6631, 0.0
    %v6666 = vmax.f32 %v6633, 0.0
    %6667 = vmatprep.subr.mxu0 0.0
    %v6668 = vand.u32 %v131, 4294901760
    %6669 = vmatpush1.msra.mxu0 %v6668
    %6670 = vmatprep.subr.mxu0 0.0
    %v6671 = vand.u32 %v132, 4294901760
    %6672 = vmatpush1.msra.mxu0 %v6671
    %6673 = vmatprep.subr.mxu0 0.0
    %v6674 = vand.u32 %v133, 4294901760
    %6675 = vmatpush1.msra.mxu0 %v6674
    %6676 = vmatprep.subr.mxu0 0.0
    %v6677 = vand.u32 %v134, 4294901760
    %6678 = vmatpush1.msra.mxu0 %v6677
    %6679 = vmatprep.subr.mxu0 0.0
    %v6680 = vand.u32 %v135, 4294901760
    %6681 = vmatpush1.msra.mxu0 %v6680
    %6682 = vmatprep.subr.mxu0 0.0
    %v6683 = vand.u32 %v136, 4294901760
    %6684 = vmatpush1.msra.mxu0 %v6683
    %6685 = vmatprep.subr.mxu0 0.0
    %v6686 = vand.u32 %v137, 4294901760
    %6687 = vmatpush1.msra.mxu0 %v6686
    %6688 = vmatprep.subr.mxu0 0.0
    %v6689 = vand.u32 %v138, 4294901760
    %6690 = vmatpush1.msra.mxu0 %v6689
    %6691 = vmatprep.subr.mxu0 0.0
    %v6692 = vand.u32 %v139, 4294901760
    %6693 = vmatpush1.msra.mxu0 %v6692
    %6694 = vmatprep.subr.mxu0 0.0
    %v6695 = vand.u32 %v140, 4294901760
    %6696 = vmatpush1.msra.mxu0 %v6695
    %6697 = vmatprep.subr.mxu0 0.0
    %v6698 = vand.u32 %v141, 4294901760
    %6699 = vmatpush1.msra.mxu0 %v6698
    %6700 = vmatprep.subr.mxu0 0.0
    %v6701 = vand.u32 %v142, 4294901760
    %6702 = vmatpush1.msra.mxu0 %v6701
    %6703 = vmatprep.subr.mxu0 0.0
    %v6704 = vand.u32 %v143, 4294901760
    %6705 = vmatpush1.msra.mxu0 %v6704
    %6706 = vmatprep.subr.mxu0 0.0
    %v6707 = vand.u32 %v144, 4294901760
    %6708 = vmatpush1.msra.mxu0 %v6707
    %6709 = vmatprep.subr.mxu0 0.0
    %v6710 = vand.u32 %v145, 4294901760
    %6711 = vmatpush1.msra.mxu0 %v6710
    %6712 = vmatprep.subr.mxu0 0.0
    %v6713 = vand.u32 %v146, 4294901760
    %6714 = vmatpush1.msra.mxu0 %v6713
    %6715 = vmatprep.subr.mxu0 0.0
    %v6716 = vand.u32 %v147, 4294901760
    %6717 = vmatpush1.msra.mxu0 %v6716
    %6718 = vmatprep.subr.mxu0 0.0
    %v6719 = vand.u32 %v148, 4294901760
    %6720 = vmatpush1.msra.mxu0 %v6719
    %6721 = vmatprep.subr.mxu0 0.0
    %v6722 = vand.u32 %v149, 4294901760
    %6723 = vmatpush1.msra.mxu0 %v6722
    %6724 = vmatprep.subr.mxu0 0.0
    %v6725 = vand.u32 %v150, 4294901760
    %6726 = vmatpush1.msra.mxu0 %v6725
    %6727 = vmatprep.subr.mxu0 0.0
    %v6728 = vand.u32 %v151, 4294901760
    %6729 = vmatpush1.msra.mxu0 %v6728
    %6730 = vmatprep.subr.mxu0 0.0
    %v6731 = vand.u32 %v152, 4294901760
    %6732 = vmatpush1.msra.mxu0 %v6731
    %6733 = vmatprep.subr.mxu0 0.0
    %v6734 = vand.u32 %v153, 4294901760
    %6735 = vmatpush1.msra.mxu0 %v6734
    %6736 = vmatprep.subr.mxu0 0.0
    %v6737 = vand.u32 %v154, 4294901760
    %6738 = vmatpush1.msra.mxu0 %v6737
    %6739 = vmatprep.subr.mxu0 0.0
    %v6740 = vand.u32 %v155, 4294901760
    %6741 = vmatpush1.msra.mxu0 %v6740
    %6742 = vmatprep.subr.mxu0 0.0
    %v6743 = vand.u32 %v156, 4294901760
    %6744 = vmatpush1.msra.mxu0 %v6743
    %6745 = vmatprep.subr.mxu0 0.0
    %v6746 = vand.u32 %v157, 4294901760
    %6747 = vmatpush1.msra.mxu0 %v6746
    %6748 = vmatprep.subr.mxu0 0.0
    %v6749 = vand.u32 %v158, 4294901760
    %6750 = vmatpush1.msra.mxu0 %v6749
    %6751 = vmatprep.subr.mxu0 0.0
    %v6752 = vand.u32 %v159, 4294901760
    %6753 = vmatpush1.msra.mxu0 %v6752
    %6754 = vmatprep.subr.mxu0 0.0
    %v6755 = vand.u32 %v160, 4294901760
    %6756 = vmatpush1.msra.mxu0 %v6755
    %6757 = vmatprep.subr.mxu0 0.0
    %v6758 = vand.u32 %v161, 4294901760
    %6759 = vmatpush1.msra.mxu0 %v6758
    %6760 = vmatprep.subr.mxu0 0.0
    %v6761 = vand.u32 %v162, 4294901760
    %6762 = vmatpush1.msra.mxu0 %v6761
    %v6763 = vand.u32 %v6636, 4294901760
    %v6764 = vsub.f32 %v6636, %v6763
    %v6765 = vand.u32 %v6764, 4294901760
    %v6766 = vsub.f32 %v6764, %v6765
    %v6767 = vand.u32 %v6766, 4294901760
    %6768 = vmatprep.mubr.f32.mxu0 %v6767
    %v6769 = vand.u32 %v6635, 4294901760
    %v6770 = vsub.f32 %v6635, %v6769
    %v6771 = vand.u32 %v6770, 4294901760
    %v6772 = vsub.f32 %v6770, %v6771
    %v6773 = vand.u32 %v6772, 4294901760
    %6774 = vmatmul.mubr.f32.gmra.mrb[0].mxu0 %v6773
    %v6775 = vpop.f32.mrb[0].mxu0
    %v6776 = vadd.f32 0.0, %v6775
    %v6777 = vpop.f32.mrb[0].mxu0
    %v6778 = vand.u32 %v6640, 4294901760
    %v6779 = vsub.f32 %v6640, %v6778
    %v6780 = vand.u32 %v6779, 4294901760
    %v6781 = vsub.f32 %v6779, %v6780
    %v6782 = vand.u32 %v6781, 4294901760
    %6783 = vmatprep.mubr.f32.mxu0 %v6782
    %v6784 = vand.u32 %v6639, 4294901760
    %v6785 = vsub.f32 %v6639, %v6784
    %v6786 = vand.u32 %v6785, 4294901760
    %v6787 = vsub.f32 %v6785, %v6786
    %v6788 = vand.u32 %v6787, 4294901760
    %6789 = vmatmul.mubr.f32.gmra.mrb[0].mxu0 %v6788
    %v6790 = vpop.f32.mrb[0].mxu0
    %v6791 = vadd.f32 0.0, %v6790
    %v6792 = vpop.f32.mrb[0].mxu0
    %v6793 = vand.u32 %v6644, 4294901760
    %v6794 = vsub.f32 %v6644, %v6793
    %v6795 = vand.u32 %v6794, 4294901760
    %v6796 = vsub.f32 %v6794, %v6795
    %v6797 = vand.u32 %v6796, 4294901760
    %6798 = vmatprep.mubr.f32.mxu0 %v6797
    %v6799 = vand.u32 %v6643, 4294901760
    %v6800 = vsub.f32 %v6643, %v6799
    %v6801 = vand.u32 %v6800, 4294901760
    %v6802 = vsub.f32 %v6800, %v6801
    %v6803 = vand.u32 %v6802, 4294901760
    %6804 = vmatmul.mubr.f32.gmra.mrb[0].mxu0 %v6803
    %v6805 = vpop.f32.mrb[0].mxu0
    %v6806 = vadd.f32 0.0, %v6805
    %v6807 = vpop.f32.mrb[0].mxu0
    %v6808 = vand.u32 %v6648, 4294901760
    %v6809 = vsub.f32 %v6648, %v6808
    %v6810 = vand.u32 %v6809, 4294901760
    %v6811 = vsub.f32 %v6809, %v6810
    %v6812 = vand.u32 %v6811, 4294901760
    %6813 = vmatprep.mubr.f32.mxu0 %v6812
    %v6814 = vand.u32 %v6647, 4294901760
    %v6815 = vsub.f32 %v6647, %v6814
    %v6816 = vand.u32 %v6815, 4294901760
    %v6817 = vsub.f32 %v6815, %v6816
    %v6818 = vand.u32 %v6817, 4294901760
    %6819 = vmatmul.mubr.f32.gmra.mrb[0].mxu0 %v6818
    %v6820 = vpop.f32.mrb[0].mxu0
    %v6821 = vadd.f32 0.0, %v6820
    %v6822 = vpop.f32.mrb[0].mxu0
    %v6823 = vand.u32 %v6652, 4294901760
    %v6824 = vsub.f32 %v6652, %v6823
    %v6825 = vand.u32 %v6824, 4294901760
    %v6826 = vsub.f32 %v6824, %v6825
    %v6827 = vand.u32 %v6826, 4294901760
    %6828 = vmatprep.mubr.f32.mxu0 %v6827
    %v6829 = vand.u32 %v6651, 4294901760
    %v6830 = vsub.f32 %v6651, %v6829
    %v6831 = vand.u32 %v6830, 4294901760
    %v6832 = vsub.f32 %v6830, %v6831
    %v6833 = vand.u32 %v6832, 4294901760
    %6834 = vmatmul.mubr.f32.gmra.mrb[0].mxu0 %v6833
    %v6835 = vpop.f32.mrb[0].mxu0
    %v6836 = vadd.f32 0.0, %v6835
    %v6837 = vpop.f32.mrb[0].mxu0
    %v6838 = vand.u32 %v6656, 4294901760
    %v6839 = vsub.f32 %v6656, %v6838
    %v6840 = vand.u32 %v6839, 4294901760
    %v6841 = vsub.f32 %v6839, %v6840
    %v6842 = vand.u32 %v6841, 4294901760
    %6843 = vmatprep.mubr.f32.mxu0 %v6842
    %v6844 = vand.u32 %v6655, 4294901760
    %v6845 = vsub.f32 %v6655, %v6844
    %v6846 = vand.u32 %v6845, 4294901760
    %v6847 = vsub.f32 %v6845, %v6846
    %v6848 = vand.u32 %v6847, 4294901760
    %6849 = vmatmul.mubr.f32.gmra.mrb[0].mxu0 %v6848
    %v6850 = vpop.f32.mrb[0].mxu0
    %v6851 = vadd.f32 0.0, %v6850
    %v6852 = vpop.f32.mrb[0].mxu0
    %v6853 = vand.u32 %v6660, 4294901760
    %v6854 = vsub.f32 %v6660, %v6853
    %v6855 = vand.u32 %v6854, 4294901760
    %v6856 = vsub.f32 %v6854, %v6855
    %v6857 = vand.u32 %v6856, 4294901760
    %6858 = vmatprep.mubr.f32.mxu0 %v6857
    %v6859 = vand.u32 %v6659, 4294901760
    %v6860 = vsub.f32 %v6659, %v6859
    %v6861 = vand.u32 %v6860, 4294901760
    %v6862 = vsub.f32 %v6860, %v6861
    %v6863 = vand.u32 %v6862, 4294901760
    %6864 = vmatmul.mubr.f32.gmra.mrb[0].mxu0 %v6863
    %v6865 = vpop.f32.mrb[0].mxu0
    %v6866 = vadd.f32 0.0, %v6865
    %v6867 = vpop.f32.mrb[0].mxu0
    %v6868 = vand.u32 %v6664, 4294901760
    %v6869 = vsub.f32 %v6664, %v6868
    %v6870 = vand.u32 %v6869, 4294901760
    %v6871 = vsub.f32 %v6869, %v6870
    %v6872 = vand.u32 %v6871, 4294901760
    %6873 = vmatprep.mubr.f32.mxu0 %v6872
    %v6874 = vand.u32 %v6663, 4294901760
    %v6875 = vsub.f32 %v6663, %v6874
    %v6876 = vand.u32 %v6875, 4294901760
    %v6877 = vsub.f32 %v6875, %v6876
    %v6878 = vand.u32 %v6877, 4294901760
    %6879 = vmatmul.mubr.f32.gmra.mrb[0].mxu0 %v6878
    %v6880 = vpop.f32.mrb[0].mxu0
    %v6881 = vadd.f32 0.0, %v6880
    %v6882 = vpop.f32.mrb[0].mxu0
    %6883 = vdwg.mxu0
    %6884 = vmatprep.subr.mxu0 0.0
    %v6885 = vand.u32 %v131, 4294901760
    %v6886 = vsub.f32 %v131, %v6885
    %v6887 = vand.u32 %v6886, 4294901760
    %v6888 = vsub.f32 %v6886, %v6887
    %v6889 = vand.u32 %v6888, 4294901760
    %6890 = vmatpush1.msra.mxu0 %v6889
    %6891 = vmatprep.subr.mxu0 0.0
    %v6892 = vand.u32 %v132, 4294901760
    %v6893 = vsub.f32 %v132, %v6892
    %v6894 = vand.u32 %v6893, 4294901760
    %v6895 = vsub.f32 %v6893, %v6894
    %v6896 = vand.u32 %v6895, 4294901760
    %6897 = vmatpush1.msra.mxu0 %v6896
    %6898 = vmatprep.subr.mxu0 0.0
    %v6899 = vand.u32 %v133, 4294901760
    %v6900 = vsub.f32 %v133, %v6899
    %v6901 = vand.u32 %v6900, 4294901760
    %v6902 = vsub.f32 %v6900, %v6901
    %v6903 = vand.u32 %v6902, 4294901760
    %6904 = vmatpush1.msra.mxu0 %v6903
    %6905 = vmatprep.subr.mxu0 0.0
    %v6906 = vand.u32 %v134, 4294901760
    %v6907 = vsub.f32 %v134, %v6906
    %v6908 = vand.u32 %v6907, 4294901760
    %v6909 = vsub.f32 %v6907, %v6908
    %v6910 = vand.u32 %v6909, 4294901760
    %6911 = vmatpush1.msra.mxu0 %v6910
    %6912 = vmatprep.subr.mxu0 0.0
    %v6913 = vand.u32 %v135, 4294901760
    %v6914 = vsub.f32 %v135, %v6913
    %v6915 = vand.u32 %v6914, 4294901760
    %v6916 = vsub.f32 %v6914, %v6915
    %v6917 = vand.u32 %v6916, 4294901760
    %6918 = vmatpush1.msra.mxu0 %v6917
    %6919 = vmatprep.subr.mxu0 0.0
    %v6920 = vand.u32 %v136, 4294901760
    %v6921 = vsub.f32 %v136, %v6920
    %v6922 = vand.u32 %v6921, 4294901760
    %v6923 = vsub.f32 %v6921, %v6922
    %v6924 = vand.u32 %v6923, 4294901760
    %6925 = vmatpush1.msra.mxu0 %v6924
    %6926 = vmatprep.subr.mxu0 0.0
    %v6927 = vand.u32 %v137, 4294901760
    %v6928 = vsub.f32 %v137, %v6927
    %v6929 = vand.u32 %v6928, 4294901760
    %v6930 = vsub.f32 %v6928, %v6929
    %v6931 = vand.u32 %v6930, 4294901760
    %6932 = vmatpush1.msra.mxu0 %v6931
    %6933 = vmatprep.subr.mxu0 0.0
    %v6934 = vand.u32 %v138, 4294901760
    %v6935 = vsub.f32 %v138, %v6934
    %v6936 = vand.u32 %v6935, 4294901760
    %v6937 = vsub.f32 %v6935, %v6936
    %v6938 = vand.u32 %v6937, 4294901760
    %6939 = vmatpush1.msra.mxu0 %v6938
    %6940 = vmatprep.subr.mxu0 0.0
    %v6941 = vand.u32 %v139, 4294901760
    %v6942 = vsub.f32 %v139, %v6941
    %v6943 = vand.u32 %v6942, 4294901760
    %v6944 = vsub.f32 %v6942, %v6943
    %v6945 = vand.u32 %v6944, 4294901760
    %6946 = vmatpush1.msra.mxu0 %v6945
    %6947 = vmatprep.subr.mxu0 0.0
    %v6948 = vand.u32 %v140, 4294901760
    %v6949 = vsub.f32 %v140, %v6948
    %v6950 = vand.u32 %v6949, 4294901760
    %v6951 = vsub.f32 %v6949, %v6950
    %v6952 = vand.u32 %v6951, 4294901760
    %6953 = vmatpush1.msra.mxu0 %v6952
    %6954 = vmatprep.subr.mxu0 0.0
    %v6955 = vand.u32 %v141, 4294901760
    %v6956 = vsub.f32 %v141, %v6955
    %v6957 = vand.u32 %v6956, 4294901760
    %v6958 = vsub.f32 %v6956, %v6957
    %v6959 = vand.u32 %v6958, 4294901760
    %6960 = vmatpush1.msra.mxu0 %v6959
    %6961 = vmatprep.subr.mxu0 0.0
    %v6962 = vand.u32 %v142, 4294901760
    %v6963 = vsub.f32 %v142, %v6962
    %v6964 = vand.u32 %v6963, 4294901760
    %v6965 = vsub.f32 %v6963, %v6964
    %v6966 = vand.u32 %v6965, 4294901760
    %6967 = vmatpush1.msra.mxu0 %v6966
    %6968 = vmatprep.subr.mxu0 0.0
    %v6969 = vand.u32 %v143, 4294901760
    %v6970 = vsub.f32 %v143, %v6969
    %v6971 = vand.u32 %v6970, 4294901760
    %v6972 = vsub.f32 %v6970, %v6971
    %v6973 = vand.u32 %v6972, 4294901760
    %6974 = vmatpush1.msra.mxu0 %v6973
    %6975 = vmatprep.subr.mxu0 0.0
    %v6976 = vand.u32 %v144, 4294901760
    %v6977 = vsub.f32 %v144, %v6976
    %v6978 = vand.u32 %v6977, 4294901760
    %v6979 = vsub.f32 %v6977, %v6978
    %v6980 = vand.u32 %v6979, 4294901760
    %6981 = vmatpush1.msra.mxu0 %v6980
    %6982 = vmatprep.subr.mxu0 0.0
    %v6983 = vand.u32 %v145, 4294901760
    %v6984 = vsub.f32 %v145, %v6983
    %v6985 = vand.u32 %v6984, 4294901760
    %v6986 = vsub.f32 %v6984, %v6985
    %v6987 = vand.u32 %v6986, 4294901760
    %6988 = vmatpush1.msra.mxu0 %v6987
    %6989 = vmatprep.subr.mxu0 0.0
    %v6990 = vand.u32 %v146, 4294901760
    %v6991 = vsub.f32 %v146, %v6990
    %v6992 = vand.u32 %v6991, 4294901760
    %v6993 = vsub.f32 %v6991, %v6992
    %v6994 = vand.u32 %v6993, 4294901760
    %6995 = vmatpush1.msra.mxu0 %v6994
    %6996 = vmatprep.subr.mxu0 0.0
    %v6997 = vand.u32 %v147, 4294901760
    %v6998 = vsub.f32 %v147, %v6997
    %v6999 = vand.u32 %v6998, 4294901760
    %v7000 = vsub.f32 %v6998, %v6999
    %v7001 = vand.u32 %v7000, 4294901760
    %7002 = vmatpush1.msra.mxu0 %v7001
    %7003 = vmatprep.subr.mxu0 0.0
    %v7004 = vand.u32 %v148, 4294901760
    %v7005 = vsub.f32 %v148, %v7004
    %v7006 = vand.u32 %v7005, 4294901760
    %v7007 = vsub.f32 %v7005, %v7006
    %v7008 = vand.u32 %v7007, 4294901760
    %7009 = vmatpush1.msra.mxu0 %v7008
    %7010 = vmatprep.subr.mxu0 0.0
    %v7011 = vand.u32 %v149, 4294901760
    %v7012 = vsub.f32 %v149, %v7011
    %v7013 = vand.u32 %v7012, 4294901760
    %v7014 = vsub.f32 %v7012, %v7013
    %v7015 = vand.u32 %v7014, 4294901760
    %7016 = vmatpush1.msra.mxu0 %v7015
    %7017 = vmatprep.subr.mxu0 0.0
    %v7018 = vand.u32 %v150, 4294901760
    %v7019 = vsub.f32 %v150, %v7018
    %v7020 = vand.u32 %v7019, 4294901760
    %v7021 = vsub.f32 %v7019, %v7020
    %v7022 = vand.u32 %v7021, 4294901760
    %7023 = vmatpush1.msra.mxu0 %v7022
    %7024 = vmatprep.subr.mxu0 0.0
    %v7025 = vand.u32 %v151, 4294901760
    %v7026 = vsub.f32 %v151, %v7025
    %v7027 = vand.u32 %v7026, 4294901760
    %v7028 = vsub.f32 %v7026, %v7027
    %v7029 = vand.u32 %v7028, 4294901760
    %7030 = vmatpush1.msra.mxu0 %v7029
    %7031 = vmatprep.subr.mxu0 0.0
    %v7032 = vand.u32 %v152, 4294901760
    %v7033 = vsub.f32 %v152, %v7032
    %v7034 = vand.u32 %v7033, 4294901760
    %v7035 = vsub.f32 %v7033, %v7034
    %v7036 = vand.u32 %v7035, 4294901760
    %7037 = vmatpush1.msra.mxu0 %v7036
    %7038 = vmatprep.subr.mxu0 0.0
    %v7039 = vand.u32 %v153, 4294901760
    %v7040 = vsub.f32 %v153, %v7039
    %v7041 = vand.u32 %v7040, 4294901760
    %v7042 = vsub.f32 %v7040, %v7041
    %v7043 = vand.u32 %v7042, 4294901760
    %7044 = vmatpush1.msra.mxu0 %v7043
    %7045 = vmatprep.subr.mxu0 0.0
    %v7046 = vand.u32 %v154, 4294901760
    %v7047 = vsub.f32 %v154, %v7046
    %v7048 = vand.u32 %v7047, 4294901760
    %v7049 = vsub.f32 %v7047, %v7048
    %v7050 = vand.u32 %v7049, 4294901760
    %7051 = vmatpush1.msra.mxu0 %v7050
    %7052 = vmatprep.subr.mxu0 0.0
    %v7053 = vand.u32 %v155, 4294901760
    %v7054 = vsub.f32 %v155, %v7053
    %v7055 = vand.u32 %v7054, 4294901760
    %v7056 = vsub.f32 %v7054, %v7055
    %v7057 = vand.u32 %v7056, 4294901760
    %7058 = vmatpush1.msra.mxu0 %v7057
    %7059 = vmatprep.subr.mxu0 0.0
    %v7060 = vand.u32 %v156, 4294901760
    %v7061 = vsub.f32 %v156, %v7060
    %v7062 = vand.u32 %v7061, 4294901760
    %v7063 = vsub.f32 %v7061, %v7062
    %v7064 = vand.u32 %v7063, 4294901760
    %7065 = vmatpush1.msra.mxu0 %v7064
    %7066 = vmatprep.subr.mxu0 0.0
    %v7067 = vand.u32 %v157, 4294901760
    %v7068 = vsub.f32 %v157, %v7067
    %v7069 = vand.u32 %v7068, 4294901760
    %v7070 = vsub.f32 %v7068, %v7069
    %v7071 = vand.u32 %v7070, 4294901760
    %7072 = vmatpush1.msra.mxu0 %v7071
    %7073 = vmatprep.subr.mxu0 0.0
    %v7074 = vand.u32 %v158, 4294901760
    %v7075 = vsub.f32 %v158, %v7074
    %v7076 = vand.u32 %v7075, 4294901760
    %v7077 = vsub.f32 %v7075, %v7076
    %v7078 = vand.u32 %v7077, 4294901760
    %7079 = vmatpush1.msra.mxu0 %v7078
    %7080 = vmatprep.subr.mxu0 0.0
    %v7081 = vand.u32 %v159, 4294901760
    %v7082 = vsub.f32 %v159, %v7081
    %v7083 = vand.u32 %v7082, 4294901760
    %v7084 = vsub.f32 %v7082, %v7083
    %v7085 = vand.u32 %v7084, 4294901760
    %7086 = vmatpush1.msra.mxu0 %v7085
    %7087 = vmatprep.subr.mxu0 0.0
    %v7088 = vand.u32 %v160, 4294901760
    %v7089 = vsub.f32 %v160, %v7088
    %v7090 = vand.u32 %v7089, 4294901760
    %v7091 = vsub.f32 %v7089, %v7090
    %v7092 = vand.u32 %v7091, 4294901760
    %7093 = vmatpush1.msra.mxu0 %v7092
    %7094 = vmatprep.subr.mxu0 0.0
    %v7095 = vand.u32 %v161, 4294901760
    %v7096 = vsub.f32 %v161, %v7095
    %v7097 = vand.u32 %v7096, 4294901760
    %v7098 = vsub.f32 %v7096, %v7097
    %v7099 = vand.u32 %v7098, 4294901760
    %7100 = vmatpush1.msra.mxu0 %v7099
    %7101 = vmatprep.subr.mxu0 0.0
    %v7102 = vand.u32 %v162, 4294901760
    %v7103 = vsub.f32 %v162, %v7102
    %v7104 = vand.u32 %v7103, 4294901760
    %v7105 = vsub.f32 %v7103, %v7104
    %v7106 = vand.u32 %v7105, 4294901760
    %7107 = vmatpush1.msra.mxu0 %v7106
    %v7108 = vand.u32 %v6636, 4294901760
    %7109 = vmatprep.mubr.f32.mxu0 %v7108
    %v7110 = vand.u32 %v6635, 4294901760
    %7111 = vmatmul.mubr.f32.gmra.mrb[0].mxu0 %v7110
    %v7112 = vpop.f32.mrb[0].mxu0
    %v7113 = vadd.f32 %v6776, %v7112
    %v7114 = vpop.f32.mrb[0].mxu0
    %v7115 = vand.u32 %v6640, 4294901760
    %7116 = vmatprep.mubr.f32.mxu0 %v7115
    %v7117 = vand.u32 %v6639, 4294901760
    %7118 = vmatmul.mubr.f32.gmra.mrb[0].mxu0 %v7117
    %v7119 = vpop.f32.mrb[0].mxu0
    %v7120 = vadd.f32 %v6791, %v7119
    %v7121 = vpop.f32.mrb[0].mxu0
    %v7122 = vand.u32 %v6644, 4294901760
    %7123 = vmatprep.mubr.f32.mxu0 %v7122
    %v7124 = vand.u32 %v6643, 4294901760
    %7125 = vmatmul.mubr.f32.gmra.mrb[0].mxu0 %v7124
    %v7126 = vpop.f32.mrb[0].mxu0
    %v7127 = vadd.f32 %v6806, %v7126
    %v7128 = vpop.f32.mrb[0].mxu0
    %v7129 = vand.u32 %v6648, 4294901760
    %7130 = vmatprep.mubr.f32.mxu0 %v7129
    %v7131 = vand.u32 %v6647, 4294901760
    %7132 = vmatmul.mubr.f32.gmra.mrb[0].mxu0 %v7131
    %v7133 = vpop.f32.mrb[0].mxu0
    %v7134 = vadd.f32 %v6821, %v7133
    %v7135 = vpop.f32.mrb[0].mxu0
    %v7136 = vand.u32 %v6652, 4294901760
    %7137 = vmatprep.mubr.f32.mxu0 %v7136
    %v7138 = vand.u32 %v6651, 4294901760
    %7139 = vmatmul.mubr.f32.gmra.mrb[0].mxu0 %v7138
    %v7140 = vpop.f32.mrb[0].mxu0
    %v7141 = vadd.f32 %v6836, %v7140
    %v7142 = vpop.f32.mrb[0].mxu0
    %v7143 = vand.u32 %v6656, 4294901760
    %7144 = vmatprep.mubr.f32.mxu0 %v7143
    %v7145 = vand.u32 %v6655, 4294901760
    %7146 = vmatmul.mubr.f32.gmra.mrb[0].mxu0 %v7145
    %v7147 = vpop.f32.mrb[0].mxu0
    %v7148 = vadd.f32 %v6851, %v7147
    %v7149 = vpop.f32.mrb[0].mxu0
    %v7150 = vand.u32 %v6660, 4294901760
    %7151 = vmatprep.mubr.f32.mxu0 %v7150
    %v7152 = vand.u32 %v6659, 4294901760
    %7153 = vmatmul.mubr.f32.gmra.mrb[0].mxu0 %v7152
    %v7154 = vpop.f32.mrb[0].mxu0
    %v7155 = vadd.f32 %v6866, %v7154
    %v7156 = vpop.f32.mrb[0].mxu0
    %v7157 = vand.u32 %v6664, 4294901760
    %7158 = vmatprep.mubr.f32.mxu0 %v7157
    %v7159 = vand.u32 %v6663, 4294901760
    %7160 = vmatmul.mubr.f32.gmra.mrb[0].mxu0 %v7159
    %v7161 = vpop.f32.mrb[0].mxu0
    %v7162 = vadd.f32 %v6881, %v7161
    %v7163 = vpop.f32.mrb[0].mxu0
    %7164 = vdwg.mxu0
    %7165 = vmatprep.subr.mxu0 0.0
    %v7166 = vand.u32 %v131, 4294901760
    %v7167 = vsub.f32 %v131, %v7166
    %7168 = vmatpush1.msra.mxu0 %v7167
    %7169 = vmatprep.subr.mxu0 0.0
    %v7170 = vand.u32 %v132, 4294901760
    %v7171 = vsub.f32 %v132, %v7170
    %7172 = vmatpush1.msra.mxu0 %v7171
    %7173 = vmatprep.subr.mxu0 0.0
    %v7174 = vand.u32 %v133, 4294901760
    %v7175 = vsub.f32 %v133, %v7174
    %7176 = vmatpush1.msra.mxu0 %v7175
    %7177 = vmatprep.subr.mxu0 0.0
    %v7178 = vand.u32 %v134, 4294901760
    %v7179 = vsub.f32 %v134, %v7178
    %7180 = vmatpush1.msra.mxu0 %v7179
    %7181 = vmatprep.subr.mxu0 0.0
    %v7182 = vand.u32 %v135, 4294901760
    %v7183 = vsub.f32 %v135, %v7182
    %7184 = vmatpush1.msra.mxu0 %v7183
    %7185 = vmatprep.subr.mxu0 0.0
    %v7186 = vand.u32 %v136, 4294901760
    %v7187 = vsub.f32 %v136, %v7186
    %7188 = vmatpush1.msra.mxu0 %v7187
    %7189 = vmatprep.subr.mxu0 0.0
    %v7190 = vand.u32 %v137, 4294901760
    %v7191 = vsub.f32 %v137, %v7190
    %7192 = vmatpush1.msra.mxu0 %v7191
    %7193 = vmatprep.subr.mxu0 0.0
    %v7194 = vand.u32 %v138, 4294901760
    %v7195 = vsub.f32 %v138, %v7194
    %7196 = vmatpush1.msra.mxu0 %v7195
    %7197 = vmatprep.subr.mxu0 0.0
    %v7198 = vand.u32 %v139, 4294901760
    %v7199 = vsub.f32 %v139, %v7198
    %7200 = vmatpush1.msra.mxu0 %v7199
    %7201 = vmatprep.subr.mxu0 0.0
    %v7202 = vand.u32 %v140, 4294901760
    %v7203 = vsub.f32 %v140, %v7202
    %7204 = vmatpush1.msra.mxu0 %v7203
    %7205 = vmatprep.subr.mxu0 0.0
    %v7206 = vand.u32 %v141, 4294901760
    %v7207 = vsub.f32 %v141, %v7206
    %7208 = vmatpush1.msra.mxu0 %v7207
    %7209 = vmatprep.subr.mxu0 0.0
    %v7210 = vand.u32 %v142, 4294901760
    %v7211 = vsub.f32 %v142, %v7210
    %7212 = vmatpush1.msra.mxu0 %v7211
    %7213 = vmatprep.subr.mxu0 0.0
    %v7214 = vand.u32 %v143, 4294901760
    %v7215 = vsub.f32 %v143, %v7214
    %7216 = vmatpush1.msra.mxu0 %v7215
    %7217 = vmatprep.subr.mxu0 0.0
    %v7218 = vand.u32 %v144, 4294901760
    %v7219 = vsub.f32 %v144, %v7218
    %7220 = vmatpush1.msra.mxu0 %v7219
    %7221 = vmatprep.subr.mxu0 0.0
    %v7222 = vand.u32 %v145, 4294901760
    %v7223 = vsub.f32 %v145, %v7222
    %7224 = vmatpush1.msra.mxu0 %v7223
    %7225 = vmatprep.subr.mxu0 0.0
    %v7226 = vand.u32 %v146, 4294901760
    %v7227 = vsub.f32 %v146, %v7226
    %7228 = vmatpush1.msra.mxu0 %v7227
    %7229 = vmatprep.subr.mxu0 0.0
    %v7230 = vand.u32 %v147, 4294901760
    %v7231 = vsub.f32 %v147, %v7230
    %7232 = vmatpush1.msra.mxu0 %v7231
    %7233 = vmatprep.subr.mxu0 0.0
    %v7234 = vand.u32 %v148, 4294901760
    %v7235 = vsub.f32 %v148, %v7234
    %7236 = vmatpush1.msra.mxu0 %v7235
    %7237 = vmatprep.subr.mxu0 0.0
    %v7238 = vand.u32 %v149, 4294901760
    %v7239 = vsub.f32 %v149, %v7238
    %7240 = vmatpush1.msra.mxu0 %v7239
    %7241 = vmatprep.subr.mxu0 0.0
    %v7242 = vand.u32 %v150, 4294901760
    %v7243 = vsub.f32 %v150, %v7242
    %7244 = vmatpush1.msra.mxu0 %v7243
    %7245 = vmatprep.subr.mxu0 0.0
    %v7246 = vand.u32 %v151, 4294901760
    %v7247 = vsub.f32 %v151, %v7246
    %7248 = vmatpush1.msra.mxu0 %v7247
    %7249 = vmatprep.subr.mxu0 0.0
    %v7250 = vand.u32 %v152, 4294901760
    %v7251 = vsub.f32 %v152, %v7250
    %7252 = vmatpush1.msra.mxu0 %v7251
    %7253 = vmatprep.subr.mxu0 0.0
    %v7254 = vand.u32 %v153, 4294901760
    %v7255 = vsub.f32 %v153, %v7254
    %7256 = vmatpush1.msra.mxu0 %v7255
    %7257 = vmatprep.subr.mxu0 0.0
    %v7258 = vand.u32 %v154, 4294901760
    %v7259 = vsub.f32 %v154, %v7258
    %7260 = vmatpush1.msra.mxu0 %v7259
    %7261 = vmatprep.subr.mxu0 0.0
    %v7262 = vand.u32 %v155, 4294901760
    %v7263 = vsub.f32 %v155, %v7262
    %7264 = vmatpush1.msra.mxu0 %v7263
    %7265 = vmatprep.subr.mxu0 0.0
    %v7266 = vand.u32 %v156, 4294901760
    %v7267 = vsub.f32 %v156, %v7266
    %7268 = vmatpush1.msra.mxu0 %v7267
    %7269 = vmatprep.subr.mxu0 0.0
    %v7270 = vand.u32 %v157, 4294901760
    %v7271 = vsub.f32 %v157, %v7270
    %7272 = vmatpush1.msra.mxu0 %v7271
    %7273 = vmatprep.subr.mxu0 0.0
    %v7274 = vand.u32 %v158, 4294901760
    %v7275 = vsub.f32 %v158, %v7274
    %7276 = vmatpush1.msra.mxu0 %v7275
    %7277 = vmatprep.subr.mxu0 0.0
    %v7278 = vand.u32 %v159, 4294901760
    %v7279 = vsub.f32 %v159, %v7278
    %7280 = vmatpush1.msra.mxu0 %v7279
    %7281 = vmatprep.subr.mxu0 0.0
    %v7282 = vand.u32 %v160, 4294901760
    %v7283 = vsub.f32 %v160, %v7282
    %7284 = vmatpush1.msra.mxu0 %v7283
    %7285 = vmatprep.subr.mxu0 0.0
    %v7286 = vand.u32 %v161, 4294901760
    %v7287 = vsub.f32 %v161, %v7286
    %7288 = vmatpush1.msra.mxu0 %v7287
    %7289 = vmatprep.subr.mxu0 0.0
    %v7290 = vand.u32 %v162, 4294901760
    %v7291 = vsub.f32 %v162, %v7290
    %7292 = vmatpush1.msra.mxu0 %v7291
    %v7293 = vand.u32 %v6636, 4294901760
    %v7294 = vsub.f32 %v6636, %v7293
    %7295 = vmatprep.mubr.f32.mxu0 %v7294
    %v7296 = vand.u32 %v6635, 4294901760
    %v7297 = vsub.f32 %v6635, %v7296
    %7298 = vmatmul.mubr.f32.gmra.mrb[0].mxu0 %v7297
    %v7299 = vpop.f32.mrb[0].mxu0
    %v7300 = vadd.f32 %v7113, %v7299
    %v7301 = vpop.f32.mrb[0].mxu0
    %v7302 = vand.u32 %v6640, 4294901760
    %v7303 = vsub.f32 %v6640, %v7302
    %7304 = vmatprep.mubr.f32.mxu0 %v7303
    %v7305 = vand.u32 %v6639, 4294901760
    %v7306 = vsub.f32 %v6639, %v7305
    %7307 = vmatmul.mubr.f32.gmra.mrb[0].mxu0 %v7306
    %v7308 = vpop.f32.mrb[0].mxu0
    %v7309 = vadd.f32 %v7120, %v7308
    %v7310 = vpop.f32.mrb[0].mxu0
    %v7311 = vand.u32 %v6644, 4294901760
    %v7312 = vsub.f32 %v6644, %v7311
    %7313 = vmatprep.mubr.f32.mxu0 %v7312
    %v7314 = vand.u32 %v6643, 4294901760
    %v7315 = vsub.f32 %v6643, %v7314
    %7316 = vmatmul.mubr.f32.gmra.mrb[0].mxu0 %v7315
    %v7317 = vpop.f32.mrb[0].mxu0
    %v7318 = vadd.f32 %v7127, %v7317
    %v7319 = vpop.f32.mrb[0].mxu0
    %v7320 = vand.u32 %v6648, 4294901760
    %v7321 = vsub.f32 %v6648, %v7320
    %7322 = vmatprep.mubr.f32.mxu0 %v7321
    %v7323 = vand.u32 %v6647, 4294901760
    %v7324 = vsub.f32 %v6647, %v7323
    %7325 = vmatmul.mubr.f32.gmra.mrb[0].mxu0 %v7324
    %v7326 = vpop.f32.mrb[0].mxu0
    %v7327 = vadd.f32 %v7134, %v7326
    %v7328 = vpop.f32.mrb[0].mxu0
    %v7329 = vand.u32 %v6652, 4294901760
    %v7330 = vsub.f32 %v6652, %v7329
    %7331 = vmatprep.mubr.f32.mxu0 %v7330
    %v7332 = vand.u32 %v6651, 4294901760
    %v7333 = vsub.f32 %v6651, %v7332
    %7334 = vmatmul.mubr.f32.gmra.mrb[0].mxu0 %v7333
    %v7335 = vpop.f32.mrb[0].mxu0
    %v7336 = vadd.f32 %v7141, %v7335
    %v7337 = vpop.f32.mrb[0].mxu0
    %v7338 = vand.u32 %v6656, 4294901760
    %v7339 = vsub.f32 %v6656, %v7338
    %7340 = vmatprep.mubr.f32.mxu0 %v7339
    %v7341 = vand.u32 %v6655, 4294901760
    %v7342 = vsub.f32 %v6655, %v7341
    %7343 = vmatmul.mubr.f32.gmra.mrb[0].mxu0 %v7342
    %v7344 = vpop.f32.mrb[0].mxu0
    %v7345 = vadd.f32 %v7148, %v7344
    %v7346 = vpop.f32.mrb[0].mxu0
    %v7347 = vand.u32 %v6660, 4294901760
    %v7348 = vsub.f32 %v6660, %v7347
    %7349 = vmatprep.mubr.f32.mxu0 %v7348
    %v7350 = vand.u32 %v6659, 4294901760
    %v7351 = vsub.f32 %v6659, %v7350
    %7352 = vmatmul.mubr.f32.gmra.mrb[0].mxu0 %v7351
    %v7353 = vpop.f32.mrb[0].mxu0
    %v7354 = vadd.f32 %v7155, %v7353
    %v7355 = vpop.f32.mrb[0].mxu0
    %v7356 = vand.u32 %v6664, 4294901760
    %v7357 = vsub.f32 %v6664, %v7356
    %7358 = vmatprep.mubr.f32.mxu0 %v7357
    %v7359 = vand.u32 %v6663, 4294901760
    %v7360 = vsub.f32 %v6663, %v7359
    %7361 = vmatmul.mubr.f32.gmra.mrb[0].mxu0 %v7360
    %v7362 = vpop.f32.mrb[0].mxu0
    %v7363 = vadd.f32 %v7162, %v7362
    %v7364 = vpop.f32.mrb[0].mxu0
    %7365 = vdwg.mxu0
    %7366 = vmatprep.subr.mxu0 0.0
    %v7367 = vand.u32 %v131, 4294901760
    %7368 = vmatpush1.msra.mxu0 %v7367
    %7369 = vmatprep.subr.mxu0 0.0
    %v7370 = vand.u32 %v132, 4294901760
    %7371 = vmatpush1.msra.mxu0 %v7370
    %7372 = vmatprep.subr.mxu0 0.0
    %v7373 = vand.u32 %v133, 4294901760
    %7374 = vmatpush1.msra.mxu0 %v7373
    %7375 = vmatprep.subr.mxu0 0.0
    %v7376 = vand.u32 %v134, 4294901760
    %7377 = vmatpush1.msra.mxu0 %v7376
    %7378 = vmatprep.subr.mxu0 0.0
    %v7379 = vand.u32 %v135, 4294901760
    %7380 = vmatpush1.msra.mxu0 %v7379
    %7381 = vmatprep.subr.mxu0 0.0
    %v7382 = vand.u32 %v136, 4294901760
    %7383 = vmatpush1.msra.mxu0 %v7382
    %7384 = vmatprep.subr.mxu0 0.0
    %v7385 = vand.u32 %v137, 4294901760
    %7386 = vmatpush1.msra.mxu0 %v7385
    %7387 = vmatprep.subr.mxu0 0.0
    %v7388 = vand.u32 %v138, 4294901760
    %7389 = vmatpush1.msra.mxu0 %v7388
    %7390 = vmatprep.subr.mxu0 0.0
    %v7391 = vand.u32 %v139, 4294901760
    %7392 = vmatpush1.msra.mxu0 %v7391
    %7393 = vmatprep.subr.mxu0 0.0
    %v7394 = vand.u32 %v140, 4294901760
    %7395 = vmatpush1.msra.mxu0 %v7394
    %7396 = vmatprep.subr.mxu0 0.0
    %v7397 = vand.u32 %v141, 4294901760
    %7398 = vmatpush1.msra.mxu0 %v7397
    %7399 = vmatprep.subr.mxu0 0.0
    %v7400 = vand.u32 %v142, 4294901760
    %7401 = vmatpush1.msra.mxu0 %v7400
    %7402 = vmatprep.subr.mxu0 0.0
    %v7403 = vand.u32 %v143, 4294901760
    %7404 = vmatpush1.msra.mxu0 %v7403
    %7405 = vmatprep.subr.mxu0 0.0
    %v7406 = vand.u32 %v144, 4294901760
    %7407 = vmatpush1.msra.mxu0 %v7406
    %7408 = vmatprep.subr.mxu0 0.0
    %v7409 = vand.u32 %v145, 4294901760
    %7410 = vmatpush1.msra.mxu0 %v7409
    %7411 = vmatprep.subr.mxu0 0.0
    %v7412 = vand.u32 %v146, 4294901760
    %7413 = vmatpush1.msra.mxu0 %v7412
    %7414 = vmatprep.subr.mxu0 0.0
    %v7415 = vand.u32 %v147, 4294901760
    %7416 = vmatpush1.msra.mxu0 %v7415
    %7417 = vmatprep.subr.mxu0 0.0
    %v7418 = vand.u32 %v148, 4294901760
    %7419 = vmatpush1.msra.mxu0 %v7418
    %7420 = vmatprep.subr.mxu0 0.0
    %v7421 = vand.u32 %v149, 4294901760
    %7422 = vmatpush1.msra.mxu0 %v7421
    %7423 = vmatprep.subr.mxu0 0.0
    %v7424 = vand.u32 %v150, 4294901760
    %7425 = vmatpush1.msra.mxu0 %v7424
    %7426 = vmatprep.subr.mxu0 0.0
    %v7427 = vand.u32 %v151, 4294901760
    %7428 = vmatpush1.msra.mxu0 %v7427
    %7429 = vmatprep.subr.mxu0 0.0
    %v7430 = vand.u32 %v152, 4294901760
    %7431 = vmatpush1.msra.mxu0 %v7430
    %7432 = vmatprep.subr.mxu0 0.0
    %v7433 = vand.u32 %v153, 4294901760
    %7434 = vmatpush1.msra.mxu0 %v7433
    %7435 = vmatprep.subr.mxu0 0.0
    %v7436 = vand.u32 %v154, 4294901760
    %7437 = vmatpush1.msra.mxu0 %v7436
    %7438 = vmatprep.subr.mxu0 0.0
    %v7439 = vand.u32 %v155, 4294901760
    %7440 = vmatpush1.msra.mxu0 %v7439
    %7441 = vmatprep.subr.mxu0 0.0
    %v7442 = vand.u32 %v156, 4294901760
    %7443 = vmatpush1.msra.mxu0 %v7442
    %7444 = vmatprep.subr.mxu0 0.0
    %v7445 = vand.u32 %v157, 4294901760
    %7446 = vmatpush1.msra.mxu0 %v7445
    %7447 = vmatprep.subr.mxu0 0.0
    %v7448 = vand.u32 %v158, 4294901760
    %7449 = vmatpush1.msra.mxu0 %v7448
    %7450 = vmatprep.subr.mxu0 0.0
    %v7451 = vand.u32 %v159, 4294901760
    %7452 = vmatpush1.msra.mxu0 %v7451
    %7453 = vmatprep.subr.mxu0 0.0
    %v7454 = vand.u32 %v160, 4294901760
    %7455 = vmatpush1.msra.mxu0 %v7454
    %7456 = vmatprep.subr.mxu0 0.0
    %v7457 = vand.u32 %v161, 4294901760
    %7458 = vmatpush1.msra.mxu0 %v7457
    %7459 = vmatprep.subr.mxu0 0.0
    %v7460 = vand.u32 %v162, 4294901760
    %7461 = vmatpush1.msra.mxu0 %v7460
    %v7462 = vand.u32 %v6636, 4294901760
    %v7463 = vsub.f32 %v6636, %v7462
    %v7464 = vand.u32 %v7463, 4294901760
    %7465 = vmatprep.mubr.f32.mxu0 %v7464
    %v7466 = vand.u32 %v6635, 4294901760
    %v7467 = vsub.f32 %v6635, %v7466
    %v7468 = vand.u32 %v7467, 4294901760
    %7469 = vmatmul.mubr.f32.gmra.mrb[0].mxu0 %v7468
    %v7470 = vpop.f32.mrb[0].mxu0
    %v7471 = vadd.f32 %v7300, %v7470
    %v7472 = vpop.f32.mrb[0].mxu0
    %v7473 = vand.u32 %v6640, 4294901760
    %v7474 = vsub.f32 %v6640, %v7473
    %v7475 = vand.u32 %v7474, 4294901760
    %7476 = vmatprep.mubr.f32.mxu0 %v7475
    %v7477 = vand.u32 %v6639, 4294901760
    %v7478 = vsub.f32 %v6639, %v7477
    %v7479 = vand.u32 %v7478, 4294901760
    %7480 = vmatmul.mubr.f32.gmra.mrb[0].mxu0 %v7479
    %v7481 = vpop.f32.mrb[0].mxu0
    %v7482 = vadd.f32 %v7309, %v7481
    %v7483 = vpop.f32.mrb[0].mxu0
    %v7484 = vand.u32 %v6644, 4294901760
    %v7485 = vsub.f32 %v6644, %v7484
    %v7486 = vand.u32 %v7485, 4294901760
    %7487 = vmatprep.mubr.f32.mxu0 %v7486
    %v7488 = vand.u32 %v6643, 4294901760
    %v7489 = vsub.f32 %v6643, %v7488
    %v7490 = vand.u32 %v7489, 4294901760
    %7491 = vmatmul.mubr.f32.gmra.mrb[0].mxu0 %v7490
    %v7492 = vpop.f32.mrb[0].mxu0
    %v7493 = vadd.f32 %v7318, %v7492
    %v7494 = vpop.f32.mrb[0].mxu0
    %v7495 = vand.u32 %v6648, 4294901760
    %v7496 = vsub.f32 %v6648, %v7495
    %v7497 = vand.u32 %v7496, 4294901760
    %7498 = vmatprep.mubr.f32.mxu0 %v7497
    %v7499 = vand.u32 %v6647, 4294901760
    %v7500 = vsub.f32 %v6647, %v7499
    %v7501 = vand.u32 %v7500, 4294901760
    %7502 = vmatmul.mubr.f32.gmra.mrb[0].mxu0 %v7501
    %v7503 = vpop.f32.mrb[0].mxu0
    %v7504 = vadd.f32 %v7327, %v7503
    %v7505 = vpop.f32.mrb[0].mxu0
    %v7506 = vand.u32 %v6652, 4294901760
    %v7507 = vsub.f32 %v6652, %v7506
    %v7508 = vand.u32 %v7507, 4294901760
    %7509 = vmatprep.mubr.f32.mxu0 %v7508
    %v7510 = vand.u32 %v6651, 4294901760
    %v7511 = vsub.f32 %v6651, %v7510
    %v7512 = vand.u32 %v7511, 4294901760
    %7513 = vmatmul.mubr.f32.gmra.mrb[0].mxu0 %v7512
    %v7514 = vpop.f32.mrb[0].mxu0
    %v7515 = vadd.f32 %v7336, %v7514
    %v7516 = vpop.f32.mrb[0].mxu0
    %v7517 = vand.u32 %v6656, 4294901760
    %v7518 = vsub.f32 %v6656, %v7517
    %v7519 = vand.u32 %v7518, 4294901760
    %7520 = vmatprep.mubr.f32.mxu0 %v7519
    %v7521 = vand.u32 %v6655, 4294901760
    %v7522 = vsub.f32 %v6655, %v7521
    %v7523 = vand.u32 %v7522, 4294901760
    %7524 = vmatmul.mubr.f32.gmra.mrb[0].mxu0 %v7523
    %v7525 = vpop.f32.mrb[0].mxu0
    %v7526 = vadd.f32 %v7345, %v7525
    %v7527 = vpop.f32.mrb[0].mxu0
    %v7528 = vand.u32 %v6660, 4294901760
    %v7529 = vsub.f32 %v6660, %v7528
    %v7530 = vand.u32 %v7529, 4294901760
    %7531 = vmatprep.mubr.f32.mxu0 %v7530
    %v7532 = vand.u32 %v6659, 4294901760
    %v7533 = vsub.f32 %v6659, %v7532
    %v7534 = vand.u32 %v7533, 4294901760
    %7535 = vmatmul.mubr.f32.gmra.mrb[0].mxu0 %v7534
    %v7536 = vpop.f32.mrb[0].mxu0
    %v7537 = vadd.f32 %v7354, %v7536
    %v7538 = vpop.f32.mrb[0].mxu0
    %v7539 = vand.u32 %v6664, 4294901760
    %v7540 = vsub.f32 %v6664, %v7539
    %v7541 = vand.u32 %v7540, 4294901760
    %7542 = vmatprep.mubr.f32.mxu0 %v7541
    %v7543 = vand.u32 %v6663, 4294901760
    %v7544 = vsub.f32 %v6663, %v7543
    %v7545 = vand.u32 %v7544, 4294901760
    %7546 = vmatmul.mubr.f32.gmra.mrb[0].mxu0 %v7545
    %v7547 = vpop.f32.mrb[0].mxu0
    %v7548 = vadd.f32 %v7363, %v7547
    %v7549 = vpop.f32.mrb[0].mxu0
    %7550 = vdwg.mxu0
    %7551 = vmatprep.subr.mxu0 0.0
    %v7552 = vand.u32 %v131, 4294901760
    %v7553 = vsub.f32 %v131, %v7552
    %v7554 = vand.u32 %v7553, 4294901760
    %7555 = vmatpush1.msra.mxu0 %v7554
    %7556 = vmatprep.subr.mxu0 0.0
    %v7557 = vand.u32 %v132, 4294901760
    %v7558 = vsub.f32 %v132, %v7557
    %v7559 = vand.u32 %v7558, 4294901760
    %7560 = vmatpush1.msra.mxu0 %v7559
    %7561 = vmatprep.subr.mxu0 0.0
    %v7562 = vand.u32 %v133, 4294901760
    %v7563 = vsub.f32 %v133, %v7562
    %v7564 = vand.u32 %v7563, 4294901760
    %7565 = vmatpush1.msra.mxu0 %v7564
    %7566 = vmatprep.subr.mxu0 0.0
    %v7567 = vand.u32 %v134, 4294901760
    %v7568 = vsub.f32 %v134, %v7567
    %v7569 = vand.u32 %v7568, 4294901760
    %7570 = vmatpush1.msra.mxu0 %v7569
    %7571 = vmatprep.subr.mxu0 0.0
    %v7572 = vand.u32 %v135, 4294901760
    %v7573 = vsub.f32 %v135, %v7572
    %v7574 = vand.u32 %v7573, 4294901760
    %7575 = vmatpush1.msra.mxu0 %v7574
    %7576 = vmatprep.subr.mxu0 0.0
    %v7577 = vand.u32 %v136, 4294901760
    %v7578 = vsub.f32 %v136, %v7577
    %v7579 = vand.u32 %v7578, 4294901760
    %7580 = vmatpush1.msra.mxu0 %v7579
    %7581 = vmatprep.subr.mxu0 0.0
    %v7582 = vand.u32 %v137, 4294901760
    %v7583 = vsub.f32 %v137, %v7582
    %v7584 = vand.u32 %v7583, 4294901760
    %7585 = vmatpush1.msra.mxu0 %v7584
    %7586 = vmatprep.subr.mxu0 0.0
    %v7587 = vand.u32 %v138, 4294901760
    %v7588 = vsub.f32 %v138, %v7587
    %v7589 = vand.u32 %v7588, 4294901760
    %7590 = vmatpush1.msra.mxu0 %v7589
    %7591 = vmatprep.subr.mxu0 0.0
    %v7592 = vand.u32 %v139, 4294901760
    %v7593 = vsub.f32 %v139, %v7592
    %v7594 = vand.u32 %v7593, 4294901760
    %7595 = vmatpush1.msra.mxu0 %v7594
    %7596 = vmatprep.subr.mxu0 0.0
    %v7597 = vand.u32 %v140, 4294901760
    %v7598 = vsub.f32 %v140, %v7597
    %v7599 = vand.u32 %v7598, 4294901760
    %7600 = vmatpush1.msra.mxu0 %v7599
    %7601 = vmatprep.subr.mxu0 0.0
    %v7602 = vand.u32 %v141, 4294901760
    %v7603 = vsub.f32 %v141, %v7602
    %v7604 = vand.u32 %v7603, 4294901760
    %7605 = vmatpush1.msra.mxu0 %v7604
    %7606 = vmatprep.subr.mxu0 0.0
    %v7607 = vand.u32 %v142, 4294901760
    %v7608 = vsub.f32 %v142, %v7607
    %v7609 = vand.u32 %v7608, 4294901760
    %7610 = vmatpush1.msra.mxu0 %v7609
    %7611 = vmatprep.subr.mxu0 0.0
    %v7612 = vand.u32 %v143, 4294901760
    %v7613 = vsub.f32 %v143, %v7612
    %v7614 = vand.u32 %v7613, 4294901760
    %7615 = vmatpush1.msra.mxu0 %v7614
    %7616 = vmatprep.subr.mxu0 0.0
    %v7617 = vand.u32 %v144, 4294901760
    %v7618 = vsub.f32 %v144, %v7617
    %v7619 = vand.u32 %v7618, 4294901760
    %7620 = vmatpush1.msra.mxu0 %v7619
    %7621 = vmatprep.subr.mxu0 0.0
    %v7622 = vand.u32 %v145, 4294901760
    %v7623 = vsub.f32 %v145, %v7622
    %v7624 = vand.u32 %v7623, 4294901760
    %7625 = vmatpush1.msra.mxu0 %v7624
    %7626 = vmatprep.subr.mxu0 0.0
    %v7627 = vand.u32 %v146, 4294901760
    %v7628 = vsub.f32 %v146, %v7627
    %v7629 = vand.u32 %v7628, 4294901760
    %7630 = vmatpush1.msra.mxu0 %v7629
    %7631 = vmatprep.subr.mxu0 0.0
    %v7632 = vand.u32 %v147, 4294901760
    %v7633 = vsub.f32 %v147, %v7632
    %v7634 = vand.u32 %v7633, 4294901760
    %7635 = vmatpush1.msra.mxu0 %v7634
    %7636 = vmatprep.subr.mxu0 0.0
    %v7637 = vand.u32 %v148, 4294901760
    %v7638 = vsub.f32 %v148, %v7637
    %v7639 = vand.u32 %v7638, 4294901760
    %7640 = vmatpush1.msra.mxu0 %v7639
    %7641 = vmatprep.subr.mxu0 0.0
    %v7642 = vand.u32 %v149, 4294901760
    %v7643 = vsub.f32 %v149, %v7642
    %v7644 = vand.u32 %v7643, 4294901760
    %7645 = vmatpush1.msra.mxu0 %v7644
    %7646 = vmatprep.subr.mxu0 0.0
    %v7647 = vand.u32 %v150, 4294901760
    %v7648 = vsub.f32 %v150, %v7647
    %v7649 = vand.u32 %v7648, 4294901760
    %7650 = vmatpush1.msra.mxu0 %v7649
    %7651 = vmatprep.subr.mxu0 0.0
    %v7652 = vand.u32 %v151, 4294901760
    %v7653 = vsub.f32 %v151, %v7652
    %v7654 = vand.u32 %v7653, 4294901760
    %7655 = vmatpush1.msra.mxu0 %v7654
    %7656 = vmatprep.subr.mxu0 0.0
    %v7657 = vand.u32 %v152, 4294901760
    %v7658 = vsub.f32 %v152, %v7657
    %v7659 = vand.u32 %v7658, 4294901760
    %7660 = vmatpush1.msra.mxu0 %v7659
    %7661 = vmatprep.subr.mxu0 0.0
    %v7662 = vand.u32 %v153, 4294901760
    %v7663 = vsub.f32 %v153, %v7662
    %v7664 = vand.u32 %v7663, 4294901760
    %7665 = vmatpush1.msra.mxu0 %v7664
    %7666 = vmatprep.subr.mxu0 0.0
    %v7667 = vand.u32 %v154, 4294901760
    %v7668 = vsub.f32 %v154, %v7667
    %v7669 = vand.u32 %v7668, 4294901760
    %7670 = vmatpush1.msra.mxu0 %v7669
    %7671 = vmatprep.subr.mxu0 0.0
    %v7672 = vand.u32 %v155, 4294901760
    %v7673 = vsub.f32 %v155, %v7672
    %v7674 = vand.u32 %v7673, 4294901760
    %7675 = vmatpush1.msra.mxu0 %v7674
    %7676 = vmatprep.subr.mxu0 0.0
    %v7677 = vand.u32 %v156, 4294901760
    %v7678 = vsub.f32 %v156, %v7677
    %v7679 = vand.u32 %v7678, 4294901760
    %7680 = vmatpush1.msra.mxu0 %v7679
    %7681 = vmatprep.subr.mxu0 0.0
    %v7682 = vand.u32 %v157, 4294901760
    %v7683 = vsub.f32 %v157, %v7682
    %v7684 = vand.u32 %v7683, 4294901760
    %7685 = vmatpush1.msra.mxu0 %v7684
    %7686 = vmatprep.subr.mxu0 0.0
    %v7687 = vand.u32 %v158, 4294901760
    %v7688 = vsub.f32 %v158, %v7687
    %v7689 = vand.u32 %v7688, 4294901760
    %7690 = vmatpush1.msra.mxu0 %v7689
    %7691 = vmatprep.subr.mxu0 0.0
    %v7692 = vand.u32 %v159, 4294901760
    %v7693 = vsub.f32 %v159, %v7692
    %v7694 = vand.u32 %v7693, 4294901760
    %7695 = vmatpush1.msra.mxu0 %v7694
    %7696 = vmatprep.subr.mxu0 0.0
    %v7697 = vand.u32 %v160, 4294901760
    %v7698 = vsub.f32 %v160, %v7697
    %v7699 = vand.u32 %v7698, 4294901760
    %7700 = vmatpush1.msra.mxu0 %v7699
    %7701 = vmatprep.subr.mxu0 0.0
    %v7702 = vand.u32 %v161, 4294901760
    %v7703 = vsub.f32 %v161, %v7702
    %v7704 = vand.u32 %v7703, 4294901760
    %7705 = vmatpush1.msra.mxu0 %v7704
    %7706 = vmatprep.subr.mxu0 0.0
    %v7707 = vand.u32 %v162, 4294901760
    %v7708 = vsub.f32 %v162, %v7707
    %v7709 = vand.u32 %v7708, 4294901760
    %7710 = vmatpush1.msra.mxu0 %v7709
    %v7711 = vand.u32 %v6636, 4294901760
    %7712 = vmatprep.mubr.f32.mxu0 %v7711
    %v7713 = vand.u32 %v6635, 4294901760
    %7714 = vmatmul.mubr.f32.gmra.mrb[0].mxu0 %v7713
    %v7715 = vpop.f32.mrb[0].mxu0
    %v7716 = vadd.f32 %v7471, %v7715
    %v7717 = vpop.f32.mrb[0].mxu0
    %v7718 = vand.u32 %v6640, 4294901760
    %7719 = vmatprep.mubr.f32.mxu0 %v7718
    %v7720 = vand.u32 %v6639, 4294901760
    %7721 = vmatmul.mubr.f32.gmra.mrb[0].mxu0 %v7720
    %v7722 = vpop.f32.mrb[0].mxu0
    %v7723 = vadd.f32 %v7482, %v7722
    %v7724 = vpop.f32.mrb[0].mxu0
    %v7725 = vand.u32 %v6644, 4294901760
    %7726 = vmatprep.mubr.f32.mxu0 %v7725
    %v7727 = vand.u32 %v6643, 4294901760
    %7728 = vmatmul.mubr.f32.gmra.mrb[0].mxu0 %v7727
    %v7729 = vpop.f32.mrb[0].mxu0
    %v7730 = vadd.f32 %v7493, %v7729
    %v7731 = vpop.f32.mrb[0].mxu0
    %v7732 = vand.u32 %v6648, 4294901760
    %7733 = vmatprep.mubr.f32.mxu0 %v7732
    %v7734 = vand.u32 %v6647, 4294901760
    %7735 = vmatmul.mubr.f32.gmra.mrb[0].mxu0 %v7734
    %v7736 = vpop.f32.mrb[0].mxu0
    %v7737 = vadd.f32 %v7504, %v7736
    %v7738 = vpop.f32.mrb[0].mxu0
    %v7739 = vand.u32 %v6652, 4294901760
    %7740 = vmatprep.mubr.f32.mxu0 %v7739
    %v7741 = vand.u32 %v6651, 4294901760
    %7742 = vmatmul.mubr.f32.gmra.mrb[0].mxu0 %v7741
    %v7743 = vpop.f32.mrb[0].mxu0
    %v7744 = vadd.f32 %v7515, %v7743
    %v7745 = vpop.f32.mrb[0].mxu0
    %v7746 = vand.u32 %v6656, 4294901760
    %7747 = vmatprep.mubr.f32.mxu0 %v7746
    %v7748 = vand.u32 %v6655, 4294901760
    %7749 = vmatmul.mubr.f32.gmra.mrb[0].mxu0 %v7748
    %v7750 = vpop.f32.mrb[0].mxu0
    %v7751 = vadd.f32 %v7526, %v7750
    %v7752 = vpop.f32.mrb[0].mxu0
    %v7753 = vand.u32 %v6660, 4294901760
    %7754 = vmatprep.mubr.f32.mxu0 %v7753
    %v7755 = vand.u32 %v6659, 4294901760
    %7756 = vmatmul.mubr.f32.gmra.mrb[0].mxu0 %v7755
    %v7757 = vpop.f32.mrb[0].mxu0
    %v7758 = vadd.f32 %v7537, %v7757
    %v7759 = vpop.f32.mrb[0].mxu0
    %v7760 = vand.u32 %v6664, 4294901760
    %7761 = vmatprep.mubr.f32.mxu0 %v7760
    %v7762 = vand.u32 %v6663, 4294901760
    %7763 = vmatmul.mubr.f32.gmra.mrb[0].mxu0 %v7762
    %v7764 = vpop.f32.mrb[0].mxu0
    %v7765 = vadd.f32 %v7548, %v7764
    %v7766 = vpop.f32.mrb[0].mxu0
    %7767 = vdwg.mxu0
    %7768 = vmatprep.subr.mxu0 0.0
    %v7769 = vand.u32 %v131, 4294901760
    %7770 = vmatpush1.msra.mxu0 %v7769
    %7771 = vmatprep.subr.mxu0 0.0
    %v7772 = vand.u32 %v132, 4294901760
    %7773 = vmatpush1.msra.mxu0 %v7772
    %7774 = vmatprep.subr.mxu0 0.0
    %v7775 = vand.u32 %v133, 4294901760
    %7776 = vmatpush1.msra.mxu0 %v7775
    %7777 = vmatprep.subr.mxu0 0.0
    %v7778 = vand.u32 %v134, 4294901760
    %7779 = vmatpush1.msra.mxu0 %v7778
    %7780 = vmatprep.subr.mxu0 0.0
    %v7781 = vand.u32 %v135, 4294901760
    %7782 = vmatpush1.msra.mxu0 %v7781
    %7783 = vmatprep.subr.mxu0 0.0
    %v7784 = vand.u32 %v136, 4294901760
    %7785 = vmatpush1.msra.mxu0 %v7784
    %7786 = vmatprep.subr.mxu0 0.0
    %v7787 = vand.u32 %v137, 4294901760
    %7788 = vmatpush1.msra.mxu0 %v7787
    %7789 = vmatprep.subr.mxu0 0.0
    %v7790 = vand.u32 %v138, 4294901760
    %7791 = vmatpush1.msra.mxu0 %v7790
    %7792 = vmatprep.subr.mxu0 0.0
    %v7793 = vand.u32 %v139, 4294901760
    %7794 = vmatpush1.msra.mxu0 %v7793
    %7795 = vmatprep.subr.mxu0 0.0
    %v7796 = vand.u32 %v140, 4294901760
    %7797 = vmatpush1.msra.mxu0 %v7796
    %7798 = vmatprep.subr.mxu0 0.0
    %v7799 = vand.u32 %v141, 4294901760
    %7800 = vmatpush1.msra.mxu0 %v7799
    %7801 = vmatprep.subr.mxu0 0.0
    %v7802 = vand.u32 %v142, 4294901760
    %7803 = vmatpush1.msra.mxu0 %v7802
    %7804 = vmatprep.subr.mxu0 0.0
    %v7805 = vand.u32 %v143, 4294901760
    %7806 = vmatpush1.msra.mxu0 %v7805
    %7807 = vmatprep.subr.mxu0 0.0
    %v7808 = vand.u32 %v144, 4294901760
    %7809 = vmatpush1.msra.mxu0 %v7808
    %7810 = vmatprep.subr.mxu0 0.0
    %v7811 = vand.u32 %v145, 4294901760
    %7812 = vmatpush1.msra.mxu0 %v7811
    %7813 = vmatprep.subr.mxu0 0.0
    %v7814 = vand.u32 %v146, 4294901760
    %7815 = vmatpush1.msra.mxu0 %v7814
    %7816 = vmatprep.subr.mxu0 0.0
    %v7817 = vand.u32 %v147, 4294901760
    %7818 = vmatpush1.msra.mxu0 %v7817
    %7819 = vmatprep.subr.mxu0 0.0
    %v7820 = vand.u32 %v148, 4294901760
    %7821 = vmatpush1.msra.mxu0 %v7820
    %7822 = vmatprep.subr.mxu0 0.0
    %v7823 = vand.u32 %v149, 4294901760
    %7824 = vmatpush1.msra.mxu0 %v7823
    %7825 = vmatprep.subr.mxu0 0.0
    %v7826 = vand.u32 %v150, 4294901760
    %7827 = vmatpush1.msra.mxu0 %v7826
    %7828 = vmatprep.subr.mxu0 0.0
    %v7829 = vand.u32 %v151, 4294901760
    %7830 = vmatpush1.msra.mxu0 %v7829
    %7831 = vmatprep.subr.mxu0 0.0
    %v7832 = vand.u32 %v152, 4294901760
    %7833 = vmatpush1.msra.mxu0 %v7832
    %7834 = vmatprep.subr.mxu0 0.0
    %v7835 = vand.u32 %v153, 4294901760
    %7836 = vmatpush1.msra.mxu0 %v7835
    %7837 = vmatprep.subr.mxu0 0.0
    %v7838 = vand.u32 %v154, 4294901760
    %7839 = vmatpush1.msra.mxu0 %v7838
    %7840 = vmatprep.subr.mxu0 0.0
    %v7841 = vand.u32 %v155, 4294901760
    %7842 = vmatpush1.msra.mxu0 %v7841
    %7843 = vmatprep.subr.mxu0 0.0
    %v7844 = vand.u32 %v156, 4294901760
    %7845 = vmatpush1.msra.mxu0 %v7844
    %7846 = vmatprep.subr.mxu0 0.0
    %v7847 = vand.u32 %v157, 4294901760
    %7848 = vmatpush1.msra.mxu0 %v7847
    %7849 = vmatprep.subr.mxu0 0.0
    %v7850 = vand.u32 %v158, 4294901760
    %7851 = vmatpush1.msra.mxu0 %v7850
    %7852 = vmatprep.subr.mxu0 0.0
    %v7853 = vand.u32 %v159, 4294901760
    %7854 = vmatpush1.msra.mxu0 %v7853
    %7855 = vmatprep.subr.mxu0 0.0
    %v7856 = vand.u32 %v160, 4294901760
    %7857 = vmatpush1.msra.mxu0 %v7856
    %7858 = vmatprep.subr.mxu0 0.0
    %v7859 = vand.u32 %v161, 4294901760
    %7860 = vmatpush1.msra.mxu0 %v7859
    %7861 = vmatprep.subr.mxu0 0.0
    %v7862 = vand.u32 %v162, 4294901760
    %7863 = vmatpush1.msra.mxu0 %v7862
    %v7864 = vand.u32 %v6636, 4294901760
    %7865 = vmatprep.mubr.f32.mxu0 %v7864
    %v7866 = vand.u32 %v6635, 4294901760
    %7867 = vmatmul.mubr.f32.gmra.mrb[0].mxu0 %v7866
    %v7868 = vpop.f32.mrb[0].mxu0
    %v7869 = vadd.f32 %v7716, %v7868
    %v7870 = vpop.f32.mrb[0].mxu0
    %v7871 = vand.u32 %v6640, 4294901760
    %7872 = vmatprep.mubr.f32.mxu0 %v7871
    %v7873 = vand.u32 %v6639, 4294901760
    %7874 = vmatmul.mubr.f32.gmra.mrb[0].mxu0 %v7873
    %v7875 = vpop.f32.mrb[0].mxu0
    %v7876 = vadd.f32 %v7723, %v7875
    %v7877 = vpop.f32.mrb[0].mxu0
    %v7878 = vand.u32 %v6644, 4294901760
    %7879 = vmatprep.mubr.f32.mxu0 %v7878
    %v7880 = vand.u32 %v6643, 4294901760
    %7881 = vmatmul.mubr.f32.gmra.mrb[0].mxu0 %v7880
    %v7882 = vpop.f32.mrb[0].mxu0
    %v7883 = vadd.f32 %v7730, %v7882
    %v7884 = vpop.f32.mrb[0].mxu0
    %v7885 = vand.u32 %v6648, 4294901760
    %7886 = vmatprep.mubr.f32.mxu0 %v7885
    %v7887 = vand.u32 %v6647, 4294901760
    %7888 = vmatmul.mubr.f32.gmra.mrb[0].mxu0 %v7887
    %v7889 = vpop.f32.mrb[0].mxu0
    %v7890 = vadd.f32 %v7737, %v7889
    %v7891 = vpop.f32.mrb[0].mxu0
    %v7892 = vand.u32 %v6652, 4294901760
    %7893 = vmatprep.mubr.f32.mxu0 %v7892
    %v7894 = vand.u32 %v6651, 4294901760
    %7895 = vmatmul.mubr.f32.gmra.mrb[0].mxu0 %v7894
    %v7896 = vpop.f32.mrb[0].mxu0
    %v7897 = vadd.f32 %v7744, %v7896
    %v7898 = vpop.f32.mrb[0].mxu0
    %v7899 = vand.u32 %v6656, 4294901760
    %7900 = vmatprep.mubr.f32.mxu0 %v7899
    %v7901 = vand.u32 %v6655, 4294901760
    %7902 = vmatmul.mubr.f32.gmra.mrb[0].mxu0 %v7901
    %v7903 = vpop.f32.mrb[0].mxu0
    %v7904 = vadd.f32 %v7751, %v7903
    %v7905 = vpop.f32.mrb[0].mxu0
    %v7906 = vand.u32 %v6660, 4294901760
    %7907 = vmatprep.mubr.f32.mxu0 %v7906
    %v7908 = vand.u32 %v6659, 4294901760
    %7909 = vmatmul.mubr.f32.gmra.mrb[0].mxu0 %v7908
    %v7910 = vpop.f32.mrb[0].mxu0
    %v7911 = vadd.f32 %v7758, %v7910
    %v7912 = vpop.f32.mrb[0].mxu0
    %v7913 = vand.u32 %v6664, 4294901760
    %7914 = vmatprep.mubr.f32.mxu0 %v7913
    %v7915 = vand.u32 %v6663, 4294901760
    %7916 = vmatmul.mubr.f32.gmra.mrb[0].mxu0 %v7915
    %v7917 = vpop.f32.mrb[0].mxu0
    %v7918 = vadd.f32 %v7765, %v7917
    %v7919 = vpop.f32.mrb[0].mxu0
    %7920 = vdwg.mxu0
    %7921 = vmatprep.subr.mxu0 0.0
    %v7922 = vand.u32 %v163, 4294901760
    %7923 = vmatpush1.msra.mxu0 %v7922
    %7924 = vmatprep.subr.mxu0 0.0
    %v7925 = vand.u32 %v164, 4294901760
    %7926 = vmatpush1.msra.mxu0 %v7925
    %7927 = vmatprep.subr.mxu0 0.0
    %v7928 = vand.u32 %v165, 4294901760
    %7929 = vmatpush1.msra.mxu0 %v7928
    %7930 = vmatprep.subr.mxu0 0.0
    %v7931 = vand.u32 %v166, 4294901760
    %7932 = vmatpush1.msra.mxu0 %v7931
    %7933 = vmatprep.subr.mxu0 0.0
    %v7934 = vand.u32 %v167, 4294901760
    %7935 = vmatpush1.msra.mxu0 %v7934
    %7936 = vmatprep.subr.mxu0 0.0
    %v7937 = vand.u32 %v168, 4294901760
    %7938 = vmatpush1.msra.mxu0 %v7937
    %7939 = vmatprep.subr.mxu0 0.0
    %v7940 = vand.u32 %v169, 4294901760
    %7941 = vmatpush1.msra.mxu0 %v7940
    %7942 = vmatprep.subr.mxu0 0.0
    %v7943 = vand.u32 %v170, 4294901760
    %7944 = vmatpush1.msra.mxu0 %v7943
    %7945 = vmatprep.subr.mxu0 0.0
    %v7946 = vand.u32 %v171, 4294901760
    %7947 = vmatpush1.msra.mxu0 %v7946
    %7948 = vmatprep.subr.mxu0 0.0
    %v7949 = vand.u32 %v172, 4294901760
    %7950 = vmatpush1.msra.mxu0 %v7949
    %7951 = vmatprep.subr.mxu0 0.0
    %v7952 = vand.u32 %v173, 4294901760
    %7953 = vmatpush1.msra.mxu0 %v7952
    %7954 = vmatprep.subr.mxu0 0.0
    %v7955 = vand.u32 %v174, 4294901760
    %7956 = vmatpush1.msra.mxu0 %v7955
    %7957 = vmatprep.subr.mxu0 0.0
    %v7958 = vand.u32 %v175, 4294901760
    %7959 = vmatpush1.msra.mxu0 %v7958
    %7960 = vmatprep.subr.mxu0 0.0
    %v7961 = vand.u32 %v176, 4294901760
    %7962 = vmatpush1.msra.mxu0 %v7961
    %7963 = vmatprep.subr.mxu0 0.0
    %v7964 = vand.u32 %v177, 4294901760
    %7965 = vmatpush1.msra.mxu0 %v7964
    %7966 = vmatprep.subr.mxu0 0.0
    %v7967 = vand.u32 %v178, 4294901760
    %7968 = vmatpush1.msra.mxu0 %v7967
    %7969 = vmatprep.subr.mxu0 0.0
    %v7970 = vand.u32 %v179, 4294901760
    %7971 = vmatpush1.msra.mxu0 %v7970
    %7972 = vmatprep.subr.mxu0 0.0
    %v7973 = vand.u32 %v180, 4294901760
    %7974 = vmatpush1.msra.mxu0 %v7973
    %7975 = vmatprep.subr.mxu0 0.0
    %v7976 = vand.u32 %v181, 4294901760
    %7977 = vmatpush1.msra.mxu0 %v7976
    %7978 = vmatprep.subr.mxu0 0.0
    %v7979 = vand.u32 %v182, 4294901760
    %7980 = vmatpush1.msra.mxu0 %v7979
    %7981 = vmatprep.subr.mxu0 0.0
    %v7982 = vand.u32 %v183, 4294901760
    %7983 = vmatpush1.msra.mxu0 %v7982
    %7984 = vmatprep.subr.mxu0 0.0
    %v7985 = vand.u32 %v184, 4294901760
    %7986 = vmatpush1.msra.mxu0 %v7985
    %7987 = vmatprep.subr.mxu0 0.0
    %v7988 = vand.u32 %v185, 4294901760
    %7989 = vmatpush1.msra.mxu0 %v7988
    %7990 = vmatprep.subr.mxu0 0.0
    %v7991 = vand.u32 %v186, 4294901760
    %7992 = vmatpush1.msra.mxu0 %v7991
    %7993 = vmatprep.subr.mxu0 0.0
    %v7994 = vand.u32 %v187, 4294901760
    %7995 = vmatpush1.msra.mxu0 %v7994
    %7996 = vmatprep.subr.mxu0 0.0
    %v7997 = vand.u32 %v188, 4294901760
    %7998 = vmatpush1.msra.mxu0 %v7997
    %7999 = vmatprep.subr.mxu0 0.0
    %v8000 = vand.u32 %v189, 4294901760
    %8001 = vmatpush1.msra.mxu0 %v8000
    %8002 = vmatprep.subr.mxu0 0.0
    %v8003 = vand.u32 %v190, 4294901760
    %8004 = vmatpush1.msra.mxu0 %v8003
    %8005 = vmatprep.subr.mxu0 0.0
    %v8006 = vand.u32 %v191, 4294901760
    %8007 = vmatpush1.msra.mxu0 %v8006
    %8008 = vmatprep.subr.mxu0 0.0
    %v8009 = vand.u32 %v192, 4294901760
    %8010 = vmatpush1.msra.mxu0 %v8009
    %8011 = vmatprep.subr.mxu0 0.0
    %v8012 = vand.u32 %v193, 4294901760
    %8013 = vmatpush1.msra.mxu0 %v8012
    %8014 = vmatprep.subr.mxu0 0.0
    %v8015 = vand.u32 %v194, 4294901760
    %8016 = vmatpush1.msra.mxu0 %v8015
    %v8017 = vand.u32 %v6638, 4294901760
    %v8018 = vsub.f32 %v6638, %v8017
    %v8019 = vand.u32 %v8018, 4294901760
    %v8020 = vsub.f32 %v8018, %v8019
    %v8021 = vand.u32 %v8020, 4294901760
    %8022 = vmatprep.mubr.f32.mxu0 %v8021
    %v8023 = vand.u32 %v6637, 4294901760
    %v8024 = vsub.f32 %v6637, %v8023
    %v8025 = vand.u32 %v8024, 4294901760
    %v8026 = vsub.f32 %v8024, %v8025
    %v8027 = vand.u32 %v8026, 4294901760
    %8028 = vmatmul.mubr.f32.gmra.mrb[0].mxu0 %v8027
    %v8029 = vpop.f32.mrb[0].mxu0
    %v8030 = vadd.f32 %v7869, %v8029
    %v8031 = vpop.f32.mrb[0].mxu0
    %v8032 = vand.u32 %v6642, 4294901760
    %v8033 = vsub.f32 %v6642, %v8032
    %v8034 = vand.u32 %v8033, 4294901760
    %v8035 = vsub.f32 %v8033, %v8034
    %v8036 = vand.u32 %v8035, 4294901760
    %8037 = vmatprep.mubr.f32.mxu0 %v8036
    %v8038 = vand.u32 %v6641, 4294901760
    %v8039 = vsub.f32 %v6641, %v8038
    %v8040 = vand.u32 %v8039, 4294901760
    %v8041 = vsub.f32 %v8039, %v8040
    %v8042 = vand.u32 %v8041, 4294901760
    %8043 = vmatmul.mubr.f32.gmra.mrb[0].mxu0 %v8042
    %v8044 = vpop.f32.mrb[0].mxu0
    %v8045 = vadd.f32 %v7876, %v8044
    %v8046 = vpop.f32.mrb[0].mxu0
    %v8047 = vand.u32 %v6646, 4294901760
    %v8048 = vsub.f32 %v6646, %v8047
    %v8049 = vand.u32 %v8048, 4294901760
    %v8050 = vsub.f32 %v8048, %v8049
    %v8051 = vand.u32 %v8050, 4294901760
    %8052 = vmatprep.mubr.f32.mxu0 %v8051
    %v8053 = vand.u32 %v6645, 4294901760
    %v8054 = vsub.f32 %v6645, %v8053
    %v8055 = vand.u32 %v8054, 4294901760
    %v8056 = vsub.f32 %v8054, %v8055
    %v8057 = vand.u32 %v8056, 4294901760
    %8058 = vmatmul.mubr.f32.gmra.mrb[0].mxu0 %v8057
    %v8059 = vpop.f32.mrb[0].mxu0
    %v8060 = vadd.f32 %v7883, %v8059
    %v8061 = vpop.f32.mrb[0].mxu0
    %v8062 = vand.u32 %v6650, 4294901760
    %v8063 = vsub.f32 %v6650, %v8062
    %v8064 = vand.u32 %v8063, 4294901760
    %v8065 = vsub.f32 %v8063, %v8064
    %v8066 = vand.u32 %v8065, 4294901760
    %8067 = vmatprep.mubr.f32.mxu0 %v8066
    %v8068 = vand.u32 %v6649, 4294901760
    %v8069 = vsub.f32 %v6649, %v8068
    %v8070 = vand.u32 %v8069, 4294901760
    %v8071 = vsub.f32 %v8069, %v8070
    %v8072 = vand.u32 %v8071, 4294901760
    %8073 = vmatmul.mubr.f32.gmra.mrb[0].mxu0 %v8072
    %v8074 = vpop.f32.mrb[0].mxu0
    %v8075 = vadd.f32 %v7890, %v8074
    %v8076 = vpop.f32.mrb[0].mxu0
    %v8077 = vand.u32 %v6654, 4294901760
    %v8078 = vsub.f32 %v6654, %v8077
    %v8079 = vand.u32 %v8078, 4294901760
    %v8080 = vsub.f32 %v8078, %v8079
    %v8081 = vand.u32 %v8080, 4294901760
    %8082 = vmatprep.mubr.f32.mxu0 %v8081
    %v8083 = vand.u32 %v6653, 4294901760
    %v8084 = vsub.f32 %v6653, %v8083
    %v8085 = vand.u32 %v8084, 4294901760
    %v8086 = vsub.f32 %v8084, %v8085
    %v8087 = vand.u32 %v8086, 4294901760
    %8088 = vmatmul.mubr.f32.gmra.mrb[0].mxu0 %v8087
    %v8089 = vpop.f32.mrb[0].mxu0
    %v8090 = vadd.f32 %v7897, %v8089
    %v8091 = vpop.f32.mrb[0].mxu0
    %v8092 = vand.u32 %v6658, 4294901760
    %v8093 = vsub.f32 %v6658, %v8092
    %v8094 = vand.u32 %v8093, 4294901760
    %v8095 = vsub.f32 %v8093, %v8094
    %v8096 = vand.u32 %v8095, 4294901760
    %8097 = vmatprep.mubr.f32.mxu0 %v8096
    %v8098 = vand.u32 %v6657, 4294901760
    %v8099 = vsub.f32 %v6657, %v8098
    %v8100 = vand.u32 %v8099, 4294901760
    %v8101 = vsub.f32 %v8099, %v8100
    %v8102 = vand.u32 %v8101, 4294901760
    %8103 = vmatmul.mubr.f32.gmra.mrb[0].mxu0 %v8102
    %v8104 = vpop.f32.mrb[0].mxu0
    %v8105 = vadd.f32 %v7904, %v8104
    %v8106 = vpop.f32.mrb[0].mxu0
    %v8107 = vand.u32 %v6662, 4294901760
    %v8108 = vsub.f32 %v6662, %v8107
    %v8109 = vand.u32 %v8108, 4294901760
    %v8110 = vsub.f32 %v8108, %v8109
    %v8111 = vand.u32 %v8110, 4294901760
    %8112 = vmatprep.mubr.f32.mxu0 %v8111
    %v8113 = vand.u32 %v6661, 4294901760
    %v8114 = vsub.f32 %v6661, %v8113
    %v8115 = vand.u32 %v8114, 4294901760
    %v8116 = vsub.f32 %v8114, %v8115
    %v8117 = vand.u32 %v8116, 4294901760
    %8118 = vmatmul.mubr.f32.gmra.mrb[0].mxu0 %v8117
    %v8119 = vpop.f32.mrb[0].mxu0
    %v8120 = vadd.f32 %v7911, %v8119
    %v8121 = vpop.f32.mrb[0].mxu0
    %v8122 = vand.u32 %v6666, 4294901760
    %v8123 = vsub.f32 %v6666, %v8122
    %v8124 = vand.u32 %v8123, 4294901760
    %v8125 = vsub.f32 %v8123, %v8124
    %v8126 = vand.u32 %v8125, 4294901760
    %8127 = vmatprep.mubr.f32.mxu0 %v8126
    %v8128 = vand.u32 %v6665, 4294901760
    %v8129 = vsub.f32 %v6665, %v8128
    %v8130 = vand.u32 %v8129, 4294901760
    %v8131 = vsub.f32 %v8129, %v8130
    %v8132 = vand.u32 %v8131, 4294901760
    %8133 = vmatmul.mubr.f32.gmra.mrb[0].mxu0 %v8132
    %v8134 = vpop.f32.mrb[0].mxu0
    %v8135 = vadd.f32 %v7918, %v8134
    %v8136 = vpop.f32.mrb[0].mxu0
    %8137 = vdwg.mxu0
    %8138 = vmatprep.subr.mxu0 0.0
    %v8139 = vand.u32 %v163, 4294901760
    %v8140 = vsub.f32 %v163, %v8139
    %v8141 = vand.u32 %v8140, 4294901760
    %v8142 = vsub.f32 %v8140, %v8141
    %v8143 = vand.u32 %v8142, 4294901760
    %8144 = vmatpush1.msra.mxu0 %v8143
    %8145 = vmatprep.subr.mxu0 0.0
    %v8146 = vand.u32 %v164, 4294901760
    %v8147 = vsub.f32 %v164, %v8146
    %v8148 = vand.u32 %v8147, 4294901760
    %v8149 = vsub.f32 %v8147, %v8148
    %v8150 = vand.u32 %v8149, 4294901760
    %8151 = vmatpush1.msra.mxu0 %v8150
    %8152 = vmatprep.subr.mxu0 0.0
    %v8153 = vand.u32 %v165, 4294901760
    %v8154 = vsub.f32 %v165, %v8153
    %v8155 = vand.u32 %v8154, 4294901760
    %v8156 = vsub.f32 %v8154, %v8155
    %v8157 = vand.u32 %v8156, 4294901760
    %8158 = vmatpush1.msra.mxu0 %v8157
    %8159 = vmatprep.subr.mxu0 0.0
    %v8160 = vand.u32 %v166, 4294901760
    %v8161 = vsub.f32 %v166, %v8160
    %v8162 = vand.u32 %v8161, 4294901760
    %v8163 = vsub.f32 %v8161, %v8162
    %v8164 = vand.u32 %v8163, 4294901760
    %8165 = vmatpush1.msra.mxu0 %v8164
    %8166 = vmatprep.subr.mxu0 0.0
    %v8167 = vand.u32 %v167, 4294901760
    %v8168 = vsub.f32 %v167, %v8167
    %v8169 = vand.u32 %v8168, 4294901760
    %v8170 = vsub.f32 %v8168, %v8169
    %v8171 = vand.u32 %v8170, 4294901760
    %8172 = vmatpush1.msra.mxu0 %v8171
    %8173 = vmatprep.subr.mxu0 0.0
    %v8174 = vand.u32 %v168, 4294901760
    %v8175 = vsub.f32 %v168, %v8174
    %v8176 = vand.u32 %v8175, 4294901760
    %v8177 = vsub.f32 %v8175, %v8176
    %v8178 = vand.u32 %v8177, 4294901760
    %8179 = vmatpush1.msra.mxu0 %v8178
    %8180 = vmatprep.subr.mxu0 0.0
    %v8181 = vand.u32 %v169, 4294901760
    %v8182 = vsub.f32 %v169, %v8181
    %v8183 = vand.u32 %v8182, 4294901760
    %v8184 = vsub.f32 %v8182, %v8183
    %v8185 = vand.u32 %v8184, 4294901760
    %8186 = vmatpush1.msra.mxu0 %v8185
    %8187 = vmatprep.subr.mxu0 0.0
    %v8188 = vand.u32 %v170, 4294901760
    %v8189 = vsub.f32 %v170, %v8188
    %v8190 = vand.u32 %v8189, 4294901760
    %v8191 = vsub.f32 %v8189, %v8190
    %v8192 = vand.u32 %v8191, 4294901760
    %8193 = vmatpush1.msra.mxu0 %v8192
    %8194 = vmatprep.subr.mxu0 0.0
    %v8195 = vand.u32 %v171, 4294901760
    %v8196 = vsub.f32 %v171, %v8195
    %v8197 = vand.u32 %v8196, 4294901760
    %v8198 = vsub.f32 %v8196, %v8197
    %v8199 = vand.u32 %v8198, 4294901760
    %8200 = vmatpush1.msra.mxu0 %v8199
    %8201 = vmatprep.subr.mxu0 0.0
    %v8202 = vand.u32 %v172, 4294901760
    %v8203 = vsub.f32 %v172, %v8202
    %v8204 = vand.u32 %v8203, 4294901760
    %v8205 = vsub.f32 %v8203, %v8204
    %v8206 = vand.u32 %v8205, 4294901760
    %8207 = vmatpush1.msra.mxu0 %v8206
    %8208 = vmatprep.subr.mxu0 0.0
    %v8209 = vand.u32 %v173, 4294901760
    %v8210 = vsub.f32 %v173, %v8209
    %v8211 = vand.u32 %v8210, 4294901760
    %v8212 = vsub.f32 %v8210, %v8211
    %v8213 = vand.u32 %v8212, 4294901760
    %8214 = vmatpush1.msra.mxu0 %v8213
    %8215 = vmatprep.subr.mxu0 0.0
    %v8216 = vand.u32 %v174, 4294901760
    %v8217 = vsub.f32 %v174, %v8216
    %v8218 = vand.u32 %v8217, 4294901760
    %v8219 = vsub.f32 %v8217, %v8218
    %v8220 = vand.u32 %v8219, 4294901760
    %8221 = vmatpush1.msra.mxu0 %v8220
    %8222 = vmatprep.subr.mxu0 0.0
    %v8223 = vand.u32 %v175, 4294901760
    %v8224 = vsub.f32 %v175, %v8223
    %v8225 = vand.u32 %v8224, 4294901760
    %v8226 = vsub.f32 %v8224, %v8225
    %v8227 = vand.u32 %v8226, 4294901760
    %8228 = vmatpush1.msra.mxu0 %v8227
    %8229 = vmatprep.subr.mxu0 0.0
    %v8230 = vand.u32 %v176, 4294901760
    %v8231 = vsub.f32 %v176, %v8230
    %v8232 = vand.u32 %v8231, 4294901760
    %v8233 = vsub.f32 %v8231, %v8232
    %v8234 = vand.u32 %v8233, 4294901760
    %8235 = vmatpush1.msra.mxu0 %v8234
    %8236 = vmatprep.subr.mxu0 0.0
    %v8237 = vand.u32 %v177, 4294901760
    %v8238 = vsub.f32 %v177, %v8237
    %v8239 = vand.u32 %v8238, 4294901760
    %v8240 = vsub.f32 %v8238, %v8239
    %v8241 = vand.u32 %v8240, 4294901760
    %8242 = vmatpush1.msra.mxu0 %v8241
    %8243 = vmatprep.subr.mxu0 0.0
    %v8244 = vand.u32 %v178, 4294901760
    %v8245 = vsub.f32 %v178, %v8244
    %v8246 = vand.u32 %v8245, 4294901760
    %v8247 = vsub.f32 %v8245, %v8246
    %v8248 = vand.u32 %v8247, 4294901760
    %8249 = vmatpush1.msra.mxu0 %v8248
    %8250 = vmatprep.subr.mxu0 0.0
    %v8251 = vand.u32 %v179, 4294901760
    %v8252 = vsub.f32 %v179, %v8251
    %v8253 = vand.u32 %v8252, 4294901760
    %v8254 = vsub.f32 %v8252, %v8253
    %v8255 = vand.u32 %v8254, 4294901760
    %8256 = vmatpush1.msra.mxu0 %v8255
    %8257 = vmatprep.subr.mxu0 0.0
    %v8258 = vand.u32 %v180, 4294901760
    %v8259 = vsub.f32 %v180, %v8258
    %v8260 = vand.u32 %v8259, 4294901760
    %v8261 = vsub.f32 %v8259, %v8260
    %v8262 = vand.u32 %v8261, 4294901760
    %8263 = vmatpush1.msra.mxu0 %v8262
    %8264 = vmatprep.subr.mxu0 0.0
    %v8265 = vand.u32 %v181, 4294901760
    %v8266 = vsub.f32 %v181, %v8265
    %v8267 = vand.u32 %v8266, 4294901760
    %v8268 = vsub.f32 %v8266, %v8267
    %v8269 = vand.u32 %v8268, 4294901760
    %8270 = vmatpush1.msra.mxu0 %v8269
    %8271 = vmatprep.subr.mxu0 0.0
    %v8272 = vand.u32 %v182, 4294901760
    %v8273 = vsub.f32 %v182, %v8272
    %v8274 = vand.u32 %v8273, 4294901760
    %v8275 = vsub.f32 %v8273, %v8274
    %v8276 = vand.u32 %v8275, 4294901760
    %8277 = vmatpush1.msra.mxu0 %v8276
    %8278 = vmatprep.subr.mxu0 0.0
    %v8279 = vand.u32 %v183, 4294901760
    %v8280 = vsub.f32 %v183, %v8279
    %v8281 = vand.u32 %v8280, 4294901760
    %v8282 = vsub.f32 %v8280, %v8281
    %v8283 = vand.u32 %v8282, 4294901760
    %8284 = vmatpush1.msra.mxu0 %v8283
    %8285 = vmatprep.subr.mxu0 0.0
    %v8286 = vand.u32 %v184, 4294901760
    %v8287 = vsub.f32 %v184, %v8286
    %v8288 = vand.u32 %v8287, 4294901760
    %v8289 = vsub.f32 %v8287, %v8288
    %v8290 = vand.u32 %v8289, 4294901760
    %8291 = vmatpush1.msra.mxu0 %v8290
    %8292 = vmatprep.subr.mxu0 0.0
    %v8293 = vand.u32 %v185, 4294901760
    %v8294 = vsub.f32 %v185, %v8293
    %v8295 = vand.u32 %v8294, 4294901760
    %v8296 = vsub.f32 %v8294, %v8295
    %v8297 = vand.u32 %v8296, 4294901760
    %8298 = vmatpush1.msra.mxu0 %v8297
    %8299 = vmatprep.subr.mxu0 0.0
    %v8300 = vand.u32 %v186, 4294901760
    %v8301 = vsub.f32 %v186, %v8300
    %v8302 = vand.u32 %v8301, 4294901760
    %v8303 = vsub.f32 %v8301, %v8302
    %v8304 = vand.u32 %v8303, 4294901760
    %8305 = vmatpush1.msra.mxu0 %v8304
    %8306 = vmatprep.subr.mxu0 0.0
    %v8307 = vand.u32 %v187, 4294901760
    %v8308 = vsub.f32 %v187, %v8307
    %v8309 = vand.u32 %v8308, 4294901760
    %v8310 = vsub.f32 %v8308, %v8309
    %v8311 = vand.u32 %v8310, 4294901760
    %8312 = vmatpush1.msra.mxu0 %v8311
    %8313 = vmatprep.subr.mxu0 0.0
    %v8314 = vand.u32 %v188, 4294901760
    %v8315 = vsub.f32 %v188, %v8314
    %v8316 = vand.u32 %v8315, 4294901760
    %v8317 = vsub.f32 %v8315, %v8316
    %v8318 = vand.u32 %v8317, 4294901760
    %8319 = vmatpush1.msra.mxu0 %v8318
    %8320 = vmatprep.subr.mxu0 0.0
    %v8321 = vand.u32 %v189, 4294901760
    %v8322 = vsub.f32 %v189, %v8321
    %v8323 = vand.u32 %v8322, 4294901760
    %v8324 = vsub.f32 %v8322, %v8323
    %v8325 = vand.u32 %v8324, 4294901760
    %8326 = vmatpush1.msra.mxu0 %v8325
    %8327 = vmatprep.subr.mxu0 0.0
    %v8328 = vand.u32 %v190, 4294901760
    %v8329 = vsub.f32 %v190, %v8328
    %v8330 = vand.u32 %v8329, 4294901760
    %v8331 = vsub.f32 %v8329, %v8330
    %v8332 = vand.u32 %v8331, 4294901760
    %8333 = vmatpush1.msra.mxu0 %v8332
    %8334 = vmatprep.subr.mxu0 0.0
    %v8335 = vand.u32 %v191, 4294901760
    %v8336 = vsub.f32 %v191, %v8335
    %v8337 = vand.u32 %v8336, 4294901760
    %v8338 = vsub.f32 %v8336, %v8337
    %v8339 = vand.u32 %v8338, 4294901760
    %8340 = vmatpush1.msra.mxu0 %v8339
    %8341 = vmatprep.subr.mxu0 0.0
    %v8342 = vand.u32 %v192, 4294901760
    %v8343 = vsub.f32 %v192, %v8342
    %v8344 = vand.u32 %v8343, 4294901760
    %v8345 = vsub.f32 %v8343, %v8344
    %v8346 = vand.u32 %v8345, 4294901760
    %8347 = vmatpush1.msra.mxu0 %v8346
    %8348 = vmatprep.subr.mxu0 0.0
    %v8349 = vand.u32 %v193, 4294901760
    %v8350 = vsub.f32 %v193, %v8349
    %v8351 = vand.u32 %v8350, 4294901760
    %v8352 = vsub.f32 %v8350, %v8351
    %v8353 = vand.u32 %v8352, 4294901760
    %8354 = vmatpush1.msra.mxu0 %v8353
    %8355 = vmatprep.subr.mxu0 0.0
    %v8356 = vand.u32 %v194, 4294901760
    %v8357 = vsub.f32 %v194, %v8356
    %v8358 = vand.u32 %v8357, 4294901760
    %v8359 = vsub.f32 %v8357, %v8358
    %v8360 = vand.u32 %v8359, 4294901760
    %8361 = vmatpush1.msra.mxu0 %v8360
    %v8362 = vand.u32 %v6638, 4294901760
    %8363 = vmatprep.mubr.f32.mxu0 %v8362
    %v8364 = vand.u32 %v6637, 4294901760
    %8365 = vmatmul.mubr.f32.gmra.mrb[0].mxu0 %v8364
    %v8366 = vpop.f32.mrb[0].mxu0
    %v8367 = vadd.f32 %v8030, %v8366
    %v8368 = vpop.f32.mrb[0].mxu0
    %v8369 = vand.u32 %v6642, 4294901760
    %8370 = vmatprep.mubr.f32.mxu0 %v8369
    %v8371 = vand.u32 %v6641, 4294901760
    %8372 = vmatmul.mubr.f32.gmra.mrb[0].mxu0 %v8371
    %v8373 = vpop.f32.mrb[0].mxu0
    %v8374 = vadd.f32 %v8045, %v8373
    %v8375 = vpop.f32.mrb[0].mxu0
    %v8376 = vand.u32 %v6646, 4294901760
    %8377 = vmatprep.mubr.f32.mxu0 %v8376
    %v8378 = vand.u32 %v6645, 4294901760
    %8379 = vmatmul.mubr.f32.gmra.mrb[0].mxu0 %v8378
    %v8380 = vpop.f32.mrb[0].mxu0
    %v8381 = vadd.f32 %v8060, %v8380
    %v8382 = vpop.f32.mrb[0].mxu0
    %v8383 = vand.u32 %v6650, 4294901760
    %8384 = vmatprep.mubr.f32.mxu0 %v8383
    %v8385 = vand.u32 %v6649, 4294901760
    %8386 = vmatmul.mubr.f32.gmra.mrb[0].mxu0 %v8385
    %v8387 = vpop.f32.mrb[0].mxu0
    %v8388 = vadd.f32 %v8075, %v8387
    %v8389 = vpop.f32.mrb[0].mxu0
    %v8390 = vand.u32 %v6654, 4294901760
    %8391 = vmatprep.mubr.f32.mxu0 %v8390
    %v8392 = vand.u32 %v6653, 4294901760
    %8393 = vmatmul.mubr.f32.gmra.mrb[0].mxu0 %v8392
    %v8394 = vpop.f32.mrb[0].mxu0
    %v8395 = vadd.f32 %v8090, %v8394
    %v8396 = vpop.f32.mrb[0].mxu0
    %v8397 = vand.u32 %v6658, 4294901760
    %8398 = vmatprep.mubr.f32.mxu0 %v8397
    %v8399 = vand.u32 %v6657, 4294901760
    %8400 = vmatmul.mubr.f32.gmra.mrb[0].mxu0 %v8399
    %v8401 = vpop.f32.mrb[0].mxu0
    %v8402 = vadd.f32 %v8105, %v8401
    %v8403 = vpop.f32.mrb[0].mxu0
    %v8404 = vand.u32 %v6662, 4294901760
    %8405 = vmatprep.mubr.f32.mxu0 %v8404
    %v8406 = vand.u32 %v6661, 4294901760
    %8407 = vmatmul.mubr.f32.gmra.mrb[0].mxu0 %v8406
    %v8408 = vpop.f32.mrb[0].mxu0
    %v8409 = vadd.f32 %v8120, %v8408
    %v8410 = vpop.f32.mrb[0].mxu0
    %v8411 = vand.u32 %v6666, 4294901760
    %8412 = vmatprep.mubr.f32.mxu0 %v8411
    %v8413 = vand.u32 %v6665, 4294901760
    %8414 = vmatmul.mubr.f32.gmra.mrb[0].mxu0 %v8413
    %v8415 = vpop.f32.mrb[0].mxu0
    %v8416 = vadd.f32 %v8135, %v8415
    %v8417 = vpop.f32.mrb[0].mxu0
    %8418 = vdwg.mxu0
    %8419 = vmatprep.subr.mxu0 0.0
    %v8420 = vand.u32 %v163, 4294901760
    %v8421 = vsub.f32 %v163, %v8420
    %8422 = vmatpush1.msra.mxu0 %v8421
    %8423 = vmatprep.subr.mxu0 0.0
    %v8424 = vand.u32 %v164, 4294901760
    %v8425 = vsub.f32 %v164, %v8424
    %8426 = vmatpush1.msra.mxu0 %v8425
    %8427 = vmatprep.subr.mxu0 0.0
    %v8428 = vand.u32 %v165, 4294901760
    %v8429 = vsub.f32 %v165, %v8428
    %8430 = vmatpush1.msra.mxu0 %v8429
    %8431 = vmatprep.subr.mxu0 0.0
    %v8432 = vand.u32 %v166, 4294901760
    %v8433 = vsub.f32 %v166, %v8432
    %8434 = vmatpush1.msra.mxu0 %v8433
    %8435 = vmatprep.subr.mxu0 0.0
    %v8436 = vand.u32 %v167, 4294901760
    %v8437 = vsub.f32 %v167, %v8436
    %8438 = vmatpush1.msra.mxu0 %v8437
    %8439 = vmatprep.subr.mxu0 0.0
    %v8440 = vand.u32 %v168, 4294901760
    %v8441 = vsub.f32 %v168, %v8440
    %8442 = vmatpush1.msra.mxu0 %v8441
    %8443 = vmatprep.subr.mxu0 0.0
    %v8444 = vand.u32 %v169, 4294901760
    %v8445 = vsub.f32 %v169, %v8444
    %8446 = vmatpush1.msra.mxu0 %v8445
    %8447 = vmatprep.subr.mxu0 0.0
    %v8448 = vand.u32 %v170, 4294901760
    %v8449 = vsub.f32 %v170, %v8448
    %8450 = vmatpush1.msra.mxu0 %v8449
    %8451 = vmatprep.subr.mxu0 0.0
    %v8452 = vand.u32 %v171, 4294901760
    %v8453 = vsub.f32 %v171, %v8452
    %8454 = vmatpush1.msra.mxu0 %v8453
    %8455 = vmatprep.subr.mxu0 0.0
    %v8456 = vand.u32 %v172, 4294901760
    %v8457 = vsub.f32 %v172, %v8456
    %8458 = vmatpush1.msra.mxu0 %v8457
    %8459 = vmatprep.subr.mxu0 0.0
    %v8460 = vand.u32 %v173, 4294901760
    %v8461 = vsub.f32 %v173, %v8460
    %8462 = vmatpush1.msra.mxu0 %v8461
    %8463 = vmatprep.subr.mxu0 0.0
    %v8464 = vand.u32 %v174, 4294901760
    %v8465 = vsub.f32 %v174, %v8464
    %8466 = vmatpush1.msra.mxu0 %v8465
    %8467 = vmatprep.subr.mxu0 0.0
    %v8468 = vand.u32 %v175, 4294901760
    %v8469 = vsub.f32 %v175, %v8468
    %8470 = vmatpush1.msra.mxu0 %v8469
    %8471 = vmatprep.subr.mxu0 0.0
    %v8472 = vand.u32 %v176, 4294901760
    %v8473 = vsub.f32 %v176, %v8472
    %8474 = vmatpush1.msra.mxu0 %v8473
    %8475 = vmatprep.subr.mxu0 0.0
    %v8476 = vand.u32 %v177, 4294901760
    %v8477 = vsub.f32 %v177, %v8476
    %8478 = vmatpush1.msra.mxu0 %v8477
    %8479 = vmatprep.subr.mxu0 0.0
    %v8480 = vand.u32 %v178, 4294901760
    %v8481 = vsub.f32 %v178, %v8480
    %8482 = vmatpush1.msra.mxu0 %v8481
    %8483 = vmatprep.subr.mxu0 0.0
    %v8484 = vand.u32 %v179, 4294901760
    %v8485 = vsub.f32 %v179, %v8484
    %8486 = vmatpush1.msra.mxu0 %v8485
    %8487 = vmatprep.subr.mxu0 0.0
    %v8488 = vand.u32 %v180, 4294901760
    %v8489 = vsub.f32 %v180, %v8488
    %8490 = vmatpush1.msra.mxu0 %v8489
    %8491 = vmatprep.subr.mxu0 0.0
    %v8492 = vand.u32 %v181, 4294901760
    %v8493 = vsub.f32 %v181, %v8492
    %8494 = vmatpush1.msra.mxu0 %v8493
    %8495 = vmatprep.subr.mxu0 0.0
    %v8496 = vand.u32 %v182, 4294901760
    %v8497 = vsub.f32 %v182, %v8496
    %8498 = vmatpush1.msra.mxu0 %v8497
    %8499 = vmatprep.subr.mxu0 0.0
    %v8500 = vand.u32 %v183, 4294901760
    %v8501 = vsub.f32 %v183, %v8500
    %8502 = vmatpush1.msra.mxu0 %v8501
    %8503 = vmatprep.subr.mxu0 0.0
    %v8504 = vand.u32 %v184, 4294901760
    %v8505 = vsub.f32 %v184, %v8504
    %8506 = vmatpush1.msra.mxu0 %v8505
    %8507 = vmatprep.subr.mxu0 0.0
    %v8508 = vand.u32 %v185, 4294901760
    %v8509 = vsub.f32 %v185, %v8508
    %8510 = vmatpush1.msra.mxu0 %v8509
    %8511 = vmatprep.subr.mxu0 0.0
    %v8512 = vand.u32 %v186, 4294901760
    %v8513 = vsub.f32 %v186, %v8512
    %8514 = vmatpush1.msra.mxu0 %v8513
    %8515 = vmatprep.subr.mxu0 0.0
    %v8516 = vand.u32 %v187, 4294901760
    %v8517 = vsub.f32 %v187, %v8516
    %8518 = vmatpush1.msra.mxu0 %v8517
    %8519 = vmatprep.subr.mxu0 0.0
    %v8520 = vand.u32 %v188, 4294901760
    %v8521 = vsub.f32 %v188, %v8520
    %8522 = vmatpush1.msra.mxu0 %v8521
    %8523 = vmatprep.subr.mxu0 0.0
    %v8524 = vand.u32 %v189, 4294901760
    %v8525 = vsub.f32 %v189, %v8524
    %8526 = vmatpush1.msra.mxu0 %v8525
    %8527 = vmatprep.subr.mxu0 0.0
    %v8528 = vand.u32 %v190, 4294901760
    %v8529 = vsub.f32 %v190, %v8528
    %8530 = vmatpush1.msra.mxu0 %v8529
    %8531 = vmatprep.subr.mxu0 0.0
    %v8532 = vand.u32 %v191, 4294901760
    %v8533 = vsub.f32 %v191, %v8532
    %8534 = vmatpush1.msra.mxu0 %v8533
    %8535 = vmatprep.subr.mxu0 0.0
    %v8536 = vand.u32 %v192, 4294901760
    %v8537 = vsub.f32 %v192, %v8536
    %8538 = vmatpush1.msra.mxu0 %v8537
    %8539 = vmatprep.subr.mxu0 0.0
    %v8540 = vand.u32 %v193, 4294901760
    %v8541 = vsub.f32 %v193, %v8540
    %8542 = vmatpush1.msra.mxu0 %v8541
    %8543 = vmatprep.subr.mxu0 0.0
    %v8544 = vand.u32 %v194, 4294901760
    %v8545 = vsub.f32 %v194, %v8544
    %8546 = vmatpush1.msra.mxu0 %v8545
    %v8547 = vand.u32 %v6638, 4294901760
    %v8548 = vsub.f32 %v6638, %v8547
    %8549 = vmatprep.mubr.f32.mxu0 %v8548
    %v8550 = vand.u32 %v6637, 4294901760
    %v8551 = vsub.f32 %v6637, %v8550
    %8552 = vmatmul.mubr.f32.gmra.mrb[0].mxu0 %v8551
    %v8553 = vpop.f32.mrb[0].mxu0
    %v8554 = vadd.f32 %v8367, %v8553
    %v8555 = vpop.f32.mrb[0].mxu0
    %v8556 = vand.u32 %v6642, 4294901760
    %v8557 = vsub.f32 %v6642, %v8556
    %8558 = vmatprep.mubr.f32.mxu0 %v8557
    %v8559 = vand.u32 %v6641, 4294901760
    %v8560 = vsub.f32 %v6641, %v8559
    %8561 = vmatmul.mubr.f32.gmra.mrb[0].mxu0 %v8560
    %v8562 = vpop.f32.mrb[0].mxu0
    %v8563 = vadd.f32 %v8374, %v8562
    %v8564 = vpop.f32.mrb[0].mxu0
    %v8565 = vand.u32 %v6646, 4294901760
    %v8566 = vsub.f32 %v6646, %v8565
    %8567 = vmatprep.mubr.f32.mxu0 %v8566
    %v8568 = vand.u32 %v6645, 4294901760
    %v8569 = vsub.f32 %v6645, %v8568
    %8570 = vmatmul.mubr.f32.gmra.mrb[0].mxu0 %v8569
    %v8571 = vpop.f32.mrb[0].mxu0
    %v8572 = vadd.f32 %v8381, %v8571
    %v8573 = vpop.f32.mrb[0].mxu0
    %v8574 = vand.u32 %v6650, 4294901760
    %v8575 = vsub.f32 %v6650, %v8574
    %8576 = vmatprep.mubr.f32.mxu0 %v8575
    %v8577 = vand.u32 %v6649, 4294901760
    %v8578 = vsub.f32 %v6649, %v8577
    %8579 = vmatmul.mubr.f32.gmra.mrb[0].mxu0 %v8578
    %v8580 = vpop.f32.mrb[0].mxu0
    %v8581 = vadd.f32 %v8388, %v8580
    %v8582 = vpop.f32.mrb[0].mxu0
    %v8583 = vand.u32 %v6654, 4294901760
    %v8584 = vsub.f32 %v6654, %v8583
    %8585 = vmatprep.mubr.f32.mxu0 %v8584
    %v8586 = vand.u32 %v6653, 4294901760
    %v8587 = vsub.f32 %v6653, %v8586
    %8588 = vmatmul.mubr.f32.gmra.mrb[0].mxu0 %v8587
    %v8589 = vpop.f32.mrb[0].mxu0
    %v8590 = vadd.f32 %v8395, %v8589
    %v8591 = vpop.f32.mrb[0].mxu0
    %v8592 = vand.u32 %v6658, 4294901760
    %v8593 = vsub.f32 %v6658, %v8592
    %8594 = vmatprep.mubr.f32.mxu0 %v8593
    %v8595 = vand.u32 %v6657, 4294901760
    %v8596 = vsub.f32 %v6657, %v8595
    %8597 = vmatmul.mubr.f32.gmra.mrb[0].mxu0 %v8596
    %v8598 = vpop.f32.mrb[0].mxu0
    %v8599 = vadd.f32 %v8402, %v8598
    %v8600 = vpop.f32.mrb[0].mxu0
    %v8601 = vand.u32 %v6662, 4294901760
    %v8602 = vsub.f32 %v6662, %v8601
    %8603 = vmatprep.mubr.f32.mxu0 %v8602
    %v8604 = vand.u32 %v6661, 4294901760
    %v8605 = vsub.f32 %v6661, %v8604
    %8606 = vmatmul.mubr.f32.gmra.mrb[0].mxu0 %v8605
    %v8607 = vpop.f32.mrb[0].mxu0
    %v8608 = vadd.f32 %v8409, %v8607
    %v8609 = vpop.f32.mrb[0].mxu0
    %v8610 = vand.u32 %v6666, 4294901760
    %v8611 = vsub.f32 %v6666, %v8610
    %8612 = vmatprep.mubr.f32.mxu0 %v8611
    %v8613 = vand.u32 %v6665, 4294901760
    %v8614 = vsub.f32 %v6665, %v8613
    %8615 = vmatmul.mubr.f32.gmra.mrb[0].mxu0 %v8614
    %v8616 = vpop.f32.mrb[0].mxu0
    %v8617 = vadd.f32 %v8416, %v8616
    %v8618 = vpop.f32.mrb[0].mxu0
    %8619 = vdwg.mxu0
    %8620 = vmatprep.subr.mxu0 0.0
    %v8621 = vand.u32 %v163, 4294901760
    %8622 = vmatpush1.msra.mxu0 %v8621
    %8623 = vmatprep.subr.mxu0 0.0
    %v8624 = vand.u32 %v164, 4294901760
    %8625 = vmatpush1.msra.mxu0 %v8624
    %8626 = vmatprep.subr.mxu0 0.0
    %v8627 = vand.u32 %v165, 4294901760
    %8628 = vmatpush1.msra.mxu0 %v8627
    %8629 = vmatprep.subr.mxu0 0.0
    %v8630 = vand.u32 %v166, 4294901760
    %8631 = vmatpush1.msra.mxu0 %v8630
    %8632 = vmatprep.subr.mxu0 0.0
    %v8633 = vand.u32 %v167, 4294901760
    %8634 = vmatpush1.msra.mxu0 %v8633
    %8635 = vmatprep.subr.mxu0 0.0
    %v8636 = vand.u32 %v168, 4294901760
    %8637 = vmatpush1.msra.mxu0 %v8636
    %8638 = vmatprep.subr.mxu0 0.0
    %v8639 = vand.u32 %v169, 4294901760
    %8640 = vmatpush1.msra.mxu0 %v8639
    %8641 = vmatprep.subr.mxu0 0.0
    %v8642 = vand.u32 %v170, 4294901760
    %8643 = vmatpush1.msra.mxu0 %v8642
    %8644 = vmatprep.subr.mxu0 0.0
    %v8645 = vand.u32 %v171, 4294901760
    %8646 = vmatpush1.msra.mxu0 %v8645
    %8647 = vmatprep.subr.mxu0 0.0
    %v8648 = vand.u32 %v172, 4294901760
    %8649 = vmatpush1.msra.mxu0 %v8648
    %8650 = vmatprep.subr.mxu0 0.0
    %v8651 = vand.u32 %v173, 4294901760
    %8652 = vmatpush1.msra.mxu0 %v8651
    %8653 = vmatprep.subr.mxu0 0.0
    %v8654 = vand.u32 %v174, 4294901760
    %8655 = vmatpush1.msra.mxu0 %v8654
    %8656 = vmatprep.subr.mxu0 0.0
    %v8657 = vand.u32 %v175, 4294901760
    %8658 = vmatpush1.msra.mxu0 %v8657
    %8659 = vmatprep.subr.mxu0 0.0
    %v8660 = vand.u32 %v176, 4294901760
    %8661 = vmatpush1.msra.mxu0 %v8660
    %8662 = vmatprep.subr.mxu0 0.0
    %v8663 = vand.u32 %v177, 4294901760
    %8664 = vmatpush1.msra.mxu0 %v8663
    %8665 = vmatprep.subr.mxu0 0.0
    %v8666 = vand.u32 %v178, 4294901760
    %8667 = vmatpush1.msra.mxu0 %v8666
    %8668 = vmatprep.subr.mxu0 0.0
    %v8669 = vand.u32 %v179, 4294901760
    %8670 = vmatpush1.msra.mxu0 %v8669
    %8671 = vmatprep.subr.mxu0 0.0
    %v8672 = vand.u32 %v180, 4294901760
    %8673 = vmatpush1.msra.mxu0 %v8672
    %8674 = vmatprep.subr.mxu0 0.0
    %v8675 = vand.u32 %v181, 4294901760
    %8676 = vmatpush1.msra.mxu0 %v8675
    %8677 = vmatprep.subr.mxu0 0.0
    %v8678 = vand.u32 %v182, 4294901760
    %8679 = vmatpush1.msra.mxu0 %v8678
    %8680 = vmatprep.subr.mxu0 0.0
    %v8681 = vand.u32 %v183, 4294901760
    %8682 = vmatpush1.msra.mxu0 %v8681
    %8683 = vmatprep.subr.mxu0 0.0
    %v8684 = vand.u32 %v184, 4294901760
    %8685 = vmatpush1.msra.mxu0 %v8684
    %8686 = vmatprep.subr.mxu0 0.0
    %v8687 = vand.u32 %v185, 4294901760
    %8688 = vmatpush1.msra.mxu0 %v8687
    %8689 = vmatprep.subr.mxu0 0.0
    %v8690 = vand.u32 %v186, 4294901760
    %8691 = vmatpush1.msra.mxu0 %v8690
    %8692 = vmatprep.subr.mxu0 0.0
    %v8693 = vand.u32 %v187, 4294901760
    %8694 = vmatpush1.msra.mxu0 %v8693
    %8695 = vmatprep.subr.mxu0 0.0
    %v8696 = vand.u32 %v188, 4294901760
    %8697 = vmatpush1.msra.mxu0 %v8696
    %8698 = vmatprep.subr.mxu0 0.0
    %v8699 = vand.u32 %v189, 4294901760
    %8700 = vmatpush1.msra.mxu0 %v8699
    %8701 = vmatprep.subr.mxu0 0.0
    %v8702 = vand.u32 %v190, 4294901760
    %8703 = vmatpush1.msra.mxu0 %v8702
    %8704 = vmatprep.subr.mxu0 0.0
    %v8705 = vand.u32 %v191, 4294901760
    %8706 = vmatpush1.msra.mxu0 %v8705
    %8707 = vmatprep.subr.mxu0 0.0
    %v8708 = vand.u32 %v192, 4294901760
    %8709 = vmatpush1.msra.mxu0 %v8708
    %8710 = vmatprep.subr.mxu0 0.0
    %v8711 = vand.u32 %v193, 4294901760
    %8712 = vmatpush1.msra.mxu0 %v8711
    %8713 = vmatprep.subr.mxu0 0.0
    %v8714 = vand.u32 %v194, 4294901760
    %8715 = vmatpush1.msra.mxu0 %v8714
    %v8716 = vand.u32 %v6638, 4294901760
    %v8717 = vsub.f32 %v6638, %v8716
    %v8718 = vand.u32 %v8717, 4294901760
    %8719 = vmatprep.mubr.f32.mxu0 %v8718
    %v8720 = vand.u32 %v6637, 4294901760
    %v8721 = vsub.f32 %v6637, %v8720
    %v8722 = vand.u32 %v8721, 4294901760
    %8723 = vmatmul.mubr.f32.gmra.mrb[0].mxu0 %v8722
    %v8724 = vpop.f32.mrb[0].mxu0
    %v8725 = vadd.f32 %v8554, %v8724
    %v8726 = vpop.f32.mrb[0].mxu0
    %v8727 = vand.u32 %v6642, 4294901760
    %v8728 = vsub.f32 %v6642, %v8727
    %v8729 = vand.u32 %v8728, 4294901760
    %8730 = vmatprep.mubr.f32.mxu0 %v8729
    %v8731 = vand.u32 %v6641, 4294901760
    %v8732 = vsub.f32 %v6641, %v8731
    %v8733 = vand.u32 %v8732, 4294901760
    %8734 = vmatmul.mubr.f32.gmra.mrb[0].mxu0 %v8733
    %v8735 = vpop.f32.mrb[0].mxu0
    %v8736 = vadd.f32 %v8563, %v8735
    %v8737 = vpop.f32.mrb[0].mxu0
    %v8738 = vand.u32 %v6646, 4294901760
    %v8739 = vsub.f32 %v6646, %v8738
    %v8740 = vand.u32 %v8739, 4294901760
    %8741 = vmatprep.mubr.f32.mxu0 %v8740
    %v8742 = vand.u32 %v6645, 4294901760
    %v8743 = vsub.f32 %v6645, %v8742
    %v8744 = vand.u32 %v8743, 4294901760
    %8745 = vmatmul.mubr.f32.gmra.mrb[0].mxu0 %v8744
    %v8746 = vpop.f32.mrb[0].mxu0
    %v8747 = vadd.f32 %v8572, %v8746
    %v8748 = vpop.f32.mrb[0].mxu0
    %v8749 = vand.u32 %v6650, 4294901760
    %v8750 = vsub.f32 %v6650, %v8749
    %v8751 = vand.u32 %v8750, 4294901760
    %8752 = vmatprep.mubr.f32.mxu0 %v8751
    %v8753 = vand.u32 %v6649, 4294901760
    %v8754 = vsub.f32 %v6649, %v8753
    %v8755 = vand.u32 %v8754, 4294901760
    %8756 = vmatmul.mubr.f32.gmra.mrb[0].mxu0 %v8755
    %v8757 = vpop.f32.mrb[0].mxu0
    %v8758 = vadd.f32 %v8581, %v8757
    %v8759 = vpop.f32.mrb[0].mxu0
    %v8760 = vand.u32 %v6654, 4294901760
    %v8761 = vsub.f32 %v6654, %v8760
    %v8762 = vand.u32 %v8761, 4294901760
    %8763 = vmatprep.mubr.f32.mxu0 %v8762
    %v8764 = vand.u32 %v6653, 4294901760
    %v8765 = vsub.f32 %v6653, %v8764
    %v8766 = vand.u32 %v8765, 4294901760
    %8767 = vmatmul.mubr.f32.gmra.mrb[0].mxu0 %v8766
    %v8768 = vpop.f32.mrb[0].mxu0
    %v8769 = vadd.f32 %v8590, %v8768
    %v8770 = vpop.f32.mrb[0].mxu0
    %v8771 = vand.u32 %v6658, 4294901760
    %v8772 = vsub.f32 %v6658, %v8771
    %v8773 = vand.u32 %v8772, 4294901760
    %8774 = vmatprep.mubr.f32.mxu0 %v8773
    %v8775 = vand.u32 %v6657, 4294901760
    %v8776 = vsub.f32 %v6657, %v8775
    %v8777 = vand.u32 %v8776, 4294901760
    %8778 = vmatmul.mubr.f32.gmra.mrb[0].mxu0 %v8777
    %v8779 = vpop.f32.mrb[0].mxu0
    %v8780 = vadd.f32 %v8599, %v8779
    %v8781 = vpop.f32.mrb[0].mxu0
    %v8782 = vand.u32 %v6662, 4294901760
    %v8783 = vsub.f32 %v6662, %v8782
    %v8784 = vand.u32 %v8783, 4294901760
    %8785 = vmatprep.mubr.f32.mxu0 %v8784
    %v8786 = vand.u32 %v6661, 4294901760
    %v8787 = vsub.f32 %v6661, %v8786
    %v8788 = vand.u32 %v8787, 4294901760
    %8789 = vmatmul.mubr.f32.gmra.mrb[0].mxu0 %v8788
    %v8790 = vpop.f32.mrb[0].mxu0
    %v8791 = vadd.f32 %v8608, %v8790
    %v8792 = vpop.f32.mrb[0].mxu0
    %v8793 = vand.u32 %v6666, 4294901760
    %v8794 = vsub.f32 %v6666, %v8793
    %v8795 = vand.u32 %v8794, 4294901760
    %8796 = vmatprep.mubr.f32.mxu0 %v8795
    %v8797 = vand.u32 %v6665, 4294901760
    %v8798 = vsub.f32 %v6665, %v8797
    %v8799 = vand.u32 %v8798, 4294901760
    %8800 = vmatmul.mubr.f32.gmra.mrb[0].mxu0 %v8799
    %v8801 = vpop.f32.mrb[0].mxu0
    %v8802 = vadd.f32 %v8617, %v8801
    %v8803 = vpop.f32.mrb[0].mxu0
    %8804 = vdwg.mxu0
    %8805 = vmatprep.subr.mxu0 0.0
    %v8806 = vand.u32 %v163, 4294901760
    %v8807 = vsub.f32 %v163, %v8806
    %v8808 = vand.u32 %v8807, 4294901760
    %8809 = vmatpush1.msra.mxu0 %v8808
    %8810 = vmatprep.subr.mxu0 0.0
    %v8811 = vand.u32 %v164, 4294901760
    %v8812 = vsub.f32 %v164, %v8811
    %v8813 = vand.u32 %v8812, 4294901760
    %8814 = vmatpush1.msra.mxu0 %v8813
    %8815 = vmatprep.subr.mxu0 0.0
    %v8816 = vand.u32 %v165, 4294901760
    %v8817 = vsub.f32 %v165, %v8816
    %v8818 = vand.u32 %v8817, 4294901760
    %8819 = vmatpush1.msra.mxu0 %v8818
    %8820 = vmatprep.subr.mxu0 0.0
    %v8821 = vand.u32 %v166, 4294901760
    %v8822 = vsub.f32 %v166, %v8821
    %v8823 = vand.u32 %v8822, 4294901760
    %8824 = vmatpush1.msra.mxu0 %v8823
    %8825 = vmatprep.subr.mxu0 0.0
    %v8826 = vand.u32 %v167, 4294901760
    %v8827 = vsub.f32 %v167, %v8826
    %v8828 = vand.u32 %v8827, 4294901760
    %8829 = vmatpush1.msra.mxu0 %v8828
    %8830 = vmatprep.subr.mxu0 0.0
    %v8831 = vand.u32 %v168, 4294901760
    %v8832 = vsub.f32 %v168, %v8831
    %v8833 = vand.u32 %v8832, 4294901760
    %8834 = vmatpush1.msra.mxu0 %v8833
    %8835 = vmatprep.subr.mxu0 0.0
    %v8836 = vand.u32 %v169, 4294901760
    %v8837 = vsub.f32 %v169, %v8836
    %v8838 = vand.u32 %v8837, 4294901760
    %8839 = vmatpush1.msra.mxu0 %v8838
    %8840 = vmatprep.subr.mxu0 0.0
    %v8841 = vand.u32 %v170, 4294901760
    %v8842 = vsub.f32 %v170, %v8841
    %v8843 = vand.u32 %v8842, 4294901760
    %8844 = vmatpush1.msra.mxu0 %v8843
    %8845 = vmatprep.subr.mxu0 0.0
    %v8846 = vand.u32 %v171, 4294901760
    %v8847 = vsub.f32 %v171, %v8846
    %v8848 = vand.u32 %v8847, 4294901760
    %8849 = vmatpush1.msra.mxu0 %v8848
    %8850 = vmatprep.subr.mxu0 0.0
    %v8851 = vand.u32 %v172, 4294901760
    %v8852 = vsub.f32 %v172, %v8851
    %v8853 = vand.u32 %v8852, 4294901760
    %8854 = vmatpush1.msra.mxu0 %v8853
    %8855 = vmatprep.subr.mxu0 0.0
    %v8856 = vand.u32 %v173, 4294901760
    %v8857 = vsub.f32 %v173, %v8856
    %v8858 = vand.u32 %v8857, 4294901760
    %8859 = vmatpush1.msra.mxu0 %v8858
    %8860 = vmatprep.subr.mxu0 0.0
    %v8861 = vand.u32 %v174, 4294901760
    %v8862 = vsub.f32 %v174, %v8861
    %v8863 = vand.u32 %v8862, 4294901760
    %8864 = vmatpush1.msra.mxu0 %v8863
    %8865 = vmatprep.subr.mxu0 0.0
    %v8866 = vand.u32 %v175, 4294901760
    %v8867 = vsub.f32 %v175, %v8866
    %v8868 = vand.u32 %v8867, 4294901760
    %8869 = vmatpush1.msra.mxu0 %v8868
    %8870 = vmatprep.subr.mxu0 0.0
    %v8871 = vand.u32 %v176, 4294901760
    %v8872 = vsub.f32 %v176, %v8871
    %v8873 = vand.u32 %v8872, 4294901760
    %8874 = vmatpush1.msra.mxu0 %v8873
    %8875 = vmatprep.subr.mxu0 0.0
    %v8876 = vand.u32 %v177, 4294901760
    %v8877 = vsub.f32 %v177, %v8876
    %v8878 = vand.u32 %v8877, 4294901760
    %8879 = vmatpush1.msra.mxu0 %v8878
    %8880 = vmatprep.subr.mxu0 0.0
    %v8881 = vand.u32 %v178, 4294901760
    %v8882 = vsub.f32 %v178, %v8881
    %v8883 = vand.u32 %v8882, 4294901760
    %8884 = vmatpush1.msra.mxu0 %v8883
    %8885 = vmatprep.subr.mxu0 0.0
    %v8886 = vand.u32 %v179, 4294901760
    %v8887 = vsub.f32 %v179, %v8886
    %v8888 = vand.u32 %v8887, 4294901760
    %8889 = vmatpush1.msra.mxu0 %v8888
    %8890 = vmatprep.subr.mxu0 0.0
    %v8891 = vand.u32 %v180, 4294901760
    %v8892 = vsub.f32 %v180, %v8891
    %v8893 = vand.u32 %v8892, 4294901760
    %8894 = vmatpush1.msra.mxu0 %v8893
    %8895 = vmatprep.subr.mxu0 0.0
    %v8896 = vand.u32 %v181, 4294901760
    %v8897 = vsub.f32 %v181, %v8896
    %v8898 = vand.u32 %v8897, 4294901760
    %8899 = vmatpush1.msra.mxu0 %v8898
    %8900 = vmatprep.subr.mxu0 0.0
    %v8901 = vand.u32 %v182, 4294901760
    %v8902 = vsub.f32 %v182, %v8901
    %v8903 = vand.u32 %v8902, 4294901760
    %8904 = vmatpush1.msra.mxu0 %v8903
    %8905 = vmatprep.subr.mxu0 0.0
    %v8906 = vand.u32 %v183, 4294901760
    %v8907 = vsub.f32 %v183, %v8906
    %v8908 = vand.u32 %v8907, 4294901760
    %8909 = vmatpush1.msra.mxu0 %v8908
    %8910 = vmatprep.subr.mxu0 0.0
    %v8911 = vand.u32 %v184, 4294901760
    %v8912 = vsub.f32 %v184, %v8911
    %v8913 = vand.u32 %v8912, 4294901760
    %8914 = vmatpush1.msra.mxu0 %v8913
    %8915 = vmatprep.subr.mxu0 0.0
    %v8916 = vand.u32 %v185, 4294901760
    %v8917 = vsub.f32 %v185, %v8916
    %v8918 = vand.u32 %v8917, 4294901760
    %8919 = vmatpush1.msra.mxu0 %v8918
    %8920 = vmatprep.subr.mxu0 0.0
    %v8921 = vand.u32 %v186, 4294901760
    %v8922 = vsub.f32 %v186, %v8921
    %v8923 = vand.u32 %v8922, 4294901760
    %8924 = vmatpush1.msra.mxu0 %v8923
    %8925 = vmatprep.subr.mxu0 0.0
    %v8926 = vand.u32 %v187, 4294901760
    %v8927 = vsub.f32 %v187, %v8926
    %v8928 = vand.u32 %v8927, 4294901760
    %8929 = vmatpush1.msra.mxu0 %v8928
    %8930 = vmatprep.subr.mxu0 0.0
    %v8931 = vand.u32 %v188, 4294901760
    %v8932 = vsub.f32 %v188, %v8931
    %v8933 = vand.u32 %v8932, 4294901760
    %8934 = vmatpush1.msra.mxu0 %v8933
    %8935 = vmatprep.subr.mxu0 0.0
    %v8936 = vand.u32 %v189, 4294901760
    %v8937 = vsub.f32 %v189, %v8936
    %v8938 = vand.u32 %v8937, 4294901760
    %8939 = vmatpush1.msra.mxu0 %v8938
    %8940 = vmatprep.subr.mxu0 0.0
    %v8941 = vand.u32 %v190, 4294901760
    %v8942 = vsub.f32 %v190, %v8941
    %v8943 = vand.u32 %v8942, 4294901760
    %8944 = vmatpush1.msra.mxu0 %v8943
    %8945 = vmatprep.subr.mxu0 0.0
    %v8946 = vand.u32 %v191, 4294901760
    %v8947 = vsub.f32 %v191, %v8946
    %v8948 = vand.u32 %v8947, 4294901760
    %8949 = vmatpush1.msra.mxu0 %v8948
    %8950 = vmatprep.subr.mxu0 0.0
    %v8951 = vand.u32 %v192, 4294901760
    %v8952 = vsub.f32 %v192, %v8951
    %v8953 = vand.u32 %v8952, 4294901760
    %8954 = vmatpush1.msra.mxu0 %v8953
    %8955 = vmatprep.subr.mxu0 0.0
    %v8956 = vand.u32 %v193, 4294901760
    %v8957 = vsub.f32 %v193, %v8956
    %v8958 = vand.u32 %v8957, 4294901760
    %8959 = vmatpush1.msra.mxu0 %v8958
    %8960 = vmatprep.subr.mxu0 0.0
    %v8961 = vand.u32 %v194, 4294901760
    %v8962 = vsub.f32 %v194, %v8961
    %v8963 = vand.u32 %v8962, 4294901760
    %8964 = vmatpush1.msra.mxu0 %v8963
    %v8965 = vand.u32 %v6638, 4294901760
    %8966 = vmatprep.mubr.f32.mxu0 %v8965
    %v8967 = vand.u32 %v6637, 4294901760
    %8968 = vmatmul.mubr.f32.gmra.mrb[0].mxu0 %v8967
    %v8969 = vpop.f32.mrb[0].mxu0
    %v8970 = vadd.f32 %v8725, %v8969
    %v8971 = vpop.f32.mrb[0].mxu0
    %v8972 = vand.u32 %v6642, 4294901760
    %8973 = vmatprep.mubr.f32.mxu0 %v8972
    %v8974 = vand.u32 %v6641, 4294901760
    %8975 = vmatmul.mubr.f32.gmra.mrb[0].mxu0 %v8974
    %v8976 = vpop.f32.mrb[0].mxu0
    %v8977 = vadd.f32 %v8736, %v8976
    %v8978 = vpop.f32.mrb[0].mxu0
    %v8979 = vand.u32 %v6646, 4294901760
    %8980 = vmatprep.mubr.f32.mxu0 %v8979
    %v8981 = vand.u32 %v6645, 4294901760
    %8982 = vmatmul.mubr.f32.gmra.mrb[0].mxu0 %v8981
    %v8983 = vpop.f32.mrb[0].mxu0
    %v8984 = vadd.f32 %v8747, %v8983
    %v8985 = vpop.f32.mrb[0].mxu0
    %v8986 = vand.u32 %v6650, 4294901760
    %8987 = vmatprep.mubr.f32.mxu0 %v8986
    %v8988 = vand.u32 %v6649, 4294901760
    %8989 = vmatmul.mubr.f32.gmra.mrb[0].mxu0 %v8988
    %v8990 = vpop.f32.mrb[0].mxu0
    %v8991 = vadd.f32 %v8758, %v8990
    %v8992 = vpop.f32.mrb[0].mxu0
    %v8993 = vand.u32 %v6654, 4294901760
    %8994 = vmatprep.mubr.f32.mxu0 %v8993
    %v8995 = vand.u32 %v6653, 4294901760
    %8996 = vmatmul.mubr.f32.gmra.mrb[0].mxu0 %v8995
    %v8997 = vpop.f32.mrb[0].mxu0
    %v8998 = vadd.f32 %v8769, %v8997
    %v8999 = vpop.f32.mrb[0].mxu0
    %v9000 = vand.u32 %v6658, 4294901760
    %9001 = vmatprep.mubr.f32.mxu0 %v9000
    %v9002 = vand.u32 %v6657, 4294901760
    %9003 = vmatmul.mubr.f32.gmra.mrb[0].mxu0 %v9002
    %v9004 = vpop.f32.mrb[0].mxu0
    %v9005 = vadd.f32 %v8780, %v9004
    %v9006 = vpop.f32.mrb[0].mxu0
    %v9007 = vand.u32 %v6662, 4294901760
    %9008 = vmatprep.mubr.f32.mxu0 %v9007
    %v9009 = vand.u32 %v6661, 4294901760
    %9010 = vmatmul.mubr.f32.gmra.mrb[0].mxu0 %v9009
    %v9011 = vpop.f32.mrb[0].mxu0
    %v9012 = vadd.f32 %v8791, %v9011
    %v9013 = vpop.f32.mrb[0].mxu0
    %v9014 = vand.u32 %v6666, 4294901760
    %9015 = vmatprep.mubr.f32.mxu0 %v9014
    %v9016 = vand.u32 %v6665, 4294901760
    %9017 = vmatmul.mubr.f32.gmra.mrb[0].mxu0 %v9016
    %v9018 = vpop.f32.mrb[0].mxu0
    %v9019 = vadd.f32 %v8802, %v9018
    %v9020 = vpop.f32.mrb[0].mxu0
    %9021 = vdwg.mxu0
    %9022 = vmatprep.subr.mxu0 0.0
    %v9023 = vand.u32 %v163, 4294901760
    %9024 = vmatpush1.msra.mxu0 %v9023
    %9025 = vmatprep.subr.mxu0 0.0
    %v9026 = vand.u32 %v164, 4294901760
    %9027 = vmatpush1.msra.mxu0 %v9026
    %9028 = vmatprep.subr.mxu0 0.0
    %v9029 = vand.u32 %v165, 4294901760
    %9030 = vmatpush1.msra.mxu0 %v9029
    %9031 = vmatprep.subr.mxu0 0.0
    %v9032 = vand.u32 %v166, 4294901760
    %9033 = vmatpush1.msra.mxu0 %v9032
    %9034 = vmatprep.subr.mxu0 0.0
    %v9035 = vand.u32 %v167, 4294901760
    %9036 = vmatpush1.msra.mxu0 %v9035
    %9037 = vmatprep.subr.mxu0 0.0
    %v9038 = vand.u32 %v168, 4294901760
    %9039 = vmatpush1.msra.mxu0 %v9038
    %9040 = vmatprep.subr.mxu0 0.0
    %v9041 = vand.u32 %v169, 4294901760
    %9042 = vmatpush1.msra.mxu0 %v9041
    %9043 = vmatprep.subr.mxu0 0.0
    %v9044 = vand.u32 %v170, 4294901760
    %9045 = vmatpush1.msra.mxu0 %v9044
    %9046 = vmatprep.subr.mxu0 0.0
    %v9047 = vand.u32 %v171, 4294901760
    %9048 = vmatpush1.msra.mxu0 %v9047
    %9049 = vmatprep.subr.mxu0 0.0
    %v9050 = vand.u32 %v172, 4294901760
    %9051 = vmatpush1.msra.mxu0 %v9050
    %9052 = vmatprep.subr.mxu0 0.0
    %v9053 = vand.u32 %v173, 4294901760
    %9054 = vmatpush1.msra.mxu0 %v9053
    %9055 = vmatprep.subr.mxu0 0.0
    %v9056 = vand.u32 %v174, 4294901760
    %9057 = vmatpush1.msra.mxu0 %v9056
    %9058 = vmatprep.subr.mxu0 0.0
    %v9059 = vand.u32 %v175, 4294901760
    %9060 = vmatpush1.msra.mxu0 %v9059
    %9061 = vmatprep.subr.mxu0 0.0
    %v9062 = vand.u32 %v176, 4294901760
    %9063 = vmatpush1.msra.mxu0 %v9062
    %9064 = vmatprep.subr.mxu0 0.0
    %v9065 = vand.u32 %v177, 4294901760
    %9066 = vmatpush1.msra.mxu0 %v9065
    %9067 = vmatprep.subr.mxu0 0.0
    %v9068 = vand.u32 %v178, 4294901760
    %9069 = vmatpush1.msra.mxu0 %v9068
    %9070 = vmatprep.subr.mxu0 0.0
    %v9071 = vand.u32 %v179, 4294901760
    %9072 = vmatpush1.msra.mxu0 %v9071
    %9073 = vmatprep.subr.mxu0 0.0
    %v9074 = vand.u32 %v180, 4294901760
    %9075 = vmatpush1.msra.mxu0 %v9074
    %9076 = vmatprep.subr.mxu0 0.0
    %v9077 = vand.u32 %v181, 4294901760
    %9078 = vmatpush1.msra.mxu0 %v9077
    %9079 = vmatprep.subr.mxu0 0.0
    %v9080 = vand.u32 %v182, 4294901760
    %9081 = vmatpush1.msra.mxu0 %v9080
    %9082 = vmatprep.subr.mxu0 0.0
    %v9083 = vand.u32 %v183, 4294901760
    %9084 = vmatpush1.msra.mxu0 %v9083
    %9085 = vmatprep.subr.mxu0 0.0
    %v9086 = vand.u32 %v184, 4294901760
    %9087 = vmatpush1.msra.mxu0 %v9086
    %9088 = vmatprep.subr.mxu0 0.0
    %v9089 = vand.u32 %v185, 4294901760
    %9090 = vmatpush1.msra.mxu0 %v9089
    %9091 = vmatprep.subr.mxu0 0.0
    %v9092 = vand.u32 %v186, 4294901760
    %9093 = vmatpush1.msra.mxu0 %v9092
    %9094 = vmatprep.subr.mxu0 0.0
    %v9095 = vand.u32 %v187, 4294901760
    %9096 = vmatpush1.msra.mxu0 %v9095
    %9097 = vmatprep.subr.mxu0 0.0
    %v9098 = vand.u32 %v188, 4294901760
    %9099 = vmatpush1.msra.mxu0 %v9098
    %9100 = vmatprep.subr.mxu0 0.0
    %v9101 = vand.u32 %v189, 4294901760
    %9102 = vmatpush1.msra.mxu0 %v9101
    %9103 = vmatprep.subr.mxu0 0.0
    %v9104 = vand.u32 %v190, 4294901760
    %9105 = vmatpush1.msra.mxu0 %v9104
    %9106 = vmatprep.subr.mxu0 0.0
    %v9107 = vand.u32 %v191, 4294901760
    %9108 = vmatpush1.msra.mxu0 %v9107
    %9109 = vmatprep.subr.mxu0 0.0
    %v9110 = vand.u32 %v192, 4294901760
    %9111 = vmatpush1.msra.mxu0 %v9110
    %9112 = vmatprep.subr.mxu0 0.0
    %v9113 = vand.u32 %v193, 4294901760
    %9114 = vmatpush1.msra.mxu0 %v9113
    %9115 = vmatprep.subr.mxu0 0.0
    %v9116 = vand.u32 %v194, 4294901760
    %9117 = vmatpush1.msra.mxu0 %v9116
    %v9118 = vand.u32 %v6638, 4294901760
    %9119 = vmatprep.mubr.f32.mxu0 %v9118
    %v9120 = vand.u32 %v6637, 4294901760
    %9121 = vmatmul.mubr.f32.gmra.mrb[0].mxu0 %v9120
    %v9122 = vpop.f32.mrb[0].mxu0
    %v9123 = vadd.f32 %v8970, %v9122
    %v9124 = vpop.f32.mrb[0].mxu0
    %v9125 = vand.u32 %v6642, 4294901760
    %9126 = vmatprep.mubr.f32.mxu0 %v9125
    %v9127 = vand.u32 %v6641, 4294901760
    %9128 = vmatmul.mubr.f32.gmra.mrb[0].mxu0 %v9127
    %v9129 = vpop.f32.mrb[0].mxu0
    %v9130 = vadd.f32 %v8977, %v9129
    %v9131 = vpop.f32.mrb[0].mxu0
    %v9132 = vand.u32 %v6646, 4294901760
    %9133 = vmatprep.mubr.f32.mxu0 %v9132
    %v9134 = vand.u32 %v6645, 4294901760
    %9135 = vmatmul.mubr.f32.gmra.mrb[0].mxu0 %v9134
    %v9136 = vpop.f32.mrb[0].mxu0
    %v9137 = vadd.f32 %v8984, %v9136
    %v9138 = vpop.f32.mrb[0].mxu0
    %v9139 = vand.u32 %v6650, 4294901760
    %9140 = vmatprep.mubr.f32.mxu0 %v9139
    %v9141 = vand.u32 %v6649, 4294901760
    %9142 = vmatmul.mubr.f32.gmra.mrb[0].mxu0 %v9141
    %v9143 = vpop.f32.mrb[0].mxu0
    %v9144 = vadd.f32 %v8991, %v9143
    %v9145 = vpop.f32.mrb[0].mxu0
    %v9146 = vand.u32 %v6654, 4294901760
    %9147 = vmatprep.mubr.f32.mxu0 %v9146
    %v9148 = vand.u32 %v6653, 4294901760
    %9149 = vmatmul.mubr.f32.gmra.mrb[0].mxu0 %v9148
    %v9150 = vpop.f32.mrb[0].mxu0
    %v9151 = vadd.f32 %v8998, %v9150
    %v9152 = vpop.f32.mrb[0].mxu0
    %v9153 = vand.u32 %v6658, 4294901760
    %9154 = vmatprep.mubr.f32.mxu0 %v9153
    %v9155 = vand.u32 %v6657, 4294901760
    %9156 = vmatmul.mubr.f32.gmra.mrb[0].mxu0 %v9155
    %v9157 = vpop.f32.mrb[0].mxu0
    %v9158 = vadd.f32 %v9005, %v9157
    %v9159 = vpop.f32.mrb[0].mxu0
    %v9160 = vand.u32 %v6662, 4294901760
    %9161 = vmatprep.mubr.f32.mxu0 %v9160
    %v9162 = vand.u32 %v6661, 4294901760
    %9163 = vmatmul.mubr.f32.gmra.mrb[0].mxu0 %v9162
    %v9164 = vpop.f32.mrb[0].mxu0
    %v9165 = vadd.f32 %v9012, %v9164
    %v9166 = vpop.f32.mrb[0].mxu0
    %v9167 = vand.u32 %v6666, 4294901760
    %9168 = vmatprep.mubr.f32.mxu0 %v9167
    %v9169 = vand.u32 %v6665, 4294901760
    %9170 = vmatmul.mubr.f32.gmra.mrb[0].mxu0 %v9169
    %v9171 = vpop.f32.mrb[0].mxu0
    %v9172 = vadd.f32 %v9019, %v9171
    %v9173 = vpop.f32.mrb[0].mxu0
    %9174 = vdwg.mxu0
    %v9175 = vadd.f32 %v4231, %v9123
    %v9176 = vadd.f32 %v4232, %v9130
    %v9177 = vadd.f32 %v4233, %v9137
    %v9178 = vadd.f32 %v4234, %v9144
    %v9179 = vadd.f32 %v4235, %v9151
    %v9180 = vadd.f32 %v4236, %v9158
    %v9181 = vadd.f32 %v4237, %v9165
    %v9182 = vadd.f32 %v4238, %v9172
    %v9185 = vrot.slane %v9175, 7
    %v9186 = vrot.slane %v9179, 7
    %v9189 = vsub.f32 %v9175, %v9185
    %v9190 = vsub.f32 %v9179, %v9186
    %v9191 = vmul.f32 %v9189, 0.07692308
    %v9192 = vmul.f32 %v9190, 0.07692308
    %v9195 = vrot.slane %v9178, 7
    %v9196 = vrot.slane %v9182, 7
    %v9199 = vsub.f32 %v9178, %v9195
    %v9200 = vsub.f32 %v9182, %v9196
    %v9201 = vmul.f32 %v9199, 0.07692308
    %v9202 = vmul.f32 %v9200, 0.07692308
    %v9203 = vlaneseq
    %v9204 = vshrl.u32 %v9203, 7
    %v9205 = vsub.s32 0, %v9204
    %v9206 = vrot.slane %v9175, %v9205
    %v9207 = vlaneseq
    %v9208 = vshrl.u32 %v9207, 7
    %v9209 = vsub.s32 0, %v9208
    %v9210 = vrot.slane %v9179, %v9209
    %v9211 = vmul.f32 %v234, %v9206
    %v9212 = vmul.f32 %v235, %v9206
    %v9213 = vmul.f32 %v236, %v9206
    %v9214 = vmul.f32 %v237, %v9206
    %v9215 = vmul.f32 %v234, %v9210
    %v9216 = vmul.f32 %v235, %v9210
    %v9217 = vmul.f32 %v236, %v9210
    %v9218 = vmul.f32 %v237, %v9210
    %v9219 = vlaneseq
    %v9220 = vshrl.u32 %v9219, 7
    %v9221 = vsub.s32 1, %v9220
    %v9222 = vrot.slane %v9191, %v9221
    %v9223 = vlaneseq
    %v9224 = vshrl.u32 %v9223, 7
    %v9225 = vsub.s32 1, %v9224
    %v9226 = vrot.slane %v9192, %v9225
    %v9227 = vmul.f32 %v250, %v9222
    %v9228 = vmul.f32 %v251, %v9222
    %v9229 = vmul.f32 %v252, %v9222
    %v9230 = vmul.f32 %v253, %v9222
    %v9231 = vmul.f32 %v250, %v9226
    %v9232 = vmul.f32 %v251, %v9226
    %v9233 = vmul.f32 %v252, %v9226
    %v9234 = vmul.f32 %v253, %v9226
    %v9235 = vadd.f32 %v9211, %v9227
    %v9236 = vadd.f32 %v9212, %v9228
    %v9237 = vadd.f32 %v9213, %v9229
    %v9238 = vadd.f32 %v9214, %v9230
    %v9239 = vadd.f32 %v9215, %v9231
    %v9240 = vadd.f32 %v9216, %v9232
    %v9241 = vadd.f32 %v9217, %v9233
    %v9242 = vadd.f32 %v9218, %v9234
    %v9243 = vlaneseq
    %v9244 = vshrl.u32 %v9243, 7
    %v9245 = vsub.s32 7, %v9244
    %v9246 = vrot.slane %v9178, %v9245
    %v9247 = vlaneseq
    %v9248 = vshrl.u32 %v9247, 7
    %v9249 = vsub.s32 7, %v9248
    %v9250 = vrot.slane %v9182, %v9249
    %v9251 = vmul.f32 %v266, %v9246
    %v9252 = vmul.f32 %v267, %v9246
    %v9253 = vmul.f32 %v268, %v9246
    %v9254 = vmul.f32 %v269, %v9246
    %v9255 = vmul.f32 %v266, %v9250
    %v9256 = vmul.f32 %v267, %v9250
    %v9257 = vmul.f32 %v268, %v9250
    %v9258 = vmul.f32 %v269, %v9250
    %v9259 = vlaneseq
    %v9260 = vshrl.u32 %v9259, 7
    %v9261 = vsub.s32 7, %v9260
    %v9262 = vrot.slane %v9201, %v9261
    %v9263 = vlaneseq
    %v9264 = vshrl.u32 %v9263, 7
    %v9265 = vsub.s32 7, %v9264
    %v9266 = vrot.slane %v9202, %v9265
    %v9267 = vmul.f32 %v278, %v9262
    %v9268 = vmul.f32 %v279, %v9262
    %v9269 = vmul.f32 %v280, %v9262
    %v9270 = vmul.f32 %v281, %v9262
    %v9271 = vmul.f32 %v278, %v9266
    %v9272 = vmul.f32 %v279, %v9266
    %v9273 = vmul.f32 %v280, %v9266
    %v9274 = vmul.f32 %v281, %v9266
    %v9275 = vsub.f32 %v9251, %v9267
    %v9276 = vsub.f32 %v9252, %v9268
    %v9277 = vsub.f32 %v9253, %v9269
    %v9278 = vsub.f32 %v9254, %v9270
    %v9279 = vsub.f32 %v9255, %v9271
    %v9280 = vsub.f32 %v9256, %v9272
    %v9281 = vsub.f32 %v9257, %v9273
    %v9282 = vsub.f32 %v9258, %v9274
    %9283 = vmatprep.subr.mxu0 0.0
    %v9284 = vand.u32 %v9175, 4294901760
    %9285 = vmatpush1.msra.mxu0 %v9284
    %9286 = vmatprep.subr.mxu0 0.0
    %v9287 = vand.u32 %v9176, 4294901760
    %9288 = vmatpush1.msra.mxu0 %v9287
    %9289 = vmatprep.subr.mxu0 0.0
    %v9290 = vand.u32 %v9177, 4294901760
    %9291 = vmatpush1.msra.mxu0 %v9290
    %9292 = vmatprep.subr.mxu0 0.0
    %v9293 = vand.u32 %v9178, 4294901760
    %9294 = vmatpush1.msra.mxu0 %v9293
    %9295 = vmatprep.subr.mxu0 0.0
    %9296 = vmatpush1.msra.mxu0 0.0
    %9297 = vmatprep.subr.mxu0 0.0
    %9298 = vmatpush1.msra.mxu0 0.0
    %9299 = vmatprep.subr.mxu0 0.0
    %9300 = vmatpush1.msra.mxu0 0.0
    %9301 = vmatprep.subr.mxu0 0.0
    %9302 = vmatpush1.msra.mxu0 0.0
    %9303 = vmatprep.subr.mxu0 0.0
    %9304 = vmatpush1.msra.mxu0 0.0
    %9305 = vmatprep.subr.mxu0 0.0
    %9306 = vmatpush1.msra.mxu0 0.0
    %9307 = vmatprep.subr.mxu0 0.0
    %9308 = vmatpush1.msra.mxu0 0.0
    %9309 = vmatprep.subr.mxu0 0.0
    %9310 = vmatpush1.msra.mxu0 0.0
    %9311 = vmatprep.subr.mxu0 0.0
    %9312 = vmatpush1.msra.mxu0 0.0
    %9313 = vmatprep.subr.mxu0 0.0
    %9314 = vmatpush1.msra.mxu0 0.0
    %9315 = vmatprep.subr.mxu0 0.0
    %9316 = vmatpush1.msra.mxu0 0.0
    %9317 = vmatprep.subr.mxu0 0.0
    %9318 = vmatpush1.msra.mxu0 0.0
    %9319 = vmatprep.subr.mxu0 0.0
    %9320 = vmatpush1.msra.mxu0 0.0
    %9321 = vmatprep.subr.mxu0 0.0
    %9322 = vmatpush1.msra.mxu0 0.0
    %9323 = vmatprep.subr.mxu0 0.0
    %9324 = vmatpush1.msra.mxu0 0.0
    %9325 = vmatprep.subr.mxu0 0.0
    %9326 = vmatpush1.msra.mxu0 0.0
    %9327 = vmatprep.subr.mxu0 0.0
    %9328 = vmatpush1.msra.mxu0 0.0
    %9329 = vmatprep.subr.mxu0 0.0
    %9330 = vmatpush1.msra.mxu0 0.0
    %9331 = vmatprep.subr.mxu0 0.0
    %9332 = vmatpush1.msra.mxu0 0.0
    %9333 = vmatprep.subr.mxu0 0.0
    %9334 = vmatpush1.msra.mxu0 0.0
    %9335 = vmatprep.subr.mxu0 0.0
    %9336 = vmatpush1.msra.mxu0 0.0
    %9337 = vmatprep.subr.mxu0 0.0
    %9338 = vmatpush1.msra.mxu0 0.0
    %9339 = vmatprep.subr.mxu0 0.0
    %9340 = vmatpush1.msra.mxu0 0.0
    %9341 = vmatprep.subr.mxu0 0.0
    %9342 = vmatpush1.msra.mxu0 0.0
    %9343 = vmatprep.subr.mxu0 0.0
    %9344 = vmatpush1.msra.mxu0 0.0
    %9345 = vmatprep.subr.mxu0 0.0
    %9346 = vmatpush1.msra.mxu0 0.0
    %9347 = vmatprep.subr.mxu0 0.0
    %9348 = vmatpush1.msra.mxu0 0.0
    %9349 = vmatprep.subr.mxu0 0.0
    %9350 = vmatpush1.msra.mxu0 0.0
    %9351 = vmatprep.mubr.f32.mxu0 0.0
    %v9352 = vand.u32 %v2968, 4294901760
    %v9353 = vsub.f32 %v2968, %v9352
    %v9354 = vand.u32 %v9353, 4294901760
    %v9355 = vsub.f32 %v9353, %v9354
    %v9356 = vand.u32 %v9355, 4294901760
    %9357 = vmatmul.mubr.f32.gmra.mrb[0].mxu0 %v9356
    %v9358 = vpop.f32.mrb[0].mxu0
    %v9359 = vadd.f32 0.0, %v9358
    %v9360 = vpop.f32.mrb[0].mxu0
    %9361 = vmatprep.mubr.f32.mxu0 0.0
    %v9362 = vand.u32 %v2971, 4294901760
    %v9363 = vsub.f32 %v2971, %v9362
    %v9364 = vand.u32 %v9363, 4294901760
    %v9365 = vsub.f32 %v9363, %v9364
    %v9366 = vand.u32 %v9365, 4294901760
    %9367 = vmatmul.mubr.f32.gmra.mrb[0].mxu0 %v9366
    %v9368 = vpop.f32.mrb[0].mxu0
    %v9369 = vadd.f32 0.0, %v9368
    %v9370 = vpop.f32.mrb[0].mxu0
    %9371 = vmatprep.mubr.f32.mxu0 0.0
    %v9372 = vand.u32 %v2974, 4294901760
    %v9373 = vsub.f32 %v2974, %v9372
    %v9374 = vand.u32 %v9373, 4294901760
    %v9375 = vsub.f32 %v9373, %v9374
    %v9376 = vand.u32 %v9375, 4294901760
    %9377 = vmatmul.mubr.f32.gmra.mrb[0].mxu0 %v9376
    %v9378 = vpop.f32.mrb[0].mxu0
    %v9379 = vadd.f32 0.0, %v9378
    %v9380 = vpop.f32.mrb[0].mxu0
    %9381 = vmatprep.mubr.f32.mxu0 0.0
    %v9382 = vand.u32 %v2977, 4294901760
    %v9383 = vsub.f32 %v2977, %v9382
    %v9384 = vand.u32 %v9383, 4294901760
    %v9385 = vsub.f32 %v9383, %v9384
    %v9386 = vand.u32 %v9385, 4294901760
    %9387 = vmatmul.mubr.f32.gmra.mrb[0].mxu0 %v9386
    %v9388 = vpop.f32.mrb[0].mxu0
    %v9389 = vadd.f32 0.0, %v9388
    %v9390 = vpop.f32.mrb[0].mxu0
    %9391 = vdwg.mxu0
    %9392 = vmatprep.subr.mxu0 0.0
    %v9393 = vand.u32 %v9175, 4294901760
    %v9394 = vsub.f32 %v9175, %v9393
    %v9395 = vand.u32 %v9394, 4294901760
    %v9396 = vsub.f32 %v9394, %v9395
    %v9397 = vand.u32 %v9396, 4294901760
    %9398 = vmatpush1.msra.mxu0 %v9397
    %9399 = vmatprep.subr.mxu0 0.0
    %v9400 = vand.u32 %v9176, 4294901760
    %v9401 = vsub.f32 %v9176, %v9400
    %v9402 = vand.u32 %v9401, 4294901760
    %v9403 = vsub.f32 %v9401, %v9402
    %v9404 = vand.u32 %v9403, 4294901760
    %9405 = vmatpush1.msra.mxu0 %v9404
    %9406 = vmatprep.subr.mxu0 0.0
    %v9407 = vand.u32 %v9177, 4294901760
    %v9408 = vsub.f32 %v9177, %v9407
    %v9409 = vand.u32 %v9408, 4294901760
    %v9410 = vsub.f32 %v9408, %v9409
    %v9411 = vand.u32 %v9410, 4294901760
    %9412 = vmatpush1.msra.mxu0 %v9411
    %9413 = vmatprep.subr.mxu0 0.0
    %v9414 = vand.u32 %v9178, 4294901760
    %v9415 = vsub.f32 %v9178, %v9414
    %v9416 = vand.u32 %v9415, 4294901760
    %v9417 = vsub.f32 %v9415, %v9416
    %v9418 = vand.u32 %v9417, 4294901760
    %9419 = vmatpush1.msra.mxu0 %v9418
    %9420 = vmatprep.subr.mxu0 0.0
    %9421 = vmatpush1.msra.mxu0 0.0
    %9422 = vmatprep.subr.mxu0 0.0
    %9423 = vmatpush1.msra.mxu0 0.0
    %9424 = vmatprep.subr.mxu0 0.0
    %9425 = vmatpush1.msra.mxu0 0.0
    %9426 = vmatprep.subr.mxu0 0.0
    %9427 = vmatpush1.msra.mxu0 0.0
    %9428 = vmatprep.subr.mxu0 0.0
    %9429 = vmatpush1.msra.mxu0 0.0
    %9430 = vmatprep.subr.mxu0 0.0
    %9431 = vmatpush1.msra.mxu0 0.0
    %9432 = vmatprep.subr.mxu0 0.0
    %9433 = vmatpush1.msra.mxu0 0.0
    %9434 = vmatprep.subr.mxu0 0.0
    %9435 = vmatpush1.msra.mxu0 0.0
    %9436 = vmatprep.subr.mxu0 0.0
    %9437 = vmatpush1.msra.mxu0 0.0
    %9438 = vmatprep.subr.mxu0 0.0
    %9439 = vmatpush1.msra.mxu0 0.0
    %9440 = vmatprep.subr.mxu0 0.0
    %9441 = vmatpush1.msra.mxu0 0.0
    %9442 = vmatprep.subr.mxu0 0.0
    %9443 = vmatpush1.msra.mxu0 0.0
    %9444 = vmatprep.subr.mxu0 0.0
    %9445 = vmatpush1.msra.mxu0 0.0
    %9446 = vmatprep.subr.mxu0 0.0
    %9447 = vmatpush1.msra.mxu0 0.0
    %9448 = vmatprep.subr.mxu0 0.0
    %9449 = vmatpush1.msra.mxu0 0.0
    %9450 = vmatprep.subr.mxu0 0.0
    %9451 = vmatpush1.msra.mxu0 0.0
    %9452 = vmatprep.subr.mxu0 0.0
    %9453 = vmatpush1.msra.mxu0 0.0
    %9454 = vmatprep.subr.mxu0 0.0
    %9455 = vmatpush1.msra.mxu0 0.0
    %9456 = vmatprep.subr.mxu0 0.0
    %9457 = vmatpush1.msra.mxu0 0.0
    %9458 = vmatprep.subr.mxu0 0.0
    %9459 = vmatpush1.msra.mxu0 0.0
    %9460 = vmatprep.subr.mxu0 0.0
    %9461 = vmatpush1.msra.mxu0 0.0
    %9462 = vmatprep.subr.mxu0 0.0
    %9463 = vmatpush1.msra.mxu0 0.0
    %9464 = vmatprep.subr.mxu0 0.0
    %9465 = vmatpush1.msra.mxu0 0.0
    %9466 = vmatprep.subr.mxu0 0.0
    %9467 = vmatpush1.msra.mxu0 0.0
    %9468 = vmatprep.subr.mxu0 0.0
    %9469 = vmatpush1.msra.mxu0 0.0
    %9470 = vmatprep.subr.mxu0 0.0
    %9471 = vmatpush1.msra.mxu0 0.0
    %9472 = vmatprep.subr.mxu0 0.0
    %9473 = vmatpush1.msra.mxu0 0.0
    %9474 = vmatprep.subr.mxu0 0.0
    %9475 = vmatpush1.msra.mxu0 0.0
    %9476 = vmatprep.mubr.f32.mxu0 0.0
    %v9477 = vand.u32 %v2968, 4294901760
    %9478 = vmatmul.mubr.f32.gmra.mrb[0].mxu0 %v9477
    %v9479 = vpop.f32.mrb[0].mxu0
    %v9480 = vadd.f32 %v9359, %v9479
    %v9481 = vpop.f32.mrb[0].mxu0
    %9482 = vmatprep.mubr.f32.mxu0 0.0
    %v9483 = vand.u32 %v2971, 4294901760
    %9484 = vmatmul.mubr.f32.gmra.mrb[0].mxu0 %v9483
    %v9485 = vpop.f32.mrb[0].mxu0
    %v9486 = vadd.f32 %v9369, %v9485
    %v9487 = vpop.f32.mrb[0].mxu0
    %9488 = vmatprep.mubr.f32.mxu0 0.0
    %v9489 = vand.u32 %v2974, 4294901760
    %9490 = vmatmul.mubr.f32.gmra.mrb[0].mxu0 %v9489
    %v9491 = vpop.f32.mrb[0].mxu0
    %v9492 = vadd.f32 %v9379, %v9491
    %v9493 = vpop.f32.mrb[0].mxu0
    %9494 = vmatprep.mubr.f32.mxu0 0.0
    %v9495 = vand.u32 %v2977, 4294901760
    %9496 = vmatmul.mubr.f32.gmra.mrb[0].mxu0 %v9495
    %v9497 = vpop.f32.mrb[0].mxu0
    %v9498 = vadd.f32 %v9389, %v9497
    %v9499 = vpop.f32.mrb[0].mxu0
    %9500 = vdwg.mxu0
    %9501 = vmatprep.subr.mxu0 0.0
    %v9502 = vand.u32 %v9175, 4294901760
    %v9503 = vsub.f32 %v9175, %v9502
    %9504 = vmatpush1.msra.mxu0 %v9503
    %9505 = vmatprep.subr.mxu0 0.0
    %v9506 = vand.u32 %v9176, 4294901760
    %v9507 = vsub.f32 %v9176, %v9506
    %9508 = vmatpush1.msra.mxu0 %v9507
    %9509 = vmatprep.subr.mxu0 0.0
    %v9510 = vand.u32 %v9177, 4294901760
    %v9511 = vsub.f32 %v9177, %v9510
    %9512 = vmatpush1.msra.mxu0 %v9511
    %9513 = vmatprep.subr.mxu0 0.0
    %v9514 = vand.u32 %v9178, 4294901760
    %v9515 = vsub.f32 %v9178, %v9514
    %9516 = vmatpush1.msra.mxu0 %v9515
    %9517 = vmatprep.subr.mxu0 0.0
    %9518 = vmatpush1.msra.mxu0 0.0
    %9519 = vmatprep.subr.mxu0 0.0
    %9520 = vmatpush1.msra.mxu0 0.0
    %9521 = vmatprep.subr.mxu0 0.0
    %9522 = vmatpush1.msra.mxu0 0.0
    %9523 = vmatprep.subr.mxu0 0.0
    %9524 = vmatpush1.msra.mxu0 0.0
    %9525 = vmatprep.subr.mxu0 0.0
    %9526 = vmatpush1.msra.mxu0 0.0
    %9527 = vmatprep.subr.mxu0 0.0
    %9528 = vmatpush1.msra.mxu0 0.0
    %9529 = vmatprep.subr.mxu0 0.0
    %9530 = vmatpush1.msra.mxu0 0.0
    %9531 = vmatprep.subr.mxu0 0.0
    %9532 = vmatpush1.msra.mxu0 0.0
    %9533 = vmatprep.subr.mxu0 0.0
    %9534 = vmatpush1.msra.mxu0 0.0
    %9535 = vmatprep.subr.mxu0 0.0
    %9536 = vmatpush1.msra.mxu0 0.0
    %9537 = vmatprep.subr.mxu0 0.0
    %9538 = vmatpush1.msra.mxu0 0.0
    %9539 = vmatprep.subr.mxu0 0.0
    %9540 = vmatpush1.msra.mxu0 0.0
    %9541 = vmatprep.subr.mxu0 0.0
    %9542 = vmatpush1.msra.mxu0 0.0
    %9543 = vmatprep.subr.mxu0 0.0
    %9544 = vmatpush1.msra.mxu0 0.0
    %9545 = vmatprep.subr.mxu0 0.0
    %9546 = vmatpush1.msra.mxu0 0.0
    %9547 = vmatprep.subr.mxu0 0.0
    %9548 = vmatpush1.msra.mxu0 0.0
    %9549 = vmatprep.subr.mxu0 0.0
    %9550 = vmatpush1.msra.mxu0 0.0
    %9551 = vmatprep.subr.mxu0 0.0
    %9552 = vmatpush1.msra.mxu0 0.0
    %9553 = vmatprep.subr.mxu0 0.0
    %9554 = vmatpush1.msra.mxu0 0.0
    %9555 = vmatprep.subr.mxu0 0.0
    %9556 = vmatpush1.msra.mxu0 0.0
    %9557 = vmatprep.subr.mxu0 0.0
    %9558 = vmatpush1.msra.mxu0 0.0
    %9559 = vmatprep.subr.mxu0 0.0
    %9560 = vmatpush1.msra.mxu0 0.0
    %9561 = vmatprep.subr.mxu0 0.0
    %9562 = vmatpush1.msra.mxu0 0.0
    %9563 = vmatprep.subr.mxu0 0.0
    %9564 = vmatpush1.msra.mxu0 0.0
    %9565 = vmatprep.subr.mxu0 0.0
    %9566 = vmatpush1.msra.mxu0 0.0
    %9567 = vmatprep.subr.mxu0 0.0
    %9568 = vmatpush1.msra.mxu0 0.0
    %9569 = vmatprep.subr.mxu0 0.0
    %9570 = vmatpush1.msra.mxu0 0.0
    %9571 = vmatprep.subr.mxu0 0.0
    %9572 = vmatpush1.msra.mxu0 0.0
    %9573 = vmatprep.mubr.f32.mxu0 0.0
    %v9574 = vand.u32 %v2968, 4294901760
    %v9575 = vsub.f32 %v2968, %v9574
    %9576 = vmatmul.mubr.f32.gmra.mrb[0].mxu0 %v9575
    %v9577 = vpop.f32.mrb[0].mxu0
    %v9578 = vadd.f32 %v9480, %v9577
    %v9579 = vpop.f32.mrb[0].mxu0
    %9580 = vmatprep.mubr.f32.mxu0 0.0
    %v9581 = vand.u32 %v2971, 4294901760
    %v9582 = vsub.f32 %v2971, %v9581
    %9583 = vmatmul.mubr.f32.gmra.mrb[0].mxu0 %v9582
    %v9584 = vpop.f32.mrb[0].mxu0
    %v9585 = vadd.f32 %v9486, %v9584
    %v9586 = vpop.f32.mrb[0].mxu0
    %9587 = vmatprep.mubr.f32.mxu0 0.0
    %v9588 = vand.u32 %v2974, 4294901760
    %v9589 = vsub.f32 %v2974, %v9588
    %9590 = vmatmul.mubr.f32.gmra.mrb[0].mxu0 %v9589
    %v9591 = vpop.f32.mrb[0].mxu0
    %v9592 = vadd.f32 %v9492, %v9591
    %v9593 = vpop.f32.mrb[0].mxu0
    %9594 = vmatprep.mubr.f32.mxu0 0.0
    %v9595 = vand.u32 %v2977, 4294901760
    %v9596 = vsub.f32 %v2977, %v9595
    %9597 = vmatmul.mubr.f32.gmra.mrb[0].mxu0 %v9596
    %v9598 = vpop.f32.mrb[0].mxu0
    %v9599 = vadd.f32 %v9498, %v9598
    %v9600 = vpop.f32.mrb[0].mxu0
    %9601 = vdwg.mxu0
    %9602 = vmatprep.subr.mxu0 0.0
    %v9603 = vand.u32 %v9175, 4294901760
    %9604 = vmatpush1.msra.mxu0 %v9603
    %9605 = vmatprep.subr.mxu0 0.0
    %v9606 = vand.u32 %v9176, 4294901760
    %9607 = vmatpush1.msra.mxu0 %v9606
    %9608 = vmatprep.subr.mxu0 0.0
    %v9609 = vand.u32 %v9177, 4294901760
    %9610 = vmatpush1.msra.mxu0 %v9609
    %9611 = vmatprep.subr.mxu0 0.0
    %v9612 = vand.u32 %v9178, 4294901760
    %9613 = vmatpush1.msra.mxu0 %v9612
    %9614 = vmatprep.subr.mxu0 0.0
    %9615 = vmatpush1.msra.mxu0 0.0
    %9616 = vmatprep.subr.mxu0 0.0
    %9617 = vmatpush1.msra.mxu0 0.0
    %9618 = vmatprep.subr.mxu0 0.0
    %9619 = vmatpush1.msra.mxu0 0.0
    %9620 = vmatprep.subr.mxu0 0.0
    %9621 = vmatpush1.msra.mxu0 0.0
    %9622 = vmatprep.subr.mxu0 0.0
    %9623 = vmatpush1.msra.mxu0 0.0
    %9624 = vmatprep.subr.mxu0 0.0
    %9625 = vmatpush1.msra.mxu0 0.0
    %9626 = vmatprep.subr.mxu0 0.0
    %9627 = vmatpush1.msra.mxu0 0.0
    %9628 = vmatprep.subr.mxu0 0.0
    %9629 = vmatpush1.msra.mxu0 0.0
    %9630 = vmatprep.subr.mxu0 0.0
    %9631 = vmatpush1.msra.mxu0 0.0
    %9632 = vmatprep.subr.mxu0 0.0
    %9633 = vmatpush1.msra.mxu0 0.0
    %9634 = vmatprep.subr.mxu0 0.0
    %9635 = vmatpush1.msra.mxu0 0.0
    %9636 = vmatprep.subr.mxu0 0.0
    %9637 = vmatpush1.msra.mxu0 0.0
    %9638 = vmatprep.subr.mxu0 0.0
    %9639 = vmatpush1.msra.mxu0 0.0
    %9640 = vmatprep.subr.mxu0 0.0
    %9641 = vmatpush1.msra.mxu0 0.0
    %9642 = vmatprep.subr.mxu0 0.0
    %9643 = vmatpush1.msra.mxu0 0.0
    %9644 = vmatprep.subr.mxu0 0.0
    %9645 = vmatpush1.msra.mxu0 0.0
    %9646 = vmatprep.subr.mxu0 0.0
    %9647 = vmatpush1.msra.mxu0 0.0
    %9648 = vmatprep.subr.mxu0 0.0
    %9649 = vmatpush1.msra.mxu0 0.0
    %9650 = vmatprep.subr.mxu0 0.0
    %9651 = vmatpush1.msra.mxu0 0.0
    %9652 = vmatprep.subr.mxu0 0.0
    %9653 = vmatpush1.msra.mxu0 0.0
    %9654 = vmatprep.subr.mxu0 0.0
    %9655 = vmatpush1.msra.mxu0 0.0
    %9656 = vmatprep.subr.mxu0 0.0
    %9657 = vmatpush1.msra.mxu0 0.0
    %9658 = vmatprep.subr.mxu0 0.0
    %9659 = vmatpush1.msra.mxu0 0.0
    %9660 = vmatprep.subr.mxu0 0.0
    %9661 = vmatpush1.msra.mxu0 0.0
    %9662 = vmatprep.subr.mxu0 0.0
    %9663 = vmatpush1.msra.mxu0 0.0
    %9664 = vmatprep.subr.mxu0 0.0
    %9665 = vmatpush1.msra.mxu0 0.0
    %9666 = vmatprep.subr.mxu0 0.0
    %9667 = vmatpush1.msra.mxu0 0.0
    %9668 = vmatprep.subr.mxu0 0.0
    %9669 = vmatpush1.msra.mxu0 0.0
    %9670 = vmatprep.mubr.f32.mxu0 0.0
    %v9671 = vand.u32 %v2968, 4294901760
    %v9672 = vsub.f32 %v2968, %v9671
    %v9673 = vand.u32 %v9672, 4294901760
    %9674 = vmatmul.mubr.f32.gmra.mrb[0].mxu0 %v9673
    %v9675 = vpop.f32.mrb[0].mxu0
    %v9676 = vadd.f32 %v9578, %v9675
    %v9677 = vpop.f32.mrb[0].mxu0
    %9678 = vmatprep.mubr.f32.mxu0 0.0
    %v9679 = vand.u32 %v2971, 4294901760
    %v9680 = vsub.f32 %v2971, %v9679
    %v9681 = vand.u32 %v9680, 4294901760
    %9682 = vmatmul.mubr.f32.gmra.mrb[0].mxu0 %v9681
    %v9683 = vpop.f32.mrb[0].mxu0
    %v9684 = vadd.f32 %v9585, %v9683
    %v9685 = vpop.f32.mrb[0].mxu0
    %9686 = vmatprep.mubr.f32.mxu0 0.0
    %v9687 = vand.u32 %v2974, 4294901760
    %v9688 = vsub.f32 %v2974, %v9687
    %v9689 = vand.u32 %v9688, 4294901760
    %9690 = vmatmul.mubr.f32.gmra.mrb[0].mxu0 %v9689
    %v9691 = vpop.f32.mrb[0].mxu0
    %v9692 = vadd.f32 %v9592, %v9691
    %v9693 = vpop.f32.mrb[0].mxu0
    %9694 = vmatprep.mubr.f32.mxu0 0.0
    %v9695 = vand.u32 %v2977, 4294901760
    %v9696 = vsub.f32 %v2977, %v9695
    %v9697 = vand.u32 %v9696, 4294901760
    %9698 = vmatmul.mubr.f32.gmra.mrb[0].mxu0 %v9697
    %v9699 = vpop.f32.mrb[0].mxu0
    %v9700 = vadd.f32 %v9599, %v9699
    %v9701 = vpop.f32.mrb[0].mxu0
    %9702 = vdwg.mxu0
    %9703 = vmatprep.subr.mxu0 0.0
    %v9704 = vand.u32 %v9175, 4294901760
    %v9705 = vsub.f32 %v9175, %v9704
    %v9706 = vand.u32 %v9705, 4294901760
    %9707 = vmatpush1.msra.mxu0 %v9706
    %9708 = vmatprep.subr.mxu0 0.0
    %v9709 = vand.u32 %v9176, 4294901760
    %v9710 = vsub.f32 %v9176, %v9709
    %v9711 = vand.u32 %v9710, 4294901760
    %9712 = vmatpush1.msra.mxu0 %v9711
    %9713 = vmatprep.subr.mxu0 0.0
    %v9714 = vand.u32 %v9177, 4294901760
    %v9715 = vsub.f32 %v9177, %v9714
    %v9716 = vand.u32 %v9715, 4294901760
    %9717 = vmatpush1.msra.mxu0 %v9716
    %9718 = vmatprep.subr.mxu0 0.0
    %v9719 = vand.u32 %v9178, 4294901760
    %v9720 = vsub.f32 %v9178, %v9719
    %v9721 = vand.u32 %v9720, 4294901760
    %9722 = vmatpush1.msra.mxu0 %v9721
    %9723 = vmatprep.subr.mxu0 0.0
    %9724 = vmatpush1.msra.mxu0 0.0
    %9725 = vmatprep.subr.mxu0 0.0
    %9726 = vmatpush1.msra.mxu0 0.0
    %9727 = vmatprep.subr.mxu0 0.0
    %9728 = vmatpush1.msra.mxu0 0.0
    %9729 = vmatprep.subr.mxu0 0.0
    %9730 = vmatpush1.msra.mxu0 0.0
    %9731 = vmatprep.subr.mxu0 0.0
    %9732 = vmatpush1.msra.mxu0 0.0
    %9733 = vmatprep.subr.mxu0 0.0
    %9734 = vmatpush1.msra.mxu0 0.0
    %9735 = vmatprep.subr.mxu0 0.0
    %9736 = vmatpush1.msra.mxu0 0.0
    %9737 = vmatprep.subr.mxu0 0.0
    %9738 = vmatpush1.msra.mxu0 0.0
    %9739 = vmatprep.subr.mxu0 0.0
    %9740 = vmatpush1.msra.mxu0 0.0
    %9741 = vmatprep.subr.mxu0 0.0
    %9742 = vmatpush1.msra.mxu0 0.0
    %9743 = vmatprep.subr.mxu0 0.0
    %9744 = vmatpush1.msra.mxu0 0.0
    %9745 = vmatprep.subr.mxu0 0.0
    %9746 = vmatpush1.msra.mxu0 0.0
    %9747 = vmatprep.subr.mxu0 0.0
    %9748 = vmatpush1.msra.mxu0 0.0
    %9749 = vmatprep.subr.mxu0 0.0
    %9750 = vmatpush1.msra.mxu0 0.0
    %9751 = vmatprep.subr.mxu0 0.0
    %9752 = vmatpush1.msra.mxu0 0.0
    %9753 = vmatprep.subr.mxu0 0.0
    %9754 = vmatpush1.msra.mxu0 0.0
    %9755 = vmatprep.subr.mxu0 0.0
    %9756 = vmatpush1.msra.mxu0 0.0
    %9757 = vmatprep.subr.mxu0 0.0
    %9758 = vmatpush1.msra.mxu0 0.0
    %9759 = vmatprep.subr.mxu0 0.0
    %9760 = vmatpush1.msra.mxu0 0.0
    %9761 = vmatprep.subr.mxu0 0.0
    %9762 = vmatpush1.msra.mxu0 0.0
    %9763 = vmatprep.subr.mxu0 0.0
    %9764 = vmatpush1.msra.mxu0 0.0
    %9765 = vmatprep.subr.mxu0 0.0
    %9766 = vmatpush1.msra.mxu0 0.0
    %9767 = vmatprep.subr.mxu0 0.0
    %9768 = vmatpush1.msra.mxu0 0.0
    %9769 = vmatprep.subr.mxu0 0.0
    %9770 = vmatpush1.msra.mxu0 0.0
    %9771 = vmatprep.subr.mxu0 0.0
    %9772 = vmatpush1.msra.mxu0 0.0
    %9773 = vmatprep.subr.mxu0 0.0
    %9774 = vmatpush1.msra.mxu0 0.0
    %9775 = vmatprep.subr.mxu0 0.0
    %9776 = vmatpush1.msra.mxu0 0.0
    %9777 = vmatprep.subr.mxu0 0.0
    %9778 = vmatpush1.msra.mxu0 0.0
    %9779 = vmatprep.mubr.f32.mxu0 0.0
    %v9780 = vand.u32 %v2968, 4294901760
    %9781 = vmatmul.mubr.f32.gmra.mrb[0].mxu0 %v9780
    %v9782 = vpop.f32.mrb[0].mxu0
    %v9783 = vadd.f32 %v9676, %v9782
    %v9784 = vpop.f32.mrb[0].mxu0
    %9785 = vmatprep.mubr.f32.mxu0 0.0
    %v9786 = vand.u32 %v2971, 4294901760
    %9787 = vmatmul.mubr.f32.gmra.mrb[0].mxu0 %v9786
    %v9788 = vpop.f32.mrb[0].mxu0
    %v9789 = vadd.f32 %v9684, %v9788
    %v9790 = vpop.f32.mrb[0].mxu0
    %9791 = vmatprep.mubr.f32.mxu0 0.0
    %v9792 = vand.u32 %v2974, 4294901760
    %9793 = vmatmul.mubr.f32.gmra.mrb[0].mxu0 %v9792
    %v9794 = vpop.f32.mrb[0].mxu0
    %v9795 = vadd.f32 %v9692, %v9794
    %v9796 = vpop.f32.mrb[0].mxu0
    %9797 = vmatprep.mubr.f32.mxu0 0.0
    %v9798 = vand.u32 %v2977, 4294901760
    %9799 = vmatmul.mubr.f32.gmra.mrb[0].mxu0 %v9798
    %v9800 = vpop.f32.mrb[0].mxu0
    %v9801 = vadd.f32 %v9700, %v9800
    %v9802 = vpop.f32.mrb[0].mxu0
    %9803 = vdwg.mxu0
    %9804 = vmatprep.subr.mxu0 0.0
    %v9805 = vand.u32 %v9175, 4294901760
    %9806 = vmatpush1.msra.mxu0 %v9805
    %9807 = vmatprep.subr.mxu0 0.0
    %v9808 = vand.u32 %v9176, 4294901760
    %9809 = vmatpush1.msra.mxu0 %v9808
    %9810 = vmatprep.subr.mxu0 0.0
    %v9811 = vand.u32 %v9177, 4294901760
    %9812 = vmatpush1.msra.mxu0 %v9811
    %9813 = vmatprep.subr.mxu0 0.0
    %v9814 = vand.u32 %v9178, 4294901760
    %9815 = vmatpush1.msra.mxu0 %v9814
    %9816 = vmatprep.subr.mxu0 0.0
    %9817 = vmatpush1.msra.mxu0 0.0
    %9818 = vmatprep.subr.mxu0 0.0
    %9819 = vmatpush1.msra.mxu0 0.0
    %9820 = vmatprep.subr.mxu0 0.0
    %9821 = vmatpush1.msra.mxu0 0.0
    %9822 = vmatprep.subr.mxu0 0.0
    %9823 = vmatpush1.msra.mxu0 0.0
    %9824 = vmatprep.subr.mxu0 0.0
    %9825 = vmatpush1.msra.mxu0 0.0
    %9826 = vmatprep.subr.mxu0 0.0
    %9827 = vmatpush1.msra.mxu0 0.0
    %9828 = vmatprep.subr.mxu0 0.0
    %9829 = vmatpush1.msra.mxu0 0.0
    %9830 = vmatprep.subr.mxu0 0.0
    %9831 = vmatpush1.msra.mxu0 0.0
    %9832 = vmatprep.subr.mxu0 0.0
    %9833 = vmatpush1.msra.mxu0 0.0
    %9834 = vmatprep.subr.mxu0 0.0
    %9835 = vmatpush1.msra.mxu0 0.0
    %9836 = vmatprep.subr.mxu0 0.0
    %9837 = vmatpush1.msra.mxu0 0.0
    %9838 = vmatprep.subr.mxu0 0.0
    %9839 = vmatpush1.msra.mxu0 0.0
    %9840 = vmatprep.subr.mxu0 0.0
    %9841 = vmatpush1.msra.mxu0 0.0
    %9842 = vmatprep.subr.mxu0 0.0
    %9843 = vmatpush1.msra.mxu0 0.0
    %9844 = vmatprep.subr.mxu0 0.0
    %9845 = vmatpush1.msra.mxu0 0.0
    %9846 = vmatprep.subr.mxu0 0.0
    %9847 = vmatpush1.msra.mxu0 0.0
    %9848 = vmatprep.subr.mxu0 0.0
    %9849 = vmatpush1.msra.mxu0 0.0
    %9850 = vmatprep.subr.mxu0 0.0
    %9851 = vmatpush1.msra.mxu0 0.0
    %9852 = vmatprep.subr.mxu0 0.0
    %9853 = vmatpush1.msra.mxu0 0.0
    %9854 = vmatprep.subr.mxu0 0.0
    %9855 = vmatpush1.msra.mxu0 0.0
    %9856 = vmatprep.subr.mxu0 0.0
    %9857 = vmatpush1.msra.mxu0 0.0
    %9858 = vmatprep.subr.mxu0 0.0
    %9859 = vmatpush1.msra.mxu0 0.0
    %9860 = vmatprep.subr.mxu0 0.0
    %9861 = vmatpush1.msra.mxu0 0.0
    %9862 = vmatprep.subr.mxu0 0.0
    %9863 = vmatpush1.msra.mxu0 0.0
    %9864 = vmatprep.subr.mxu0 0.0
    %9865 = vmatpush1.msra.mxu0 0.0
    %9866 = vmatprep.subr.mxu0 0.0
    %9867 = vmatpush1.msra.mxu0 0.0
    %9868 = vmatprep.subr.mxu0 0.0
    %9869 = vmatpush1.msra.mxu0 0.0
    %9870 = vmatprep.subr.mxu0 0.0
    %9871 = vmatpush1.msra.mxu0 0.0
    %9872 = vmatprep.mubr.f32.mxu0 0.0
    %v9873 = vand.u32 %v2968, 4294901760
    %9874 = vmatmul.mubr.f32.gmra.mrb[0].mxu0 %v9873
    %v9875 = vpop.f32.mrb[0].mxu0
    %v9876 = vadd.f32 %v9783, %v9875
    %v9877 = vpop.f32.mrb[0].mxu0
    %9878 = vmatprep.mubr.f32.mxu0 0.0
    %v9879 = vand.u32 %v2971, 4294901760
    %9880 = vmatmul.mubr.f32.gmra.mrb[0].mxu0 %v9879
    %v9881 = vpop.f32.mrb[0].mxu0
    %v9882 = vadd.f32 %v9789, %v9881
    %v9883 = vpop.f32.mrb[0].mxu0
    %9884 = vmatprep.mubr.f32.mxu0 0.0
    %v9885 = vand.u32 %v2974, 4294901760
    %9886 = vmatmul.mubr.f32.gmra.mrb[0].mxu0 %v9885
    %v9887 = vpop.f32.mrb[0].mxu0
    %v9888 = vadd.f32 %v9795, %v9887
    %v9889 = vpop.f32.mrb[0].mxu0
    %9890 = vmatprep.mubr.f32.mxu0 0.0
    %v9891 = vand.u32 %v2977, 4294901760
    %9892 = vmatmul.mubr.f32.gmra.mrb[0].mxu0 %v9891
    %v9893 = vpop.f32.mrb[0].mxu0
    %v9894 = vadd.f32 %v9801, %v9893
    %v9895 = vpop.f32.mrb[0].mxu0
    %9896 = vdwg.mxu0
    %9897 = vmatprep.subr.mxu0 0.0
    %v9898 = vand.u32 %v9179, 4294901760
    %9899 = vmatpush1.msra.mxu0 %v9898
    %9900 = vmatprep.subr.mxu0 0.0
    %v9901 = vand.u32 %v9180, 4294901760
    %9902 = vmatpush1.msra.mxu0 %v9901
    %9903 = vmatprep.subr.mxu0 0.0
    %v9904 = vand.u32 %v9181, 4294901760
    %9905 = vmatpush1.msra.mxu0 %v9904
    %9906 = vmatprep.subr.mxu0 0.0
    %v9907 = vand.u32 %v9182, 4294901760
    %9908 = vmatpush1.msra.mxu0 %v9907
    %9909 = vmatprep.subr.mxu0 0.0
    %9910 = vmatpush1.msra.mxu0 0.0
    %9911 = vmatprep.subr.mxu0 0.0
    %9912 = vmatpush1.msra.mxu0 0.0
    %9913 = vmatprep.subr.mxu0 0.0
    %9914 = vmatpush1.msra.mxu0 0.0
    %9915 = vmatprep.subr.mxu0 0.0
    %9916 = vmatpush1.msra.mxu0 0.0
    %9917 = vmatprep.subr.mxu0 0.0
    %9918 = vmatpush1.msra.mxu0 0.0
    %9919 = vmatprep.subr.mxu0 0.0
    %9920 = vmatpush1.msra.mxu0 0.0
    %9921 = vmatprep.subr.mxu0 0.0
    %9922 = vmatpush1.msra.mxu0 0.0
    %9923 = vmatprep.subr.mxu0 0.0
    %9924 = vmatpush1.msra.mxu0 0.0
    %9925 = vmatprep.subr.mxu0 0.0
    %9926 = vmatpush1.msra.mxu0 0.0
    %9927 = vmatprep.subr.mxu0 0.0
    %9928 = vmatpush1.msra.mxu0 0.0
    %9929 = vmatprep.subr.mxu0 0.0
    %9930 = vmatpush1.msra.mxu0 0.0
    %9931 = vmatprep.subr.mxu0 0.0
    %9932 = vmatpush1.msra.mxu0 0.0
    %9933 = vmatprep.subr.mxu0 0.0
    %9934 = vmatpush1.msra.mxu0 0.0
    %9935 = vmatprep.subr.mxu0 0.0
    %9936 = vmatpush1.msra.mxu0 0.0
    %9937 = vmatprep.subr.mxu0 0.0
    %9938 = vmatpush1.msra.mxu0 0.0
    %9939 = vmatprep.subr.mxu0 0.0
    %9940 = vmatpush1.msra.mxu0 0.0
    %9941 = vmatprep.subr.mxu0 0.0
    %9942 = vmatpush1.msra.mxu0 0.0
    %9943 = vmatprep.subr.mxu0 0.0
    %9944 = vmatpush1.msra.mxu0 0.0
    %9945 = vmatprep.subr.mxu0 0.0
    %9946 = vmatpush1.msra.mxu0 0.0
    %9947 = vmatprep.subr.mxu0 0.0
    %9948 = vmatpush1.msra.mxu0 0.0
    %9949 = vmatprep.subr.mxu0 0.0
    %9950 = vmatpush1.msra.mxu0 0.0
    %9951 = vmatprep.subr.mxu0 0.0
    %9952 = vmatpush1.msra.mxu0 0.0
    %9953 = vmatprep.subr.mxu0 0.0
    %9954 = vmatpush1.msra.mxu0 0.0
    %9955 = vmatprep.subr.mxu0 0.0
    %9956 = vmatpush1.msra.mxu0 0.0
    %9957 = vmatprep.subr.mxu0 0.0
    %9958 = vmatpush1.msra.mxu0 0.0
    %9959 = vmatprep.subr.mxu0 0.0
    %9960 = vmatpush1.msra.mxu0 0.0
    %9961 = vmatprep.subr.mxu0 0.0
    %9962 = vmatpush1.msra.mxu0 0.0
    %9963 = vmatprep.subr.mxu0 0.0
    %9964 = vmatpush1.msra.mxu0 0.0
    %9965 = vmatprep.mubr.f32.mxu0 0.0
    %v9966 = vand.u32 %v2968, 4294901760
    %v9967 = vsub.f32 %v2968, %v9966
    %v9968 = vand.u32 %v9967, 4294901760
    %v9969 = vsub.f32 %v9967, %v9968
    %v9970 = vand.u32 %v9969, 4294901760
    %9971 = vmatmul.mubr.f32.gmra.mrb[0].mxu0 %v9970
    %v9972 = vpop.f32.mrb[0].mxu0
    %v9973 = vadd.f32 0.0, %v9972
    %v9974 = vpop.f32.mrb[0].mxu0
    %9975 = vmatprep.mubr.f32.mxu0 0.0
    %v9976 = vand.u32 %v2971, 4294901760
    %v9977 = vsub.f32 %v2971, %v9976
    %v9978 = vand.u32 %v9977, 4294901760
    %v9979 = vsub.f32 %v9977, %v9978
    %v9980 = vand.u32 %v9979, 4294901760
    %9981 = vmatmul.mubr.f32.gmra.mrb[0].mxu0 %v9980
    %v9982 = vpop.f32.mrb[0].mxu0
    %v9983 = vadd.f32 0.0, %v9982
    %v9984 = vpop.f32.mrb[0].mxu0
    %9985 = vmatprep.mubr.f32.mxu0 0.0
    %v9986 = vand.u32 %v2974, 4294901760
    %v9987 = vsub.f32 %v2974, %v9986
    %v9988 = vand.u32 %v9987, 4294901760
    %v9989 = vsub.f32 %v9987, %v9988
    %v9990 = vand.u32 %v9989, 4294901760
    %9991 = vmatmul.mubr.f32.gmra.mrb[0].mxu0 %v9990
    %v9992 = vpop.f32.mrb[0].mxu0
    %v9993 = vadd.f32 0.0, %v9992
    %v9994 = vpop.f32.mrb[0].mxu0
    %9995 = vmatprep.mubr.f32.mxu0 0.0
    %v9996 = vand.u32 %v2977, 4294901760
    %v9997 = vsub.f32 %v2977, %v9996
    %v9998 = vand.u32 %v9997, 4294901760
    %v9999 = vsub.f32 %v9997, %v9998
    %v10000 = vand.u32 %v9999, 4294901760
    %10001 = vmatmul.mubr.f32.gmra.mrb[0].mxu0 %v10000
    %v10002 = vpop.f32.mrb[0].mxu0
    %v10003 = vadd.f32 0.0, %v10002
    %v10004 = vpop.f32.mrb[0].mxu0
    %10005 = vdwg.mxu0
    %10006 = vmatprep.subr.mxu0 0.0
    %v10007 = vand.u32 %v9179, 4294901760
    %v10008 = vsub.f32 %v9179, %v10007
    %v10009 = vand.u32 %v10008, 4294901760
    %v10010 = vsub.f32 %v10008, %v10009
    %v10011 = vand.u32 %v10010, 4294901760
    %10012 = vmatpush1.msra.mxu0 %v10011
    %10013 = vmatprep.subr.mxu0 0.0
    %v10014 = vand.u32 %v9180, 4294901760
    %v10015 = vsub.f32 %v9180, %v10014
    %v10016 = vand.u32 %v10015, 4294901760
    %v10017 = vsub.f32 %v10015, %v10016
    %v10018 = vand.u32 %v10017, 4294901760
    %10019 = vmatpush1.msra.mxu0 %v10018
    %10020 = vmatprep.subr.mxu0 0.0
    %v10021 = vand.u32 %v9181, 4294901760
    %v10022 = vsub.f32 %v9181, %v10021
    %v10023 = vand.u32 %v10022, 4294901760
    %v10024 = vsub.f32 %v10022, %v10023
    %v10025 = vand.u32 %v10024, 4294901760
    %10026 = vmatpush1.msra.mxu0 %v10025
    %10027 = vmatprep.subr.mxu0 0.0
    %v10028 = vand.u32 %v9182, 4294901760
    %v10029 = vsub.f32 %v9182, %v10028
    %v10030 = vand.u32 %v10029, 4294901760
    %v10031 = vsub.f32 %v10029, %v10030
    %v10032 = vand.u32 %v10031, 4294901760
    %10033 = vmatpush1.msra.mxu0 %v10032
    %10034 = vmatprep.subr.mxu0 0.0
    %10035 = vmatpush1.msra.mxu0 0.0
    %10036 = vmatprep.subr.mxu0 0.0
    %10037 = vmatpush1.msra.mxu0 0.0
    %10038 = vmatprep.subr.mxu0 0.0
    %10039 = vmatpush1.msra.mxu0 0.0
    %10040 = vmatprep.subr.mxu0 0.0
    %10041 = vmatpush1.msra.mxu0 0.0
    %10042 = vmatprep.subr.mxu0 0.0
    %10043 = vmatpush1.msra.mxu0 0.0
    %10044 = vmatprep.subr.mxu0 0.0
    %10045 = vmatpush1.msra.mxu0 0.0
    %10046 = vmatprep.subr.mxu0 0.0
    %10047 = vmatpush1.msra.mxu0 0.0
    %10048 = vmatprep.subr.mxu0 0.0
    %10049 = vmatpush1.msra.mxu0 0.0
    %10050 = vmatprep.subr.mxu0 0.0
    %10051 = vmatpush1.msra.mxu0 0.0
    %10052 = vmatprep.subr.mxu0 0.0
    %10053 = vmatpush1.msra.mxu0 0.0
    %10054 = vmatprep.subr.mxu0 0.0
    %10055 = vmatpush1.msra.mxu0 0.0
    %10056 = vmatprep.subr.mxu0 0.0
    %10057 = vmatpush1.msra.mxu0 0.0
    %10058 = vmatprep.subr.mxu0 0.0
    %10059 = vmatpush1.msra.mxu0 0.0
    %10060 = vmatprep.subr.mxu0 0.0
    %10061 = vmatpush1.msra.mxu0 0.0
    %10062 = vmatprep.subr.mxu0 0.0
    %10063 = vmatpush1.msra.mxu0 0.0
    %10064 = vmatprep.subr.mxu0 0.0
    %10065 = vmatpush1.msra.mxu0 0.0
    %10066 = vmatprep.subr.mxu0 0.0
    %10067 = vmatpush1.msra.mxu0 0.0
    %10068 = vmatprep.subr.mxu0 0.0
    %10069 = vmatpush1.msra.mxu0 0.0
    %10070 = vmatprep.subr.mxu0 0.0
    %10071 = vmatpush1.msra.mxu0 0.0
    %10072 = vmatprep.subr.mxu0 0.0
    %10073 = vmatpush1.msra.mxu0 0.0
    %10074 = vmatprep.subr.mxu0 0.0
    %10075 = vmatpush1.msra.mxu0 0.0
    %10076 = vmatprep.subr.mxu0 0.0
    %10077 = vmatpush1.msra.mxu0 0.0
    %10078 = vmatprep.subr.mxu0 0.0
    %10079 = vmatpush1.msra.mxu0 0.0
    %10080 = vmatprep.subr.mxu0 0.0
    %10081 = vmatpush1.msra.mxu0 0.0
    %10082 = vmatprep.subr.mxu0 0.0
    %10083 = vmatpush1.msra.mxu0 0.0
    %10084 = vmatprep.subr.mxu0 0.0
    %10085 = vmatpush1.msra.mxu0 0.0
    %10086 = vmatprep.subr.mxu0 0.0
    %10087 = vmatpush1.msra.mxu0 0.0
    %10088 = vmatprep.subr.mxu0 0.0
    %10089 = vmatpush1.msra.mxu0 0.0
    %10090 = vmatprep.mubr.f32.mxu0 0.0
    %v10091 = vand.u32 %v2968, 4294901760
    %10092 = vmatmul.mubr.f32.gmra.mrb[0].mxu0 %v10091
    %v10093 = vpop.f32.mrb[0].mxu0
    %v10094 = vadd.f32 %v9973, %v10093
    %v10095 = vpop.f32.mrb[0].mxu0
    %10096 = vmatprep.mubr.f32.mxu0 0.0
    %v10097 = vand.u32 %v2971, 4294901760
    %10098 = vmatmul.mubr.f32.gmra.mrb[0].mxu0 %v10097
    %v10099 = vpop.f32.mrb[0].mxu0
    %v10100 = vadd.f32 %v9983, %v10099
    %v10101 = vpop.f32.mrb[0].mxu0
    %10102 = vmatprep.mubr.f32.mxu0 0.0
    %v10103 = vand.u32 %v2974, 4294901760
    %10104 = vmatmul.mubr.f32.gmra.mrb[0].mxu0 %v10103
    %v10105 = vpop.f32.mrb[0].mxu0
    %v10106 = vadd.f32 %v9993, %v10105
    %v10107 = vpop.f32.mrb[0].mxu0
    %10108 = vmatprep.mubr.f32.mxu0 0.0
    %v10109 = vand.u32 %v2977, 4294901760
    %10110 = vmatmul.mubr.f32.gmra.mrb[0].mxu0 %v10109
    %v10111 = vpop.f32.mrb[0].mxu0
    %v10112 = vadd.f32 %v10003, %v10111
    %v10113 = vpop.f32.mrb[0].mxu0
    %10114 = vdwg.mxu0
    %10115 = vmatprep.subr.mxu0 0.0
    %v10116 = vand.u32 %v9179, 4294901760
    %v10117 = vsub.f32 %v9179, %v10116
    %10118 = vmatpush1.msra.mxu0 %v10117
    %10119 = vmatprep.subr.mxu0 0.0
    %v10120 = vand.u32 %v9180, 4294901760
    %v10121 = vsub.f32 %v9180, %v10120
    %10122 = vmatpush1.msra.mxu0 %v10121
    %10123 = vmatprep.subr.mxu0 0.0
    %v10124 = vand.u32 %v9181, 4294901760
    %v10125 = vsub.f32 %v9181, %v10124
    %10126 = vmatpush1.msra.mxu0 %v10125
    %10127 = vmatprep.subr.mxu0 0.0
    %v10128 = vand.u32 %v9182, 4294901760
    %v10129 = vsub.f32 %v9182, %v10128
    %10130 = vmatpush1.msra.mxu0 %v10129
    %10131 = vmatprep.subr.mxu0 0.0
    %10132 = vmatpush1.msra.mxu0 0.0
    %10133 = vmatprep.subr.mxu0 0.0
    %10134 = vmatpush1.msra.mxu0 0.0
    %10135 = vmatprep.subr.mxu0 0.0
    %10136 = vmatpush1.msra.mxu0 0.0
    %10137 = vmatprep.subr.mxu0 0.0
    %10138 = vmatpush1.msra.mxu0 0.0
    %10139 = vmatprep.subr.mxu0 0.0
    %10140 = vmatpush1.msra.mxu0 0.0
    %10141 = vmatprep.subr.mxu0 0.0
    %10142 = vmatpush1.msra.mxu0 0.0
    %10143 = vmatprep.subr.mxu0 0.0
    %10144 = vmatpush1.msra.mxu0 0.0
    %10145 = vmatprep.subr.mxu0 0.0
    %10146 = vmatpush1.msra.mxu0 0.0
    %10147 = vmatprep.subr.mxu0 0.0
    %10148 = vmatpush1.msra.mxu0 0.0
    %10149 = vmatprep.subr.mxu0 0.0
    %10150 = vmatpush1.msra.mxu0 0.0
    %10151 = vmatprep.subr.mxu0 0.0
    %10152 = vmatpush1.msra.mxu0 0.0
    %10153 = vmatprep.subr.mxu0 0.0
    %10154 = vmatpush1.msra.mxu0 0.0
    %10155 = vmatprep.subr.mxu0 0.0
    %10156 = vmatpush1.msra.mxu0 0.0
    %10157 = vmatprep.subr.mxu0 0.0
    %10158 = vmatpush1.msra.mxu0 0.0
    %10159 = vmatprep.subr.mxu0 0.0
    %10160 = vmatpush1.msra.mxu0 0.0
    %10161 = vmatprep.subr.mxu0 0.0
    %10162 = vmatpush1.msra.mxu0 0.0
    %10163 = vmatprep.subr.mxu0 0.0
    %10164 = vmatpush1.msra.mxu0 0.0
    %10165 = vmatprep.subr.mxu0 0.0
    %10166 = vmatpush1.msra.mxu0 0.0
    %10167 = vmatprep.subr.mxu0 0.0
    %10168 = vmatpush1.msra.mxu0 0.0
    %10169 = vmatprep.subr.mxu0 0.0
    %10170 = vmatpush1.msra.mxu0 0.0
    %10171 = vmatprep.subr.mxu0 0.0
    %10172 = vmatpush1.msra.mxu0 0.0
    %10173 = vmatprep.subr.mxu0 0.0
    %10174 = vmatpush1.msra.mxu0 0.0
    %10175 = vmatprep.subr.mxu0 0.0
    %10176 = vmatpush1.msra.mxu0 0.0
    %10177 = vmatprep.subr.mxu0 0.0
    %10178 = vmatpush1.msra.mxu0 0.0
    %10179 = vmatprep.subr.mxu0 0.0
    %10180 = vmatpush1.msra.mxu0 0.0
    %10181 = vmatprep.subr.mxu0 0.0
    %10182 = vmatpush1.msra.mxu0 0.0
    %10183 = vmatprep.subr.mxu0 0.0
    %10184 = vmatpush1.msra.mxu0 0.0
    %10185 = vmatprep.subr.mxu0 0.0
    %10186 = vmatpush1.msra.mxu0 0.0
    %10187 = vmatprep.mubr.f32.mxu0 0.0
    %v10188 = vand.u32 %v2968, 4294901760
    %v10189 = vsub.f32 %v2968, %v10188
    %10190 = vmatmul.mubr.f32.gmra.mrb[0].mxu0 %v10189
    %v10191 = vpop.f32.mrb[0].mxu0
    %v10192 = vadd.f32 %v10094, %v10191
    %v10193 = vpop.f32.mrb[0].mxu0
    %10194 = vmatprep.mubr.f32.mxu0 0.0
    %v10195 = vand.u32 %v2971, 4294901760
    %v10196 = vsub.f32 %v2971, %v10195
    %10197 = vmatmul.mubr.f32.gmra.mrb[0].mxu0 %v10196
    %v10198 = vpop.f32.mrb[0].mxu0
    %v10199 = vadd.f32 %v10100, %v10198
    %v10200 = vpop.f32.mrb[0].mxu0
    %10201 = vmatprep.mubr.f32.mxu0 0.0
    %v10202 = vand.u32 %v2974, 4294901760
    %v10203 = vsub.f32 %v2974, %v10202
    %10204 = vmatmul.mubr.f32.gmra.mrb[0].mxu0 %v10203
    %v10205 = vpop.f32.mrb[0].mxu0
    %v10206 = vadd.f32 %v10106, %v10205
    %v10207 = vpop.f32.mrb[0].mxu0
    %10208 = vmatprep.mubr.f32.mxu0 0.0
    %v10209 = vand.u32 %v2977, 4294901760
    %v10210 = vsub.f32 %v2977, %v10209
    %10211 = vmatmul.mubr.f32.gmra.mrb[0].mxu0 %v10210
    %v10212 = vpop.f32.mrb[0].mxu0
    %v10213 = vadd.f32 %v10112, %v10212
    %v10214 = vpop.f32.mrb[0].mxu0
    %10215 = vdwg.mxu0
    %10216 = vmatprep.subr.mxu0 0.0
    %v10217 = vand.u32 %v9179, 4294901760
    %10218 = vmatpush1.msra.mxu0 %v10217
    %10219 = vmatprep.subr.mxu0 0.0
    %v10220 = vand.u32 %v9180, 4294901760
    %10221 = vmatpush1.msra.mxu0 %v10220
    %10222 = vmatprep.subr.mxu0 0.0
    %v10223 = vand.u32 %v9181, 4294901760
    %10224 = vmatpush1.msra.mxu0 %v10223
    %10225 = vmatprep.subr.mxu0 0.0
    %v10226 = vand.u32 %v9182, 4294901760
    %10227 = vmatpush1.msra.mxu0 %v10226
    %10228 = vmatprep.subr.mxu0 0.0
    %10229 = vmatpush1.msra.mxu0 0.0
    %10230 = vmatprep.subr.mxu0 0.0
    %10231 = vmatpush1.msra.mxu0 0.0
    %10232 = vmatprep.subr.mxu0 0.0
    %10233 = vmatpush1.msra.mxu0 0.0
    %10234 = vmatprep.subr.mxu0 0.0
    %10235 = vmatpush1.msra.mxu0 0.0
    %10236 = vmatprep.subr.mxu0 0.0
    %10237 = vmatpush1.msra.mxu0 0.0
    %10238 = vmatprep.subr.mxu0 0.0
    %10239 = vmatpush1.msra.mxu0 0.0
    %10240 = vmatprep.subr.mxu0 0.0
    %10241 = vmatpush1.msra.mxu0 0.0
    %10242 = vmatprep.subr.mxu0 0.0
    %10243 = vmatpush1.msra.mxu0 0.0
    %10244 = vmatprep.subr.mxu0 0.0
    %10245 = vmatpush1.msra.mxu0 0.0
    %10246 = vmatprep.subr.mxu0 0.0
    %10247 = vmatpush1.msra.mxu0 0.0
    %10248 = vmatprep.subr.mxu0 0.0
    %10249 = vmatpush1.msra.mxu0 0.0
    %10250 = vmatprep.subr.mxu0 0.0
    %10251 = vmatpush1.msra.mxu0 0.0
    %10252 = vmatprep.subr.mxu0 0.0
    %10253 = vmatpush1.msra.mxu0 0.0
    %10254 = vmatprep.subr.mxu0 0.0
    %10255 = vmatpush1.msra.mxu0 0.0
    %10256 = vmatprep.subr.mxu0 0.0
    %10257 = vmatpush1.msra.mxu0 0.0
    %10258 = vmatprep.subr.mxu0 0.0
    %10259 = vmatpush1.msra.mxu0 0.0
    %10260 = vmatprep.subr.mxu0 0.0
    %10261 = vmatpush1.msra.mxu0 0.0
    %10262 = vmatprep.subr.mxu0 0.0
    %10263 = vmatpush1.msra.mxu0 0.0
    %10264 = vmatprep.subr.mxu0 0.0
    %10265 = vmatpush1.msra.mxu0 0.0
    %10266 = vmatprep.subr.mxu0 0.0
    %10267 = vmatpush1.msra.mxu0 0.0
    %10268 = vmatprep.subr.mxu0 0.0
    %10269 = vmatpush1.msra.mxu0 0.0
    %10270 = vmatprep.subr.mxu0 0.0
    %10271 = vmatpush1.msra.mxu0 0.0
    %10272 = vmatprep.subr.mxu0 0.0
    %10273 = vmatpush1.msra.mxu0 0.0
    %10274 = vmatprep.subr.mxu0 0.0
    %10275 = vmatpush1.msra.mxu0 0.0
    %10276 = vmatprep.subr.mxu0 0.0
    %10277 = vmatpush1.msra.mxu0 0.0
    %10278 = vmatprep.subr.mxu0 0.0
    %10279 = vmatpush1.msra.mxu0 0.0
    %10280 = vmatprep.subr.mxu0 0.0
    %10281 = vmatpush1.msra.mxu0 0.0
    %10282 = vmatprep.subr.mxu0 0.0
    %10283 = vmatpush1.msra.mxu0 0.0
    %10284 = vmatprep.mubr.f32.mxu0 0.0
    %v10285 = vand.u32 %v2968, 4294901760
    %v10286 = vsub.f32 %v2968, %v10285
    %v10287 = vand.u32 %v10286, 4294901760
    %10288 = vmatmul.mubr.f32.gmra.mrb[0].mxu0 %v10287
    %v10289 = vpop.f32.mrb[0].mxu0
    %v10290 = vadd.f32 %v10192, %v10289
    %v10291 = vpop.f32.mrb[0].mxu0
    %10292 = vmatprep.mubr.f32.mxu0 0.0
    %v10293 = vand.u32 %v2971, 4294901760
    %v10294 = vsub.f32 %v2971, %v10293
    %v10295 = vand.u32 %v10294, 4294901760
    %10296 = vmatmul.mubr.f32.gmra.mrb[0].mxu0 %v10295
    %v10297 = vpop.f32.mrb[0].mxu0
    %v10298 = vadd.f32 %v10199, %v10297
    %v10299 = vpop.f32.mrb[0].mxu0
    %10300 = vmatprep.mubr.f32.mxu0 0.0
    %v10301 = vand.u32 %v2974, 4294901760
    %v10302 = vsub.f32 %v2974, %v10301
    %v10303 = vand.u32 %v10302, 4294901760
    %10304 = vmatmul.mubr.f32.gmra.mrb[0].mxu0 %v10303
    %v10305 = vpop.f32.mrb[0].mxu0
    %v10306 = vadd.f32 %v10206, %v10305
    %v10307 = vpop.f32.mrb[0].mxu0
    %10308 = vmatprep.mubr.f32.mxu0 0.0
    %v10309 = vand.u32 %v2977, 4294901760
    %v10310 = vsub.f32 %v2977, %v10309
    %v10311 = vand.u32 %v10310, 4294901760
    %10312 = vmatmul.mubr.f32.gmra.mrb[0].mxu0 %v10311
    %v10313 = vpop.f32.mrb[0].mxu0
    %v10314 = vadd.f32 %v10213, %v10313
    %v10315 = vpop.f32.mrb[0].mxu0
    %10316 = vdwg.mxu0
    %10317 = vmatprep.subr.mxu0 0.0
    %v10318 = vand.u32 %v9179, 4294901760
    %v10319 = vsub.f32 %v9179, %v10318
    %v10320 = vand.u32 %v10319, 4294901760
    %10321 = vmatpush1.msra.mxu0 %v10320
    %10322 = vmatprep.subr.mxu0 0.0
    %v10323 = vand.u32 %v9180, 4294901760
    %v10324 = vsub.f32 %v9180, %v10323
    %v10325 = vand.u32 %v10324, 4294901760
    %10326 = vmatpush1.msra.mxu0 %v10325
    %10327 = vmatprep.subr.mxu0 0.0
    %v10328 = vand.u32 %v9181, 4294901760
    %v10329 = vsub.f32 %v9181, %v10328
    %v10330 = vand.u32 %v10329, 4294901760
    %10331 = vmatpush1.msra.mxu0 %v10330
    %10332 = vmatprep.subr.mxu0 0.0
    %v10333 = vand.u32 %v9182, 4294901760
    %v10334 = vsub.f32 %v9182, %v10333
    %v10335 = vand.u32 %v10334, 4294901760
    %10336 = vmatpush1.msra.mxu0 %v10335
    %10337 = vmatprep.subr.mxu0 0.0
    %10338 = vmatpush1.msra.mxu0 0.0
    %10339 = vmatprep.subr.mxu0 0.0
    %10340 = vmatpush1.msra.mxu0 0.0
    %10341 = vmatprep.subr.mxu0 0.0
    %10342 = vmatpush1.msra.mxu0 0.0
    %10343 = vmatprep.subr.mxu0 0.0
    %10344 = vmatpush1.msra.mxu0 0.0
    %10345 = vmatprep.subr.mxu0 0.0
    %10346 = vmatpush1.msra.mxu0 0.0
    %10347 = vmatprep.subr.mxu0 0.0
    %10348 = vmatpush1.msra.mxu0 0.0
    %10349 = vmatprep.subr.mxu0 0.0
    %10350 = vmatpush1.msra.mxu0 0.0
    %10351 = vmatprep.subr.mxu0 0.0
    %10352 = vmatpush1.msra.mxu0 0.0
    %10353 = vmatprep.subr.mxu0 0.0
    %10354 = vmatpush1.msra.mxu0 0.0
    %10355 = vmatprep.subr.mxu0 0.0
    %10356 = vmatpush1.msra.mxu0 0.0
    %10357 = vmatprep.subr.mxu0 0.0
    %10358 = vmatpush1.msra.mxu0 0.0
    %10359 = vmatprep.subr.mxu0 0.0
    %10360 = vmatpush1.msra.mxu0 0.0
    %10361 = vmatprep.subr.mxu0 0.0
    %10362 = vmatpush1.msra.mxu0 0.0
    %10363 = vmatprep.subr.mxu0 0.0
    %10364 = vmatpush1.msra.mxu0 0.0
    %10365 = vmatprep.subr.mxu0 0.0
    %10366 = vmatpush1.msra.mxu0 0.0
    %10367 = vmatprep.subr.mxu0 0.0
    %10368 = vmatpush1.msra.mxu0 0.0
    %10369 = vmatprep.subr.mxu0 0.0
    %10370 = vmatpush1.msra.mxu0 0.0
    %10371 = vmatprep.subr.mxu0 0.0
    %10372 = vmatpush1.msra.mxu0 0.0
    %10373 = vmatprep.subr.mxu0 0.0
    %10374 = vmatpush1.msra.mxu0 0.0
    %10375 = vmatprep.subr.mxu0 0.0
    %10376 = vmatpush1.msra.mxu0 0.0
    %10377 = vmatprep.subr.mxu0 0.0
    %10378 = vmatpush1.msra.mxu0 0.0
    %10379 = vmatprep.subr.mxu0 0.0
    %10380 = vmatpush1.msra.mxu0 0.0
    %10381 = vmatprep.subr.mxu0 0.0
    %10382 = vmatpush1.msra.mxu0 0.0
    %10383 = vmatprep.subr.mxu0 0.0
    %10384 = vmatpush1.msra.mxu0 0.0
    %10385 = vmatprep.subr.mxu0 0.0
    %10386 = vmatpush1.msra.mxu0 0.0
    %10387 = vmatprep.subr.mxu0 0.0
    %10388 = vmatpush1.msra.mxu0 0.0
    %10389 = vmatprep.subr.mxu0 0.0
    %10390 = vmatpush1.msra.mxu0 0.0
    %10391 = vmatprep.subr.mxu0 0.0
    %10392 = vmatpush1.msra.mxu0 0.0
    %10393 = vmatprep.mubr.f32.mxu0 0.0
    %v10394 = vand.u32 %v2968, 4294901760
    %10395 = vmatmul.mubr.f32.gmra.mrb[0].mxu0 %v10394
    %v10396 = vpop.f32.mrb[0].mxu0
    %v10397 = vadd.f32 %v10290, %v10396
    %v10398 = vpop.f32.mrb[0].mxu0
    %10399 = vmatprep.mubr.f32.mxu0 0.0
    %v10400 = vand.u32 %v2971, 4294901760
    %10401 = vmatmul.mubr.f32.gmra.mrb[0].mxu0 %v10400
    %v10402 = vpop.f32.mrb[0].mxu0
    %v10403 = vadd.f32 %v10298, %v10402
    %v10404 = vpop.f32.mrb[0].mxu0
    %10405 = vmatprep.mubr.f32.mxu0 0.0
    %v10406 = vand.u32 %v2974, 4294901760
    %10407 = vmatmul.mubr.f32.gmra.mrb[0].mxu0 %v10406
    %v10408 = vpop.f32.mrb[0].mxu0
    %v10409 = vadd.f32 %v10306, %v10408
    %v10410 = vpop.f32.mrb[0].mxu0
    %10411 = vmatprep.mubr.f32.mxu0 0.0
    %v10412 = vand.u32 %v2977, 4294901760
    %10413 = vmatmul.mubr.f32.gmra.mrb[0].mxu0 %v10412
    %v10414 = vpop.f32.mrb[0].mxu0
    %v10415 = vadd.f32 %v10314, %v10414
    %v10416 = vpop.f32.mrb[0].mxu0
    %10417 = vdwg.mxu0
    %10418 = vmatprep.subr.mxu0 0.0
    %v10419 = vand.u32 %v9179, 4294901760
    %10420 = vmatpush1.msra.mxu0 %v10419
    %10421 = vmatprep.subr.mxu0 0.0
    %v10422 = vand.u32 %v9180, 4294901760
    %10423 = vmatpush1.msra.mxu0 %v10422
    %10424 = vmatprep.subr.mxu0 0.0
    %v10425 = vand.u32 %v9181, 4294901760
    %10426 = vmatpush1.msra.mxu0 %v10425
    %10427 = vmatprep.subr.mxu0 0.0
    %v10428 = vand.u32 %v9182, 4294901760
    %10429 = vmatpush1.msra.mxu0 %v10428
    %10430 = vmatprep.subr.mxu0 0.0
    %10431 = vmatpush1.msra.mxu0 0.0
    %10432 = vmatprep.subr.mxu0 0.0
    %10433 = vmatpush1.msra.mxu0 0.0
    %10434 = vmatprep.subr.mxu0 0.0
    %10435 = vmatpush1.msra.mxu0 0.0
    %10436 = vmatprep.subr.mxu0 0.0
    %10437 = vmatpush1.msra.mxu0 0.0
    %10438 = vmatprep.subr.mxu0 0.0
    %10439 = vmatpush1.msra.mxu0 0.0
    %10440 = vmatprep.subr.mxu0 0.0
    %10441 = vmatpush1.msra.mxu0 0.0
    %10442 = vmatprep.subr.mxu0 0.0
    %10443 = vmatpush1.msra.mxu0 0.0
    %10444 = vmatprep.subr.mxu0 0.0
    %10445 = vmatpush1.msra.mxu0 0.0
    %10446 = vmatprep.subr.mxu0 0.0
    %10447 = vmatpush1.msra.mxu0 0.0
    %10448 = vmatprep.subr.mxu0 0.0
    %10449 = vmatpush1.msra.mxu0 0.0
    %10450 = vmatprep.subr.mxu0 0.0
    %10451 = vmatpush1.msra.mxu0 0.0
    %10452 = vmatprep.subr.mxu0 0.0
    %10453 = vmatpush1.msra.mxu0 0.0
    %10454 = vmatprep.subr.mxu0 0.0
    %10455 = vmatpush1.msra.mxu0 0.0
    %10456 = vmatprep.subr.mxu0 0.0
    %10457 = vmatpush1.msra.mxu0 0.0
    %10458 = vmatprep.subr.mxu0 0.0
    %10459 = vmatpush1.msra.mxu0 0.0
    %10460 = vmatprep.subr.mxu0 0.0
    %10461 = vmatpush1.msra.mxu0 0.0
    %10462 = vmatprep.subr.mxu0 0.0
    %10463 = vmatpush1.msra.mxu0 0.0
    %10464 = vmatprep.subr.mxu0 0.0
    %10465 = vmatpush1.msra.mxu0 0.0
    %10466 = vmatprep.subr.mxu0 0.0
    %10467 = vmatpush1.msra.mxu0 0.0
    %10468 = vmatprep.subr.mxu0 0.0
    %10469 = vmatpush1.msra.mxu0 0.0
    %10470 = vmatprep.subr.mxu0 0.0
    %10471 = vmatpush1.msra.mxu0 0.0
    %10472 = vmatprep.subr.mxu0 0.0
    %10473 = vmatpush1.msra.mxu0 0.0
    %10474 = vmatprep.subr.mxu0 0.0
    %10475 = vmatpush1.msra.mxu0 0.0
    %10476 = vmatprep.subr.mxu0 0.0
    %10477 = vmatpush1.msra.mxu0 0.0
    %10478 = vmatprep.subr.mxu0 0.0
    %10479 = vmatpush1.msra.mxu0 0.0
    %10480 = vmatprep.subr.mxu0 0.0
    %10481 = vmatpush1.msra.mxu0 0.0
    %10482 = vmatprep.subr.mxu0 0.0
    %10483 = vmatpush1.msra.mxu0 0.0
    %10484 = vmatprep.subr.mxu0 0.0
    %10485 = vmatpush1.msra.mxu0 0.0
    %10486 = vmatprep.mubr.f32.mxu0 0.0
    %v10487 = vand.u32 %v2968, 4294901760
    %10488 = vmatmul.mubr.f32.gmra.mrb[0].mxu0 %v10487
    %v10489 = vpop.f32.mrb[0].mxu0
    %v10490 = vadd.f32 %v10397, %v10489
    %v10491 = vpop.f32.mrb[0].mxu0
    %10492 = vmatprep.mubr.f32.mxu0 0.0
    %v10493 = vand.u32 %v2971, 4294901760
    %10494 = vmatmul.mubr.f32.gmra.mrb[0].mxu0 %v10493
    %v10495 = vpop.f32.mrb[0].mxu0
    %v10496 = vadd.f32 %v10403, %v10495
    %v10497 = vpop.f32.mrb[0].mxu0
    %10498 = vmatprep.mubr.f32.mxu0 0.0
    %v10499 = vand.u32 %v2974, 4294901760
    %10500 = vmatmul.mubr.f32.gmra.mrb[0].mxu0 %v10499
    %v10501 = vpop.f32.mrb[0].mxu0
    %v10502 = vadd.f32 %v10409, %v10501
    %v10503 = vpop.f32.mrb[0].mxu0
    %10504 = vmatprep.mubr.f32.mxu0 0.0
    %v10505 = vand.u32 %v2977, 4294901760
    %10506 = vmatmul.mubr.f32.gmra.mrb[0].mxu0 %v10505
    %v10507 = vpop.f32.mrb[0].mxu0
    %v10508 = vadd.f32 %v10415, %v10507
    %v10509 = vpop.f32.mrb[0].mxu0
    %10510 = vdwg.mxu0
    %v10511 = vadd.f32 %v9235, %v9876
    %v10512 = vadd.f32 %v9236, %v9882
    %v10513 = vadd.f32 %v9237, %v9888
    %v10514 = vadd.f32 %v9238, %v9894
    %v10515 = vadd.f32 %v9239, %v10490
    %v10516 = vadd.f32 %v9240, %v10496
    %v10517 = vadd.f32 %v9241, %v10502
    %v10518 = vadd.f32 %v9242, %v10508
    %v10519 = vadd.f32 %v10511, %v9275
    %v10520 = vadd.f32 %v10512, %v9276
    %v10521 = vadd.f32 %v10513, %v9277
    %v10522 = vadd.f32 %v10514, %v9278
    %v10523 = vadd.f32 %v10515, %v9279
    %v10524 = vadd.f32 %v10516, %v9280
    %v10525 = vadd.f32 %v10517, %v9281
    %v10526 = vadd.f32 %v10518, %v9282
    %v10527 = vmul.f32 %v10519, 0.04
    %v10528 = vmul.f32 %v10520, 0.04
    %v10529 = vmul.f32 %v10521, 0.04
    %v10530 = vmul.f32 %v10522, 0.04
    %v10531 = vmul.f32 %v10523, 0.04
    %v10532 = vmul.f32 %v10524, 0.04
    %v10533 = vmul.f32 %v10525, 0.04
    %v10534 = vmul.f32 %v10526, 0.04
    %v10535 = vsub.f32 %v9175, %v10527
    %v10536 = vsub.f32 %v9176, %v10528
    %v10537 = vsub.f32 %v9177, %v10529
    %v10538 = vsub.f32 %v9178, %v10530
    %v10539 = vsub.f32 %v9179, %v10531
    %v10540 = vsub.f32 %v9180, %v10532
    %v10541 = vsub.f32 %v9181, %v10533
    %v10542 = vsub.f32 %v9182, %v10534
    %10543 = vst [vmem:[#allocation8] sm:$0xff] %v10535
    %10544 = vst [vmem:[#allocation8 + $0x8] sm:$0xff] %v10536
    %10545 = vst [vmem:[#allocation8 + $0x10] sm:$0xff] %v10537
    %10546 = vst [vmem:[#allocation8 + $0x18] sm:$0xff] %v10538
    %10547 = vst [vmem:[#allocation8 + $0x20] sm:$0xff] %v10539
    %10548 = vst [vmem:[#allocation8 + $0x28] sm:$0xff] %v10540
    %10549 = vst [vmem:[#allocation8 + $0x30] sm:$0xff] %v10541
    %10550 = vst [vmem:[#allocation8 + $0x38] sm:$0xff] %v10542
    %10551 = vst.msk [vmem:[#allocation9] sm:$0xff] %vm1518, %v1592
    %10552 = vst.msk [vmem:[#allocation9 + $0x8] sm:$0xff] %vm1518, %v1594
    %10553 = vst.msk [vmem:[#allocation9 + $0x10] sm:$0xff] %vm1518, %v1596
    %10554 = vst.msk [vmem:[#allocation9 + $0x18] sm:$0xff] %vm1518, %v1598
    %10555 = vst.msk [vmem:[#allocation9 + $0x20] sm:$0xff] %vm1518, %v1600
    %10556 = vst.msk [vmem:[#allocation9 + $0x28] sm:$0xff] %vm1518, %v1602
    %10557 = vst.msk [vmem:[#allocation9 + $0x30] sm:$0xff] %vm1518, %v1604
    %10558 = vst.msk [vmem:[#allocation9 + $0x38] sm:$0xff] %vm1518, %v1606
    // Predicated region
    $region26: #{tpu_custom_call.1} parent=1 // pred_check
      _
    $region27: #{tpu_custom_call.1} parent=1 // pred_check_branch
      %10560 = sbr.rel (0) target = $region29
    $region28: #{tpu_custom_call.1} parent=1 // pred_region
      %s10562 = ssub.s32 1024, 1024
      %10563 = vsyncadd [#allocation4], %s10562
      %s10564 = sshll.u32 [#allocation8], 4
      %s10565 = int_to_ptr.vmem [resolvable:$true] %s10564
      %10570 = dma.vmem_to_hbm [thread:$0]  %s10565, 1024, %s3, [#allocation4], 128, 128, 8
    $region29: #{tpu_custom_call.1} parent=1 // pred_fallthru
      _
    // Predicated region
    $region30: #{tpu_custom_call.1} parent=1 // pred_check
      _
    $region31: #{tpu_custom_call.1} parent=1 // pred_check_branch
      %10572 = sbr.rel (0) target = $region33
    $region32: #{tpu_custom_call.1} parent=1 // pred_region
      %s10574 = ssub.s32 1024, 1024
      %10575 = vsyncadd [#allocation10], %s10574
      %s10576 = sshll.u32 [#allocation9], 4
      %s10577 = int_to_ptr.vmem [resolvable:$true] %s10576
      %10582 = dma.vmem_to_hbm [thread:$0]  %s10577, 1024, %s4, [#allocation10], 128, 128, 8
    $region33: #{tpu_custom_call.1} parent=1 // pred_fallthru
      _
    // Predicated region
    $region34: #{tpu_custom_call.1} parent=1 // pred_check
      _
    $region35: #{tpu_custom_call.1} parent=1 // pred_check_branch
      %10584 = sbr.rel (0) target = $region37
    $region36: #{tpu_custom_call.1} parent=1 // pred_region
      %10585 = dma.done [#allocation4], 1024
    $region37: #{tpu_custom_call.1} parent=1 // pred_fallthru
      _
    // Predicated region
    $region38: #{tpu_custom_call.1} parent=1 // pred_check
      _
    $region39: #{tpu_custom_call.1} parent=1 // pred_check_branch
      %10587 = sbr.rel (0) target = $region41
    $region40: #{tpu_custom_call.1} parent=1 // pred_region
      %10588 = dma.done [#allocation10], 1024
    $region41: #{tpu_custom_call.1} parent=1 // pred_fallthru
      _
    %10589 = vsyncpa [#allocation3], 1
    %10590 = vsyncpa [#allocation6], 1
    %10591 = vsyncpa [#allocation4], 1
    %10592 = vsyncpa [#allocation10], 1

</llo_original>
